<compile_context>
chip_gen: v6e
topology: v6e:2x2x1
jax: 0.10.0
libtpu: 0.0.40
codegen_flags: <defaults>
</compile_context>

<pallas_src>
import jax
import jax.numpy as jnp
from jax import lax
from jax.experimental import pallas as pl
from jax.experimental.pallas import tpu as pltpu


_VMEM_LIMIT_BYTES = 48 * 1024 * 1024   # scoped VMEM limit: safe on v5e/v6e (128 MiB) and v7x (64 MiB)
_VMEM_TILE_BUDGET = 40 * 1024 * 1024   # target resident set when picking block sizes


def _sigmoid(v):
    # EUP-only sigmoid: a single tanh push, no VPU divide on the recurrent chain.
    return 0.5 * jnp.tanh(0.5 * v) + 0.5


# ----------------------------------------------------------------------------
# Fused bidirectional LSTM layer kernel
# ----------------------------------------------------------------------------
def _make_bilstm_kernel(n_in, t_blk, bb, hidden, unroll):
    """Builds the fused bi-LSTM layer kernel.

    Ref order:
      inputs : xs_f[n_in] (rows, Dk)       forward-ordered time block (rows = t_blk*bb)
               xs_r[n_in] (rows, Dk)       mirrored (reverse) time block (same arrays)
               ws_f[n_in], ws_r[n_in]      (Dk, 4H) bf16 input->gate weights
               b_f, b_r   (1, 4H) f32      combined biases (b_ih + b_hh)
               whh_f, whh_r (H, 4H) bf16   hidden->gate weights
      outputs: out_f, out_r (rows, H) bf16 hidden states, time-aligned with the input
      scratch: gf, gr (rows, 4H) f32       block input-gate pre-activations
               of, or (rows, H)  f32       staged per-block hidden outputs
               hf, cf, hr, cr (bb, H) f32  persistent recurrent state (per batch tile)

    Row layout is time-major within the block: row = local_t*bb + local_b, so every
    per-timestep access is a dense contiguous (bb, feat) slab.
    Gate order follows PyTorch: i, f, g, o.
    """
    H = hidden

    def kernel(*refs):
        xs_f = refs[0:n_in]
        xs_r = refs[n_in:2 * n_in]
        ws_f = refs[2 * n_in:3 * n_in]
        ws_r = refs[3 * n_in:4 * n_in]
        b_f_ref, b_r_ref, whh_f_ref, whh_r_ref = refs[4 * n_in:4 * n_in + 4]
        out_f_ref, out_r_ref = refs[4 * n_in + 4:4 * n_in + 6]
        (gf_scr, gr_scr, of_scr, or_scr,
         hf_scr, cf_scr, hr_scr, cr_scr) = refs[4 * n_in + 6:]

        # Each batch tile starts at time block 0 (time axis is the inner grid axis):
        # reset recurrent state there so it never carries across batch tiles.
        @pl.when(pl.program_id(1) == 0)
        def _():
            hf_scr[...] = jnp.zeros_like(hf_scr)
            cf_scr[...] = jnp.zeros_like(cf_scr)
            hr_scr[...] = jnp.zeros_like(hr_scr)
            cr_scr[...] = jnp.zeros_like(cr_scr)

        # Hoisted input->gate matmul for the whole time block (one big MXU matmul per
        # input per direction); staged in VMEM scratch — never round-trips through HBM.
        def block_gates(x_refs, w_refs, b_ref, g_scr):
            acc = b_ref[...]                                   # (1, 4H) f32, broadcasts
            for x_ref, w_ref in zip(x_refs, w_refs):
                acc = acc + jnp.dot(x_ref[...].astype(jnp.bfloat16), w_ref[...],
                                    preferred_element_type=jnp.float32)
            g_scr[...] = acc

        block_gates(xs_f, ws_f, b_f_ref, gf_scr)
        block_gates(xs_r, ws_r, b_r_ref, gr_scr)

        def cell(pre, h, c, whh_ref):
            gates = pre + jnp.dot(h.astype(jnp.bfloat16), whh_ref[...],
                                  preferred_element_type=jnp.float32)
            # NOTE: gate slices are lane-aligned whenever H % 128 == 0.
            i_g = _sigmoid(gates[:, 0 * H:1 * H])
            f_g = _sigmoid(gates[:, 1 * H:2 * H])
            g_g = jnp.tanh(gates[:, 2 * H:3 * H])
            o_g = _sigmoid(gates[:, 3 * H:4 * H])
            c_new = f_g * c + i_g * g_g
            h_new = o_g * jnp.tanh(c_new)
            return h_new, c_new

        def step(t, carry):
            h_f, c_f, h_r, c_r = carry
            # forward direction: local step t
            rf = pl.multiple_of(t * bb, bb)
            h_f, c_f = cell(gf_scr[pl.ds(rf, bb), :], h_f, c_f, whh_f_ref)
            of_scr[pl.ds(rf, bb), :] = h_f
            # reverse direction walks the (already mirrored) block backwards
            rr = pl.multiple_of((t_blk - 1 - t) * bb, bb)
            h_r, c_r = cell(gr_scr[pl.ds(rr, bb), :], h_r, c_r, whh_r_ref)
            or_scr[pl.ds(rr, bb), :] = h_r
            return h_f, c_f, h_r, c_r

        carry = (hf_scr[...], cf_scr[...], hr_scr[...], cr_scr[...])
        h_f, c_f, h_r, c_r = lax.fori_loop(0, t_blk, step, carry, unroll=unroll)
        hf_scr[...] = h_f
        cf_scr[...] = c_f
        hr_scr[...] = h_r
        cr_scr[...] = c_r

        # Single full-block, lane-dense writeback of the staged hidden states.
        out_f_ref[...] = of_scr[...].astype(out_f_ref.dtype)
        out_r_ref[...] = or_scr[...].astype(out_r_ref.dtype)

    return kernel


def bilstm_layer(xs, ws_f, ws_r, b_f, b_r, w_hh_f, w_hh_r, *, bb, tb):
    """One fused bidirectional LSTM layer.

    xs: list of input activation arrays, each (nbt, T*bb, Dk); the layer input is the
        virtual concatenation of them along features (concat folded into ws_f / ws_r).
    Returns (hf, hr): (nbt, T*bb, H) bf16 each, time-aligned with the input.
    """
    n_in = len(xs)
    nbt, n_rows, _ = xs[0].shape
    rows = tb * bb
    nt = n_rows // rows
    H = w_hh_f.shape[0]

    def fwd_map(bi, ti):
        return (bi, ti, 0)

    def rev_map(bi, ti):
        return (bi, nt - 1 - ti, 0)

    def const_map(bi, ti):
        return (0, 0)

    in_specs = (
        [pl.BlockSpec((None, rows, x.shape[2]), fwd_map) for x in xs]
        + [pl.BlockSpec((None, rows, x.shape[2]), rev_map) for x in xs]
        + [pl.BlockSpec(w.shape, const_map) for w in ws_f]
        + [pl.BlockSpec(w.shape, const_map) for w in ws_r]
        + [pl.BlockSpec(b_f.shape, const_map),
           pl.BlockSpec(b_r.shape, const_map),
           pl.BlockSpec(w_hh_f.shape, const_map),
           pl.BlockSpec(w_hh_r.shape, const_map)]
    )
    out_specs = (pl.BlockSpec((None, rows, H), fwd_map),
                 pl.BlockSpec((None, rows, H), rev_map))
    out_shape = (jax.ShapeDtypeStruct((nbt, n_rows, H), jnp.bfloat16),
                 jax.ShapeDtypeStruct((nbt, n_rows, H), jnp.bfloat16))

    unroll = next(u for u in (8, 4, 2, 1) if tb % u == 0)
    kernel = _make_bilstm_kernel(n_in, tb, bb, H, unroll)

    return pl.pallas_call(
        kernel,
        out_shape=out_shape,
        grid=(nbt, nt),
        in_specs=in_specs,
        out_specs=out_specs,
        scratch_shapes=[
            pltpu.VMEM((rows, 4 * H), jnp.float32),   # fwd gate pre-activations
            pltpu.VMEM((rows, 4 * H), jnp.float32),   # rev gate pre-activations
            pltpu.VMEM((rows, H), jnp.float32),       # staged fwd hidden outputs
            pltpu.VMEM((rows, H), jnp.float32),       # staged rev hidden outputs
            pltpu.VMEM((bb, H), jnp.float32),         # h fwd
            pltpu.VMEM((bb, H), jnp.float32),         # c fwd
            pltpu.VMEM((bb, H), jnp.float32),         # h rev
            pltpu.VMEM((bb, H), jnp.float32),         # c rev
        ],
        compiler_params=pltpu.CompilerParams(
            dimension_semantics=("parallel", "arbitrary"),   # batch || , time sequential
            vmem_limit_bytes=_VMEM_LIMIT_BYTES),
    )(*xs, *xs, *ws_f, *ws_r, b_f, b_r, w_hh_f, w_hh_r)


# ----------------------------------------------------------------------------
# Final dense (Linear) on the virtual concat [h_fwd | h_rev]
# ----------------------------------------------------------------------------
def _dense_kernel(xa_ref, xb_ref, wa_ref, wb_ref, b_ref, o_ref):
    o_ref[...] = (jnp.dot(xa_ref[...], wa_ref[...], preferred_element_type=jnp.float32)
                  + jnp.dot(xb_ref[...], wb_ref[...], preferred_element_type=jnp.float32)
                  + b_ref[...]).astype(o_ref.dtype)


def dense_layer(xa, xb, wa, wb, b):
    """Final Linear on the virtual concat [xa | xb]; output is lane-padded (vp % 128 == 0)."""
    nbt, n_rows, feat = xa.shape
    vp = wa.shape[1]
    rb = next((c for c in (512, 256, 128) if n_rows % c == 0), n_rows)
    x_spec = pl.BlockSpec((None, rb, feat), lambda bi, ri: (bi, ri, 0))
    return pl.pallas_call(
        _dense_kernel,
        out_shape=jax.ShapeDtypeStruct((nbt, n_rows, vp), jnp.float32),
        grid=(nbt, n_rows // rb),
        in_specs=[x_spec, x_spec,
                  pl.BlockSpec(wa.shape, lambda bi, ri: (0, 0)),
                  pl.BlockSpec(wb.shape, lambda bi, ri: (0, 0)),
                  pl.BlockSpec(b.shape, lambda bi, ri: (0, 0))],
        out_specs=pl.BlockSpec((None, rb, vp), lambda bi, ri: (bi, ri, 0)),
        compiler_params=pltpu.CompilerParams(
            dimension_semantics=("parallel", "parallel"),
            vmem_limit_bytes=_VMEM_LIMIT_BYTES),
    )(xa, xb, wa, wb, b)


# ----------------------------------------------------------------------------
# Tiling heuristics
# ----------------------------------------------------------------------------
def _pick_tiles(batch, seq, hidden, d_in):
    """Choose (num_batch_tiles, batch_tile, time_block).

    Batch tiles (>=8 rows each) shard across TensorCores via the "parallel" grid axis
    (v7x megacore) and bound the VMEM resident set; the time block is the largest
    divisor of seq whose estimated resident set fits the budget.
    """
    nbt = 1
    for cand in (4, 2):
        if batch % cand == 0 and (batch // cand) >= 8:
            nbt = cand
            break
    bb = batch // nbt

    def vmem_est(tb):
        rows = tb * bb
        acts = 2 * 2 * rows * (2 * d_in + 2 * hidden) * 2      # bf16 in/out, double buffered
        gates = 2 * rows * 4 * hidden * 4                       # f32 gate scratch
        stage = 2 * rows * hidden * 4                           # f32 output staging
        weights = 2 * 2 * (d_in + hidden) * 4 * hidden * 2
        state = 4 * bb * hidden * 4
        return acts + gates + stage + weights + state

    cands = [tb for tb in range(seq, 0, -1)
             if seq % tb == 0 and ((tb * bb) % 8 == 0 or tb == seq)]
    tb = cands[-1]
    for cand in cands:                       # descending: biggest block that fits
        if vmem_est(cand) <= _VMEM_TILE_BUDGET:
            tb = cand
            break
    return nbt, bb, tb


# ----------------------------------------------------------------------------
# Parameters & forward pass
# ----------------------------------------------------------------------------
def init_params(key, filter_size, vocab_size, hidden_size):
    """Deterministic init mirroring the PyTorch module's parameter shapes."""
    H = hidden_size
    k = 1.0 / jnp.sqrt(jnp.float32(H))
    params = {}
    ki = 0

    def u(key_idx, shape):
        return jax.random.uniform(
            jax.random.fold_in(key, key_idx), shape, jnp.float32, -k, k)

    for layer in range(2):
        in_size = filter_size if layer == 0 else 2 * H
        for direction in ("fwd", "rev"):
            w_ih = u(ki, (4 * H, in_size)); ki += 1   # PyTorch: (4H, in)
            w_hh = u(ki, (4 * H, H)); ki += 1         # PyTorch: (4H, H)
            b_ih = u(ki, (4 * H,)); ki += 1
            b_hh = u(ki, (4 * H,)); ki += 1
            w_ih_t = jnp.transpose(w_ih).astype(jnp.bfloat16)        # (in, 4H)
            entry = {
                "w_hh_t": jnp.transpose(w_hh).astype(jnp.bfloat16),  # (H, 4H)
                "b": (b_ih + b_hh).reshape(1, 4 * H),                # (1, 4H) f32
            }
            if layer == 0:
                entry["w_ih_t"] = w_ih_t
            else:
                # rows multiplying the fwd / rev halves of the (virtual) concat input
                entry["w_ih_t_from_f"] = w_ih_t[:H]
                entry["w_ih_t_from_r"] = w_ih_t[H:]
            params[f"l{layer}_{direction}"] = entry

    dense_w = u(ki, (vocab_size, 2 * H)); ki += 1     # PyTorch Linear: (V, 2H)
    dense_b = u(ki, (vocab_size,)); ki += 1
    dw_t = jnp.transpose(dense_w)                     # (2H, V)
    params["dense_w_t_from_f"] = dw_t[:H].astype(jnp.bfloat16)
    params["dense_w_t_from_r"] = dw_t[H:].astype(jnp.bfloat16)
    params["dense_b"] = dense_b.reshape(1, vocab_size)
    return params


def classifier_forward(x_bsd, params):
    """x_bsd: (batch, seq_len, filter_size) -> (batch * seq_len, vocab_size)."""
    B, T, D = x_bsd.shape
    H = params["l0_fwd"]["w_hh_t"].shape[0]
    V = params["dense_b"].shape[1]

    nbt, bb, tb = _pick_tiles(B, T, H, max(D, 2 * H))

    # (B, T, D) -> (nbt, T*bb, D): time-major rows (row = t*bb + local_b) per batch tile.
    x_in = jnp.transpose(x_bsd.reshape(nbt, bb, T, D), (0, 2, 1, 3)).reshape(nbt, T * bb, D)

    # ---- layer 0 ----
    p0f, p0r = params["l0_fwd"], params["l0_rev"]
    hf, hr = bilstm_layer([x_in], [p0f["w_ih_t"]], [p0r["w_ih_t"]],
                          p0f["b"], p0r["b"], p0f["w_hh_t"], p0r["w_hh_t"],
                          bb=bb, tb=tb)
    # inter-layer LSTM dropout (p=0.5): identity in eval mode

    # ---- layer 1 (input = virtual concat [hf | hr], folded into split weights) ----
    p1f, p1r = params["l1_fwd"], params["l1_rev"]
    hf, hr = bilstm_layer([hf, hr],
                          [p1f["w_ih_t_from_f"], p1f["w_ih_t_from_r"]],
                          [p1r["w_ih_t_from_f"], p1r["w_ih_t_from_r"]],
                          p1f["b"], p1r["b"], p1f["w_hh_t"], p1r["w_hh_t"],
                          bb=bb, tb=tb)

    # final nn.Dropout: identity in eval mode
    # Dense on the virtual concat; output lane-padded to a multiple of 128 (dense stores).
    vp = ((V + 127) // 128) * 128
    wa = jnp.pad(params["dense_w_t_from_f"], ((0, 0), (0, vp - V)))
    wb = jnp.pad(params["dense_w_t_from_r"], ((0, 0), (0, vp - V)))
    bd = jnp.pad(params["dense_b"], ((0, 0), (0, vp - V)))
    logits = dense_layer(hf, hr, wa, wb, bd)               # (nbt, T*bb, vp) f32

    # Back to PyTorch's (batch*seq, vocab) row order (b*T + t); drop lane padding.
    logits = jnp.transpose(logits.reshape(nbt, T, bb, vp), (0, 2, 1, 3))
    return logits.reshape(B, T, vp)[:, :, :V].reshape(B * T, V)


if __name__ == "__main__":
    filter_size = 16
    vocab_size = 10
    hidden_size = 32
    batch_size = 2
    seq_len = 8

    key = jax.random.PRNGKey(0)
    params = init_params(key, filter_size, vocab_size, hidden_size)

    x = jax.random.normal(
        jax.random.fold_in(key, 10_000),
        (batch_size, seq_len, filter_size),
        dtype=jnp.float32,
    )

    fwd = jax.jit(classifier_forward)
    out = jax.block_until_ready(fwd(x, params))
    assert out.shape == (batch_size * seq_len, vocab_size), out.shape
    assert bool(jnp.all(jnp.isfinite(out)))
    print("KERNEL_OK")
</pallas_src>

<mosaic_0001>
module attributes {stable_mosaic.version = 11 : i64} {
  func.func @kernel(%arg0: i32, %arg1: i32, %arg2: memref<1x16x32xbf16, #tpu.memory_space<vmem>>, %arg3: memref<1x16x32xbf16, #tpu.memory_space<vmem>>, %arg4: memref<1x16x32xbf16, #tpu.memory_space<vmem>>, %arg5: memref<1x16x32xbf16, #tpu.memory_space<vmem>>, %arg6: memref<32x128xbf16, #tpu.memory_space<vmem>>, %arg7: memref<32x128xbf16, #tpu.memory_space<vmem>>, %arg8: memref<32x128xbf16, #tpu.memory_space<vmem>>, %arg9: memref<32x128xbf16, #tpu.memory_space<vmem>>, %arg10: memref<1x128xf32, #tpu.memory_space<vmem>>, %arg11: memref<1x128xf32, #tpu.memory_space<vmem>>, %arg12: memref<32x128xbf16, #tpu.memory_space<vmem>>, %arg13: memref<32x128xbf16, #tpu.memory_space<vmem>>, %arg14: memref<1x16x32xbf16, #tpu.memory_space<vmem>>, %arg15: memref<1x16x32xbf16, #tpu.memory_space<vmem>>, %arg16: memref<16x128xf32, #tpu.memory_space<vmem>>, %arg17: memref<16x128xf32, #tpu.memory_space<vmem>>, %arg18: memref<16x32xf32, #tpu.memory_space<vmem>>, %arg19: memref<16x32xf32, #tpu.memory_space<vmem>>, %arg20: memref<2x32xf32, #tpu.memory_space<vmem>>, %arg21: memref<2x32xf32, #tpu.memory_space<vmem>>, %arg22: memref<2x32xf32, #tpu.memory_space<vmem>>, %arg23: memref<2x32xf32, #tpu.memory_space<vmem>>) attributes {dimension_semantics = [#tpu.dimension_semantics<parallel>, #tpu.dimension_semantics<arbitrary>], iteration_bounds = array<i64: 1, 1>, scalar_prefetch = 0 : i64, scratch_operands = 8 : i64, tpu.core_type = #tpu.core_type<tc>, window_params = [{transform_indices = @transform_0, window_bounds = array<i64: 1, 16, 32>}, {transform_indices = @transform_1, window_bounds = array<i64: 1, 16, 32>}, {transform_indices = @transform_2, window_bounds = array<i64: 1, 16, 32>}, {transform_indices = @transform_3, window_bounds = array<i64: 1, 16, 32>}, {pipeline_mode = #tpu.pipeline_mode<synchronous>, transform_indices = @transform_4, window_bounds = array<i64: 32, 128>}, {pipeline_mode = #tpu.pipeline_mode<synchronous>, transform_indices = @transform_5, window_bounds = array<i64: 32, 128>}, {pipeline_mode = #tpu.pipeline_mode<synchronous>, transform_indices = @transform_6, window_bounds = array<i64: 32, 128>}, {pipeline_mode = #tpu.pipeline_mode<synchronous>, transform_indices = @transform_7, window_bounds = array<i64: 32, 128>}, {pipeline_mode = #tpu.pipeline_mode<synchronous>, transform_indices = @transform_8, window_bounds = array<i64: 1, 128>}, {pipeline_mode = #tpu.pipeline_mode<synchronous>, transform_indices = @transform_9, window_bounds = array<i64: 1, 128>}, {pipeline_mode = #tpu.pipeline_mode<synchronous>, transform_indices = @transform_10, window_bounds = array<i64: 32, 128>}, {pipeline_mode = #tpu.pipeline_mode<synchronous>, transform_indices = @transform_11, window_bounds = array<i64: 32, 128>}, {transform_indices = @transform_12, window_bounds = array<i64: 1, 16, 32>}, {transform_indices = @transform_13, window_bounds = array<i64: 1, 16, 32>}]} {
    %c0_i32 = arith.constant 0 : i32
    %0 = arith.cmpi eq, %arg1, %c0_i32 : i32
    %1 = arith.extui %0 : i1 to i32
    %c0_i32_0 = arith.constant 0 : i32
    %2 = arith.cmpi ne, %1, %c0_i32_0 : i32
    scf.if %2 {
      %cst_306 = arith.constant 0.000000e+00 : f32
      %711 = vector.broadcast %cst_306 : f32 to vector<2x32xf32>
      %c0_307 = arith.constant 0 : index
      %c0_308 = arith.constant 0 : index
      %712 = vector.load %arg20[%c0_307, %c0_308] : memref<2x32xf32, #tpu.memory_space<vmem>>, vector<2x32xf32>
      tpu.vector_store %arg20[%c0_307, %c0_308], %711 {strides = array<i32>} : memref<2x32xf32, #tpu.memory_space<vmem>>, vector<2x32xf32>,
      %cst_309 = arith.constant 0.000000e+00 : f32
      %713 = vector.broadcast %cst_309 : f32 to vector<2x32xf32>
      %c0_310 = arith.constant 0 : index
      %c0_311 = arith.constant 0 : index
      %714 = vector.load %arg21[%c0_310, %c0_311] : memref<2x32xf32, #tpu.memory_space<vmem>>, vector<2x32xf32>
      tpu.vector_store %arg21[%c0_310, %c0_311], %713 {strides = array<i32>} : memref<2x32xf32, #tpu.memory_space<vmem>>, vector<2x32xf32>,
      %cst_312 = arith.constant 0.000000e+00 : f32
      %715 = vector.broadcast %cst_312 : f32 to vector<2x32xf32>
      %c0_313 = arith.constant 0 : index
      %c0_314 = arith.constant 0 : index
      %716 = vector.load %arg22[%c0_313, %c0_314] : memref<2x32xf32, #tpu.memory_space<vmem>>, vector<2x32xf32>
      tpu.vector_store %arg22[%c0_313, %c0_314], %715 {strides = array<i32>} : memref<2x32xf32, #tpu.memory_space<vmem>>, vector<2x32xf32>,
      %cst_315 = arith.constant 0.000000e+00 : f32
      %717 = vector.broadcast %cst_315 : f32 to vector<2x32xf32>
      %c0_316 = arith.constant 0 : index
      %c0_317 = arith.constant 0 : index
      %718 = vector.load %arg23[%c0_316, %c0_317] : memref<2x32xf32, #tpu.memory_space<vmem>>, vector<2x32xf32>
      tpu.vector_store %arg23[%c0_316, %c0_317], %717 {strides = array<i32>} : memref<2x32xf32, #tpu.memory_space<vmem>>, vector<2x32xf32>,
    } else {
    }
    %c0 = arith.constant 0 : index
    %c0_1 = arith.constant 0 : index
    %3 = vector.load %arg10[%c0, %c0_1] : memref<1x128xf32, #tpu.memory_space<vmem>>, vector<1x128xf32>
    %c0_2 = arith.constant 0 : index
    %c0_3 = arith.constant 0 : index
    %c0_4 = arith.constant 0 : index
    %4 = vector.load %arg2[%c0_2, %c0_3, %c0_4] : memref<1x16x32xbf16, #tpu.memory_space<vmem>>, vector<1x16x32xbf16>
    %5 = vector.shape_cast %4 : vector<1x16x32xbf16> to vector<16x32xbf16>
    %c0_5 = arith.constant 0 : index
    %c0_6 = arith.constant 0 : index
    %6 = vector.load %arg6[%c0_5, %c0_6] : memref<32x128xbf16, #tpu.memory_space<vmem>>, vector<32x128xbf16>
    %cst = arith.constant dense<0.000000e+00> : vector<16x128xf32>
    %7 = tpu.matmul %5, %6, %cst {dimension_numbers = #tpu.dot_dimension_numbers<[1], [0], [0], [1], [0, 0, 1, 1], [], []>} : vector<16x32xbf16>, vector<32x128xbf16>, vector<16x128xf32> -> vector<16x128xf32>
    %8 = vector.broadcast %3 : vector<1x128xf32> to vector<16x128xf32>
    %9 = arith.addf %8, %7 : vector<16x128xf32>
    %c0_7 = arith.constant 0 : index
    %c0_8 = arith.constant 0 : index
    %c0_9 = arith.constant 0 : index
    %10 = vector.load %arg3[%c0_7, %c0_8, %c0_9] : memref<1x16x32xbf16, #tpu.memory_space<vmem>>, vector<1x16x32xbf16>
    %11 = vector.shape_cast %10 : vector<1x16x32xbf16> to vector<16x32xbf16>
    %c0_10 = arith.constant 0 : index
    %c0_11 = arith.constant 0 : index
    %12 = vector.load %arg7[%c0_10, %c0_11] : memref<32x128xbf16, #tpu.memory_space<vmem>>, vector<32x128xbf16>
    %cst_12 = arith.constant dense<0.000000e+00> : vector<16x128xf32>
    %13 = tpu.matmul %11, %12, %cst_12 {dimension_numbers = #tpu.dot_dimension_numbers<[1], [0], [0], [1], [0, 0, 1, 1], [], []>} : vector<16x32xbf16>, vector<32x128xbf16>, vector<16x128xf32> -> vector<16x128xf32>
    %14 = arith.addf %9, %13 : vector<16x128xf32>
    %c0_13 = arith.constant 0 : index
    %c0_14 = arith.constant 0 : index
    %15 = vector.load %arg16[%c0_13, %c0_14] : memref<16x128xf32, #tpu.memory_space<vmem>>, vector<16x128xf32>
    tpu.vector_store %arg16[%c0_13, %c0_14], %14 {strides = array<i32>} : memref<16x128xf32, #tpu.memory_space<vmem>>, vector<16x128xf32>,
    %c0_15 = arith.constant 0 : index
    %c0_16 = arith.constant 0 : index
    %16 = vector.load %arg11[%c0_15, %c0_16] : memref<1x128xf32, #tpu.memory_space<vmem>>, vector<1x128xf32>
    %c0_17 = arith.constant 0 : index
    %c0_18 = arith.constant 0 : index
    %c0_19 = arith.constant 0 : index
    %17 = vector.load %arg4[%c0_17, %c0_18, %c0_19] : memref<1x16x32xbf16, #tpu.memory_space<vmem>>, vector<1x16x32xbf16>
    %18 = vector.shape_cast %17 : vector<1x16x32xbf16> to vector<16x32xbf16>
    %c0_20 = arith.constant 0 : index
    %c0_21 = arith.constant 0 : index
    %19 = vector.load %arg8[%c0_20, %c0_21] : memref<32x128xbf16, #tpu.memory_space<vmem>>, vector<32x128xbf16>
    %cst_22 = arith.constant dense<0.000000e+00> : vector<16x128xf32>
    %20 = tpu.matmul %18, %19, %cst_22 {dimension_numbers = #tpu.dot_dimension_numbers<[1], [0], [0], [1], [0, 0, 1, 1], [], []>} : vector<16x32xbf16>, vector<32x128xbf16>, vector<16x128xf32> -> vector<16x128xf32>
    %21 = vector.broadcast %16 : vector<1x128xf32> to vector<16x128xf32>
    %22 = arith.addf %21, %20 : vector<16x128xf32>
    %c0_23 = arith.constant 0 : index
    %c0_24 = arith.constant 0 : index
    %c0_25 = arith.constant 0 : index
    %23 = vector.load %arg5[%c0_23, %c0_24, %c0_25] : memref<1x16x32xbf16, #tpu.memory_space<vmem>>, vector<1x16x32xbf16>
    %24 = vector.shape_cast %23 : vector<1x16x32xbf16> to vector<16x32xbf16>
    %c0_26 = arith.constant 0 : index
    %c0_27 = arith.constant 0 : index
    %25 = vector.load %arg9[%c0_26, %c0_27] : memref<32x128xbf16, #tpu.memory_space<vmem>>, vector<32x128xbf16>
    %cst_28 = arith.constant dense<0.000000e+00> : vector<16x128xf32>
    %26 = tpu.matmul %24, %25, %cst_28 {dimension_numbers = #tpu.dot_dimension_numbers<[1], [0], [0], [1], [0, 0, 1, 1], [], []>} : vector<16x32xbf16>, vector<32x128xbf16>, vector<16x128xf32> -> vector<16x128xf32>
    %27 = arith.addf %22, %26 : vector<16x128xf32>
    %c0_29 = arith.constant 0 : index
    %c0_30 = arith.constant 0 : index
    %28 = vector.load %arg17[%c0_29, %c0_30] : memref<16x128xf32, #tpu.memory_space<vmem>>, vector<16x128xf32>
    tpu.vector_store %arg17[%c0_29, %c0_30], %27 {strides = array<i32>} : memref<16x128xf32, #tpu.memory_space<vmem>>, vector<16x128xf32>,
    %c0_31 = arith.constant 0 : index
    %c0_32 = arith.constant 0 : index
    %29 = vector.load %arg20[%c0_31, %c0_32] : memref<2x32xf32, #tpu.memory_space<vmem>>, vector<2x32xf32>
    %c0_33 = arith.constant 0 : index
    %c0_34 = arith.constant 0 : index
    %30 = vector.load %arg21[%c0_33, %c0_34] : memref<2x32xf32, #tpu.memory_space<vmem>>, vector<2x32xf32>
    %c0_35 = arith.constant 0 : index
    %c0_36 = arith.constant 0 : index
    %31 = vector.load %arg22[%c0_35, %c0_36] : memref<2x32xf32, #tpu.memory_space<vmem>>, vector<2x32xf32>
    %c0_37 = arith.constant 0 : index
    %c0_38 = arith.constant 0 : index
    %32 = vector.load %arg23[%c0_37, %c0_38] : memref<2x32xf32, #tpu.memory_space<vmem>>, vector<2x32xf32>
    %c0_i32_39 = arith.constant 0 : i32
    %c2_i32 = arith.constant 2 : i32
    %33 = arith.muli %c0_i32_39, %c2_i32 : i32
    %34 = tpu.assume_multiple %33, 2 : i32
    %35 = arith.index_cast %34 : i32 to index
    %c0_40 = arith.constant 0 : index
    %36 = vector.load %arg16[%35, %c0_40] : memref<16x128xf32, #tpu.memory_space<vmem>>, vector<2x128xf32>
    %37 = arith.truncf %29 : vector<2x32xf32> to vector<2x32xbf16>
    %c0_41 = arith.constant 0 : index
    %c0_42 = arith.constant 0 : index
    %38 = vector.load %arg12[%c0_41, %c0_42] : memref<32x128xbf16, #tpu.memory_space<vmem>>, vector<32x128xbf16>
    %cst_43 = arith.constant dense<0.000000e+00> : vector<2x128xf32>
    %39 = tpu.matmul %37, %38, %cst_43 {dimension_numbers = #tpu.dot_dimension_numbers<[1], [0], [0], [1], [0, 0, 1, 1], [], []>} : vector<2x32xbf16>, vector<32x128xbf16>, vector<2x128xf32> -> vector<2x128xf32>
    %40 = arith.addf %36, %39 : vector<2x128xf32>
    %41 = vector.extract_strided_slice %40 {offsets = [0, 0], sizes = [2, 32], strides = [1, 1]} : vector<2x128xf32> to vector<2x32xf32>
    %cst_44 = arith.constant 5.000000e-01 : f32
    %42 = vector.broadcast %cst_44 : f32 to vector<2x32xf32>
    %43 = arith.mulf %42, %41 : vector<2x32xf32>
    %44 = math.tanh %43 : vector<2x32xf32>
    %cst_45 = arith.constant 5.000000e-01 : f32
    %45 = vector.broadcast %cst_45 : f32 to vector<2x32xf32>
    %46 = arith.mulf %45, %44 : vector<2x32xf32>
    %cst_46 = arith.constant 5.000000e-01 : f32
    %47 = vector.broadcast %cst_46 : f32 to vector<2x32xf32>
    %48 = arith.addf %46, %47 : vector<2x32xf32>
    %49 = vector.extract_strided_slice %40 {offsets = [0, 32], sizes = [2, 32], strides = [1, 1]} : vector<2x128xf32> to vector<2x32xf32>
    %cst_47 = arith.constant 5.000000e-01 : f32
    %50 = vector.broadcast %cst_47 : f32 to vector<2x32xf32>
    %51 = arith.mulf %50, %49 : vector<2x32xf32>
    %52 = math.tanh %51 : vector<2x32xf32>
    %cst_48 = arith.constant 5.000000e-01 : f32
    %53 = vector.broadcast %cst_48 : f32 to vector<2x32xf32>
    %54 = arith.mulf %53, %52 : vector<2x32xf32>
    %cst_49 = arith.constant 5.000000e-01 : f32
    %55 = vector.broadcast %cst_49 : f32 to vector<2x32xf32>
    %56 = arith.addf %54, %55 : vector<2x32xf32>
    %57 = vector.extract_strided_slice %40 {offsets = [0, 64], sizes = [2, 32], strides = [1, 1]} : vector<2x128xf32> to vector<2x32xf32>
    %58 = math.tanh %57 : vector<2x32xf32>
    %59 = vector.extract_strided_slice %40 {offsets = [0, 96], sizes = [2, 32], strides = [1, 1]} : vector<2x128xf32> to vector<2x32xf32>
    %cst_50 = arith.constant 5.000000e-01 : f32
    %60 = vector.broadcast %cst_50 : f32 to vector<2x32xf32>
    %61 = arith.mulf %60, %59 : vector<2x32xf32>
    %62 = math.tanh %61 : vector<2x32xf32>
    %cst_51 = arith.constant 5.000000e-01 : f32
    %63 = vector.broadcast %cst_51 : f32 to vector<2x32xf32>
    %64 = arith.mulf %63, %62 : vector<2x32xf32>
    %cst_52 = arith.constant 5.000000e-01 : f32
    %65 = vector.broadcast %cst_52 : f32 to vector<2x32xf32>
    %66 = arith.addf %64, %65 : vector<2x32xf32>
    %67 = arith.mulf %56, %30 : vector<2x32xf32>
    %68 = arith.mulf %48, %58 : vector<2x32xf32>
    %69 = arith.addf %67, %68 : vector<2x32xf32>
    %70 = math.tanh %69 : vector<2x32xf32>
    %71 = arith.mulf %66, %70 : vector<2x32xf32>
    %72 = arith.index_cast %34 : i32 to index
    %c0_53 = arith.constant 0 : index
    %73 = vector.load %arg18[%72, %c0_53] : memref<16x32xf32, #tpu.memory_space<vmem>>, vector<2x32xf32>
    tpu.vector_store %arg18[%72, %c0_53], %71 {strides = array<i32>} : memref<16x32xf32, #tpu.memory_space<vmem>>, vector<2x32xf32>,
    %c7_i32 = arith.constant 7 : i32
    %74 = arith.subi %c7_i32, %c0_i32_39 : i32
    %c2_i32_54 = arith.constant 2 : i32
    %75 = arith.muli %74, %c2_i32_54 : i32
    %76 = tpu.assume_multiple %75, 2 : i32
    %77 = arith.index_cast %76 : i32 to index
    %c0_55 = arith.constant 0 : index
    %78 = vector.load %arg17[%77, %c0_55] : memref<16x128xf32, #tpu.memory_space<vmem>>, vector<2x128xf32>
    %79 = arith.truncf %31 : vector<2x32xf32> to vector<2x32xbf16>
    %c0_56 = arith.constant 0 : index
    %c0_57 = arith.constant 0 : index
    %80 = vector.load %arg13[%c0_56, %c0_57] : memref<32x128xbf16, #tpu.memory_space<vmem>>, vector<32x128xbf16>
    %cst_58 = arith.constant dense<0.000000e+00> : vector<2x128xf32>
    %81 = tpu.matmul %79, %80, %cst_58 {dimension_numbers = #tpu.dot_dimension_numbers<[1], [0], [0], [1], [0, 0, 1, 1], [], []>} : vector<2x32xbf16>, vector<32x128xbf16>, vector<2x128xf32> -> vector<2x128xf32>
    %82 = arith.addf %78, %81 : vector<2x128xf32>
    %83 = vector.extract_strided_slice %82 {offsets = [0, 0], sizes = [2, 32], strides = [1, 1]} : vector<2x128xf32> to vector<2x32xf32>
    %cst_59 = arith.constant 5.000000e-01 : f32
    %84 = vector.broadcast %cst_59 : f32 to vector<2x32xf32>
    %85 = arith.mulf %84, %83 : vector<2x32xf32>
    %86 = math.tanh %85 : vector<2x32xf32>
    %cst_60 = arith.constant 5.000000e-01 : f32
    %87 = vector.broadcast %cst_60 : f32 to vector<2x32xf32>
    %88 = arith.mulf %87, %86 : vector<2x32xf32>
    %cst_61 = arith.constant 5.000000e-01 : f32
    %89 = vector.broadcast %cst_61 : f32 to vector<2x32xf32>
    %90 = arith.addf %88, %89 : vector<2x32xf32>
    %91 = vector.extract_strided_slice %82 {offsets = [0, 32], sizes = [2, 32], strides = [1, 1]} : vector<2x128xf32> to vector<2x32xf32>
    %cst_62 = arith.constant 5.000000e-01 : f32
    %92 = vector.broadcast %cst_62 : f32 to vector<2x32xf32>
    %93 = arith.mulf %92, %91 : vector<2x32xf32>
    %94 = math.tanh %93 : vector<2x32xf32>
    %cst_63 = arith.constant 5.000000e-01 : f32
    %95 = vector.broadcast %cst_63 : f32 to vector<2x32xf32>
    %96 = arith.mulf %95, %94 : vector<2x32xf32>
    %cst_64 = arith.constant 5.000000e-01 : f32
    %97 = vector.broadcast %cst_64 : f32 to vector<2x32xf32>
    %98 = arith.addf %96, %97 : vector<2x32xf32>
    %99 = vector.extract_strided_slice %82 {offsets = [0, 64], sizes = [2, 32], strides = [1, 1]} : vector<2x128xf32> to vector<2x32xf32>
    %100 = math.tanh %99 : vector<2x32xf32>
    %101 = vector.extract_strided_slice %82 {offsets = [0, 96], sizes = [2, 32], strides = [1, 1]} : vector<2x128xf32> to vector<2x32xf32>
    %cst_65 = arith.constant 5.000000e-01 : f32
    %102 = vector.broadcast %cst_65 : f32 to vector<2x32xf32>
    %103 = arith.mulf %102, %101 : vector<2x32xf32>
    %104 = math.tanh %103 : vector<2x32xf32>
    %cst_66 = arith.constant 5.000000e-01 : f32
    %105 = vector.broadcast %cst_66 : f32 to vector<2x32xf32>
    %106 = arith.mulf %105, %104 : vector<2x32xf32>
    %cst_67 = arith.constant 5.000000e-01 : f32
    %107 = vector.broadcast %cst_67 : f32 to vector<2x32xf32>
    %108 = arith.addf %106, %107 : vector<2x32xf32>
    %109 = arith.mulf %98, %32 : vector<2x32xf32>
    %110 = arith.mulf %90, %100 : vector<2x32xf32>
    %111 = arith.addf %109, %110 : vector<2x32xf32>
    %112 = math.tanh %111 : vector<2x32xf32>
    %113 = arith.mulf %108, %112 : vector<2x32xf32>
    %114 = arith.index_cast %76 : i32 to index
    %c0_68 = arith.constant 0 : index
    %115 = vector.load %arg19[%114, %c0_68] : memref<16x32xf32, #tpu.memory_space<vmem>>, vector<2x32xf32>
    tpu.vector_store %arg19[%114, %c0_68], %113 {strides = array<i32>} : memref<16x32xf32, #tpu.memory_space<vmem>>, vector<2x32xf32>,
    %c1_i32 = arith.constant 1 : i32
    %c2_i32_69 = arith.constant 2 : i32
    %116 = arith.muli %c1_i32, %c2_i32_69 : i32
    %117 = tpu.assume_multiple %116, 2 : i32
    %118 = arith.index_cast %117 : i32 to index
    %c0_70 = arith.constant 0 : index
    %119 = vector.load %arg16[%118, %c0_70] : memref<16x128xf32, #tpu.memory_space<vmem>>, vector<2x128xf32>
    %120 = arith.truncf %71 : vector<2x32xf32> to vector<2x32xbf16>
    %c0_71 = arith.constant 0 : index
    %c0_72 = arith.constant 0 : index
    %121 = vector.load %arg12[%c0_71, %c0_72] : memref<32x128xbf16, #tpu.memory_space<vmem>>, vector<32x128xbf16>
    %cst_73 = arith.constant dense<0.000000e+00> : vector<2x128xf32>
    %122 = tpu.matmul %120, %121, %cst_73 {dimension_numbers = #tpu.dot_dimension_numbers<[1], [0], [0], [1], [0, 0, 1, 1], [], []>} : vector<2x32xbf16>, vector<32x128xbf16>, vector<2x128xf32> -> vector<2x128xf32>
    %123 = arith.addf %119, %122 : vector<2x128xf32>
    %124 = vector.extract_strided_slice %123 {offsets = [0, 0], sizes = [2, 32], strides = [1, 1]} : vector<2x128xf32> to vector<2x32xf32>
    %cst_74 = arith.constant 5.000000e-01 : f32
    %125 = vector.broadcast %cst_74 : f32 to vector<2x32xf32>
    %126 = arith.mulf %125, %124 : vector<2x32xf32>
    %127 = math.tanh %126 : vector<2x32xf32>
    %cst_75 = arith.constant 5.000000e-01 : f32
    %128 = vector.broadcast %cst_75 : f32 to vector<2x32xf32>
    %129 = arith.mulf %128, %127 : vector<2x32xf32>
    %cst_76 = arith.constant 5.000000e-01 : f32
    %130 = vector.broadcast %cst_76 : f32 to vector<2x32xf32>
    %131 = arith.addf %129, %130 : vector<2x32xf32>
    %132 = vector.extract_strided_slice %123 {offsets = [0, 32], sizes = [2, 32], strides = [1, 1]} : vector<2x128xf32> to vector<2x32xf32>
    %cst_77 = arith.constant 5.000000e-01 : f32
    %133 = vector.broadcast %cst_77 : f32 to vector<2x32xf32>
    %134 = arith.mulf %133, %132 : vector<2x32xf32>
    %135 = math.tanh %134 : vector<2x32xf32>
    %cst_78 = arith.constant 5.000000e-01 : f32
    %136 = vector.broadcast %cst_78 : f32 to vector<2x32xf32>
    %137 = arith.mulf %136, %135 : vector<2x32xf32>
    %cst_79 = arith.constant 5.000000e-01 : f32
    %138 = vector.broadcast %cst_79 : f32 to vector<2x32xf32>
    %139 = arith.addf %137, %138 : vector<2x32xf32>
    %140 = vector.extract_strided_slice %123 {offsets = [0, 64], sizes = [2, 32], strides = [1, 1]} : vector<2x128xf32> to vector<2x32xf32>
    %141 = math.tanh %140 : vector<2x32xf32>
    %142 = vector.extract_strided_slice %123 {offsets = [0, 96], sizes = [2, 32], strides = [1, 1]} : vector<2x128xf32> to vector<2x32xf32>
    %cst_80 = arith.constant 5.000000e-01 : f32
    %143 = vector.broadcast %cst_80 : f32 to vector<2x32xf32>
    %144 = arith.mulf %143, %142 : vector<2x32xf32>
    %145 = math.tanh %144 : vector<2x32xf32>
    %cst_81 = arith.constant 5.000000e-01 : f32
    %146 = vector.broadcast %cst_81 : f32 to vector<2x32xf32>
    %147 = arith.mulf %146, %145 : vector<2x32xf32>
    %cst_82 = arith.constant 5.000000e-01 : f32
    %148 = vector.broadcast %cst_82 : f32 to vector<2x32xf32>
    %149 = arith.addf %147, %148 : vector<2x32xf32>
    %150 = arith.mulf %139, %69 : vector<2x32xf32>
    %151 = arith.mulf %131, %141 : vector<2x32xf32>
    %152 = arith.addf %150, %151 : vector<2x32xf32>
    %153 = math.tanh %152 : vector<2x32xf32>
    %154 = arith.mulf %149, %153 : vector<2x32xf32>
    %155 = arith.index_cast %117 : i32 to index
    %c0_83 = arith.constant 0 : index
    %156 = vector.load %arg18[%155, %c0_83] : memref<16x32xf32, #tpu.memory_space<vmem>>, vector<2x32xf32>
    tpu.vector_store %arg18[%155, %c0_83], %154 {strides = array<i32>} : memref<16x32xf32, #tpu.memory_space<vmem>>, vector<2x32xf32>,
    %c7_i32_84 = arith.constant 7 : i32
    %157 = arith.subi %c7_i32_84, %c1_i32 : i32
    %c2_i32_85 = arith.constant 2 : i32
    %158 = arith.muli %157, %c2_i32_85 : i32
    %159 = tpu.assume_multiple %158, 2 : i32
    %160 = arith.index_cast %159 : i32 to index
    %c0_86 = arith.constant 0 : index
    %161 = vector.load %arg17[%160, %c0_86] : memref<16x128xf32, #tpu.memory_space<vmem>>, vector<2x128xf32>
    %162 = arith.truncf %113 : vector<2x32xf32> to vector<2x32xbf16>
    %c0_87 = arith.constant 0 : index
    %c0_88 = arith.constant 0 : index
    %163 = vector.load %arg13[%c0_87, %c0_88] : memref<32x128xbf16, #tpu.memory_space<vmem>>, vector<32x128xbf16>
    %cst_89 = arith.constant dense<0.000000e+00> : vector<2x128xf32>
    %164 = tpu.matmul %162, %163, %cst_89 {dimension_numbers = #tpu.dot_dimension_numbers<[1], [0], [0], [1], [0, 0, 1, 1], [], []>} : vector<2x32xbf16>, vector<32x128xbf16>, vector<2x128xf32> -> vector<2x128xf32>
    %165 = arith.addf %161, %164 : vector<2x128xf32>
    %166 = vector.extract_strided_slice %165 {offsets = [0, 0], sizes = [2, 32], strides = [1, 1]} : vector<2x128xf32> to vector<2x32xf32>
    %cst_90 = arith.constant 5.000000e-01 : f32
    %167 = vector.broadcast %cst_90 : f32 to vector<2x32xf32>
    %168 = arith.mulf %167, %166 : vector<2x32xf32>
    %169 = math.tanh %168 : vector<2x32xf32>
    %cst_91 = arith.constant 5.000000e-01 : f32
    %170 = vector.broadcast %cst_91 : f32 to vector<2x32xf32>
    %171 = arith.mulf %170, %169 : vector<2x32xf32>
    %cst_92 = arith.constant 5.000000e-01 : f32
    %172 = vector.broadcast %cst_92 : f32 to vector<2x32xf32>
    %173 = arith.addf %171, %172 : vector<2x32xf32>
    %174 = vector.extract_strided_slice %165 {offsets = [0, 32], sizes = [2, 32], strides = [1, 1]} : vector<2x128xf32> to vector<2x32xf32>
    %cst_93 = arith.constant 5.000000e-01 : f32
    %175 = vector.broadcast %cst_93 : f32 to vector<2x32xf32>
    %176 = arith.mulf %175, %174 : vector<2x32xf32>
    %177 = math.tanh %176 : vector<2x32xf32>
    %cst_94 = arith.constant 5.000000e-01 : f32
    %178 = vector.broadcast %cst_94 : f32 to vector<2x32xf32>
    %179 = arith.mulf %178, %177 : vector<2x32xf32>
    %cst_95 = arith.constant 5.000000e-01 : f32
    %180 = vector.broadcast %cst_95 : f32 to vector<2x32xf32>
    %181 = arith.addf %179, %180 : vector<2x32xf32>
    %182 = vector.extract_strided_slice %165 {offsets = [0, 64], sizes = [2, 32], strides = [1, 1]} : vector<2x128xf32> to vector<2x32xf32>
    %183 = math.tanh %182 : vector<2x32xf32>
    %184 = vector.extract_strided_slice %165 {offsets = [0, 96], sizes = [2, 32], strides = [1, 1]} : vector<2x128xf32> to vector<2x32xf32>
    %cst_96 = arith.constant 5.000000e-01 : f32
    %185 = vector.broadcast %cst_96 : f32 to vector<2x32xf32>
    %186 = arith.mulf %185, %184 : vector<2x32xf32>
    %187 = math.tanh %186 : vector<2x32xf32>
    %cst_97 = arith.constant 5.000000e-01 : f32
    %188 = vector.broadcast %cst_97 : f32 to vector<2x32xf32>
    %189 = arith.mulf %188, %187 : vector<2x32xf32>
    %cst_98 = arith.constant 5.000000e-01 : f32
    %190 = vector.broadcast %cst_98 : f32 to vector<2x32xf32>
    %191 = arith.addf %189, %190 : vector<2x32xf32>
    %192 = arith.mulf %181, %111 : vector<2x32xf32>
    %193 = arith.mulf %173, %183 : vector<2x32xf32>
    %194 = arith.addf %192, %193 : vector<2x32xf32>
    %195 = math.tanh %194 : vector<2x32xf32>
    %196 = arith.mulf %191, %195 : vector<2x32xf32>
    %197 = arith.index_cast %159 : i32 to index
    %c0_99 = arith.constant 0 : index
    %198 = vector.load %arg19[%197, %c0_99] : memref<16x32xf32, #tpu.memory_space<vmem>>, vector<2x32xf32>
    tpu.vector_store %arg19[%197, %c0_99], %196 {strides = array<i32>} : memref<16x32xf32, #tpu.memory_space<vmem>>, vector<2x32xf32>,
    %c2_i32_100 = arith.constant 2 : i32
    %c2_i32_101 = arith.constant 2 : i32
    %199 = arith.muli %c2_i32_100, %c2_i32_101 : i32
    %200 = tpu.assume_multiple %199, 2 : i32
    %201 = arith.index_cast %200 : i32 to index
    %c0_102 = arith.constant 0 : index
    %202 = vector.load %arg16[%201, %c0_102] : memref<16x128xf32, #tpu.memory_space<vmem>>, vector<2x128xf32>
    %203 = arith.truncf %154 : vector<2x32xf32> to vector<2x32xbf16>
    %c0_103 = arith.constant 0 : index
    %c0_104 = arith.constant 0 : index
    %204 = vector.load %arg12[%c0_103, %c0_104] : memref<32x128xbf16, #tpu.memory_space<vmem>>, vector<32x128xbf16>
    %cst_105 = arith.constant dense<0.000000e+00> : vector<2x128xf32>
    %205 = tpu.matmul %203, %204, %cst_105 {dimension_numbers = #tpu.dot_dimension_numbers<[1], [0], [0], [1], [0, 0, 1, 1], [], []>} : vector<2x32xbf16>, vector<32x128xbf16>, vector<2x128xf32> -> vector<2x128xf32>
    %206 = arith.addf %202, %205 : vector<2x128xf32>
    %207 = vector.extract_strided_slice %206 {offsets = [0, 0], sizes = [2, 32], strides = [1, 1]} : vector<2x128xf32> to vector<2x32xf32>
    %cst_106 = arith.constant 5.000000e-01 : f32
    %208 = vector.broadcast %cst_106 : f32 to vector<2x32xf32>
    %209 = arith.mulf %208, %207 : vector<2x32xf32>
    %210 = math.tanh %209 : vector<2x32xf32>
    %cst_107 = arith.constant 5.000000e-01 : f32
    %211 = vector.broadcast %cst_107 : f32 to vector<2x32xf32>
    %212 = arith.mulf %211, %210 : vector<2x32xf32>
    %cst_108 = arith.constant 5.000000e-01 : f32
    %213 = vector.broadcast %cst_108 : f32 to vector<2x32xf32>
    %214 = arith.addf %212, %213 : vector<2x32xf32>
    %215 = vector.extract_strided_slice %206 {offsets = [0, 32], sizes = [2, 32], strides = [1, 1]} : vector<2x128xf32> to vector<2x32xf32>
    %cst_109 = arith.constant 5.000000e-01 : f32
    %216 = vector.broadcast %cst_109 : f32 to vector<2x32xf32>
    %217 = arith.mulf %216, %215 : vector<2x32xf32>
    %218 = math.tanh %217 : vector<2x32xf32>
    %cst_110 = arith.constant 5.000000e-01 : f32
    %219 = vector.broadcast %cst_110 : f32 to vector<2x32xf32>
    %220 = arith.mulf %219, %218 : vector<2x32xf32>
    %cst_111 = arith.constant 5.000000e-01 : f32
    %221 = vector.broadcast %cst_111 : f32 to vector<2x32xf32>
    %222 = arith.addf %220, %221 : vector<2x32xf32>
    %223 = vector.extract_strided_slice %206 {offsets = [0, 64], sizes = [2, 32], strides = [1, 1]} : vector<2x128xf32> to vector<2x32xf32>
    %224 = math.tanh %223 : vector<2x32xf32>
    %225 = vector.extract_strided_slice %206 {offsets = [0, 96], sizes = [2, 32], strides = [1, 1]} : vector<2x128xf32> to vector<2x32xf32>
    %cst_112 = arith.constant 5.000000e-01 : f32
    %226 = vector.broadcast %cst_112 : f32 to vector<2x32xf32>
    %227 = arith.mulf %226, %225 : vector<2x32xf32>
    %228 = math.tanh %227 : vector<2x32xf32>
    %cst_113 = arith.constant 5.000000e-01 : f32
    %229 = vector.broadcast %cst_113 : f32 to vector<2x32xf32>
    %230 = arith.mulf %229, %228 : vector<2x32xf32>
    %cst_114 = arith.constant 5.000000e-01 : f32
    %231 = vector.broadcast %cst_114 : f32 to vector<2x32xf32>
    %232 = arith.addf %230, %231 : vector<2x32xf32>
    %233 = arith.mulf %222, %152 : vector<2x32xf32>
    %234 = arith.mulf %214, %224 : vector<2x32xf32>
    %235 = arith.addf %233, %234 : vector<2x32xf32>
    %236 = math.tanh %235 : vector<2x32xf32>
    %237 = arith.mulf %232, %236 : vector<2x32xf32>
    %238 = arith.index_cast %200 : i32 to index
    %c0_115 = arith.constant 0 : index
    %239 = vector.load %arg18[%238, %c0_115] : memref<16x32xf32, #tpu.memory_space<vmem>>, vector<2x32xf32>
    tpu.vector_store %arg18[%238, %c0_115], %237 {strides = array<i32>} : memref<16x32xf32, #tpu.memory_space<vmem>>, vector<2x32xf32>,
    %c7_i32_116 = arith.constant 7 : i32
    %240 = arith.subi %c7_i32_116, %c2_i32_100 : i32
    %c2_i32_117 = arith.constant 2 : i32
    %241 = arith.muli %240, %c2_i32_117 : i32
    %242 = tpu.assume_multiple %241, 2 : i32
    %243 = arith.index_cast %242 : i32 to index
    %c0_118 = arith.constant 0 : index
    %244 = vector.load %arg17[%243, %c0_118] : memref<16x128xf32, #tpu.memory_space<vmem>>, vector<2x128xf32>
    %245 = arith.truncf %196 : vector<2x32xf32> to vector<2x32xbf16>
    %c0_119 = arith.constant 0 : index
    %c0_120 = arith.constant 0 : index
    %246 = vector.load %arg13[%c0_119, %c0_120] : memref<32x128xbf16, #tpu.memory_space<vmem>>, vector<32x128xbf16>
    %cst_121 = arith.constant dense<0.000000e+00> : vector<2x128xf32>
    %247 = tpu.matmul %245, %246, %cst_121 {dimension_numbers = #tpu.dot_dimension_numbers<[1], [0], [0], [1], [0, 0, 1, 1], [], []>} : vector<2x32xbf16>, vector<32x128xbf16>, vector<2x128xf32> -> vector<2x128xf32>
    %248 = arith.addf %244, %247 : vector<2x128xf32>
    %249 = vector.extract_strided_slice %248 {offsets = [0, 0], sizes = [2, 32], strides = [1, 1]} : vector<2x128xf32> to vector<2x32xf32>
    %cst_122 = arith.constant 5.000000e-01 : f32
    %250 = vector.broadcast %cst_122 : f32 to vector<2x32xf32>
    %251 = arith.mulf %250, %249 : vector<2x32xf32>
    %252 = math.tanh %251 : vector<2x32xf32>
    %cst_123 = arith.constant 5.000000e-01 : f32
    %253 = vector.broadcast %cst_123 : f32 to vector<2x32xf32>
    %254 = arith.mulf %253, %252 : vector<2x32xf32>
    %cst_124 = arith.constant 5.000000e-01 : f32
    %255 = vector.broadcast %cst_124 : f32 to vector<2x32xf32>
    %256 = arith.addf %254, %255 : vector<2x32xf32>
    %257 = vector.extract_strided_slice %248 {offsets = [0, 32], sizes = [2, 32], strides = [1, 1]} : vector<2x128xf32> to vector<2x32xf32>
    %cst_125 = arith.constant 5.000000e-01 : f32
    %258 = vector.broadcast %cst_125 : f32 to vector<2x32xf32>
    %259 = arith.mulf %258, %257 : vector<2x32xf32>
    %260 = math.tanh %259 : vector<2x32xf32>
    %cst_126 = arith.constant 5.000000e-01 : f32
    %261 = vector.broadcast %cst_126 : f32 to vector<2x32xf32>
    %262 = arith.mulf %261, %260 : vector<2x32xf32>
    %cst_127 = arith.constant 5.000000e-01 : f32
    %263 = vector.broadcast %cst_127 : f32 to vector<2x32xf32>
    %264 = arith.addf %262, %263 : vector<2x32xf32>
    %265 = vector.extract_strided_slice %248 {offsets = [0, 64], sizes = [2, 32], strides = [1, 1]} : vector<2x128xf32> to vector<2x32xf32>
    %266 = math.tanh %265 : vector<2x32xf32>
    %267 = vector.extract_strided_slice %248 {offsets = [0, 96], sizes = [2, 32], strides = [1, 1]} : vector<2x128xf32> to vector<2x32xf32>
    %cst_128 = arith.constant 5.000000e-01 : f32
    %268 = vector.broadcast %cst_128 : f32 to vector<2x32xf32>
    %269 = arith.mulf %268, %267 : vector<2x32xf32>
    %270 = math.tanh %269 : vector<2x32xf32>
    %cst_129 = arith.constant 5.000000e-01 : f32
    %271 = vector.broadcast %cst_129 : f32 to vector<2x32xf32>
    %272 = arith.mulf %271, %270 : vector<2x32xf32>
    %cst_130 = arith.constant 5.000000e-01 : f32
    %273 = vector.broadcast %cst_130 : f32 to vector<2x32xf32>
    %274 = arith.addf %272, %273 : vector<2x32xf32>
    %275 = arith.mulf %264, %194 : vector<2x32xf32>
    %276 = arith.mulf %256, %266 : vector<2x32xf32>
    %277 = arith.addf %275, %276 : vector<2x32xf32>
    %278 = math.tanh %277 : vector<2x32xf32>
    %279 = arith.mulf %274, %278 : vector<2x32xf32>
    %280 = arith.index_cast %242 : i32 to index
    %c0_131 = arith.constant 0 : index
    %281 = vector.load %arg19[%280, %c0_131] : memref<16x32xf32, #tpu.memory_space<vmem>>, vector<2x32xf32>
    tpu.vector_store %arg19[%280, %c0_131], %279 {strides = array<i32>} : memref<16x32xf32, #tpu.memory_space<vmem>>, vector<2x32xf32>,
    %c3_i32 = arith.constant 3 : i32
    %c2_i32_132 = arith.constant 2 : i32
    %282 = arith.muli %c3_i32, %c2_i32_132 : i32
    %283 = tpu.assume_multiple %282, 2 : i32
    %284 = arith.index_cast %283 : i32 to index
    %c0_133 = arith.constant 0 : index
    %285 = vector.load %arg16[%284, %c0_133] : memref<16x128xf32, #tpu.memory_space<vmem>>, vector<2x128xf32>
    %286 = arith.truncf %237 : vector<2x32xf32> to vector<2x32xbf16>
    %c0_134 = arith.constant 0 : index
    %c0_135 = arith.constant 0 : index
    %287 = vector.load %arg12[%c0_134, %c0_135] : memref<32x128xbf16, #tpu.memory_space<vmem>>, vector<32x128xbf16>
    %cst_136 = arith.constant dense<0.000000e+00> : vector<2x128xf32>
    %288 = tpu.matmul %286, %287, %cst_136 {dimension_numbers = #tpu.dot_dimension_numbers<[1], [0], [0], [1], [0, 0, 1, 1], [], []>} : vector<2x32xbf16>, vector<32x128xbf16>, vector<2x128xf32> -> vector<2x128xf32>
    %289 = arith.addf %285, %288 : vector<2x128xf32>
    %290 = vector.extract_strided_slice %289 {offsets = [0, 0], sizes = [2, 32], strides = [1, 1]} : vector<2x128xf32> to vector<2x32xf32>
    %cst_137 = arith.constant 5.000000e-01 : f32
    %291 = vector.broadcast %cst_137 : f32 to vector<2x32xf32>
    %292 = arith.mulf %291, %290 : vector<2x32xf32>
    %293 = math.tanh %292 : vector<2x32xf32>
    %cst_138 = arith.constant 5.000000e-01 : f32
    %294 = vector.broadcast %cst_138 : f32 to vector<2x32xf32>
    %295 = arith.mulf %294, %293 : vector<2x32xf32>
    %cst_139 = arith.constant 5.000000e-01 : f32
    %296 = vector.broadcast %cst_139 : f32 to vector<2x32xf32>
    %297 = arith.addf %295, %296 : vector<2x32xf32>
    %298 = vector.extract_strided_slice %289 {offsets = [0, 32], sizes = [2, 32], strides = [1, 1]} : vector<2x128xf32> to vector<2x32xf32>
    %cst_140 = arith.constant 5.000000e-01 : f32
    %299 = vector.broadcast %cst_140 : f32 to vector<2x32xf32>
    %300 = arith.mulf %299, %298 : vector<2x32xf32>
    %301 = math.tanh %300 : vector<2x32xf32>
    %cst_141 = arith.constant 5.000000e-01 : f32
    %302 = vector.broadcast %cst_141 : f32 to vector<2x32xf32>
    %303 = arith.mulf %302, %301 : vector<2x32xf32>
    %cst_142 = arith.constant 5.000000e-01 : f32
    %304 = vector.broadcast %cst_142 : f32 to vector<2x32xf32>
    %305 = arith.addf %303, %304 : vector<2x32xf32>
    %306 = vector.extract_strided_slice %289 {offsets = [0, 64], sizes = [2, 32], strides = [1, 1]} : vector<2x128xf32> to vector<2x32xf32>
    %307 = math.tanh %306 : vector<2x32xf32>
    %308 = vector.extract_strided_slice %289 {offsets = [0, 96], sizes = [2, 32], strides = [1, 1]} : vector<2x128xf32> to vector<2x32xf32>
    %cst_143 = arith.constant 5.000000e-01 : f32
    %309 = vector.broadcast %cst_143 : f32 to vector<2x32xf32>
    %310 = arith.mulf %309, %308 : vector<2x32xf32>
    %311 = math.tanh %310 : vector<2x32xf32>
    %cst_144 = arith.constant 5.000000e-01 : f32
    %312 = vector.broadcast %cst_144 : f32 to vector<2x32xf32>
    %313 = arith.mulf %312, %311 : vector<2x32xf32>
    %cst_145 = arith.constant 5.000000e-01 : f32
    %314 = vector.broadcast %cst_145 : f32 to vector<2x32xf32>
    %315 = arith.addf %313, %314 : vector<2x32xf32>
    %316 = arith.mulf %305, %235 : vector<2x32xf32>
    %317 = arith.mulf %297, %307 : vector<2x32xf32>
    %318 = arith.addf %316, %317 : vector<2x32xf32>
    %319 = math.tanh %318 : vector<2x32xf32>
    %320 = arith.mulf %315, %319 : vector<2x32xf32>
    %321 = arith.index_cast %283 : i32 to index
    %c0_146 = arith.constant 0 : index
    %322 = vector.load %arg18[%321, %c0_146] : memref<16x32xf32, #tpu.memory_space<vmem>>, vector<2x32xf32>
    tpu.vector_store %arg18[%321, %c0_146], %320 {strides = array<i32>} : memref<16x32xf32, #tpu.memory_space<vmem>>, vector<2x32xf32>,
    %c7_i32_147 = arith.constant 7 : i32
    %323 = arith.subi %c7_i32_147, %c3_i32 : i32
    %c2_i32_148 = arith.constant 2 : i32
    %324 = arith.muli %323, %c2_i32_148 : i32
    %325 = tpu.assume_multiple %324, 2 : i32
    %326 = arith.index_cast %325 : i32 to index
    %c0_149 = arith.constant 0 : index
    %327 = vector.load %arg17[%326, %c0_149] : memref<16x128xf32, #tpu.memory_space<vmem>>, vector<2x128xf32>
    %328 = arith.truncf %279 : vector<2x32xf32> to vector<2x32xbf16>
    %c0_150 = arith.constant 0 : index
    %c0_151 = arith.constant 0 : index
    %329 = vector.load %arg13[%c0_150, %c0_151] : memref<32x128xbf16, #tpu.memory_space<vmem>>, vector<32x128xbf16>
    %cst_152 = arith.constant dense<0.000000e+00> : vector<2x128xf32>
    %330 = tpu.matmul %328, %329, %cst_152 {dimension_numbers = #tpu.dot_dimension_numbers<[1], [0], [0], [1], [0, 0, 1, 1], [], []>} : vector<2x32xbf16>, vector<32x128xbf16>, vector<2x128xf32> -> vector<2x128xf32>
    %331 = arith.addf %327, %330 : vector<2x128xf32>
    %332 = vector.extract_strided_slice %331 {offsets = [0, 0], sizes = [2, 32], strides = [1, 1]} : vector<2x128xf32> to vector<2x32xf32>
    %cst_153 = arith.constant 5.000000e-01 : f32
    %333 = vector.broadcast %cst_153 : f32 to vector<2x32xf32>
    %334 = arith.mulf %333, %332 : vector<2x32xf32>
    %335 = math.tanh %334 : vector<2x32xf32>
    %cst_154 = arith.constant 5.000000e-01 : f32
    %336 = vector.broadcast %cst_154 : f32 to vector<2x32xf32>
    %337 = arith.mulf %336, %335 : vector<2x32xf32>
    %cst_155 = arith.constant 5.000000e-01 : f32
    %338 = vector.broadcast %cst_155 : f32 to vector<2x32xf32>
    %339 = arith.addf %337, %338 : vector<2x32xf32>
    %340 = vector.extract_strided_slice %331 {offsets = [0, 32], sizes = [2, 32], strides = [1, 1]} : vector<2x128xf32> to vector<2x32xf32>
    %cst_156 = arith.constant 5.000000e-01 : f32
    %341 = vector.broadcast %cst_156 : f32 to vector<2x32xf32>
    %342 = arith.mulf %341, %340 : vector<2x32xf32>
    %343 = math.tanh %342 : vector<2x32xf32>
    %cst_157 = arith.constant 5.000000e-01 : f32
    %344 = vector.broadcast %cst_157 : f32 to vector<2x32xf32>
    %345 = arith.mulf %344, %343 : vector<2x32xf32>
    %cst_158 = arith.constant 5.000000e-01 : f32
    %346 = vector.broadcast %cst_158 : f32 to vector<2x32xf32>
    %347 = arith.addf %345, %346 : vector<2x32xf32>
    %348 = vector.extract_strided_slice %331 {offsets = [0, 64], sizes = [2, 32], strides = [1, 1]} : vector<2x128xf32> to vector<2x32xf32>
    %349 = math.tanh %348 : vector<2x32xf32>
    %350 = vector.extract_strided_slice %331 {offsets = [0, 96], sizes = [2, 32], strides = [1, 1]} : vector<2x128xf32> to vector<2x32xf32>
    %cst_159 = arith.constant 5.000000e-01 : f32
    %351 = vector.broadcast %cst_159 : f32 to vector<2x32xf32>
    %352 = arith.mulf %351, %350 : vector<2x32xf32>
    %353 = math.tanh %352 : vector<2x32xf32>
    %cst_160 = arith.constant 5.000000e-01 : f32
    %354 = vector.broadcast %cst_160 : f32 to vector<2x32xf32>
    %355 = arith.mulf %354, %353 : vector<2x32xf32>
    %cst_161 = arith.constant 5.000000e-01 : f32
    %356 = vector.broadcast %cst_161 : f32 to vector<2x32xf32>
    %357 = arith.addf %355, %356 : vector<2x32xf32>
    %358 = arith.mulf %347, %277 : vector<2x32xf32>
    %359 = arith.mulf %339, %349 : vector<2x32xf32>
    %360 = arith.addf %358, %359 : vector<2x32xf32>
    %361 = math.tanh %360 : vector<2x32xf32>
    %362 = arith.mulf %357, %361 : vector<2x32xf32>
    %363 = arith.index_cast %325 : i32 to index
    %c0_162 = arith.constant 0 : index
    %364 = vector.load %arg19[%363, %c0_162] : memref<16x32xf32, #tpu.memory_space<vmem>>, vector<2x32xf32>
    tpu.vector_store %arg19[%363, %c0_162], %362 {strides = array<i32>} : memref<16x32xf32, #tpu.memory_space<vmem>>, vector<2x32xf32>,
    %c4_i32 = arith.constant 4 : i32
    %c2_i32_163 = arith.constant 2 : i32
    %365 = arith.muli %c4_i32, %c2_i32_163 : i32
    %366 = tpu.assume_multiple %365, 2 : i32
    %367 = arith.index_cast %366 : i32 to index
    %c0_164 = arith.constant 0 : index
    %368 = vector.load %arg16[%367, %c0_164] : memref<16x128xf32, #tpu.memory_space<vmem>>, vector<2x128xf32>
    %369 = arith.truncf %320 : vector<2x32xf32> to vector<2x32xbf16>
    %c0_165 = arith.constant 0 : index
    %c0_166 = arith.constant 0 : index
    %370 = vector.load %arg12[%c0_165, %c0_166] : memref<32x128xbf16, #tpu.memory_space<vmem>>, vector<32x128xbf16>
    %cst_167 = arith.constant dense<0.000000e+00> : vector<2x128xf32>
    %371 = tpu.matmul %369, %370, %cst_167 {dimension_numbers = #tpu.dot_dimension_numbers<[1], [0], [0], [1], [0, 0, 1, 1], [], []>} : vector<2x32xbf16>, vector<32x128xbf16>, vector<2x128xf32> -> vector<2x128xf32>
    %372 = arith.addf %368, %371 : vector<2x128xf32>
    %373 = vector.extract_strided_slice %372 {offsets = [0, 0], sizes = [2, 32], strides = [1, 1]} : vector<2x128xf32> to vector<2x32xf32>
    %cst_168 = arith.constant 5.000000e-01 : f32
    %374 = vector.broadcast %cst_168 : f32 to vector<2x32xf32>
    %375 = arith.mulf %374, %373 : vector<2x32xf32>
    %376 = math.tanh %375 : vector<2x32xf32>
    %cst_169 = arith.constant 5.000000e-01 : f32
    %377 = vector.broadcast %cst_169 : f32 to vector<2x32xf32>
    %378 = arith.mulf %377, %376 : vector<2x32xf32>
    %cst_170 = arith.constant 5.000000e-01 : f32
    %379 = vector.broadcast %cst_170 : f32 to vector<2x32xf32>
    %380 = arith.addf %378, %379 : vector<2x32xf32>
    %381 = vector.extract_strided_slice %372 {offsets = [0, 32], sizes = [2, 32], strides = [1, 1]} : vector<2x128xf32> to vector<2x32xf32>
    %cst_171 = arith.constant 5.000000e-01 : f32
    %382 = vector.broadcast %cst_171 : f32 to vector<2x32xf32>
    %383 = arith.mulf %382, %381 : vector<2x32xf32>
    %384 = math.tanh %383 : vector<2x32xf32>
    %cst_172 = arith.constant 5.000000e-01 : f32
    %385 = vector.broadcast %cst_172 : f32 to vector<2x32xf32>
    %386 = arith.mulf %385, %384 : vector<2x32xf32>
    %cst_173 = arith.constant 5.000000e-01 : f32
    %387 = vector.broadcast %cst_173 : f32 to vector<2x32xf32>
    %388 = arith.addf %386, %387 : vector<2x32xf32>
    %389 = vector.extract_strided_slice %372 {offsets = [0, 64], sizes = [2, 32], strides = [1, 1]} : vector<2x128xf32> to vector<2x32xf32>
    %390 = math.tanh %389 : vector<2x32xf32>
    %391 = vector.extract_strided_slice %372 {offsets = [0, 96], sizes = [2, 32], strides = [1, 1]} : vector<2x128xf32> to vector<2x32xf32>
    %cst_174 = arith.constant 5.000000e-01 : f32
    %392 = vector.broadcast %cst_174 : f32 to vector<2x32xf32>
    %393 = arith.mulf %392, %391 : vector<2x32xf32>
    %394 = math.tanh %393 : vector<2x32xf32>
    %cst_175 = arith.constant 5.000000e-01 : f32
    %395 = vector.broadcast %cst_175 : f32 to vector<2x32xf32>
    %396 = arith.mulf %395, %394 : vector<2x32xf32>
    %cst_176 = arith.constant 5.000000e-01 : f32
    %397 = vector.broadcast %cst_176 : f32 to vector<2x32xf32>
    %398 = arith.addf %396, %397 : vector<2x32xf32>
    %399 = arith.mulf %388, %318 : vector<2x32xf32>
    %400 = arith.mulf %380, %390 : vector<2x32xf32>
    %401 = arith.addf %399, %400 : vector<2x32xf32>
    %402 = math.tanh %401 : vector<2x32xf32>
    %403 = arith.mulf %398, %402 : vector<2x32xf32>
    %404 = arith.index_cast %366 : i32 to index
    %c0_177 = arith.constant 0 : index
    %405 = vector.load %arg18[%404, %c0_177] : memref<16x32xf32, #tpu.memory_space<vmem>>, vector<2x32xf32>
    tpu.vector_store %arg18[%404, %c0_177], %403 {strides = array<i32>} : memref<16x32xf32, #tpu.memory_space<vmem>>, vector<2x32xf32>,
    %c7_i32_178 = arith.constant 7 : i32
    %406 = arith.subi %c7_i32_178, %c4_i32 : i32
    %c2_i32_179 = arith.constant 2 : i32
    %407 = arith.muli %406, %c2_i32_179 : i32
    %408 = tpu.assume_multiple %407, 2 : i32
    %409 = arith.index_cast %408 : i32 to index
    %c0_180 = arith.constant 0 : index
    %410 = vector.load %arg17[%409, %c0_180] : memref<16x128xf32, #tpu.memory_space<vmem>>, vector<2x128xf32>
    %411 = arith.truncf %362 : vector<2x32xf32> to vector<2x32xbf16>
    %c0_181 = arith.constant 0 : index
    %c0_182 = arith.constant 0 : index
    %412 = vector.load %arg13[%c0_181, %c0_182] : memref<32x128xbf16, #tpu.memory_space<vmem>>, vector<32x128xbf16>
    %cst_183 = arith.constant dense<0.000000e+00> : vector<2x128xf32>
    %413 = tpu.matmul %411, %412, %cst_183 {dimension_numbers = #tpu.dot_dimension_numbers<[1], [0], [0], [1], [0, 0, 1, 1], [], []>} : vector<2x32xbf16>, vector<32x128xbf16>, vector<2x128xf32> -> vector<2x128xf32>
    %414 = arith.addf %410, %413 : vector<2x128xf32>
    %415 = vector.extract_strided_slice %414 {offsets = [0, 0], sizes = [2, 32], strides = [1, 1]} : vector<2x128xf32> to vector<2x32xf32>
    %cst_184 = arith.constant 5.000000e-01 : f32
    %416 = vector.broadcast %cst_184 : f32 to vector<2x32xf32>
    %417 = arith.mulf %416, %415 : vector<2x32xf32>
    %418 = math.tanh %417 : vector<2x32xf32>
    %cst_185 = arith.constant 5.000000e-01 : f32
    %419 = vector.broadcast %cst_185 : f32 to vector<2x32xf32>
    %420 = arith.mulf %419, %418 : vector<2x32xf32>
    %cst_186 = arith.constant 5.000000e-01 : f32
    %421 = vector.broadcast %cst_186 : f32 to vector<2x32xf32>
    %422 = arith.addf %420, %421 : vector<2x32xf32>
    %423 = vector.extract_strided_slice %414 {offsets = [0, 32], sizes = [2, 32], strides = [1, 1]} : vector<2x128xf32> to vector<2x32xf32>
    %cst_187 = arith.constant 5.000000e-01 : f32
    %424 = vector.broadcast %cst_187 : f32 to vector<2x32xf32>
    %425 = arith.mulf %424, %423 : vector<2x32xf32>
    %426 = math.tanh %425 : vector<2x32xf32>
    %cst_188 = arith.constant 5.000000e-01 : f32
    %427 = vector.broadcast %cst_188 : f32 to vector<2x32xf32>
    %428 = arith.mulf %427, %426 : vector<2x32xf32>
    %cst_189 = arith.constant 5.000000e-01 : f32
    %429 = vector.broadcast %cst_189 : f32 to vector<2x32xf32>
    %430 = arith.addf %428, %429 : vector<2x32xf32>
    %431 = vector.extract_strided_slice %414 {offsets = [0, 64], sizes = [2, 32], strides = [1, 1]} : vector<2x128xf32> to vector<2x32xf32>
    %432 = math.tanh %431 : vector<2x32xf32>
    %433 = vector.extract_strided_slice %414 {offsets = [0, 96], sizes = [2, 32], strides = [1, 1]} : vector<2x128xf32> to vector<2x32xf32>
    %cst_190 = arith.constant 5.000000e-01 : f32
    %434 = vector.broadcast %cst_190 : f32 to vector<2x32xf32>
    %435 = arith.mulf %434, %433 : vector<2x32xf32>
    %436 = math.tanh %435 : vector<2x32xf32>
    %cst_191 = arith.constant 5.000000e-01 : f32
    %437 = vector.broadcast %cst_191 : f32 to vector<2x32xf32>
    %438 = arith.mulf %437, %436 : vector<2x32xf32>
    %cst_192 = arith.constant 5.000000e-01 : f32
    %439 = vector.broadcast %cst_192 : f32 to vector<2x32xf32>
    %440 = arith.addf %438, %439 : vector<2x32xf32>
    %441 = arith.mulf %430, %360 : vector<2x32xf32>
    %442 = arith.mulf %422, %432 : vector<2x32xf32>
    %443 = arith.addf %441, %442 : vector<2x32xf32>
    %444 = math.tanh %443 : vector<2x32xf32>
    %445 = arith.mulf %440, %444 : vector<2x32xf32>
    %446 = arith.index_cast %408 : i32 to index
    %c0_193 = arith.constant 0 : index
    %447 = vector.load %arg19[%446, %c0_193] : memref<16x32xf32, #tpu.memory_space<vmem>>, vector<2x32xf32>
    tpu.vector_store %arg19[%446, %c0_193], %445 {strides = array<i32>} : memref<16x32xf32, #tpu.memory_space<vmem>>, vector<2x32xf32>,
    %c5_i32 = arith.constant 5 : i32
    %c2_i32_194 = arith.constant 2 : i32
    %448 = arith.muli %c5_i32, %c2_i32_194 : i32
    %449 = tpu.assume_multiple %448, 2 : i32
    %450 = arith.index_cast %449 : i32 to index
    %c0_195 = arith.constant 0 : index
    %451 = vector.load %arg16[%450, %c0_195] : memref<16x128xf32, #tpu.memory_space<vmem>>, vector<2x128xf32>
    %452 = arith.truncf %403 : vector<2x32xf32> to vector<2x32xbf16>
    %c0_196 = arith.constant 0 : index
    %c0_197 = arith.constant 0 : index
    %453 = vector.load %arg12[%c0_196, %c0_197] : memref<32x128xbf16, #tpu.memory_space<vmem>>, vector<32x128xbf16>
    %cst_198 = arith.constant dense<0.000000e+00> : vector<2x128xf32>
    %454 = tpu.matmul %452, %453, %cst_198 {dimension_numbers = #tpu.dot_dimension_numbers<[1], [0], [0], [1], [0, 0, 1, 1], [], []>} : vector<2x32xbf16>, vector<32x128xbf16>, vector<2x128xf32> -> vector<2x128xf32>
    %455 = arith.addf %451, %454 : vector<2x128xf32>
    %456 = vector.extract_strided_slice %455 {offsets = [0, 0], sizes = [2, 32], strides = [1, 1]} : vector<2x128xf32> to vector<2x32xf32>
    %cst_199 = arith.constant 5.000000e-01 : f32
    %457 = vector.broadcast %cst_199 : f32 to vector<2x32xf32>
    %458 = arith.mulf %457, %456 : vector<2x32xf32>
    %459 = math.tanh %458 : vector<2x32xf32>
    %cst_200 = arith.constant 5.000000e-01 : f32
    %460 = vector.broadcast %cst_200 : f32 to vector<2x32xf32>
    %461 = arith.mulf %460, %459 : vector<2x32xf32>
    %cst_201 = arith.constant 5.000000e-01 : f32
    %462 = vector.broadcast %cst_201 : f32 to vector<2x32xf32>
    %463 = arith.addf %461, %462 : vector<2x32xf32>
    %464 = vector.extract_strided_slice %455 {offsets = [0, 32], sizes = [2, 32], strides = [1, 1]} : vector<2x128xf32> to vector<2x32xf32>
    %cst_202 = arith.constant 5.000000e-01 : f32
    %465 = vector.broadcast %cst_202 : f32 to vector<2x32xf32>
    %466 = arith.mulf %465, %464 : vector<2x32xf32>
    %467 = math.tanh %466 : vector<2x32xf32>
    %cst_203 = arith.constant 5.000000e-01 : f32
    %468 = vector.broadcast %cst_203 : f32 to vector<2x32xf32>
    %469 = arith.mulf %468, %467 : vector<2x32xf32>
    %cst_204 = arith.constant 5.000000e-01 : f32
    %470 = vector.broadcast %cst_204 : f32 to vector<2x32xf32>
    %471 = arith.addf %469, %470 : vector<2x32xf32>
    %472 = vector.extract_strided_slice %455 {offsets = [0, 64], sizes = [2, 32], strides = [1, 1]} : vector<2x128xf32> to vector<2x32xf32>
    %473 = math.tanh %472 : vector<2x32xf32>
    %474 = vector.extract_strided_slice %455 {offsets = [0, 96], sizes = [2, 32], strides = [1, 1]} : vector<2x128xf32> to vector<2x32xf32>
    %cst_205 = arith.constant 5.000000e-01 : f32
    %475 = vector.broadcast %cst_205 : f32 to vector<2x32xf32>
    %476 = arith.mulf %475, %474 : vector<2x32xf32>
    %477 = math.tanh %476 : vector<2x32xf32>
    %cst_206 = arith.constant 5.000000e-01 : f32
    %478 = vector.broadcast %cst_206 : f32 to vector<2x32xf32>
    %479 = arith.mulf %478, %477 : vector<2x32xf32>
    %cst_207 = arith.constant 5.000000e-01 : f32
    %480 = vector.broadcast %cst_207 : f32 to vector<2x32xf32>
    %481 = arith.addf %479, %480 : vector<2x32xf32>
    %482 = arith.mulf %471, %401 : vector<2x32xf32>
    %483 = arith.mulf %463, %473 : vector<2x32xf32>
    %484 = arith.addf %482, %483 : vector<2x32xf32>
    %485 = math.tanh %484 : vector<2x32xf32>
    %486 = arith.mulf %481, %485 : vector<2x32xf32>
    %487 = arith.index_cast %449 : i32 to index
    %c0_208 = arith.constant 0 : index
    %488 = vector.load %arg18[%487, %c0_208] : memref<16x32xf32, #tpu.memory_space<vmem>>, vector<2x32xf32>
    tpu.vector_store %arg18[%487, %c0_208], %486 {strides = array<i32>} : memref<16x32xf32, #tpu.memory_space<vmem>>, vector<2x32xf32>,
    %c7_i32_209 = arith.constant 7 : i32
    %489 = arith.subi %c7_i32_209, %c5_i32 : i32
    %c2_i32_210 = arith.constant 2 : i32
    %490 = arith.muli %489, %c2_i32_210 : i32
    %491 = tpu.assume_multiple %490, 2 : i32
    %492 = arith.index_cast %491 : i32 to index
    %c0_211 = arith.constant 0 : index
    %493 = vector.load %arg17[%492, %c0_211] : memref<16x128xf32, #tpu.memory_space<vmem>>, vector<2x128xf32>
    %494 = arith.truncf %445 : vector<2x32xf32> to vector<2x32xbf16>
    %c0_212 = arith.constant 0 : index
    %c0_213 = arith.constant 0 : index
    %495 = vector.load %arg13[%c0_212, %c0_213] : memref<32x128xbf16, #tpu.memory_space<vmem>>, vector<32x128xbf16>
    %cst_214 = arith.constant dense<0.000000e+00> : vector<2x128xf32>
    %496 = tpu.matmul %494, %495, %cst_214 {dimension_numbers = #tpu.dot_dimension_numbers<[1], [0], [0], [1], [0, 0, 1, 1], [], []>} : vector<2x32xbf16>, vector<32x128xbf16>, vector<2x128xf32> -> vector<2x128xf32>
    %497 = arith.addf %493, %496 : vector<2x128xf32>
    %498 = vector.extract_strided_slice %497 {offsets = [0, 0], sizes = [2, 32], strides = [1, 1]} : vector<2x128xf32> to vector<2x32xf32>
    %cst_215 = arith.constant 5.000000e-01 : f32
    %499 = vector.broadcast %cst_215 : f32 to vector<2x32xf32>
    %500 = arith.mulf %499, %498 : vector<2x32xf32>
    %501 = math.tanh %500 : vector<2x32xf32>
    %cst_216 = arith.constant 5.000000e-01 : f32
    %502 = vector.broadcast %cst_216 : f32 to vector<2x32xf32>
    %503 = arith.mulf %502, %501 : vector<2x32xf32>
    %cst_217 = arith.constant 5.000000e-01 : f32
    %504 = vector.broadcast %cst_217 : f32 to vector<2x32xf32>
    %505 = arith.addf %503, %504 : vector<2x32xf32>
    %506 = vector.extract_strided_slice %497 {offsets = [0, 32], sizes = [2, 32], strides = [1, 1]} : vector<2x128xf32> to vector<2x32xf32>
    %cst_218 = arith.constant 5.000000e-01 : f32
    %507 = vector.broadcast %cst_218 : f32 to vector<2x32xf32>
    %508 = arith.mulf %507, %506 : vector<2x32xf32>
    %509 = math.tanh %508 : vector<2x32xf32>
    %cst_219 = arith.constant 5.000000e-01 : f32
    %510 = vector.broadcast %cst_219 : f32 to vector<2x32xf32>
    %511 = arith.mulf %510, %509 : vector<2x32xf32>
    %cst_220 = arith.constant 5.000000e-01 : f32
    %512 = vector.broadcast %cst_220 : f32 to vector<2x32xf32>
    %513 = arith.addf %511, %512 : vector<2x32xf32>
    %514 = vector.extract_strided_slice %497 {offsets = [0, 64], sizes = [2, 32], strides = [1, 1]} : vector<2x128xf32> to vector<2x32xf32>
    %515 = math.tanh %514 : vector<2x32xf32>
    %516 = vector.extract_strided_slice %497 {offsets = [0, 96], sizes = [2, 32], strides = [1, 1]} : vector<2x128xf32> to vector<2x32xf32>
    %cst_221 = arith.constant 5.000000e-01 : f32
    %517 = vector.broadcast %cst_221 : f32 to vector<2x32xf32>
    %518 = arith.mulf %517, %516 : vector<2x32xf32>
    %519 = math.tanh %518 : vector<2x32xf32>
    %cst_222 = arith.constant 5.000000e-01 : f32
    %520 = vector.broadcast %cst_222 : f32 to vector<2x32xf32>
    %521 = arith.mulf %520, %519 : vector<2x32xf32>
    %cst_223 = arith.constant 5.000000e-01 : f32
    %522 = vector.broadcast %cst_223 : f32 to vector<2x32xf32>
    %523 = arith.addf %521, %522 : vector<2x32xf32>
    %524 = arith.mulf %513, %443 : vector<2x32xf32>
    %525 = arith.mulf %505, %515 : vector<2x32xf32>
    %526 = arith.addf %524, %525 : vector<2x32xf32>
    %527 = math.tanh %526 : vector<2x32xf32>
    %528 = arith.mulf %523, %527 : vector<2x32xf32>
    %529 = arith.index_cast %491 : i32 to index
    %c0_224 = arith.constant 0 : index
    %530 = vector.load %arg19[%529, %c0_224] : memref<16x32xf32, #tpu.memory_space<vmem>>, vector<2x32xf32>
    tpu.vector_store %arg19[%529, %c0_224], %528 {strides = array<i32>} : memref<16x32xf32, #tpu.memory_space<vmem>>, vector<2x32xf32>,
    %c6_i32 = arith.constant 6 : i32
    %c2_i32_225 = arith.constant 2 : i32
    %531 = arith.muli %c6_i32, %c2_i32_225 : i32
    %532 = tpu.assume_multiple %531, 2 : i32
    %533 = arith.index_cast %532 : i32 to index
    %c0_226 = arith.constant 0 : index
    %534 = vector.load %arg16[%533, %c0_226] : memref<16x128xf32, #tpu.memory_space<vmem>>, vector<2x128xf32>
    %535 = arith.truncf %486 : vector<2x32xf32> to vector<2x32xbf16>
    %c0_227 = arith.constant 0 : index
    %c0_228 = arith.constant 0 : index
    %536 = vector.load %arg12[%c0_227, %c0_228] : memref<32x128xbf16, #tpu.memory_space<vmem>>, vector<32x128xbf16>
    %cst_229 = arith.constant dense<0.000000e+00> : vector<2x128xf32>
    %537 = tpu.matmul %535, %536, %cst_229 {dimension_numbers = #tpu.dot_dimension_numbers<[1], [0], [0], [1], [0, 0, 1, 1], [], []>} : vector<2x32xbf16>, vector<32x128xbf16>, vector<2x128xf32> -> vector<2x128xf32>
    %538 = arith.addf %534, %537 : vector<2x128xf32>
    %539 = vector.extract_strided_slice %538 {offsets = [0, 0], sizes = [2, 32], strides = [1, 1]} : vector<2x128xf32> to vector<2x32xf32>
    %cst_230 = arith.constant 5.000000e-01 : f32
    %540 = vector.broadcast %cst_230 : f32 to vector<2x32xf32>
    %541 = arith.mulf %540, %539 : vector<2x32xf32>
    %542 = math.tanh %541 : vector<2x32xf32>
    %cst_231 = arith.constant 5.000000e-01 : f32
    %543 = vector.broadcast %cst_231 : f32 to vector<2x32xf32>
    %544 = arith.mulf %543, %542 : vector<2x32xf32>
    %cst_232 = arith.constant 5.000000e-01 : f32
    %545 = vector.broadcast %cst_232 : f32 to vector<2x32xf32>
    %546 = arith.addf %544, %545 : vector<2x32xf32>
    %547 = vector.extract_strided_slice %538 {offsets = [0, 32], sizes = [2, 32], strides = [1, 1]} : vector<2x128xf32> to vector<2x32xf32>
    %cst_233 = arith.constant 5.000000e-01 : f32
    %548 = vector.broadcast %cst_233 : f32 to vector<2x32xf32>
    %549 = arith.mulf %548, %547 : vector<2x32xf32>
    %550 = math.tanh %549 : vector<2x32xf32>
    %cst_234 = arith.constant 5.000000e-01 : f32
    %551 = vector.broadcast %cst_234 : f32 to vector<2x32xf32>
    %552 = arith.mulf %551, %550 : vector<2x32xf32>
    %cst_235 = arith.constant 5.000000e-01 : f32
    %553 = vector.broadcast %cst_235 : f32 to vector<2x32xf32>
    %554 = arith.addf %552, %553 : vector<2x32xf32>
    %555 = vector.extract_strided_slice %538 {offsets = [0, 64], sizes = [2, 32], strides = [1, 1]} : vector<2x128xf32> to vector<2x32xf32>
    %556 = math.tanh %555 : vector<2x32xf32>
    %557 = vector.extract_strided_slice %538 {offsets = [0, 96], sizes = [2, 32], strides = [1, 1]} : vector<2x128xf32> to vector<2x32xf32>
    %cst_236 = arith.constant 5.000000e-01 : f32
    %558 = vector.broadcast %cst_236 : f32 to vector<2x32xf32>
    %559 = arith.mulf %558, %557 : vector<2x32xf32>
    %560 = math.tanh %559 : vector<2x32xf32>
    %cst_237 = arith.constant 5.000000e-01 : f32
    %561 = vector.broadcast %cst_237 : f32 to vector<2x32xf32>
    %562 = arith.mulf %561, %560 : vector<2x32xf32>
    %cst_238 = arith.constant 5.000000e-01 : f32
    %563 = vector.broadcast %cst_238 : f32 to vector<2x32xf32>
    %564 = arith.addf %562, %563 : vector<2x32xf32>
    %565 = arith.mulf %554, %484 : vector<2x32xf32>
    %566 = arith.mulf %546, %556 : vector<2x32xf32>
    %567 = arith.addf %565, %566 : vector<2x32xf32>
    %568 = math.tanh %567 : vector<2x32xf32>
    %569 = arith.mulf %564, %568 : vector<2x32xf32>
    %570 = arith.index_cast %532 : i32 to index
    %c0_239 = arith.constant 0 : index
    %571 = vector.load %arg18[%570, %c0_239] : memref<16x32xf32, #tpu.memory_space<vmem>>, vector<2x32xf32>
    tpu.vector_store %arg18[%570, %c0_239], %569 {strides = array<i32>} : memref<16x32xf32, #tpu.memory_space<vmem>>, vector<2x32xf32>,
    %c7_i32_240 = arith.constant 7 : i32
    %572 = arith.subi %c7_i32_240, %c6_i32 : i32
    %c2_i32_241 = arith.constant 2 : i32
    %573 = arith.muli %572, %c2_i32_241 : i32
    %574 = tpu.assume_multiple %573, 2 : i32
    %575 = arith.index_cast %574 : i32 to index
    %c0_242 = arith.constant 0 : index
    %576 = vector.load %arg17[%575, %c0_242] : memref<16x128xf32, #tpu.memory_space<vmem>>, vector<2x128xf32>
    %577 = arith.truncf %528 : vector<2x32xf32> to vector<2x32xbf16>
    %c0_243 = arith.constant 0 : index
    %c0_244 = arith.constant 0 : index
    %578 = vector.load %arg13[%c0_243, %c0_244] : memref<32x128xbf16, #tpu.memory_space<vmem>>, vector<32x128xbf16>
    %cst_245 = arith.constant dense<0.000000e+00> : vector<2x128xf32>
    %579 = tpu.matmul %577, %578, %cst_245 {dimension_numbers = #tpu.dot_dimension_numbers<[1], [0], [0], [1], [0, 0, 1, 1], [], []>} : vector<2x32xbf16>, vector<32x128xbf16>, vector<2x128xf32> -> vector<2x128xf32>
    %580 = arith.addf %576, %579 : vector<2x128xf32>
    %581 = vector.extract_strided_slice %580 {offsets = [0, 0], sizes = [2, 32], strides = [1, 1]} : vector<2x128xf32> to vector<2x32xf32>
    %cst_246 = arith.constant 5.000000e-01 : f32
    %582 = vector.broadcast %cst_246 : f32 to vector<2x32xf32>
    %583 = arith.mulf %582, %581 : vector<2x32xf32>
    %584 = math.tanh %583 : vector<2x32xf32>
    %cst_247 = arith.constant 5.000000e-01 : f32
    %585 = vector.broadcast %cst_247 : f32 to vector<2x32xf32>
    %586 = arith.mulf %585, %584 : vector<2x32xf32>
    %cst_248 = arith.constant 5.000000e-01 : f32
    %587 = vector.broadcast %cst_248 : f32 to vector<2x32xf32>
    %588 = arith.addf %586, %587 : vector<2x32xf32>
    %589 = vector.extract_strided_slice %580 {offsets = [0, 32], sizes = [2, 32], strides = [1, 1]} : vector<2x128xf32> to vector<2x32xf32>
    %cst_249 = arith.constant 5.000000e-01 : f32
    %590 = vector.broadcast %cst_249 : f32 to vector<2x32xf32>
    %591 = arith.mulf %590, %589 : vector<2x32xf32>
    %592 = math.tanh %591 : vector<2x32xf32>
    %cst_250 = arith.constant 5.000000e-01 : f32
    %593 = vector.broadcast %cst_250 : f32 to vector<2x32xf32>
    %594 = arith.mulf %593, %592 : vector<2x32xf32>
    %cst_251 = arith.constant 5.000000e-01 : f32
    %595 = vector.broadcast %cst_251 : f32 to vector<2x32xf32>
    %596 = arith.addf %594, %595 : vector<2x32xf32>
    %597 = vector.extract_strided_slice %580 {offsets = [0, 64], sizes = [2, 32], strides = [1, 1]} : vector<2x128xf32> to vector<2x32xf32>
    %598 = math.tanh %597 : vector<2x32xf32>
    %599 = vector.extract_strided_slice %580 {offsets = [0, 96], sizes = [2, 32], strides = [1, 1]} : vector<2x128xf32> to vector<2x32xf32>
    %cst_252 = arith.constant 5.000000e-01 : f32
    %600 = vector.broadcast %cst_252 : f32 to vector<2x32xf32>
    %601 = arith.mulf %600, %599 : vector<2x32xf32>
    %602 = math.tanh %601 : vector<2x32xf32>
    %cst_253 = arith.constant 5.000000e-01 : f32
    %603 = vector.broadcast %cst_253 : f32 to vector<2x32xf32>
    %604 = arith.mulf %603, %602 : vector<2x32xf32>
    %cst_254 = arith.constant 5.000000e-01 : f32
    %605 = vector.broadcast %cst_254 : f32 to vector<2x32xf32>
    %606 = arith.addf %604, %605 : vector<2x32xf32>
    %607 = arith.mulf %596, %526 : vector<2x32xf32>
    %608 = arith.mulf %588, %598 : vector<2x32xf32>
    %609 = arith.addf %607, %608 : vector<2x32xf32>
    %610 = math.tanh %609 : vector<2x32xf32>
    %611 = arith.mulf %606, %610 : vector<2x32xf32>
    %612 = arith.index_cast %574 : i32 to index
    %c0_255 = arith.constant 0 : index
    %613 = vector.load %arg19[%612, %c0_255] : memref<16x32xf32, #tpu.memory_space<vmem>>, vector<2x32xf32>
    tpu.vector_store %arg19[%612, %c0_255], %611 {strides = array<i32>} : memref<16x32xf32, #tpu.memory_space<vmem>>, vector<2x32xf32>,
    %c7_i32_256 = arith.constant 7 : i32
    %c2_i32_257 = arith.constant 2 : i32
    %614 = arith.muli %c7_i32_256, %c2_i32_257 : i32
    %615 = tpu.assume_multiple %614, 2 : i32
    %616 = arith.index_cast %615 : i32 to index
    %c0_258 = arith.constant 0 : index
    %617 = vector.load %arg16[%616, %c0_258] : memref<16x128xf32, #tpu.memory_space<vmem>>, vector<2x128xf32>
    %618 = arith.truncf %569 : vector<2x32xf32> to vector<2x32xbf16>
    %c0_259 = arith.constant 0 : index
    %c0_260 = arith.constant 0 : index
    %619 = vector.load %arg12[%c0_259, %c0_260] : memref<32x128xbf16, #tpu.memory_space<vmem>>, vector<32x128xbf16>
    %cst_261 = arith.constant dense<0.000000e+00> : vector<2x128xf32>
    %620 = tpu.matmul %618, %619, %cst_261 {dimension_numbers = #tpu.dot_dimension_numbers<[1], [0], [0], [1], [0, 0, 1, 1], [], []>} : vector<2x32xbf16>, vector<32x128xbf16>, vector<2x128xf32> -> vector<2x128xf32>
    %621 = arith.addf %617, %620 : vector<2x128xf32>
    %622 = vector.extract_strided_slice %621 {offsets = [0, 0], sizes = [2, 32], strides = [1, 1]} : vector<2x128xf32> to vector<2x32xf32>
    %cst_262 = arith.constant 5.000000e-01 : f32
    %623 = vector.broadcast %cst_262 : f32 to vector<2x32xf32>
    %624 = arith.mulf %623, %622 : vector<2x32xf32>
    %625 = math.tanh %624 : vector<2x32xf32>
    %cst_263 = arith.constant 5.000000e-01 : f32
    %626 = vector.broadcast %cst_263 : f32 to vector<2x32xf32>
    %627 = arith.mulf %626, %625 : vector<2x32xf32>
    %cst_264 = arith.constant 5.000000e-01 : f32
    %628 = vector.broadcast %cst_264 : f32 to vector<2x32xf32>
    %629 = arith.addf %627, %628 : vector<2x32xf32>
    %630 = vector.extract_strided_slice %621 {offsets = [0, 32], sizes = [2, 32], strides = [1, 1]} : vector<2x128xf32> to vector<2x32xf32>
    %cst_265 = arith.constant 5.000000e-01 : f32
    %631 = vector.broadcast %cst_265 : f32 to vector<2x32xf32>
    %632 = arith.mulf %631, %630 : vector<2x32xf32>
    %633 = math.tanh %632 : vector<2x32xf32>
    %cst_266 = arith.constant 5.000000e-01 : f32
    %634 = vector.broadcast %cst_266 : f32 to vector<2x32xf32>
    %635 = arith.mulf %634, %633 : vector<2x32xf32>
    %cst_267 = arith.constant 5.000000e-01 : f32
    %636 = vector.broadcast %cst_267 : f32 to vector<2x32xf32>
    %637 = arith.addf %635, %636 : vector<2x32xf32>
    %638 = vector.extract_strided_slice %621 {offsets = [0, 64], sizes = [2, 32], strides = [1, 1]} : vector<2x128xf32> to vector<2x32xf32>
    %639 = math.tanh %638 : vector<2x32xf32>
    %640 = vector.extract_strided_slice %621 {offsets = [0, 96], sizes = [2, 32], strides = [1, 1]} : vector<2x128xf32> to vector<2x32xf32>
    %cst_268 = arith.constant 5.000000e-01 : f32
    %641 = vector.broadcast %cst_268 : f32 to vector<2x32xf32>
    %642 = arith.mulf %641, %640 : vector<2x32xf32>
    %643 = math.tanh %642 : vector<2x32xf32>
    %cst_269 = arith.constant 5.000000e-01 : f32
    %644 = vector.broadcast %cst_269 : f32 to vector<2x32xf32>
    %645 = arith.mulf %644, %643 : vector<2x32xf32>
    %cst_270 = arith.constant 5.000000e-01 : f32
    %646 = vector.broadcast %cst_270 : f32 to vector<2x32xf32>
    %647 = arith.addf %645, %646 : vector<2x32xf32>
    %648 = arith.mulf %637, %567 : vector<2x32xf32>
    %649 = arith.mulf %629, %639 : vector<2x32xf32>
    %650 = arith.addf %648, %649 : vector<2x32xf32>
    %651 = math.tanh %650 : vector<2x32xf32>
    %652 = arith.mulf %647, %651 : vector<2x32xf32>
    %653 = arith.index_cast %615 : i32 to index
    %c0_271 = arith.constant 0 : index
    %654 = vector.load %arg18[%653, %c0_271] : memref<16x32xf32, #tpu.memory_space<vmem>>, vector<2x32xf32>
    tpu.vector_store %arg18[%653, %c0_271], %652 {strides = array<i32>} : memref<16x32xf32, #tpu.memory_space<vmem>>, vector<2x32xf32>,
    %c7_i32_272 = arith.constant 7 : i32
    %655 = arith.subi %c7_i32_272, %c7_i32_256 : i32
    %c2_i32_273 = arith.constant 2 : i32
    %656 = arith.muli %655, %c2_i32_273 : i32
    %657 = tpu.assume_multiple %656, 2 : i32
    %658 = arith.index_cast %657 : i32 to index
    %c0_274 = arith.constant 0 : index
    %659 = vector.load %arg17[%658, %c0_274] : memref<16x128xf32, #tpu.memory_space<vmem>>, vector<2x128xf32>
    %660 = arith.truncf %611 : vector<2x32xf32> to vector<2x32xbf16>
    %c0_275 = arith.constant 0 : index
    %c0_276 = arith.constant 0 : index
    %661 = vector.load %arg13[%c0_275, %c0_276] : memref<32x128xbf16, #tpu.memory_space<vmem>>, vector<32x128xbf16>
    %cst_277 = arith.constant dense<0.000000e+00> : vector<2x128xf32>
    %662 = tpu.matmul %660, %661, %cst_277 {dimension_numbers = #tpu.dot_dimension_numbers<[1], [0], [0], [1], [0, 0, 1, 1], [], []>} : vector<2x32xbf16>, vector<32x128xbf16>, vector<2x128xf32> -> vector<2x128xf32>
    %663 = arith.addf %659, %662 : vector<2x128xf32>
    %664 = vector.extract_strided_slice %663 {offsets = [0, 0], sizes = [2, 32], strides = [1, 1]} : vector<2x128xf32> to vector<2x32xf32>
    %cst_278 = arith.constant 5.000000e-01 : f32
    %665 = vector.broadcast %cst_278 : f32 to vector<2x32xf32>
    %666 = arith.mulf %665, %664 : vector<2x32xf32>
    %667 = math.tanh %666 : vector<2x32xf32>
    %cst_279 = arith.constant 5.000000e-01 : f32
    %668 = vector.broadcast %cst_279 : f32 to vector<2x32xf32>
    %669 = arith.mulf %668, %667 : vector<2x32xf32>
    %cst_280 = arith.constant 5.000000e-01 : f32
    %670 = vector.broadcast %cst_280 : f32 to vector<2x32xf32>
    %671 = arith.addf %669, %670 : vector<2x32xf32>
    %672 = vector.extract_strided_slice %663 {offsets = [0, 32], sizes = [2, 32], strides = [1, 1]} : vector<2x128xf32> to vector<2x32xf32>
    %cst_281 = arith.constant 5.000000e-01 : f32
    %673 = vector.broadcast %cst_281 : f32 to vector<2x32xf32>
    %674 = arith.mulf %673, %672 : vector<2x32xf32>
    %675 = math.tanh %674 : vector<2x32xf32>
    %cst_282 = arith.constant 5.000000e-01 : f32
    %676 = vector.broadcast %cst_282 : f32 to vector<2x32xf32>
    %677 = arith.mulf %676, %675 : vector<2x32xf32>
    %cst_283 = arith.constant 5.000000e-01 : f32
    %678 = vector.broadcast %cst_283 : f32 to vector<2x32xf32>
    %679 = arith.addf %677, %678 : vector<2x32xf32>
    %680 = vector.extract_strided_slice %663 {offsets = [0, 64], sizes = [2, 32], strides = [1, 1]} : vector<2x128xf32> to vector<2x32xf32>
    %681 = math.tanh %680 : vector<2x32xf32>
    %682 = vector.extract_strided_slice %663 {offsets = [0, 96], sizes = [2, 32], strides = [1, 1]} : vector<2x128xf32> to vector<2x32xf32>
    %cst_284 = arith.constant 5.000000e-01 : f32
    %683 = vector.broadcast %cst_284 : f32 to vector<2x32xf32>
    %684 = arith.mulf %683, %682 : vector<2x32xf32>
    %685 = math.tanh %684 : vector<2x32xf32>
    %cst_285 = arith.constant 5.000000e-01 : f32
    %686 = vector.broadcast %cst_285 : f32 to vector<2x32xf32>
    %687 = arith.mulf %686, %685 : vector<2x32xf32>
    %cst_286 = arith.constant 5.000000e-01 : f32
    %688 = vector.broadcast %cst_286 : f32 to vector<2x32xf32>
    %689 = arith.addf %687, %688 : vector<2x32xf32>
    %690 = arith.mulf %679, %609 : vector<2x32xf32>
    %691 = arith.mulf %671, %681 : vector<2x32xf32>
    %692 = arith.addf %690, %691 : vector<2x32xf32>
    %693 = math.tanh %692 : vector<2x32xf32>
    %694 = arith.mulf %689, %693 : vector<2x32xf32>
    %695 = arith.index_cast %657 : i32 to index
    %c0_287 = arith.constant 0 : index
    %696 = vector.load %arg19[%695, %c0_287] : memref<16x32xf32, #tpu.memory_space<vmem>>, vector<2x32xf32>
    tpu.vector_store %arg19[%695, %c0_287], %694 {strides = array<i32>} : memref<16x32xf32, #tpu.memory_space<vmem>>, vector<2x32xf32>,
    %c8_i32 = arith.constant 8 : i32
    %c0_288 = arith.constant 0 : index
    %c0_289 = arith.constant 0 : index
    %697 = vector.load %arg20[%c0_288, %c0_289] : memref<2x32xf32, #tpu.memory_space<vmem>>, vector<2x32xf32>
    tpu.vector_store %arg20[%c0_288, %c0_289], %652 {strides = array<i32>} : memref<2x32xf32, #tpu.memory_space<vmem>>, vector<2x32xf32>,
    %c0_290 = arith.constant 0 : index
    %c0_291 = arith.constant 0 : index
    %698 = vector.load %arg21[%c0_290, %c0_291] : memref<2x32xf32, #tpu.memory_space<vmem>>, vector<2x32xf32>
    tpu.vector_store %arg21[%c0_290, %c0_291], %650 {strides = array<i32>} : memref<2x32xf32, #tpu.memory_space<vmem>>, vector<2x32xf32>,
    %c0_292 = arith.constant 0 : index
    %c0_293 = arith.constant 0 : index
    %699 = vector.load %arg22[%c0_292, %c0_293] : memref<2x32xf32, #tpu.memory_space<vmem>>, vector<2x32xf32>
    tpu.vector_store %arg22[%c0_292, %c0_293], %694 {strides = array<i32>} : memref<2x32xf32, #tpu.memory_space<vmem>>, vector<2x32xf32>,
    %c0_294 = arith.constant 0 : index
    %c0_295 = arith.constant 0 : index
    %700 = vector.load %arg23[%c0_294, %c0_295] : memref<2x32xf32, #tpu.memory_space<vmem>>, vector<2x32xf32>
    tpu.vector_store %arg23[%c0_294, %c0_295], %692 {strides = array<i32>} : memref<2x32xf32, #tpu.memory_space<vmem>>, vector<2x32xf32>,
    %c0_296 = arith.constant 0 : index
    %c0_297 = arith.constant 0 : index
    %701 = vector.load %arg18[%c0_296, %c0_297] : memref<16x32xf32, #tpu.memory_space<vmem>>, vector<16x32xf32>
    %702 = arith.truncf %701 : vector<16x32xf32> to vector<16x32xbf16>
    %c0_298 = arith.constant 0 : index
    %c0_299 = arith.constant 0 : index
    %c0_300 = arith.constant 0 : index
    %703 = vector.load %arg14[%c0_298, %c0_299, %c0_300] : memref<1x16x32xbf16, #tpu.memory_space<vmem>>, vector<1x16x32xbf16>
    %704 = vector.shape_cast %703 : vector<1x16x32xbf16> to vector<16x32xbf16>
    %705 = vector.shape_cast %702 : vector<16x32xbf16> to vector<1x16x32xbf16>
    tpu.vector_store %arg14[%c0_298, %c0_299, %c0_300], %705 {strides = array<i32>} : memref<1x16x32xbf16, #tpu.memory_space<vmem>>, vector<1x16x32xbf16>,
    %c0_301 = arith.constant 0 : index
    %c0_302 = arith.constant 0 : index
    %706 = vector.load %arg19[%c0_301, %c0_302] : memref<16x32xf32, #tpu.memory_space<vmem>>, vector<16x32xf32>
    %707 = arith.truncf %706 : vector<16x32xf32> to vector<16x32xbf16>
    %c0_303 = arith.constant 0 : index
    %c0_304 = arith.constant 0 : index
    %c0_305 = arith.constant 0 : index
    %708 = vector.load %arg15[%c0_303, %c0_304, %c0_305] : memref<1x16x32xbf16, #tpu.memory_space<vmem>>, vector<1x16x32xbf16>
    %709 = vector.shape_cast %708 : vector<1x16x32xbf16> to vector<16x32xbf16>
    %710 = vector.shape_cast %707 : vector<16x32xbf16> to vector<1x16x32xbf16>
    tpu.vector_store %arg15[%c0_303, %c0_304, %c0_305], %710 {strides = array<i32>} : memref<1x16x32xbf16, #tpu.memory_space<vmem>>, vector<1x16x32xbf16>,
    return
  }
  func.func @transform_0(%arg0: i32, %arg1: i32) -> (i32, i32, i32) {
    %c0_i32 = arith.constant 0 : i32
    %c0_i32_0 = arith.constant 0 : i32
    return %arg0, %arg1, %c0_i32 : i32, i32, i32
  }
  func.func @transform_1(%arg0: i32, %arg1: i32) -> (i32, i32, i32) {
    %c0_i32 = arith.constant 0 : i32
    %c0_i32_0 = arith.constant 0 : i32
    return %arg0, %arg1, %c0_i32 : i32, i32, i32
  }
  func.func @transform_2(%arg0: i32, %arg1: i32) -> (i32, i32, i32) {
    %c0_i32 = arith.constant 0 : i32
    %0 = arith.subi %c0_i32, %arg1 : i32
    %c0_i32_0 = arith.constant 0 : i32
    %c0_i32_1 = arith.constant 0 : i32
    return %arg0, %0, %c0_i32_0 : i32, i32, i32
  }
  func.func @transform_3(%arg0: i32, %arg1: i32) -> (i32, i32, i32) {
    %c0_i32 = arith.constant 0 : i32
    %0 = arith.subi %c0_i32, %arg1 : i32
    %c0_i32_0 = arith.constant 0 : i32
    %c0_i32_1 = arith.constant 0 : i32
    return %arg0, %0, %c0_i32_0 : i32, i32, i32
  }
  func.func @transform_4(%arg0: i32, %arg1: i32) -> (i32, i32) {
    %c0_i32 = arith.constant 0 : i32
    %c0_i32_0 = arith.constant 0 : i32
    %c0_i32_1 = arith.constant 0 : i32
    return %c0_i32, %c0_i32_0 : i32, i32
  }
  func.func @transform_5(%arg0: i32, %arg1: i32) -> (i32, i32) {
    %c0_i32 = arith.constant 0 : i32
    %c0_i32_0 = arith.constant 0 : i32
    %c0_i32_1 = arith.constant 0 : i32
    return %c0_i32, %c0_i32_0 : i32, i32
  }
  func.func @transform_6(%arg0: i32, %arg1: i32) -> (i32, i32) {
    %c0_i32 = arith.constant 0 : i32
    %c0_i32_0 = arith.constant 0 : i32
    %c0_i32_1 = arith.constant 0 : i32
    return %c0_i32, %c0_i32_0 : i32, i32
  }
  func.func @transform_7(%arg0: i32, %arg1: i32) -> (i32, i32) {
    %c0_i32 = arith.constant 0 : i32
    %c0_i32_0 = arith.constant 0 : i32
    %c0_i32_1 = arith.constant 0 : i32
    return %c0_i32, %c0_i32_0 : i32, i32
  }
  func.func @transform_8(%arg0: i32, %arg1: i32) -> (i32, i32) {
    %c0_i32 = arith.constant 0 : i32
    %c0_i32_0 = arith.constant 0 : i32
    %c0_i32_1 = arith.constant 0 : i32
    return %c0_i32, %c0_i32_0 : i32, i32
  }
  func.func @transform_9(%arg0: i32, %arg1: i32) -> (i32, i32) {
    %c0_i32 = arith.constant 0 : i32
    %c0_i32_0 = arith.constant 0 : i32
    %c0_i32_1 = arith.constant 0 : i32
    return %c0_i32, %c0_i32_0 : i32, i32
  }
  func.func @transform_10(%arg0: i32, %arg1: i32) -> (i32, i32) {
    %c0_i32 = arith.constant 0 : i32
    %c0_i32_0 = arith.constant 0 : i32
    %c0_i32_1 = arith.constant 0 : i32
    return %c0_i32, %c0_i32_0 : i32, i32
  }
  func.func @transform_11(%arg0: i32, %arg1: i32) -> (i32, i32) {
    %c0_i32 = arith.constant 0 : i32
    %c0_i32_0 = arith.constant 0 : i32
    %c0_i32_1 = arith.constant 0 : i32
    return %c0_i32, %c0_i32_0 : i32, i32
  }
  func.func @transform_12(%arg0: i32, %arg1: i32) -> (i32, i32, i32) {
    %c0_i32 = arith.constant 0 : i32
    %c0_i32_0 = arith.constant 0 : i32
    return %arg0, %arg1, %c0_i32 : i32, i32, i32
  }
  func.func @transform_13(%arg0: i32, %arg1: i32) -> (i32, i32, i32) {
    %c0_i32 = arith.constant 0 : i32
    %0 = arith.subi %c0_i32, %arg1 : i32
    %c0_i32_0 = arith.constant 0 : i32
    %c0_i32_1 = arith.constant 0 : i32
    return %arg0, %0, %c0_i32_0 : i32, i32, i32
  }
}

module attributes {stable_mosaic.version = 11 : i64} {
  func.func @kernel(%arg0: i32, %arg1: i32, %arg2: memref<1x16x16xf32, #tpu.memory_space<vmem>>, %arg3: memref<1x16x16xf32, #tpu.memory_space<vmem>>, %arg4: memref<16x128xbf16, #tpu.memory_space<vmem>>, %arg5: memref<16x128xbf16, #tpu.memory_space<vmem>>, %arg6: memref<1x128xf32, #tpu.memory_space<vmem>>, %arg7: memref<1x128xf32, #tpu.memory_space<vmem>>, %arg8: memref<32x128xbf16, #tpu.memory_space<vmem>>, %arg9: memref<32x128xbf16, #tpu.memory_space<vmem>>, %arg10: memref<1x16x32xbf16, #tpu.memory_space<vmem>>, %arg11: memref<1x16x32xbf16, #tpu.memory_space<vmem>>, %arg12: memref<16x128xf32, #tpu.memory_space<vmem>>, %arg13: memref<16x128xf32, #tpu.memory_space<vmem>>, %arg14: memref<16x32xf32, #tpu.memory_space<vmem>>, %arg15: memref<16x32xf32, #tpu.memory_space<vmem>>, %arg16: memref<2x32xf32, #tpu.memory_space<vmem>>, %arg17: memref<2x32xf32, #tpu.memory_space<vmem>>, %arg18: memref<2x32xf32, #tpu.memory_space<vmem>>, %arg19: memref<2x32xf32, #tpu.memory_space<vmem>>) attributes {dimension_semantics = [#tpu.dimension_semantics<parallel>, #tpu.dimension_semantics<arbitrary>], iteration_bounds = array<i64: 1, 1>, scalar_prefetch = 0 : i64, scratch_operands = 8 : i64, tpu.core_type = #tpu.core_type<tc>, window_params = [{transform_indices = @transform_0, window_bounds = array<i64: 1, 16, 16>}, {transform_indices = @transform_1, window_bounds = array<i64: 1, 16, 16>}, {pipeline_mode = #tpu.pipeline_mode<synchronous>, transform_indices = @transform_2, window_bounds = array<i64: 16, 128>}, {pipeline_mode = #tpu.pipeline_mode<synchronous>, transform_indices = @transform_3, window_bounds = array<i64: 16, 128>}, {pipeline_mode = #tpu.pipeline_mode<synchronous>, transform_indices = @transform_4, window_bounds = array<i64: 1, 128>}, {pipeline_mode = #tpu.pipeline_mode<synchronous>, transform_indices = @transform_5, window_bounds = array<i64: 1, 128>}, {pipeline_mode = #tpu.pipeline_mode<synchronous>, transform_indices = @transform_6, window_bounds = array<i64: 32, 128>}, {pipeline_mode = #tpu.pipeline_mode<synchronous>, transform_indices = @transform_7, window_bounds = array<i64: 32, 128>}, {transform_indices = @transform_8, window_bounds = array<i64: 1, 16, 32>}, {transform_indices = @transform_9, window_bounds = array<i64: 1, 16, 32>}]} {
    %c0_i32 = arith.constant 0 : i32
    %0 = arith.cmpi eq, %arg1, %c0_i32 : i32
    %1 = arith.extui %0 : i1 to i32
    %c0_i32_0 = arith.constant 0 : i32
    %2 = arith.cmpi ne, %1, %c0_i32_0 : i32
    scf.if %2 {
      %cst_294 = arith.constant 0.000000e+00 : f32
      %703 = vector.broadcast %cst_294 : f32 to vector<2x32xf32>
      %c0_295 = arith.constant 0 : index
      %c0_296 = arith.constant 0 : index
      %704 = vector.load %arg16[%c0_295, %c0_296] : memref<2x32xf32, #tpu.memory_space<vmem>>, vector<2x32xf32>
      tpu.vector_store %arg16[%c0_295, %c0_296], %703 {strides = array<i32>} : memref<2x32xf32, #tpu.memory_space<vmem>>, vector<2x32xf32>,
      %cst_297 = arith.constant 0.000000e+00 : f32
      %705 = vector.broadcast %cst_297 : f32 to vector<2x32xf32>
      %c0_298 = arith.constant 0 : index
      %c0_299 = arith.constant 0 : index
      %706 = vector.load %arg17[%c0_298, %c0_299] : memref<2x32xf32, #tpu.memory_space<vmem>>, vector<2x32xf32>
      tpu.vector_store %arg17[%c0_298, %c0_299], %705 {strides = array<i32>} : memref<2x32xf32, #tpu.memory_space<vmem>>, vector<2x32xf32>,
      %cst_300 = arith.constant 0.000000e+00 : f32
      %707 = vector.broadcast %cst_300 : f32 to vector<2x32xf32>
      %c0_301 = arith.constant 0 : index
      %c0_302 = arith.constant 0 : index
      %708 = vector.load %arg18[%c0_301, %c0_302] : memref<2x32xf32, #tpu.memory_space<vmem>>, vector<2x32xf32>
      tpu.vector_store %arg18[%c0_301, %c0_302], %707 {strides = array<i32>} : memref<2x32xf32, #tpu.memory_space<vmem>>, vector<2x32xf32>,
      %cst_303 = arith.constant 0.000000e+00 : f32
      %709 = vector.broadcast %cst_303 : f32 to vector<2x32xf32>
      %c0_304 = arith.constant 0 : index
      %c0_305 = arith.constant 0 : index
      %710 = vector.load %arg19[%c0_304, %c0_305] : memref<2x32xf32, #tpu.memory_space<vmem>>, vector<2x32xf32>
      tpu.vector_store %arg19[%c0_304, %c0_305], %709 {strides = array<i32>} : memref<2x32xf32, #tpu.memory_space<vmem>>, vector<2x32xf32>,
    } else {
    }
    %c0 = arith.constant 0 : index
    %c0_1 = arith.constant 0 : index
    %3 = vector.load %arg6[%c0, %c0_1] : memref<1x128xf32, #tpu.memory_space<vmem>>, vector<1x128xf32>
    %c0_2 = arith.constant 0 : index
    %c0_3 = arith.constant 0 : index
    %c0_4 = arith.constant 0 : index
    %4 = vector.load %arg2[%c0_2, %c0_3, %c0_4] : memref<1x16x16xf32, #tpu.memory_space<vmem>>, vector<1x16x16xf32>
    %5 = vector.shape_cast %4 : vector<1x16x16xf32> to vector<16x16xf32>
    %6 = arith.truncf %5 : vector<16x16xf32> to vector<16x16xbf16>
    %c0_5 = arith.constant 0 : index
    %c0_6 = arith.constant 0 : index
    %7 = vector.load %arg4[%c0_5, %c0_6] : memref<16x128xbf16, #tpu.memory_space<vmem>>, vector<16x128xbf16>
    %cst = arith.constant dense<0.000000e+00> : vector<16x128xf32>
    %8 = tpu.matmul %6, %7, %cst {dimension_numbers = #tpu.dot_dimension_numbers<[1], [0], [0], [1], [0, 0, 1, 1], [], []>} : vector<16x16xbf16>, vector<16x128xbf16>, vector<16x128xf32> -> vector<16x128xf32>
    %9 = vector.broadcast %3 : vector<1x128xf32> to vector<16x128xf32>
    %10 = arith.addf %9, %8 : vector<16x128xf32>
    %c0_7 = arith.constant 0 : index
    %c0_8 = arith.constant 0 : index
    %11 = vector.load %arg12[%c0_7, %c0_8] : memref<16x128xf32, #tpu.memory_space<vmem>>, vector<16x128xf32>
    tpu.vector_store %arg12[%c0_7, %c0_8], %10 {strides = array<i32>} : memref<16x128xf32, #tpu.memory_space<vmem>>, vector<16x128xf32>,
    %c0_9 = arith.constant 0 : index
    %c0_10 = arith.constant 0 : index
    %12 = vector.load %arg7[%c0_9, %c0_10] : memref<1x128xf32, #tpu.memory_space<vmem>>, vector<1x128xf32>
    %c0_11 = arith.constant 0 : index
    %c0_12 = arith.constant 0 : index
    %c0_13 = arith.constant 0 : index
    %13 = vector.load %arg3[%c0_11, %c0_12, %c0_13] : memref<1x16x16xf32, #tpu.memory_space<vmem>>, vector<1x16x16xf32>
    %14 = vector.shape_cast %13 : vector<1x16x16xf32> to vector<16x16xf32>
    %15 = arith.truncf %14 : vector<16x16xf32> to vector<16x16xbf16>
    %c0_14 = arith.constant 0 : index
    %c0_15 = arith.constant 0 : index
    %16 = vector.load %arg5[%c0_14, %c0_15] : memref<16x128xbf16, #tpu.memory_space<vmem>>, vector<16x128xbf16>
    %cst_16 = arith.constant dense<0.000000e+00> : vector<16x128xf32>
    %17 = tpu.matmul %15, %16, %cst_16 {dimension_numbers = #tpu.dot_dimension_numbers<[1], [0], [0], [1], [0, 0, 1, 1], [], []>} : vector<16x16xbf16>, vector<16x128xbf16>, vector<16x128xf32> -> vector<16x128xf32>
    %18 = vector.broadcast %12 : vector<1x128xf32> to vector<16x128xf32>
    %19 = arith.addf %18, %17 : vector<16x128xf32>
    %c0_17 = arith.constant 0 : index
    %c0_18 = arith.constant 0 : index
    %20 = vector.load %arg13[%c0_17, %c0_18] : memref<16x128xf32, #tpu.memory_space<vmem>>, vector<16x128xf32>
    tpu.vector_store %arg13[%c0_17, %c0_18], %19 {strides = array<i32>} : memref<16x128xf32, #tpu.memory_space<vmem>>, vector<16x128xf32>,
    %c0_19 = arith.constant 0 : index
    %c0_20 = arith.constant 0 : index
    %21 = vector.load %arg16[%c0_19, %c0_20] : memref<2x32xf32, #tpu.memory_space<vmem>>, vector<2x32xf32>
    %c0_21 = arith.constant 0 : index
    %c0_22 = arith.constant 0 : index
    %22 = vector.load %arg17[%c0_21, %c0_22] : memref<2x32xf32, #tpu.memory_space<vmem>>, vector<2x32xf32>
    %c0_23 = arith.constant 0 : index
    %c0_24 = arith.constant 0 : index
    %23 = vector.load %arg18[%c0_23, %c0_24] : memref<2x32xf32, #tpu.memory_space<vmem>>, vector<2x32xf32>
    %c0_25 = arith.constant 0 : index
    %c0_26 = arith.constant 0 : index
    %24 = vector.load %arg19[%c0_25, %c0_26] : memref<2x32xf32, #tpu.memory_space<vmem>>, vector<2x32xf32>
    %c0_i32_27 = arith.constant 0 : i32
    %c2_i32 = arith.constant 2 : i32
    %25 = arith.muli %c0_i32_27, %c2_i32 : i32
    %26 = tpu.assume_multiple %25, 2 : i32
    %27 = arith.index_cast %26 : i32 to index
    %c0_28 = arith.constant 0 : index
    %28 = vector.load %arg12[%27, %c0_28] : memref<16x128xf32, #tpu.memory_space<vmem>>, vector<2x128xf32>
    %29 = arith.truncf %21 : vector<2x32xf32> to vector<2x32xbf16>
    %c0_29 = arith.constant 0 : index
    %c0_30 = arith.constant 0 : index
    %30 = vector.load %arg8[%c0_29, %c0_30] : memref<32x128xbf16, #tpu.memory_space<vmem>>, vector<32x128xbf16>
    %cst_31 = arith.constant dense<0.000000e+00> : vector<2x128xf32>
    %31 = tpu.matmul %29, %30, %cst_31 {dimension_numbers = #tpu.dot_dimension_numbers<[1], [0], [0], [1], [0, 0, 1, 1], [], []>} : vector<2x32xbf16>, vector<32x128xbf16>, vector<2x128xf32> -> vector<2x128xf32>
    %32 = arith.addf %28, %31 : vector<2x128xf32>
    %33 = vector.extract_strided_slice %32 {offsets = [0, 0], sizes = [2, 32], strides = [1, 1]} : vector<2x128xf32> to vector<2x32xf32>
    %cst_32 = arith.constant 5.000000e-01 : f32
    %34 = vector.broadcast %cst_32 : f32 to vector<2x32xf32>
    %35 = arith.mulf %34, %33 : vector<2x32xf32>
    %36 = math.tanh %35 : vector<2x32xf32>
    %cst_33 = arith.constant 5.000000e-01 : f32
    %37 = vector.broadcast %cst_33 : f32 to vector<2x32xf32>
    %38 = arith.mulf %37, %36 : vector<2x32xf32>
    %cst_34 = arith.constant 5.000000e-01 : f32
    %39 = vector.broadcast %cst_34 : f32 to vector<2x32xf32>
    %40 = arith.addf %38, %39 : vector<2x32xf32>
    %41 = vector.extract_strided_slice %32 {offsets = [0, 32], sizes = [2, 32], strides = [1, 1]} : vector<2x128xf32> to vector<2x32xf32>
    %cst_35 = arith.constant 5.000000e-01 : f32
    %42 = vector.broadcast %cst_35 : f32 to vector<2x32xf32>
    %43 = arith.mulf %42, %41 : vector<2x32xf32>
    %44 = math.tanh %43 : vector<2x32xf32>
    %cst_36 = arith.constant 5.000000e-01 : f32
    %45 = vector.broadcast %cst_36 : f32 to vector<2x32xf32>
    %46 = arith.mulf %45, %44 : vector<2x32xf32>
    %cst_37 = arith.constant 5.000000e-01 : f32
    %47 = vector.broadcast %cst_37 : f32 to vector<2x32xf32>
    %48 = arith.addf %46, %47 : vector<2x32xf32>
    %49 = vector.extract_strided_slice %32 {offsets = [0, 64], sizes = [2, 32], strides = [1, 1]} : vector<2x128xf32> to vector<2x32xf32>
    %50 = math.tanh %49 : vector<2x32xf32>
    %51 = vector.extract_strided_slice %32 {offsets = [0, 96], sizes = [2, 32], strides = [1, 1]} : vector<2x128xf32> to vector<2x32xf32>
    %cst_38 = arith.constant 5.000000e-01 : f32
    %52 = vector.broadcast %cst_38 : f32 to vector<2x32xf32>
    %53 = arith.mulf %52, %51 : vector<2x32xf32>
    %54 = math.tanh %53 : vector<2x32xf32>
    %cst_39 = arith.constant 5.000000e-01 : f32
    %55 = vector.broadcast %cst_39 : f32 to vector<2x32xf32>
    %56 = arith.mulf %55, %54 : vector<2x32xf32>
    %cst_40 = arith.constant 5.000000e-01 : f32
    %57 = vector.broadcast %cst_40 : f32 to vector<2x32xf32>
    %58 = arith.addf %56, %57 : vector<2x32xf32>
    %59 = arith.mulf %48, %22 : vector<2x32xf32>
    %60 = arith.mulf %40, %50 : vector<2x32xf32>
    %61 = arith.addf %59, %60 : vector<2x32xf32>
    %62 = math.tanh %61 : vector<2x32xf32>
    %63 = arith.mulf %58, %62 : vector<2x32xf32>
    %64 = arith.index_cast %26 : i32 to index
    %c0_41 = arith.constant 0 : index
    %65 = vector.load %arg14[%64, %c0_41] : memref<16x32xf32, #tpu.memory_space<vmem>>, vector<2x32xf32>
    tpu.vector_store %arg14[%64, %c0_41], %63 {strides = array<i32>} : memref<16x32xf32, #tpu.memory_space<vmem>>, vector<2x32xf32>,
    %c7_i32 = arith.constant 7 : i32
    %66 = arith.subi %c7_i32, %c0_i32_27 : i32
    %c2_i32_42 = arith.constant 2 : i32
    %67 = arith.muli %66, %c2_i32_42 : i32
    %68 = tpu.assume_multiple %67, 2 : i32
    %69 = arith.index_cast %68 : i32 to index
    %c0_43 = arith.constant 0 : index
    %70 = vector.load %arg13[%69, %c0_43] : memref<16x128xf32, #tpu.memory_space<vmem>>, vector<2x128xf32>
    %71 = arith.truncf %23 : vector<2x32xf32> to vector<2x32xbf16>
    %c0_44 = arith.constant 0 : index
    %c0_45 = arith.constant 0 : index
    %72 = vector.load %arg9[%c0_44, %c0_45] : memref<32x128xbf16, #tpu.memory_space<vmem>>, vector<32x128xbf16>
    %cst_46 = arith.constant dense<0.000000e+00> : vector<2x128xf32>
    %73 = tpu.matmul %71, %72, %cst_46 {dimension_numbers = #tpu.dot_dimension_numbers<[1], [0], [0], [1], [0, 0, 1, 1], [], []>} : vector<2x32xbf16>, vector<32x128xbf16>, vector<2x128xf32> -> vector<2x128xf32>
    %74 = arith.addf %70, %73 : vector<2x128xf32>
    %75 = vector.extract_strided_slice %74 {offsets = [0, 0], sizes = [2, 32], strides = [1, 1]} : vector<2x128xf32> to vector<2x32xf32>
    %cst_47 = arith.constant 5.000000e-01 : f32
    %76 = vector.broadcast %cst_47 : f32 to vector<2x32xf32>
    %77 = arith.mulf %76, %75 : vector<2x32xf32>
    %78 = math.tanh %77 : vector<2x32xf32>
    %cst_48 = arith.constant 5.000000e-01 : f32
    %79 = vector.broadcast %cst_48 : f32 to vector<2x32xf32>
    %80 = arith.mulf %79, %78 : vector<2x32xf32>
    %cst_49 = arith.constant 5.000000e-01 : f32
    %81 = vector.broadcast %cst_49 : f32 to vector<2x32xf32>
    %82 = arith.addf %80, %81 : vector<2x32xf32>
    %83 = vector.extract_strided_slice %74 {offsets = [0, 32], sizes = [2, 32], strides = [1, 1]} : vector<2x128xf32> to vector<2x32xf32>
    %cst_50 = arith.constant 5.000000e-01 : f32
    %84 = vector.broadcast %cst_50 : f32 to vector<2x32xf32>
    %85 = arith.mulf %84, %83 : vector<2x32xf32>
    %86 = math.tanh %85 : vector<2x32xf32>
    %cst_51 = arith.constant 5.000000e-01 : f32
    %87 = vector.broadcast %cst_51 : f32 to vector<2x32xf32>
    %88 = arith.mulf %87, %86 : vector<2x32xf32>
    %cst_52 = arith.constant 5.000000e-01 : f32
    %89 = vector.broadcast %cst_52 : f32 to vector<2x32xf32>
    %90 = arith.addf %88, %89 : vector<2x32xf32>
    %91 = vector.extract_strided_slice %74 {offsets = [0, 64], sizes = [2, 32], strides = [1, 1]} : vector<2x128xf32> to vector<2x32xf32>
    %92 = math.tanh %91 : vector<2x32xf32>
    %93 = vector.extract_strided_slice %74 {offsets = [0, 96], sizes = [2, 32], strides = [1, 1]} : vector<2x128xf32> to vector<2x32xf32>
    %cst_53 = arith.constant 5.000000e-01 : f32
    %94 = vector.broadcast %cst_53 : f32 to vector<2x32xf32>
    %95 = arith.mulf %94, %93 : vector<2x32xf32>
    %96 = math.tanh %95 : vector<2x32xf32>
    %cst_54 = arith.constant 5.000000e-01 : f32
    %97 = vector.broadcast %cst_54 : f32 to vector<2x32xf32>
    %98 = arith.mulf %97, %96 : vector<2x32xf32>
    %cst_55 = arith.constant 5.000000e-01 : f32
    %99 = vector.broadcast %cst_55 : f32 to vector<2x32xf32>
    %100 = arith.addf %98, %99 : vector<2x32xf32>
    %101 = arith.mulf %90, %24 : vector<2x32xf32>
    %102 = arith.mulf %82, %92 : vector<2x32xf32>
    %103 = arith.addf %101, %102 : vector<2x32xf32>
    %104 = math.tanh %103 : vector<2x32xf32>
    %105 = arith.mulf %100, %104 : vector<2x32xf32>
    %106 = arith.index_cast %68 : i32 to index
    %c0_56 = arith.constant 0 : index
    %107 = vector.load %arg15[%106, %c0_56] : memref<16x32xf32, #tpu.memory_space<vmem>>, vector<2x32xf32>
    tpu.vector_store %arg15[%106, %c0_56], %105 {strides = array<i32>} : memref<16x32xf32, #tpu.memory_space<vmem>>, vector<2x32xf32>,
    %c1_i32 = arith.constant 1 : i32
    %c2_i32_57 = arith.constant 2 : i32
    %108 = arith.muli %c1_i32, %c2_i32_57 : i32
    %109 = tpu.assume_multiple %108, 2 : i32
    %110 = arith.index_cast %109 : i32 to index
    %c0_58 = arith.constant 0 : index
    %111 = vector.load %arg12[%110, %c0_58] : memref<16x128xf32, #tpu.memory_space<vmem>>, vector<2x128xf32>
    %112 = arith.truncf %63 : vector<2x32xf32> to vector<2x32xbf16>
    %c0_59 = arith.constant 0 : index
    %c0_60 = arith.constant 0 : index
    %113 = vector.load %arg8[%c0_59, %c0_60] : memref<32x128xbf16, #tpu.memory_space<vmem>>, vector<32x128xbf16>
    %cst_61 = arith.constant dense<0.000000e+00> : vector<2x128xf32>
    %114 = tpu.matmul %112, %113, %cst_61 {dimension_numbers = #tpu.dot_dimension_numbers<[1], [0], [0], [1], [0, 0, 1, 1], [], []>} : vector<2x32xbf16>, vector<32x128xbf16>, vector<2x128xf32> -> vector<2x128xf32>
    %115 = arith.addf %111, %114 : vector<2x128xf32>
    %116 = vector.extract_strided_slice %115 {offsets = [0, 0], sizes = [2, 32], strides = [1, 1]} : vector<2x128xf32> to vector<2x32xf32>
    %cst_62 = arith.constant 5.000000e-01 : f32
    %117 = vector.broadcast %cst_62 : f32 to vector<2x32xf32>
    %118 = arith.mulf %117, %116 : vector<2x32xf32>
    %119 = math.tanh %118 : vector<2x32xf32>
    %cst_63 = arith.constant 5.000000e-01 : f32
    %120 = vector.broadcast %cst_63 : f32 to vector<2x32xf32>
    %121 = arith.mulf %120, %119 : vector<2x32xf32>
    %cst_64 = arith.constant 5.000000e-01 : f32
    %122 = vector.broadcast %cst_64 : f32 to vector<2x32xf32>
    %123 = arith.addf %121, %122 : vector<2x32xf32>
    %124 = vector.extract_strided_slice %115 {offsets = [0, 32], sizes = [2, 32], strides = [1, 1]} : vector<2x128xf32> to vector<2x32xf32>
    %cst_65 = arith.constant 5.000000e-01 : f32
    %125 = vector.broadcast %cst_65 : f32 to vector<2x32xf32>
    %126 = arith.mulf %125, %124 : vector<2x32xf32>
    %127 = math.tanh %126 : vector<2x32xf32>
    %cst_66 = arith.constant 5.000000e-01 : f32
    %128 = vector.broadcast %cst_66 : f32 to vector<2x32xf32>
    %129 = arith.mulf %128, %127 : vector<2x32xf32>
    %cst_67 = arith.constant 5.000000e-01 : f32
    %130 = vector.broadcast %cst_67 : f32 to vector<2x32xf32>
    %131 = arith.addf %129, %130 : vector<2x32xf32>
    %132 = vector.extract_strided_slice %115 {offsets = [0, 64], sizes = [2, 32], strides = [1, 1]} : vector<2x128xf32> to vector<2x32xf32>
    %133 = math.tanh %132 : vector<2x32xf32>
    %134 = vector.extract_strided_slice %115 {offsets = [0, 96], sizes = [2, 32], strides = [1, 1]} : vector<2x128xf32> to vector<2x32xf32>
    %cst_68 = arith.constant 5.000000e-01 : f32
    %135 = vector.broadcast %cst_68 : f32 to vector<2x32xf32>
    %136 = arith.mulf %135, %134 : vector<2x32xf32>
    %137 = math.tanh %136 : vector<2x32xf32>
    %cst_69 = arith.constant 5.000000e-01 : f32
    %138 = vector.broadcast %cst_69 : f32 to vector<2x32xf32>
    %139 = arith.mulf %138, %137 : vector<2x32xf32>
    %cst_70 = arith.constant 5.000000e-01 : f32
    %140 = vector.broadcast %cst_70 : f32 to vector<2x32xf32>
    %141 = arith.addf %139, %140 : vector<2x32xf32>
    %142 = arith.mulf %131, %61 : vector<2x32xf32>
    %143 = arith.mulf %123, %133 : vector<2x32xf32>
    %144 = arith.addf %142, %143 : vector<2x32xf32>
    %145 = math.tanh %144 : vector<2x32xf32>
    %146 = arith.mulf %141, %145 : vector<2x32xf32>
    %147 = arith.index_cast %109 : i32 to index
    %c0_71 = arith.constant 0 : index
    %148 = vector.load %arg14[%147, %c0_71] : memref<16x32xf32, #tpu.memory_space<vmem>>, vector<2x32xf32>
    tpu.vector_store %arg14[%147, %c0_71], %146 {strides = array<i32>} : memref<16x32xf32, #tpu.memory_space<vmem>>, vector<2x32xf32>,
    %c7_i32_72 = arith.constant 7 : i32
    %149 = arith.subi %c7_i32_72, %c1_i32 : i32
    %c2_i32_73 = arith.constant 2 : i32
    %150 = arith.muli %149, %c2_i32_73 : i32
    %151 = tpu.assume_multiple %150, 2 : i32
    %152 = arith.index_cast %151 : i32 to index
    %c0_74 = arith.constant 0 : index
    %153 = vector.load %arg13[%152, %c0_74] : memref<16x128xf32, #tpu.memory_space<vmem>>, vector<2x128xf32>
    %154 = arith.truncf %105 : vector<2x32xf32> to vector<2x32xbf16>
    %c0_75 = arith.constant 0 : index
    %c0_76 = arith.constant 0 : index
    %155 = vector.load %arg9[%c0_75, %c0_76] : memref<32x128xbf16, #tpu.memory_space<vmem>>, vector<32x128xbf16>
    %cst_77 = arith.constant dense<0.000000e+00> : vector<2x128xf32>
    %156 = tpu.matmul %154, %155, %cst_77 {dimension_numbers = #tpu.dot_dimension_numbers<[1], [0], [0], [1], [0, 0, 1, 1], [], []>} : vector<2x32xbf16>, vector<32x128xbf16>, vector<2x128xf32> -> vector<2x128xf32>
    %157 = arith.addf %153, %156 : vector<2x128xf32>
    %158 = vector.extract_strided_slice %157 {offsets = [0, 0], sizes = [2, 32], strides = [1, 1]} : vector<2x128xf32> to vector<2x32xf32>
    %cst_78 = arith.constant 5.000000e-01 : f32
    %159 = vector.broadcast %cst_78 : f32 to vector<2x32xf32>
    %160 = arith.mulf %159, %158 : vector<2x32xf32>
    %161 = math.tanh %160 : vector<2x32xf32>
    %cst_79 = arith.constant 5.000000e-01 : f32
    %162 = vector.broadcast %cst_79 : f32 to vector<2x32xf32>
    %163 = arith.mulf %162, %161 : vector<2x32xf32>
    %cst_80 = arith.constant 5.000000e-01 : f32
    %164 = vector.broadcast %cst_80 : f32 to vector<2x32xf32>
    %165 = arith.addf %163, %164 : vector<2x32xf32>
    %166 = vector.extract_strided_slice %157 {offsets = [0, 32], sizes = [2, 32], strides = [1, 1]} : vector<2x128xf32> to vector<2x32xf32>
    %cst_81 = arith.constant 5.000000e-01 : f32
    %167 = vector.broadcast %cst_81 : f32 to vector<2x32xf32>
    %168 = arith.mulf %167, %166 : vector<2x32xf32>
    %169 = math.tanh %168 : vector<2x32xf32>
    %cst_82 = arith.constant 5.000000e-01 : f32
    %170 = vector.broadcast %cst_82 : f32 to vector<2x32xf32>
    %171 = arith.mulf %170, %169 : vector<2x32xf32>
    %cst_83 = arith.constant 5.000000e-01 : f32
    %172 = vector.broadcast %cst_83 : f32 to vector<2x32xf32>
    %173 = arith.addf %171, %172 : vector<2x32xf32>
    %174 = vector.extract_strided_slice %157 {offsets = [0, 64], sizes = [2, 32], strides = [1, 1]} : vector<2x128xf32> to vector<2x32xf32>
    %175 = math.tanh %174 : vector<2x32xf32>
    %176 = vector.extract_strided_slice %157 {offsets = [0, 96], sizes = [2, 32], strides = [1, 1]} : vector<2x128xf32> to vector<2x32xf32>
    %cst_84 = arith.constant 5.000000e-01 : f32
    %177 = vector.broadcast %cst_84 : f32 to vector<2x32xf32>
    %178 = arith.mulf %177, %176 : vector<2x32xf32>
    %179 = math.tanh %178 : vector<2x32xf32>
    %cst_85 = arith.constant 5.000000e-01 : f32
    %180 = vector.broadcast %cst_85 : f32 to vector<2x32xf32>
    %181 = arith.mulf %180, %179 : vector<2x32xf32>
    %cst_86 = arith.constant 5.000000e-01 : f32
    %182 = vector.broadcast %cst_86 : f32 to vector<2x32xf32>
    %183 = arith.addf %181, %182 : vector<2x32xf32>
    %184 = arith.mulf %173, %103 : vector<2x32xf32>
    %185 = arith.mulf %165, %175 : vector<2x32xf32>
    %186 = arith.addf %184, %185 : vector<2x32xf32>
    %187 = math.tanh %186 : vector<2x32xf32>
    %188 = arith.mulf %183, %187 : vector<2x32xf32>
    %189 = arith.index_cast %151 : i32 to index
    %c0_87 = arith.constant 0 : index
    %190 = vector.load %arg15[%189, %c0_87] : memref<16x32xf32, #tpu.memory_space<vmem>>, vector<2x32xf32>
    tpu.vector_store %arg15[%189, %c0_87], %188 {strides = array<i32>} : memref<16x32xf32, #tpu.memory_space<vmem>>, vector<2x32xf32>,
    %c2_i32_88 = arith.constant 2 : i32
    %c2_i32_89 = arith.constant 2 : i32
    %191 = arith.muli %c2_i32_88, %c2_i32_89 : i32
    %192 = tpu.assume_multiple %191, 2 : i32
    %193 = arith.index_cast %192 : i32 to index
    %c0_90 = arith.constant 0 : index
    %194 = vector.load %arg12[%193, %c0_90] : memref<16x128xf32, #tpu.memory_space<vmem>>, vector<2x128xf32>
    %195 = arith.truncf %146 : vector<2x32xf32> to vector<2x32xbf16>
    %c0_91 = arith.constant 0 : index
    %c0_92 = arith.constant 0 : index
    %196 = vector.load %arg8[%c0_91, %c0_92] : memref<32x128xbf16, #tpu.memory_space<vmem>>, vector<32x128xbf16>
    %cst_93 = arith.constant dense<0.000000e+00> : vector<2x128xf32>
    %197 = tpu.matmul %195, %196, %cst_93 {dimension_numbers = #tpu.dot_dimension_numbers<[1], [0], [0], [1], [0, 0, 1, 1], [], []>} : vector<2x32xbf16>, vector<32x128xbf16>, vector<2x128xf32> -> vector<2x128xf32>
    %198 = arith.addf %194, %197 : vector<2x128xf32>
    %199 = vector.extract_strided_slice %198 {offsets = [0, 0], sizes = [2, 32], strides = [1, 1]} : vector<2x128xf32> to vector<2x32xf32>
    %cst_94 = arith.constant 5.000000e-01 : f32
    %200 = vector.broadcast %cst_94 : f32 to vector<2x32xf32>
    %201 = arith.mulf %200, %199 : vector<2x32xf32>
    %202 = math.tanh %201 : vector<2x32xf32>
    %cst_95 = arith.constant 5.000000e-01 : f32
    %203 = vector.broadcast %cst_95 : f32 to vector<2x32xf32>
    %204 = arith.mulf %203, %202 : vector<2x32xf32>
    %cst_96 = arith.constant 5.000000e-01 : f32
    %205 = vector.broadcast %cst_96 : f32 to vector<2x32xf32>
    %206 = arith.addf %204, %205 : vector<2x32xf32>
    %207 = vector.extract_strided_slice %198 {offsets = [0, 32], sizes = [2, 32], strides = [1, 1]} : vector<2x128xf32> to vector<2x32xf32>
    %cst_97 = arith.constant 5.000000e-01 : f32
    %208 = vector.broadcast %cst_97 : f32 to vector<2x32xf32>
    %209 = arith.mulf %208, %207 : vector<2x32xf32>
    %210 = math.tanh %209 : vector<2x32xf32>
    %cst_98 = arith.constant 5.000000e-01 : f32
    %211 = vector.broadcast %cst_98 : f32 to vector<2x32xf32>
    %212 = arith.mulf %211, %210 : vector<2x32xf32>
    %cst_99 = arith.constant 5.000000e-01 : f32
    %213 = vector.broadcast %cst_99 : f32 to vector<2x32xf32>
    %214 = arith.addf %212, %213 : vector<2x32xf32>
    %215 = vector.extract_strided_slice %198 {offsets = [0, 64], sizes = [2, 32], strides = [1, 1]} : vector<2x128xf32> to vector<2x32xf32>
    %216 = math.tanh %215 : vector<2x32xf32>
    %217 = vector.extract_strided_slice %198 {offsets = [0, 96], sizes = [2, 32], strides = [1, 1]} : vector<2x128xf32> to vector<2x32xf32>
    %cst_100 = arith.constant 5.000000e-01 : f32
    %218 = vector.broadcast %cst_100 : f32 to vector<2x32xf32>
    %219 = arith.mulf %218, %217 : vector<2x32xf32>
    %220 = math.tanh %219 : vector<2x32xf32>
    %cst_101 = arith.constant 5.000000e-01 : f32
    %221 = vector.broadcast %cst_101 : f32 to vector<2x32xf32>
    %222 = arith.mulf %221, %220 : vector<2x32xf32>
    %cst_102 = arith.constant 5.000000e-01 : f32
    %223 = vector.broadcast %cst_102 : f32 to vector<2x32xf32>
    %224 = arith.addf %222, %223 : vector<2x32xf32>
    %225 = arith.mulf %214, %144 : vector<2x32xf32>
    %226 = arith.mulf %206, %216 : vector<2x32xf32>
    %227 = arith.addf %225, %226 : vector<2x32xf32>
    %228 = math.tanh %227 : vector<2x32xf32>
    %229 = arith.mulf %224, %228 : vector<2x32xf32>
    %230 = arith.index_cast %192 : i32 to index
    %c0_103 = arith.constant 0 : index
    %231 = vector.load %arg14[%230, %c0_103] : memref<16x32xf32, #tpu.memory_space<vmem>>, vector<2x32xf32>
    tpu.vector_store %arg14[%230, %c0_103], %229 {strides = array<i32>} : memref<16x32xf32, #tpu.memory_space<vmem>>, vector<2x32xf32>,
    %c7_i32_104 = arith.constant 7 : i32
    %232 = arith.subi %c7_i32_104, %c2_i32_88 : i32
    %c2_i32_105 = arith.constant 2 : i32
    %233 = arith.muli %232, %c2_i32_105 : i32
    %234 = tpu.assume_multiple %233, 2 : i32
    %235 = arith.index_cast %234 : i32 to index
    %c0_106 = arith.constant 0 : index
    %236 = vector.load %arg13[%235, %c0_106] : memref<16x128xf32, #tpu.memory_space<vmem>>, vector<2x128xf32>
    %237 = arith.truncf %188 : vector<2x32xf32> to vector<2x32xbf16>
    %c0_107 = arith.constant 0 : index
    %c0_108 = arith.constant 0 : index
    %238 = vector.load %arg9[%c0_107, %c0_108] : memref<32x128xbf16, #tpu.memory_space<vmem>>, vector<32x128xbf16>
    %cst_109 = arith.constant dense<0.000000e+00> : vector<2x128xf32>
    %239 = tpu.matmul %237, %238, %cst_109 {dimension_numbers = #tpu.dot_dimension_numbers<[1], [0], [0], [1], [0, 0, 1, 1], [], []>} : vector<2x32xbf16>, vector<32x128xbf16>, vector<2x128xf32> -> vector<2x128xf32>
    %240 = arith.addf %236, %239 : vector<2x128xf32>
    %241 = vector.extract_strided_slice %240 {offsets = [0, 0], sizes = [2, 32], strides = [1, 1]} : vector<2x128xf32> to vector<2x32xf32>
    %cst_110 = arith.constant 5.000000e-01 : f32
    %242 = vector.broadcast %cst_110 : f32 to vector<2x32xf32>
    %243 = arith.mulf %242, %241 : vector<2x32xf32>
    %244 = math.tanh %243 : vector<2x32xf32>
    %cst_111 = arith.constant 5.000000e-01 : f32
    %245 = vector.broadcast %cst_111 : f32 to vector<2x32xf32>
    %246 = arith.mulf %245, %244 : vector<2x32xf32>
    %cst_112 = arith.constant 5.000000e-01 : f32
    %247 = vector.broadcast %cst_112 : f32 to vector<2x32xf32>
    %248 = arith.addf %246, %247 : vector<2x32xf32>
    %249 = vector.extract_strided_slice %240 {offsets = [0, 32], sizes = [2, 32], strides = [1, 1]} : vector<2x128xf32> to vector<2x32xf32>
    %cst_113 = arith.constant 5.000000e-01 : f32
    %250 = vector.broadcast %cst_113 : f32 to vector<2x32xf32>
    %251 = arith.mulf %250, %249 : vector<2x32xf32>
    %252 = math.tanh %251 : vector<2x32xf32>
    %cst_114 = arith.constant 5.000000e-01 : f32
    %253 = vector.broadcast %cst_114 : f32 to vector<2x32xf32>
    %254 = arith.mulf %253, %252 : vector<2x32xf32>
    %cst_115 = arith.constant 5.000000e-01 : f32
    %255 = vector.broadcast %cst_115 : f32 to vector<2x32xf32>
    %256 = arith.addf %254, %255 : vector<2x32xf32>
    %257 = vector.extract_strided_slice %240 {offsets = [0, 64], sizes = [2, 32], strides = [1, 1]} : vector<2x128xf32> to vector<2x32xf32>
    %258 = math.tanh %257 : vector<2x32xf32>
    %259 = vector.extract_strided_slice %240 {offsets = [0, 96], sizes = [2, 32], strides = [1, 1]} : vector<2x128xf32> to vector<2x32xf32>
    %cst_116 = arith.constant 5.000000e-01 : f32
    %260 = vector.broadcast %cst_116 : f32 to vector<2x32xf32>
    %261 = arith.mulf %260, %259 : vector<2x32xf32>
    %262 = math.tanh %261 : vector<2x32xf32>
    %cst_117 = arith.constant 5.000000e-01 : f32
    %263 = vector.broadcast %cst_117 : f32 to vector<2x32xf32>
    %264 = arith.mulf %263, %262 : vector<2x32xf32>
    %cst_118 = arith.constant 5.000000e-01 : f32
    %265 = vector.broadcast %cst_118 : f32 to vector<2x32xf32>
    %266 = arith.addf %264, %265 : vector<2x32xf32>
    %267 = arith.mulf %256, %186 : vector<2x32xf32>
    %268 = arith.mulf %248, %258 : vector<2x32xf32>
    %269 = arith.addf %267, %268 : vector<2x32xf32>
    %270 = math.tanh %269 : vector<2x32xf32>
    %271 = arith.mulf %266, %270 : vector<2x32xf32>
    %272 = arith.index_cast %234 : i32 to index
    %c0_119 = arith.constant 0 : index
    %273 = vector.load %arg15[%272, %c0_119] : memref<16x32xf32, #tpu.memory_space<vmem>>, vector<2x32xf32>
    tpu.vector_store %arg15[%272, %c0_119], %271 {strides = array<i32>} : memref<16x32xf32, #tpu.memory_space<vmem>>, vector<2x32xf32>,
    %c3_i32 = arith.constant 3 : i32
    %c2_i32_120 = arith.constant 2 : i32
    %274 = arith.muli %c3_i32, %c2_i32_120 : i32
    %275 = tpu.assume_multiple %274, 2 : i32
    %276 = arith.index_cast %275 : i32 to index
    %c0_121 = arith.constant 0 : index
    %277 = vector.load %arg12[%276, %c0_121] : memref<16x128xf32, #tpu.memory_space<vmem>>, vector<2x128xf32>
    %278 = arith.truncf %229 : vector<2x32xf32> to vector<2x32xbf16>
    %c0_122 = arith.constant 0 : index
    %c0_123 = arith.constant 0 : index
    %279 = vector.load %arg8[%c0_122, %c0_123] : memref<32x128xbf16, #tpu.memory_space<vmem>>, vector<32x128xbf16>
    %cst_124 = arith.constant dense<0.000000e+00> : vector<2x128xf32>
    %280 = tpu.matmul %278, %279, %cst_124 {dimension_numbers = #tpu.dot_dimension_numbers<[1], [0], [0], [1], [0, 0, 1, 1], [], []>} : vector<2x32xbf16>, vector<32x128xbf16>, vector<2x128xf32> -> vector<2x128xf32>
    %281 = arith.addf %277, %280 : vector<2x128xf32>
    %282 = vector.extract_strided_slice %281 {offsets = [0, 0], sizes = [2, 32], strides = [1, 1]} : vector<2x128xf32> to vector<2x32xf32>
    %cst_125 = arith.constant 5.000000e-01 : f32
    %283 = vector.broadcast %cst_125 : f32 to vector<2x32xf32>
    %284 = arith.mulf %283, %282 : vector<2x32xf32>
    %285 = math.tanh %284 : vector<2x32xf32>
    %cst_126 = arith.constant 5.000000e-01 : f32
    %286 = vector.broadcast %cst_126 : f32 to vector<2x32xf32>
    %287 = arith.mulf %286, %285 : vector<2x32xf32>
    %cst_127 = arith.constant 5.000000e-01 : f32
    %288 = vector.broadcast %cst_127 : f32 to vector<2x32xf32>
    %289 = arith.addf %287, %288 : vector<2x32xf32>
    %290 = vector.extract_strided_slice %281 {offsets = [0, 32], sizes = [2, 32], strides = [1, 1]} : vector<2x128xf32> to vector<2x32xf32>
    %cst_128 = arith.constant 5.000000e-01 : f32
    %291 = vector.broadcast %cst_128 : f32 to vector<2x32xf32>
    %292 = arith.mulf %291, %290 : vector<2x32xf32>
    %293 = math.tanh %292 : vector<2x32xf32>
    %cst_129 = arith.constant 5.000000e-01 : f32
    %294 = vector.broadcast %cst_129 : f32 to vector<2x32xf32>
    %295 = arith.mulf %294, %293 : vector<2x32xf32>
    %cst_130 = arith.constant 5.000000e-01 : f32
    %296 = vector.broadcast %cst_130 : f32 to vector<2x32xf32>
    %297 = arith.addf %295, %296 : vector<2x32xf32>
    %298 = vector.extract_strided_slice %281 {offsets = [0, 64], sizes = [2, 32], strides = [1, 1]} : vector<2x128xf32> to vector<2x32xf32>
    %299 = math.tanh %298 : vector<2x32xf32>
    %300 = vector.extract_strided_slice %281 {offsets = [0, 96], sizes = [2, 32], strides = [1, 1]} : vector<2x128xf32> to vector<2x32xf32>
    %cst_131 = arith.constant 5.000000e-01 : f32
    %301 = vector.broadcast %cst_131 : f32 to vector<2x32xf32>
    %302 = arith.mulf %301, %300 : vector<2x32xf32>
    %303 = math.tanh %302 : vector<2x32xf32>
    %cst_132 = arith.constant 5.000000e-01 : f32
    %304 = vector.broadcast %cst_132 : f32 to vector<2x32xf32>
    %305 = arith.mulf %304, %303 : vector<2x32xf32>
    %cst_133 = arith.constant 5.000000e-01 : f32
    %306 = vector.broadcast %cst_133 : f32 to vector<2x32xf32>
    %307 = arith.addf %305, %306 : vector<2x32xf32>
    %308 = arith.mulf %297, %227 : vector<2x32xf32>
    %309 = arith.mulf %289, %299 : vector<2x32xf32>
    %310 = arith.addf %308, %309 : vector<2x32xf32>
    %311 = math.tanh %310 : vector<2x32xf32>
    %312 = arith.mulf %307, %311 : vector<2x32xf32>
    %313 = arith.index_cast %275 : i32 to index
    %c0_134 = arith.constant 0 : index
    %314 = vector.load %arg14[%313, %c0_134] : memref<16x32xf32, #tpu.memory_space<vmem>>, vector<2x32xf32>
    tpu.vector_store %arg14[%313, %c0_134], %312 {strides = array<i32>} : memref<16x32xf32, #tpu.memory_space<vmem>>, vector<2x32xf32>,
    %c7_i32_135 = arith.constant 7 : i32
    %315 = arith.subi %c7_i32_135, %c3_i32 : i32
    %c2_i32_136 = arith.constant 2 : i32
    %316 = arith.muli %315, %c2_i32_136 : i32
    %317 = tpu.assume_multiple %316, 2 : i32
    %318 = arith.index_cast %317 : i32 to index
    %c0_137 = arith.constant 0 : index
    %319 = vector.load %arg13[%318, %c0_137] : memref<16x128xf32, #tpu.memory_space<vmem>>, vector<2x128xf32>
    %320 = arith.truncf %271 : vector<2x32xf32> to vector<2x32xbf16>
    %c0_138 = arith.constant 0 : index
    %c0_139 = arith.constant 0 : index
    %321 = vector.load %arg9[%c0_138, %c0_139] : memref<32x128xbf16, #tpu.memory_space<vmem>>, vector<32x128xbf16>
    %cst_140 = arith.constant dense<0.000000e+00> : vector<2x128xf32>
    %322 = tpu.matmul %320, %321, %cst_140 {dimension_numbers = #tpu.dot_dimension_numbers<[1], [0], [0], [1], [0, 0, 1, 1], [], []>} : vector<2x32xbf16>, vector<32x128xbf16>, vector<2x128xf32> -> vector<2x128xf32>
    %323 = arith.addf %319, %322 : vector<2x128xf32>
    %324 = vector.extract_strided_slice %323 {offsets = [0, 0], sizes = [2, 32], strides = [1, 1]} : vector<2x128xf32> to vector<2x32xf32>
    %cst_141 = arith.constant 5.000000e-01 : f32
    %325 = vector.broadcast %cst_141 : f32 to vector<2x32xf32>
    %326 = arith.mulf %325, %324 : vector<2x32xf32>
    %327 = math.tanh %326 : vector<2x32xf32>
    %cst_142 = arith.constant 5.000000e-01 : f32
    %328 = vector.broadcast %cst_142 : f32 to vector<2x32xf32>
    %329 = arith.mulf %328, %327 : vector<2x32xf32>
    %cst_143 = arith.constant 5.000000e-01 : f32
    %330 = vector.broadcast %cst_143 : f32 to vector<2x32xf32>
    %331 = arith.addf %329, %330 : vector<2x32xf32>
    %332 = vector.extract_strided_slice %323 {offsets = [0, 32], sizes = [2, 32], strides = [1, 1]} : vector<2x128xf32> to vector<2x32xf32>
    %cst_144 = arith.constant 5.000000e-01 : f32
    %333 = vector.broadcast %cst_144 : f32 to vector<2x32xf32>
    %334 = arith.mulf %333, %332 : vector<2x32xf32>
    %335 = math.tanh %334 : vector<2x32xf32>
    %cst_145 = arith.constant 5.000000e-01 : f32
    %336 = vector.broadcast %cst_145 : f32 to vector<2x32xf32>
    %337 = arith.mulf %336, %335 : vector<2x32xf32>
    %cst_146 = arith.constant 5.000000e-01 : f32
    %338 = vector.broadcast %cst_146 : f32 to vector<2x32xf32>
    %339 = arith.addf %337, %338 : vector<2x32xf32>
    %340 = vector.extract_strided_slice %323 {offsets = [0, 64], sizes = [2, 32], strides = [1, 1]} : vector<2x128xf32> to vector<2x32xf32>
    %341 = math.tanh %340 : vector<2x32xf32>
    %342 = vector.extract_strided_slice %323 {offsets = [0, 96], sizes = [2, 32], strides = [1, 1]} : vector<2x128xf32> to vector<2x32xf32>
    %cst_147 = arith.constant 5.000000e-01 : f32
    %343 = vector.broadcast %cst_147 : f32 to vector<2x32xf32>
    %344 = arith.mulf %343, %342 : vector<2x32xf32>
    %345 = math.tanh %344 : vector<2x32xf32>
    %cst_148 = arith.constant 5.000000e-01 : f32
    %346 = vector.broadcast %cst_148 : f32 to vector<2x32xf32>
    %347 = arith.mulf %346, %345 : vector<2x32xf32>
    %cst_149 = arith.constant 5.000000e-01 : f32
    %348 = vector.broadcast %cst_149 : f32 to vector<2x32xf32>
    %349 = arith.addf %347, %348 : vector<2x32xf32>
    %350 = arith.mulf %339, %269 : vector<2x32xf32>
    %351 = arith.mulf %331, %341 : vector<2x32xf32>
    %352 = arith.addf %350, %351 : vector<2x32xf32>
    %353 = math.tanh %352 : vector<2x32xf32>
    %354 = arith.mulf %349, %353 : vector<2x32xf32>
    %355 = arith.index_cast %317 : i32 to index
    %c0_150 = arith.constant 0 : index
    %356 = vector.load %arg15[%355, %c0_150] : memref<16x32xf32, #tpu.memory_space<vmem>>, vector<2x32xf32>
    tpu.vector_store %arg15[%355, %c0_150], %354 {strides = array<i32>} : memref<16x32xf32, #tpu.memory_space<vmem>>, vector<2x32xf32>,
    %c4_i32 = arith.constant 4 : i32
    %c2_i32_151 = arith.constant 2 : i32
    %357 = arith.muli %c4_i32, %c2_i32_151 : i32
    %358 = tpu.assume_multiple %357, 2 : i32
    %359 = arith.index_cast %358 : i32 to index
    %c0_152 = arith.constant 0 : index
    %360 = vector.load %arg12[%359, %c0_152] : memref<16x128xf32, #tpu.memory_space<vmem>>, vector<2x128xf32>
    %361 = arith.truncf %312 : vector<2x32xf32> to vector<2x32xbf16>
    %c0_153 = arith.constant 0 : index
    %c0_154 = arith.constant 0 : index
    %362 = vector.load %arg8[%c0_153, %c0_154] : memref<32x128xbf16, #tpu.memory_space<vmem>>, vector<32x128xbf16>
    %cst_155 = arith.constant dense<0.000000e+00> : vector<2x128xf32>
    %363 = tpu.matmul %361, %362, %cst_155 {dimension_numbers = #tpu.dot_dimension_numbers<[1], [0], [0], [1], [0, 0, 1, 1], [], []>} : vector<2x32xbf16>, vector<32x128xbf16>, vector<2x128xf32> -> vector<2x128xf32>
    %364 = arith.addf %360, %363 : vector<2x128xf32>
    %365 = vector.extract_strided_slice %364 {offsets = [0, 0], sizes = [2, 32], strides = [1, 1]} : vector<2x128xf32> to vector<2x32xf32>
    %cst_156 = arith.constant 5.000000e-01 : f32
    %366 = vector.broadcast %cst_156 : f32 to vector<2x32xf32>
    %367 = arith.mulf %366, %365 : vector<2x32xf32>
    %368 = math.tanh %367 : vector<2x32xf32>
    %cst_157 = arith.constant 5.000000e-01 : f32
    %369 = vector.broadcast %cst_157 : f32 to vector<2x32xf32>
    %370 = arith.mulf %369, %368 : vector<2x32xf32>
    %cst_158 = arith.constant 5.000000e-01 : f32
    %371 = vector.broadcast %cst_158 : f32 to vector<2x32xf32>
    %372 = arith.addf %370, %371 : vector<2x32xf32>
    %373 = vector.extract_strided_slice %364 {offsets = [0, 32], sizes = [2, 32], strides = [1, 1]} : vector<2x128xf32> to vector<2x32xf32>
    %cst_159 = arith.constant 5.000000e-01 : f32
    %374 = vector.broadcast %cst_159 : f32 to vector<2x32xf32>
    %375 = arith.mulf %374, %373 : vector<2x32xf32>
    %376 = math.tanh %375 : vector<2x32xf32>
    %cst_160 = arith.constant 5.000000e-01 : f32
    %377 = vector.broadcast %cst_160 : f32 to vector<2x32xf32>
    %378 = arith.mulf %377, %376 : vector<2x32xf32>
    %cst_161 = arith.constant 5.000000e-01 : f32
    %379 = vector.broadcast %cst_161 : f32 to vector<2x32xf32>
    %380 = arith.addf %378, %379 : vector<2x32xf32>
    %381 = vector.extract_strided_slice %364 {offsets = [0, 64], sizes = [2, 32], strides = [1, 1]} : vector<2x128xf32> to vector<2x32xf32>
    %382 = math.tanh %381 : vector<2x32xf32>
    %383 = vector.extract_strided_slice %364 {offsets = [0, 96], sizes = [2, 32], strides = [1, 1]} : vector<2x128xf32> to vector<2x32xf32>
    %cst_162 = arith.constant 5.000000e-01 : f32
    %384 = vector.broadcast %cst_162 : f32 to vector<2x32xf32>
    %385 = arith.mulf %384, %383 : vector<2x32xf32>
    %386 = math.tanh %385 : vector<2x32xf32>
    %cst_163 = arith.constant 5.000000e-01 : f32
    %387 = vector.broadcast %cst_163 : f32 to vector<2x32xf32>
    %388 = arith.mulf %387, %386 : vector<2x32xf32>
    %cst_164 = arith.constant 5.000000e-01 : f32
    %389 = vector.broadcast %cst_164 : f32 to vector<2x32xf32>
    %390 = arith.addf %388, %389 : vector<2x32xf32>
    %391 = arith.mulf %380, %310 : vector<2x32xf32>
    %392 = arith.mulf %372, %382 : vector<2x32xf32>
    %393 = arith.addf %391, %392 : vector<2x32xf32>
    %394 = math.tanh %393 : vector<2x32xf32>
    %395 = arith.mulf %390, %394 : vector<2x32xf32>
    %396 = arith.index_cast %358 : i32 to index
    %c0_165 = arith.constant 0 : index
    %397 = vector.load %arg14[%396, %c0_165] : memref<16x32xf32, #tpu.memory_space<vmem>>, vector<2x32xf32>
    tpu.vector_store %arg14[%396, %c0_165], %395 {strides = array<i32>} : memref<16x32xf32, #tpu.memory_space<vmem>>, vector<2x32xf32>,
    %c7_i32_166 = arith.constant 7 : i32
    %398 = arith.subi %c7_i32_166, %c4_i32 : i32
    %c2_i32_167 = arith.constant 2 : i32
    %399 = arith.muli %398, %c2_i32_167 : i32
    %400 = tpu.assume_multiple %399, 2 : i32
    %401 = arith.index_cast %400 : i32 to index
    %c0_168 = arith.constant 0 : index
    %402 = vector.load %arg13[%401, %c0_168] : memref<16x128xf32, #tpu.memory_space<vmem>>, vector<2x128xf32>
    %403 = arith.truncf %354 : vector<2x32xf32> to vector<2x32xbf16>
    %c0_169 = arith.constant 0 : index
    %c0_170 = arith.constant 0 : index
    %404 = vector.load %arg9[%c0_169, %c0_170] : memref<32x128xbf16, #tpu.memory_space<vmem>>, vector<32x128xbf16>
    %cst_171 = arith.constant dense<0.000000e+00> : vector<2x128xf32>
    %405 = tpu.matmul %403, %404, %cst_171 {dimension_numbers = #tpu.dot_dimension_numbers<[1], [0], [0], [1], [0, 0, 1, 1], [], []>} : vector<2x32xbf16>, vector<32x128xbf16>, vector<2x128xf32> -> vector<2x128xf32>
    %406 = arith.addf %402, %405 : vector<2x128xf32>
    %407 = vector.extract_strided_slice %406 {offsets = [0, 0], sizes = [2, 32], strides = [1, 1]} : vector<2x128xf32> to vector<2x32xf32>
    %cst_172 = arith.constant 5.000000e-01 : f32
    %408 = vector.broadcast %cst_172 : f32 to vector<2x32xf32>
    %409 = arith.mulf %408, %407 : vector<2x32xf32>
    %410 = math.tanh %409 : vector<2x32xf32>
    %cst_173 = arith.constant 5.000000e-01 : f32
    %411 = vector.broadcast %cst_173 : f32 to vector<2x32xf32>
    %412 = arith.mulf %411, %410 : vector<2x32xf32>
    %cst_174 = arith.constant 5.000000e-01 : f32
    %413 = vector.broadcast %cst_174 : f32 to vector<2x32xf32>
    %414 = arith.addf %412, %413 : vector<2x32xf32>
    %415 = vector.extract_strided_slice %406 {offsets = [0, 32], sizes = [2, 32], strides = [1, 1]} : vector<2x128xf32> to vector<2x32xf32>
    %cst_175 = arith.constant 5.000000e-01 : f32
    %416 = vector.broadcast %cst_175 : f32 to vector<2x32xf32>
    %417 = arith.mulf %416, %415 : vector<2x32xf32>
    %418 = math.tanh %417 : vector<2x32xf32>
    %cst_176 = arith.constant 5.000000e-01 : f32
    %419 = vector.broadcast %cst_176 : f32 to vector<2x32xf32>
    %420 = arith.mulf %419, %418 : vector<2x32xf32>
    %cst_177 = arith.constant 5.000000e-01 : f32
    %421 = vector.broadcast %cst_177 : f32 to vector<2x32xf32>
    %422 = arith.addf %420, %421 : vector<2x32xf32>
    %423 = vector.extract_strided_slice %406 {offsets = [0, 64], sizes = [2, 32], strides = [1, 1]} : vector<2x128xf32> to vector<2x32xf32>
    %424 = math.tanh %423 : vector<2x32xf32>
    %425 = vector.extract_strided_slice %406 {offsets = [0, 96], sizes = [2, 32], strides = [1, 1]} : vector<2x128xf32> to vector<2x32xf32>
    %cst_178 = arith.constant 5.000000e-01 : f32
    %426 = vector.broadcast %cst_178 : f32 to vector<2x32xf32>
    %427 = arith.mulf %426, %425 : vector<2x32xf32>
    %428 = math.tanh %427 : vector<2x32xf32>
    %cst_179 = arith.constant 5.000000e-01 : f32
    %429 = vector.broadcast %cst_179 : f32 to vector<2x32xf32>
    %430 = arith.mulf %429, %428 : vector<2x32xf32>
    %cst_180 = arith.constant 5.000000e-01 : f32
    %431 = vector.broadcast %cst_180 : f32 to vector<2x32xf32>
    %432 = arith.addf %430, %431 : vector<2x32xf32>
    %433 = arith.mulf %422, %352 : vector<2x32xf32>
    %434 = arith.mulf %414, %424 : vector<2x32xf32>
    %435 = arith.addf %433, %434 : vector<2x32xf32>
    %436 = math.tanh %435 : vector<2x32xf32>
    %437 = arith.mulf %432, %436 : vector<2x32xf32>
    %438 = arith.index_cast %400 : i32 to index
    %c0_181 = arith.constant 0 : index
    %439 = vector.load %arg15[%438, %c0_181] : memref<16x32xf32, #tpu.memory_space<vmem>>, vector<2x32xf32>
    tpu.vector_store %arg15[%438, %c0_181], %437 {strides = array<i32>} : memref<16x32xf32, #tpu.memory_space<vmem>>, vector<2x32xf32>,
    %c5_i32 = arith.constant 5 : i32
    %c2_i32_182 = arith.constant 2 : i32
    %440 = arith.muli %c5_i32, %c2_i32_182 : i32
    %441 = tpu.assume_multiple %440, 2 : i32
    %442 = arith.index_cast %441 : i32 to index
    %c0_183 = arith.constant 0 : index
    %443 = vector.load %arg12[%442, %c0_183] : memref<16x128xf32, #tpu.memory_space<vmem>>, vector<2x128xf32>
    %444 = arith.truncf %395 : vector<2x32xf32> to vector<2x32xbf16>
    %c0_184 = arith.constant 0 : index
    %c0_185 = arith.constant 0 : index
    %445 = vector.load %arg8[%c0_184, %c0_185] : memref<32x128xbf16, #tpu.memory_space<vmem>>, vector<32x128xbf16>
    %cst_186 = arith.constant dense<0.000000e+00> : vector<2x128xf32>
    %446 = tpu.matmul %444, %445, %cst_186 {dimension_numbers = #tpu.dot_dimension_numbers<[1], [0], [0], [1], [0, 0, 1, 1], [], []>} : vector<2x32xbf16>, vector<32x128xbf16>, vector<2x128xf32> -> vector<2x128xf32>
    %447 = arith.addf %443, %446 : vector<2x128xf32>
    %448 = vector.extract_strided_slice %447 {offsets = [0, 0], sizes = [2, 32], strides = [1, 1]} : vector<2x128xf32> to vector<2x32xf32>
    %cst_187 = arith.constant 5.000000e-01 : f32
    %449 = vector.broadcast %cst_187 : f32 to vector<2x32xf32>
    %450 = arith.mulf %449, %448 : vector<2x32xf32>
    %451 = math.tanh %450 : vector<2x32xf32>
    %cst_188 = arith.constant 5.000000e-01 : f32
    %452 = vector.broadcast %cst_188 : f32 to vector<2x32xf32>
    %453 = arith.mulf %452, %451 : vector<2x32xf32>
    %cst_189 = arith.constant 5.000000e-01 : f32
    %454 = vector.broadcast %cst_189 : f32 to vector<2x32xf32>
    %455 = arith.addf %453, %454 : vector<2x32xf32>
    %456 = vector.extract_strided_slice %447 {offsets = [0, 32], sizes = [2, 32], strides = [1, 1]} : vector<2x128xf32> to vector<2x32xf32>
    %cst_190 = arith.constant 5.000000e-01 : f32
    %457 = vector.broadcast %cst_190 : f32 to vector<2x32xf32>
    %458 = arith.mulf %457, %456 : vector<2x32xf32>
    %459 = math.tanh %458 : vector<2x32xf32>
    %cst_191 = arith.constant 5.000000e-01 : f32
    %460 = vector.broadcast %cst_191 : f32 to vector<2x32xf32>
    %461 = arith.mulf %460, %459 : vector<2x32xf32>
    %cst_192 = arith.constant 5.000000e-01 : f32
    %462 = vector.broadcast %cst_192 : f32 to vector<2x32xf32>
    %463 = arith.addf %461, %462 : vector<2x32xf32>
    %464 = vector.extract_strided_slice %447 {offsets = [0, 64], sizes = [2, 32], strides = [1, 1]} : vector<2x128xf32> to vector<2x32xf32>
    %465 = math.tanh %464 : vector<2x32xf32>
    %466 = vector.extract_strided_slice %447 {offsets = [0, 96], sizes = [2, 32], strides = [1, 1]} : vector<2x128xf32> to vector<2x32xf32>
    %cst_193 = arith.constant 5.000000e-01 : f32
    %467 = vector.broadcast %cst_193 : f32 to vector<2x32xf32>
    %468 = arith.mulf %467, %466 : vector<2x32xf32>
    %469 = math.tanh %468 : vector<2x32xf32>
    %cst_194 = arith.constant 5.000000e-01 : f32
    %470 = vector.broadcast %cst_194 : f32 to vector<2x32xf32>
    %471 = arith.mulf %470, %469 : vector<2x32xf32>
    %cst_195 = arith.constant 5.000000e-01 : f32
    %472 = vector.broadcast %cst_195 : f32 to vector<2x32xf32>
    %473 = arith.addf %471, %472 : vector<2x32xf32>
    %474 = arith.mulf %463, %393 : vector<2x32xf32>
    %475 = arith.mulf %455, %465 : vector<2x32xf32>
    %476 = arith.addf %474, %475 : vector<2x32xf32>
    %477 = math.tanh %476 : vector<2x32xf32>
    %478 = arith.mulf %473, %477 : vector<2x32xf32>
    %479 = arith.index_cast %441 : i32 to index
    %c0_196 = arith.constant 0 : index
    %480 = vector.load %arg14[%479, %c0_196] : memref<16x32xf32, #tpu.memory_space<vmem>>, vector<2x32xf32>
    tpu.vector_store %arg14[%479, %c0_196], %478 {strides = array<i32>} : memref<16x32xf32, #tpu.memory_space<vmem>>, vector<2x32xf32>,
    %c7_i32_197 = arith.constant 7 : i32
    %481 = arith.subi %c7_i32_197, %c5_i32 : i32
    %c2_i32_198 = arith.constant 2 : i32
    %482 = arith.muli %481, %c2_i32_198 : i32
    %483 = tpu.assume_multiple %482, 2 : i32
    %484 = arith.index_cast %483 : i32 to index
    %c0_199 = arith.constant 0 : index
    %485 = vector.load %arg13[%484, %c0_199] : memref<16x128xf32, #tpu.memory_space<vmem>>, vector<2x128xf32>
    %486 = arith.truncf %437 : vector<2x32xf32> to vector<2x32xbf16>
    %c0_200 = arith.constant 0 : index
    %c0_201 = arith.constant 0 : index
    %487 = vector.load %arg9[%c0_200, %c0_201] : memref<32x128xbf16, #tpu.memory_space<vmem>>, vector<32x128xbf16>
    %cst_202 = arith.constant dense<0.000000e+00> : vector<2x128xf32>
    %488 = tpu.matmul %486, %487, %cst_202 {dimension_numbers = #tpu.dot_dimension_numbers<[1], [0], [0], [1], [0, 0, 1, 1], [], []>} : vector<2x32xbf16>, vector<32x128xbf16>, vector<2x128xf32> -> vector<2x128xf32>
    %489 = arith.addf %485, %488 : vector<2x128xf32>
    %490 = vector.extract_strided_slice %489 {offsets = [0, 0], sizes = [2, 32], strides = [1, 1]} : vector<2x128xf32> to vector<2x32xf32>
    %cst_203 = arith.constant 5.000000e-01 : f32
    %491 = vector.broadcast %cst_203 : f32 to vector<2x32xf32>
    %492 = arith.mulf %491, %490 : vector<2x32xf32>
    %493 = math.tanh %492 : vector<2x32xf32>
    %cst_204 = arith.constant 5.000000e-01 : f32
    %494 = vector.broadcast %cst_204 : f32 to vector<2x32xf32>
    %495 = arith.mulf %494, %493 : vector<2x32xf32>
    %cst_205 = arith.constant 5.000000e-01 : f32
    %496 = vector.broadcast %cst_205 : f32 to vector<2x32xf32>
    %497 = arith.addf %495, %496 : vector<2x32xf32>
    %498 = vector.extract_strided_slice %489 {offsets = [0, 32], sizes = [2, 32], strides = [1, 1]} : vector<2x128xf32> to vector<2x32xf32>
    %cst_206 = arith.constant 5.000000e-01 : f32
    %499 = vector.broadcast %cst_206 : f32 to vector<2x32xf32>
    %500 = arith.mulf %499, %498 : vector<2x32xf32>
    %501 = math.tanh %500 : vector<2x32xf32>
    %cst_207 = arith.constant 5.000000e-01 : f32
    %502 = vector.broadcast %cst_207 : f32 to vector<2x32xf32>
    %503 = arith.mulf %502, %501 : vector<2x32xf32>
    %cst_208 = arith.constant 5.000000e-01 : f32
    %504 = vector.broadcast %cst_208 : f32 to vector<2x32xf32>
    %505 = arith.addf %503, %504 : vector<2x32xf32>
    %506 = vector.extract_strided_slice %489 {offsets = [0, 64], sizes = [2, 32], strides = [1, 1]} : vector<2x128xf32> to vector<2x32xf32>
    %507 = math.tanh %506 : vector<2x32xf32>
    %508 = vector.extract_strided_slice %489 {offsets = [0, 96], sizes = [2, 32], strides = [1, 1]} : vector<2x128xf32> to vector<2x32xf32>
    %cst_209 = arith.constant 5.000000e-01 : f32
    %509 = vector.broadcast %cst_209 : f32 to vector<2x32xf32>
    %510 = arith.mulf %509, %508 : vector<2x32xf32>
    %511 = math.tanh %510 : vector<2x32xf32>
    %cst_210 = arith.constant 5.000000e-01 : f32
    %512 = vector.broadcast %cst_210 : f32 to vector<2x32xf32>
    %513 = arith.mulf %512, %511 : vector<2x32xf32>
    %cst_211 = arith.constant 5.000000e-01 : f32
    %514 = vector.broadcast %cst_211 : f32 to vector<2x32xf32>
    %515 = arith.addf %513, %514 : vector<2x32xf32>
    %516 = arith.mulf %505, %435 : vector<2x32xf32>
    %517 = arith.mulf %497, %507 : vector<2x32xf32>
    %518 = arith.addf %516, %517 : vector<2x32xf32>
    %519 = math.tanh %518 : vector<2x32xf32>
    %520 = arith.mulf %515, %519 : vector<2x32xf32>
    %521 = arith.index_cast %483 : i32 to index
    %c0_212 = arith.constant 0 : index
    %522 = vector.load %arg15[%521, %c0_212] : memref<16x32xf32, #tpu.memory_space<vmem>>, vector<2x32xf32>
    tpu.vector_store %arg15[%521, %c0_212], %520 {strides = array<i32>} : memref<16x32xf32, #tpu.memory_space<vmem>>, vector<2x32xf32>,
    %c6_i32 = arith.constant 6 : i32
    %c2_i32_213 = arith.constant 2 : i32
    %523 = arith.muli %c6_i32, %c2_i32_213 : i32
    %524 = tpu.assume_multiple %523, 2 : i32
    %525 = arith.index_cast %524 : i32 to index
    %c0_214 = arith.constant 0 : index
    %526 = vector.load %arg12[%525, %c0_214] : memref<16x128xf32, #tpu.memory_space<vmem>>, vector<2x128xf32>
    %527 = arith.truncf %478 : vector<2x32xf32> to vector<2x32xbf16>
    %c0_215 = arith.constant 0 : index
    %c0_216 = arith.constant 0 : index
    %528 = vector.load %arg8[%c0_215, %c0_216] : memref<32x128xbf16, #tpu.memory_space<vmem>>, vector<32x128xbf16>
    %cst_217 = arith.constant dense<0.000000e+00> : vector<2x128xf32>
    %529 = tpu.matmul %527, %528, %cst_217 {dimension_numbers = #tpu.dot_dimension_numbers<[1], [0], [0], [1], [0, 0, 1, 1], [], []>} : vector<2x32xbf16>, vector<32x128xbf16>, vector<2x128xf32> -> vector<2x128xf32>
    %530 = arith.addf %526, %529 : vector<2x128xf32>
    %531 = vector.extract_strided_slice %530 {offsets = [0, 0], sizes = [2, 32], strides = [1, 1]} : vector<2x128xf32> to vector<2x32xf32>
    %cst_218 = arith.constant 5.000000e-01 : f32
    %532 = vector.broadcast %cst_218 : f32 to vector<2x32xf32>
    %533 = arith.mulf %532, %531 : vector<2x32xf32>
    %534 = math.tanh %533 : vector<2x32xf32>
    %cst_219 = arith.constant 5.000000e-01 : f32
    %535 = vector.broadcast %cst_219 : f32 to vector<2x32xf32>
    %536 = arith.mulf %535, %534 : vector<2x32xf32>
    %cst_220 = arith.constant 5.000000e-01 : f32
    %537 = vector.broadcast %cst_220 : f32 to vector<2x32xf32>
    %538 = arith.addf %536, %537 : vector<2x32xf32>
    %539 = vector.extract_strided_slice %530 {offsets = [0, 32], sizes = [2, 32], strides = [1, 1]} : vector<2x128xf32> to vector<2x32xf32>
    %cst_221 = arith.constant 5.000000e-01 : f32
    %540 = vector.broadcast %cst_221 : f32 to vector<2x32xf32>
    %541 = arith.mulf %540, %539 : vector<2x32xf32>
    %542 = math.tanh %541 : vector<2x32xf32>
    %cst_222 = arith.constant 5.000000e-01 : f32
    %543 = vector.broadcast %cst_222 : f32 to vector<2x32xf32>
    %544 = arith.mulf %543, %542 : vector<2x32xf32>
    %cst_223 = arith.constant 5.000000e-01 : f32
    %545 = vector.broadcast %cst_223 : f32 to vector<2x32xf32>
    %546 = arith.addf %544, %545 : vector<2x32xf32>
    %547 = vector.extract_strided_slice %530 {offsets = [0, 64], sizes = [2, 32], strides = [1, 1]} : vector<2x128xf32> to vector<2x32xf32>
    %548 = math.tanh %547 : vector<2x32xf32>
    %549 = vector.extract_strided_slice %530 {offsets = [0, 96], sizes = [2, 32], strides = [1, 1]} : vector<2x128xf32> to vector<2x32xf32>
    %cst_224 = arith.constant 5.000000e-01 : f32
    %550 = vector.broadcast %cst_224 : f32 to vector<2x32xf32>
    %551 = arith.mulf %550, %549 : vector<2x32xf32>
    %552 = math.tanh %551 : vector<2x32xf32>
    %cst_225 = arith.constant 5.000000e-01 : f32
    %553 = vector.broadcast %cst_225 : f32 to vector<2x32xf32>
    %554 = arith.mulf %553, %552 : vector<2x32xf32>
    %cst_226 = arith.constant 5.000000e-01 : f32
    %555 = vector.broadcast %cst_226 : f32 to vector<2x32xf32>
    %556 = arith.addf %554, %555 : vector<2x32xf32>
    %557 = arith.mulf %546, %476 : vector<2x32xf32>
    %558 = arith.mulf %538, %548 : vector<2x32xf32>
    %559 = arith.addf %557, %558 : vector<2x32xf32>
    %560 = math.tanh %559 : vector<2x32xf32>
    %561 = arith.mulf %556, %560 : vector<2x32xf32>
    %562 = arith.index_cast %524 : i32 to index
    %c0_227 = arith.constant 0 : index
    %563 = vector.load %arg14[%562, %c0_227] : memref<16x32xf32, #tpu.memory_space<vmem>>, vector<2x32xf32>
    tpu.vector_store %arg14[%562, %c0_227], %561 {strides = array<i32>} : memref<16x32xf32, #tpu.memory_space<vmem>>, vector<2x32xf32>,
    %c7_i32_228 = arith.constant 7 : i32
    %564 = arith.subi %c7_i32_228, %c6_i32 : i32
    %c2_i32_229 = arith.constant 2 : i32
    %565 = arith.muli %564, %c2_i32_229 : i32
    %566 = tpu.assume_multiple %565, 2 : i32
    %567 = arith.index_cast %566 : i32 to index
    %c0_230 = arith.constant 0 : index
    %568 = vector.load %arg13[%567, %c0_230] : memref<16x128xf32, #tpu.memory_space<vmem>>, vector<2x128xf32>
    %569 = arith.truncf %520 : vector<2x32xf32> to vector<2x32xbf16>
    %c0_231 = arith.constant 0 : index
    %c0_232 = arith.constant 0 : index
    %570 = vector.load %arg9[%c0_231, %c0_232] : memref<32x128xbf16, #tpu.memory_space<vmem>>, vector<32x128xbf16>
    %cst_233 = arith.constant dense<0.000000e+00> : vector<2x128xf32>
    %571 = tpu.matmul %569, %570, %cst_233 {dimension_numbers = #tpu.dot_dimension_numbers<[1], [0], [0], [1], [0, 0, 1, 1], [], []>} : vector<2x32xbf16>, vector<32x128xbf16>, vector<2x128xf32> -> vector<2x128xf32>
    %572 = arith.addf %568, %571 : vector<2x128xf32>
    %573 = vector.extract_strided_slice %572 {offsets = [0, 0], sizes = [2, 32], strides = [1, 1]} : vector<2x128xf32> to vector<2x32xf32>
    %cst_234 = arith.constant 5.000000e-01 : f32
    %574 = vector.broadcast %cst_234 : f32 to vector<2x32xf32>
    %575 = arith.mulf %574, %573 : vector<2x32xf32>
    %576 = math.tanh %575 : vector<2x32xf32>
    %cst_235 = arith.constant 5.000000e-01 : f32
    %577 = vector.broadcast %cst_235 : f32 to vector<2x32xf32>
    %578 = arith.mulf %577, %576 : vector<2x32xf32>
    %cst_236 = arith.constant 5.000000e-01 : f32
    %579 = vector.broadcast %cst_236 : f32 to vector<2x32xf32>
    %580 = arith.addf %578, %579 : vector<2x32xf32>
    %581 = vector.extract_strided_slice %572 {offsets = [0, 32], sizes = [2, 32], strides = [1, 1]} : vector<2x128xf32> to vector<2x32xf32>
    %cst_237 = arith.constant 5.000000e-01 : f32
    %582 = vector.broadcast %cst_237 : f32 to vector<2x32xf32>
    %583 = arith.mulf %582, %581 : vector<2x32xf32>
    %584 = math.tanh %583 : vector<2x32xf32>
    %cst_238 = arith.constant 5.000000e-01 : f32
    %585 = vector.broadcast %cst_238 : f32 to vector<2x32xf32>
    %586 = arith.mulf %585, %584 : vector<2x32xf32>
    %cst_239 = arith.constant 5.000000e-01 : f32
    %587 = vector.broadcast %cst_239 : f32 to vector<2x32xf32>
    %588 = arith.addf %586, %587 : vector<2x32xf32>
    %589 = vector.extract_strided_slice %572 {offsets = [0, 64], sizes = [2, 32], strides = [1, 1]} : vector<2x128xf32> to vector<2x32xf32>
    %590 = math.tanh %589 : vector<2x32xf32>
    %591 = vector.extract_strided_slice %572 {offsets = [0, 96], sizes = [2, 32], strides = [1, 1]} : vector<2x128xf32> to vector<2x32xf32>
    %cst_240 = arith.constant 5.000000e-01 : f32
    %592 = vector.broadcast %cst_240 : f32 to vector<2x32xf32>
    %593 = arith.mulf %592, %591 : vector<2x32xf32>
    %594 = math.tanh %593 : vector<2x32xf32>
    %cst_241 = arith.constant 5.000000e-01 : f32
    %595 = vector.broadcast %cst_241 : f32 to vector<2x32xf32>
    %596 = arith.mulf %595, %594 : vector<2x32xf32>
    %cst_242 = arith.constant 5.000000e-01 : f32
    %597 = vector.broadcast %cst_242 : f32 to vector<2x32xf32>
    %598 = arith.addf %596, %597 : vector<2x32xf32>
    %599 = arith.mulf %588, %518 : vector<2x32xf32>
    %600 = arith.mulf %580, %590 : vector<2x32xf32>
    %601 = arith.addf %599, %600 : vector<2x32xf32>
    %602 = math.tanh %601 : vector<2x32xf32>
    %603 = arith.mulf %598, %602 : vector<2x32xf32>
    %604 = arith.index_cast %566 : i32 to index
    %c0_243 = arith.constant 0 : index
    %605 = vector.load %arg15[%604, %c0_243] : memref<16x32xf32, #tpu.memory_space<vmem>>, vector<2x32xf32>
    tpu.vector_store %arg15[%604, %c0_243], %603 {strides = array<i32>} : memref<16x32xf32, #tpu.memory_space<vmem>>, vector<2x32xf32>,
    %c7_i32_244 = arith.constant 7 : i32
    %c2_i32_245 = arith.constant 2 : i32
    %606 = arith.muli %c7_i32_244, %c2_i32_245 : i32
    %607 = tpu.assume_multiple %606, 2 : i32
    %608 = arith.index_cast %607 : i32 to index
    %c0_246 = arith.constant 0 : index
    %609 = vector.load %arg12[%608, %c0_246] : memref<16x128xf32, #tpu.memory_space<vmem>>, vector<2x128xf32>
    %610 = arith.truncf %561 : vector<2x32xf32> to vector<2x32xbf16>
    %c0_247 = arith.constant 0 : index
    %c0_248 = arith.constant 0 : index
    %611 = vector.load %arg8[%c0_247, %c0_248] : memref<32x128xbf16, #tpu.memory_space<vmem>>, vector<32x128xbf16>
    %cst_249 = arith.constant dense<0.000000e+00> : vector<2x128xf32>
    %612 = tpu.matmul %610, %611, %cst_249 {dimension_numbers = #tpu.dot_dimension_numbers<[1], [0], [0], [1], [0, 0, 1, 1], [], []>} : vector<2x32xbf16>, vector<32x128xbf16>, vector<2x128xf32> -> vector<2x128xf32>
    %613 = arith.addf %609, %612 : vector<2x128xf32>
    %614 = vector.extract_strided_slice %613 {offsets = [0, 0], sizes = [2, 32], strides = [1, 1]} : vector<2x128xf32> to vector<2x32xf32>
    %cst_250 = arith.constant 5.000000e-01 : f32
    %615 = vector.broadcast %cst_250 : f32 to vector<2x32xf32>
    %616 = arith.mulf %615, %614 : vector<2x32xf32>
    %617 = math.tanh %616 : vector<2x32xf32>
    %cst_251 = arith.constant 5.000000e-01 : f32
    %618 = vector.broadcast %cst_251 : f32 to vector<2x32xf32>
    %619 = arith.mulf %618, %617 : vector<2x32xf32>
    %cst_252 = arith.constant 5.000000e-01 : f32
    %620 = vector.broadcast %cst_252 : f32 to vector<2x32xf32>
    %621 = arith.addf %619, %620 : vector<2x32xf32>
    %622 = vector.extract_strided_slice %613 {offsets = [0, 32], sizes = [2, 32], strides = [1, 1]} : vector<2x128xf32> to vector<2x32xf32>
    %cst_253 = arith.constant 5.000000e-01 : f32
    %623 = vector.broadcast %cst_253 : f32 to vector<2x32xf32>
    %624 = arith.mulf %623, %622 : vector<2x32xf32>
    %625 = math.tanh %624 : vector<2x32xf32>
    %cst_254 = arith.constant 5.000000e-01 : f32
    %626 = vector.broadcast %cst_254 : f32 to vector<2x32xf32>
    %627 = arith.mulf %626, %625 : vector<2x32xf32>
    %cst_255 = arith.constant 5.000000e-01 : f32
    %628 = vector.broadcast %cst_255 : f32 to vector<2x32xf32>
    %629 = arith.addf %627, %628 : vector<2x32xf32>
    %630 = vector.extract_strided_slice %613 {offsets = [0, 64], sizes = [2, 32], strides = [1, 1]} : vector<2x128xf32> to vector<2x32xf32>
    %631 = math.tanh %630 : vector<2x32xf32>
    %632 = vector.extract_strided_slice %613 {offsets = [0, 96], sizes = [2, 32], strides = [1, 1]} : vector<2x128xf32> to vector<2x32xf32>
    %cst_256 = arith.constant 5.000000e-01 : f32
    %633 = vector.broadcast %cst_256 : f32 to vector<2x32xf32>
    %634 = arith.mulf %633, %632 : vector<2x32xf32>
    %635 = math.tanh %634 : vector<2x32xf32>
    %cst_257 = arith.constant 5.000000e-01 : f32
    %636 = vector.broadcast %cst_257 : f32 to vector<2x32xf32>
    %637 = arith.mulf %636, %635 : vector<2x32xf32>
    %cst_258 = arith.constant 5.000000e-01 : f32
    %638 = vector.broadcast %cst_258 : f32 to vector<2x32xf32>
    %639 = arith.addf %637, %638 : vector<2x32xf32>
    %640 = arith.mulf %629, %559 : vector<2x32xf32>
    %641 = arith.mulf %621, %631 : vector<2x32xf32>
    %642 = arith.addf %640, %641 : vector<2x32xf32>
    %643 = math.tanh %642 : vector<2x32xf32>
    %644 = arith.mulf %639, %643 : vector<2x32xf32>
    %645 = arith.index_cast %607 : i32 to index
    %c0_259 = arith.constant 0 : index
    %646 = vector.load %arg14[%645, %c0_259] : memref<16x32xf32, #tpu.memory_space<vmem>>, vector<2x32xf32>
    tpu.vector_store %arg14[%645, %c0_259], %644 {strides = array<i32>} : memref<16x32xf32, #tpu.memory_space<vmem>>, vector<2x32xf32>,
    %c7_i32_260 = arith.constant 7 : i32
    %647 = arith.subi %c7_i32_260, %c7_i32_244 : i32
    %c2_i32_261 = arith.constant 2 : i32
    %648 = arith.muli %647, %c2_i32_261 : i32
    %649 = tpu.assume_multiple %648, 2 : i32
    %650 = arith.index_cast %649 : i32 to index
    %c0_262 = arith.constant 0 : index
    %651 = vector.load %arg13[%650, %c0_262] : memref<16x128xf32, #tpu.memory_space<vmem>>, vector<2x128xf32>
    %652 = arith.truncf %603 : vector<2x32xf32> to vector<2x32xbf16>
    %c0_263 = arith.constant 0 : index
    %c0_264 = arith.constant 0 : index
    %653 = vector.load %arg9[%c0_263, %c0_264] : memref<32x128xbf16, #tpu.memory_space<vmem>>, vector<32x128xbf16>
    %cst_265 = arith.constant dense<0.000000e+00> : vector<2x128xf32>
    %654 = tpu.matmul %652, %653, %cst_265 {dimension_numbers = #tpu.dot_dimension_numbers<[1], [0], [0], [1], [0, 0, 1, 1], [], []>} : vector<2x32xbf16>, vector<32x128xbf16>, vector<2x128xf32> -> vector<2x128xf32>
    %655 = arith.addf %651, %654 : vector<2x128xf32>
    %656 = vector.extract_strided_slice %655 {offsets = [0, 0], sizes = [2, 32], strides = [1, 1]} : vector<2x128xf32> to vector<2x32xf32>
    %cst_266 = arith.constant 5.000000e-01 : f32
    %657 = vector.broadcast %cst_266 : f32 to vector<2x32xf32>
    %658 = arith.mulf %657, %656 : vector<2x32xf32>
    %659 = math.tanh %658 : vector<2x32xf32>
    %cst_267 = arith.constant 5.000000e-01 : f32
    %660 = vector.broadcast %cst_267 : f32 to vector<2x32xf32>
    %661 = arith.mulf %660, %659 : vector<2x32xf32>
    %cst_268 = arith.constant 5.000000e-01 : f32
    %662 = vector.broadcast %cst_268 : f32 to vector<2x32xf32>
    %663 = arith.addf %661, %662 : vector<2x32xf32>
    %664 = vector.extract_strided_slice %655 {offsets = [0, 32], sizes = [2, 32], strides = [1, 1]} : vector<2x128xf32> to vector<2x32xf32>
    %cst_269 = arith.constant 5.000000e-01 : f32
    %665 = vector.broadcast %cst_269 : f32 to vector<2x32xf32>
    %666 = arith.mulf %665, %664 : vector<2x32xf32>
    %667 = math.tanh %666 : vector<2x32xf32>
    %cst_270 = arith.constant 5.000000e-01 : f32
    %668 = vector.broadcast %cst_270 : f32 to vector<2x32xf32>
    %669 = arith.mulf %668, %667 : vector<2x32xf32>
    %cst_271 = arith.constant 5.000000e-01 : f32
    %670 = vector.broadcast %cst_271 : f32 to vector<2x32xf32>
    %671 = arith.addf %669, %670 : vector<2x32xf32>
    %672 = vector.extract_strided_slice %655 {offsets = [0, 64], sizes = [2, 32], strides = [1, 1]} : vector<2x128xf32> to vector<2x32xf32>
    %673 = math.tanh %672 : vector<2x32xf32>
    %674 = vector.extract_strided_slice %655 {offsets = [0, 96], sizes = [2, 32], strides = [1, 1]} : vector<2x128xf32> to vector<2x32xf32>
    %cst_272 = arith.constant 5.000000e-01 : f32
    %675 = vector.broadcast %cst_272 : f32 to vector<2x32xf32>
    %676 = arith.mulf %675, %674 : vector<2x32xf32>
    %677 = math.tanh %676 : vector<2x32xf32>
    %cst_273 = arith.constant 5.000000e-01 : f32
    %678 = vector.broadcast %cst_273 : f32 to vector<2x32xf32>
    %679 = arith.mulf %678, %677 : vector<2x32xf32>
    %cst_274 = arith.constant 5.000000e-01 : f32
    %680 = vector.broadcast %cst_274 : f32 to vector<2x32xf32>
    %681 = arith.addf %679, %680 : vector<2x32xf32>
    %682 = arith.mulf %671, %601 : vector<2x32xf32>
    %683 = arith.mulf %663, %673 : vector<2x32xf32>
    %684 = arith.addf %682, %683 : vector<2x32xf32>
    %685 = math.tanh %684 : vector<2x32xf32>
    %686 = arith.mulf %681, %685 : vector<2x32xf32>
    %687 = arith.index_cast %649 : i32 to index
    %c0_275 = arith.constant 0 : index
    %688 = vector.load %arg15[%687, %c0_275] : memref<16x32xf32, #tpu.memory_space<vmem>>, vector<2x32xf32>
    tpu.vector_store %arg15[%687, %c0_275], %686 {strides = array<i32>} : memref<16x32xf32, #tpu.memory_space<vmem>>, vector<2x32xf32>,
    %c8_i32 = arith.constant 8 : i32
    %c0_276 = arith.constant 0 : index
    %c0_277 = arith.constant 0 : index
    %689 = vector.load %arg16[%c0_276, %c0_277] : memref<2x32xf32, #tpu.memory_space<vmem>>, vector<2x32xf32>
    tpu.vector_store %arg16[%c0_276, %c0_277], %644 {strides = array<i32>} : memref<2x32xf32, #tpu.memory_space<vmem>>, vector<2x32xf32>,
    %c0_278 = arith.constant 0 : index
    %c0_279 = arith.constant 0 : index
    %690 = vector.load %arg17[%c0_278, %c0_279] : memref<2x32xf32, #tpu.memory_space<vmem>>, vector<2x32xf32>
    tpu.vector_store %arg17[%c0_278, %c0_279], %642 {strides = array<i32>} : memref<2x32xf32, #tpu.memory_space<vmem>>, vector<2x32xf32>,
    %c0_280 = arith.constant 0 : index
    %c0_281 = arith.constant 0 : index
    %691 = vector.load %arg18[%c0_280, %c0_281] : memref<2x32xf32, #tpu.memory_space<vmem>>, vector<2x32xf32>
    tpu.vector_store %arg18[%c0_280, %c0_281], %686 {strides = array<i32>} : memref<2x32xf32, #tpu.memory_space<vmem>>, vector<2x32xf32>,
    %c0_282 = arith.constant 0 : index
    %c0_283 = arith.constant 0 : index
    %692 = vector.load %arg19[%c0_282, %c0_283] : memref<2x32xf32, #tpu.memory_space<vmem>>, vector<2x32xf32>
    tpu.vector_store %arg19[%c0_282, %c0_283], %684 {strides = array<i32>} : memref<2x32xf32, #tpu.memory_space<vmem>>, vector<2x32xf32>,
    %c0_284 = arith.constant 0 : index
    %c0_285 = arith.constant 0 : index
    %693 = vector.load %arg14[%c0_284, %c0_285] : memref<16x32xf32, #tpu.memory_space<vmem>>, vector<16x32xf32>
    %694 = arith.truncf %693 : vector<16x32xf32> to vector<16x32xbf16>
    %c0_286 = arith.constant 0 : index
    %c0_287 = arith.constant 0 : index
    %c0_288 = arith.constant 0 : index
    %695 = vector.load %arg10[%c0_286, %c0_287, %c0_288] : memref<1x16x32xbf16, #tpu.memory_space<vmem>>, vector<1x16x32xbf16>
    %696 = vector.shape_cast %695 : vector<1x16x32xbf16> to vector<16x32xbf16>
    %697 = vector.shape_cast %694 : vector<16x32xbf16> to vector<1x16x32xbf16>
    tpu.vector_store %arg10[%c0_286, %c0_287, %c0_288], %697 {strides = array<i32>} : memref<1x16x32xbf16, #tpu.memory_space<vmem>>, vector<1x16x32xbf16>,
    %c0_289 = arith.constant 0 : index
    %c0_290 = arith.constant 0 : index
    %698 = vector.load %arg15[%c0_289, %c0_290] : memref<16x32xf32, #tpu.memory_space<vmem>>, vector<16x32xf32>
    %699 = arith.truncf %698 : vector<16x32xf32> to vector<16x32xbf16>
    %c0_291 = arith.constant 0 : index
    %c0_292 = arith.constant 0 : index
    %c0_293 = arith.constant 0 : index
    %700 = vector.load %arg11[%c0_291, %c0_292, %c0_293] : memref<1x16x32xbf16, #tpu.memory_space<vmem>>, vector<1x16x32xbf16>
    %701 = vector.shape_cast %700 : vector<1x16x32xbf16> to vector<16x32xbf16>
    %702 = vector.shape_cast %699 : vector<16x32xbf16> to vector<1x16x32xbf16>
    tpu.vector_store %arg11[%c0_291, %c0_292, %c0_293], %702 {strides = array<i32>} : memref<1x16x32xbf16, #tpu.memory_space<vmem>>, vector<1x16x32xbf16>,
    return
  }
  func.func @transform_0(%arg0: i32, %arg1: i32) -> (i32, i32, i32) {
    %c0_i32 = arith.constant 0 : i32
    %c0_i32_0 = arith.constant 0 : i32
    return %arg0, %arg1, %c0_i32 : i32, i32, i32
  }
  func.func @transform_1(%arg0: i32, %arg1: i32) -> (i32, i32, i32) {
    %c0_i32 = arith.constant 0 : i32
    %0 = arith.subi %c0_i32, %arg1 : i32
    %c0_i32_0 = arith.constant 0 : i32
    %c0_i32_1 = arith.constant 0 : i32
    return %arg0, %0, %c0_i32_0 : i32, i32, i32
  }
  func.func @transform_2(%arg0: i32, %arg1: i32) -> (i32, i32) {
    %c0_i32 = arith.constant 0 : i32
    %c0_i32_0 = arith.constant 0 : i32
    %c0_i32_1 = arith.constant 0 : i32
    return %c0_i32, %c0_i32_0 : i32, i32
  }
  func.func @transform_3(%arg0: i32, %arg1: i32) -> (i32, i32) {
    %c0_i32 = arith.constant 0 : i32
    %c0_i32_0 = arith.constant 0 : i32
    %c0_i32_1 = arith.constant 0 : i32
    return %c0_i32, %c0_i32_0 : i32, i32
  }
  func.func @transform_4(%arg0: i32, %arg1: i32) -> (i32, i32) {
    %c0_i32 = arith.constant 0 : i32
    %c0_i32_0 = arith.constant 0 : i32
    %c0_i32_1 = arith.constant 0 : i32
    return %c0_i32, %c0_i32_0 : i32, i32
  }
  func.func @transform_5(%arg0: i32, %arg1: i32) -> (i32, i32) {
    %c0_i32 = arith.constant 0 : i32
    %c0_i32_0 = arith.constant 0 : i32
    %c0_i32_1 = arith.constant 0 : i32
    return %c0_i32, %c0_i32_0 : i32, i32
  }
  func.func @transform_6(%arg0: i32, %arg1: i32) -> (i32, i32) {
    %c0_i32 = arith.constant 0 : i32
    %c0_i32_0 = arith.constant 0 : i32
    %c0_i32_1 = arith.constant 0 : i32
    return %c0_i32, %c0_i32_0 : i32, i32
  }
  func.func @transform_7(%arg0: i32, %arg1: i32) -> (i32, i32) {
    %c0_i32 = arith.constant 0 : i32
    %c0_i32_0 = arith.constant 0 : i32
    %c0_i32_1 = arith.constant 0 : i32
    return %c0_i32, %c0_i32_0 : i32, i32
  }
  func.func @transform_8(%arg0: i32, %arg1: i32) -> (i32, i32, i32) {
    %c0_i32 = arith.constant 0 : i32
    %c0_i32_0 = arith.constant 0 : i32
    return %arg0, %arg1, %c0_i32 : i32, i32, i32
  }
  func.func @transform_9(%arg0: i32, %arg1: i32) -> (i32, i32, i32) {
    %c0_i32 = arith.constant 0 : i32
    %0 = arith.subi %c0_i32, %arg1 : i32
    %c0_i32_0 = arith.constant 0 : i32
    %c0_i32_1 = arith.constant 0 : i32
    return %arg0, %0, %c0_i32_0 : i32, i32, i32
  }
}

module attributes {stable_mosaic.version = 11 : i64} {
  func.func @_dense_kernel(%arg0: i32, %arg1: i32, %arg2: memref<1x16x32xbf16, #tpu.memory_space<vmem>>, %arg3: memref<1x16x32xbf16, #tpu.memory_space<vmem>>, %arg4: memref<32x128xbf16, #tpu.memory_space<vmem>>, %arg5: memref<32x128xbf16, #tpu.memory_space<vmem>>, %arg6: memref<1x128xf32, #tpu.memory_space<vmem>>, %arg7: memref<1x16x128xf32, #tpu.memory_space<vmem>>) attributes {dimension_semantics = [#tpu.dimension_semantics<parallel>, #tpu.dimension_semantics<parallel>], iteration_bounds = array<i64: 1, 1>, scalar_prefetch = 0 : i64, scratch_operands = 0 : i64, tpu.core_type = #tpu.core_type<tc>, window_params = [{transform_indices = @transform_0, window_bounds = array<i64: 1, 16, 32>}, {transform_indices = @transform_1, window_bounds = array<i64: 1, 16, 32>}, {pipeline_mode = #tpu.pipeline_mode<synchronous>, transform_indices = @transform_2, window_bounds = array<i64: 32, 128>}, {pipeline_mode = #tpu.pipeline_mode<synchronous>, transform_indices = @transform_3, window_bounds = array<i64: 32, 128>}, {pipeline_mode = #tpu.pipeline_mode<synchronous>, transform_indices = @transform_4, window_bounds = array<i64: 1, 128>}, {transform_indices = @transform_5, window_bounds = array<i64: 1, 16, 128>}]} {
    %c0 = arith.constant 0 : index
    %c0_0 = arith.constant 0 : index
    %c0_1 = arith.constant 0 : index
    %0 = vector.load %arg2[%c0, %c0_0, %c0_1] : memref<1x16x32xbf16, #tpu.memory_space<vmem>>, vector<1x16x32xbf16>
    %1 = vector.shape_cast %0 : vector<1x16x32xbf16> to vector<16x32xbf16>
    %c0_2 = arith.constant 0 : index
    %c0_3 = arith.constant 0 : index
    %2 = vector.load %arg4[%c0_2, %c0_3] : memref<32x128xbf16, #tpu.memory_space<vmem>>, vector<32x128xbf16>
    %cst = arith.constant dense<0.000000e+00> : vector<16x128xf32>
    %3 = tpu.matmul %1, %2, %cst {dimension_numbers = #tpu.dot_dimension_numbers<[1], [0], [0], [1], [0, 0, 1, 1], [], []>} : vector<16x32xbf16>, vector<32x128xbf16>, vector<16x128xf32> -> vector<16x128xf32>
    %c0_4 = arith.constant 0 : index
    %c0_5 = arith.constant 0 : index
    %c0_6 = arith.constant 0 : index
    %4 = vector.load %arg3[%c0_4, %c0_5, %c0_6] : memref<1x16x32xbf16, #tpu.memory_space<vmem>>, vector<1x16x32xbf16>
    %5 = vector.shape_cast %4 : vector<1x16x32xbf16> to vector<16x32xbf16>
    %c0_7 = arith.constant 0 : index
    %c0_8 = arith.constant 0 : index
    %6 = vector.load %arg5[%c0_7, %c0_8] : memref<32x128xbf16, #tpu.memory_space<vmem>>, vector<32x128xbf16>
    %cst_9 = arith.constant dense<0.000000e+00> : vector<16x128xf32>
    %7 = tpu.matmul %5, %6, %cst_9 {dimension_numbers = #tpu.dot_dimension_numbers<[1], [0], [0], [1], [0, 0, 1, 1], [], []>} : vector<16x32xbf16>, vector<32x128xbf16>, vector<16x128xf32> -> vector<16x128xf32>
    %8 = arith.addf %3, %7 : vector<16x128xf32>
    %c0_10 = arith.constant 0 : index
    %c0_11 = arith.constant 0 : index
    %9 = vector.load %arg6[%c0_10, %c0_11] : memref<1x128xf32, #tpu.memory_space<vmem>>, vector<1x128xf32>
    %10 = vector.broadcast %9 : vector<1x128xf32> to vector<16x128xf32>
    %11 = arith.addf %8, %10 : vector<16x128xf32>
    %c0_12 = arith.constant 0 : index
    %c0_13 = arith.constant 0 : index
    %c0_14 = arith.constant 0 : index
    %12 = vector.load %arg7[%c0_12, %c0_13, %c0_14] : memref<1x16x128xf32, #tpu.memory_space<vmem>>, vector<1x16x128xf32>
    %13 = vector.shape_cast %12 : vector<1x16x128xf32> to vector<16x128xf32>
    %14 = vector.shape_cast %11 : vector<16x128xf32> to vector<1x16x128xf32>
    tpu.vector_store %arg7[%c0_12, %c0_13, %c0_14], %14 {strides = array<i32>} : memref<1x16x128xf32, #tpu.memory_space<vmem>>, vector<1x16x128xf32>,
    return
  }
  func.func @transform_0(%arg0: i32, %arg1: i32) -> (i32, i32, i32) {
    %c0_i32 = arith.constant 0 : i32
    %c0_i32_0 = arith.constant 0 : i32
    return %arg0, %arg1, %c0_i32 : i32, i32, i32
  }
  func.func @transform_1(%arg0: i32, %arg1: i32) -> (i32, i32, i32) {
    %c0_i32 = arith.constant 0 : i32
    %c0_i32_0 = arith.constant 0 : i32
    return %arg0, %arg1, %c0_i32 : i32, i32, i32
  }
  func.func @transform_2(%arg0: i32, %arg1: i32) -> (i32, i32) {
    %c0_i32 = arith.constant 0 : i32
    %c0_i32_0 = arith.constant 0 : i32
    %c0_i32_1 = arith.constant 0 : i32
    return %c0_i32, %c0_i32_0 : i32, i32
  }
  func.func @transform_3(%arg0: i32, %arg1: i32) -> (i32, i32) {
    %c0_i32 = arith.constant 0 : i32
    %c0_i32_0 = arith.constant 0 : i32
    %c0_i32_1 = arith.constant 0 : i32
    return %c0_i32, %c0_i32_0 : i32, i32
  }
  func.func @transform_4(%arg0: i32, %arg1: i32) -> (i32, i32) {
    %c0_i32 = arith.constant 0 : i32
    %c0_i32_0 = arith.constant 0 : i32
    %c0_i32_1 = arith.constant 0 : i32
    return %c0_i32, %c0_i32_0 : i32, i32
  }
  func.func @transform_5(%arg0: i32, %arg1: i32) -> (i32, i32, i32) {
    %c0_i32 = arith.constant 0 : i32
    %c0_i32_0 = arith.constant 0 : i32
    return %arg0, %arg1, %c0_i32 : i32, i32, i32
  }
}

</mosaic_0001>

<llo_original>
// kernel: classifier_forward.5
$region0: #{classifier_forward.5}
  #allocation0 [shape = 'u32[]', space=smem, size = 0x4, offset = 0x4, fixed_abs, tag = 'smem constant byte address 0x4 - core index']
  #allocation1 [shape = 'u32[144,128]{1,0:T(1,128)}', space=vmem, size = 0x12000, scoped, tag = 'internal scratch']
  %s0 = inlined_call_operand.vmem [shape: bf16[1,16,32], index: 0, kind: input, shape index: {}]
  %s1 = inlined_call_operand.vmem [shape: bf16[1,16,32], index: 1, kind: input, shape index: {}]
  %s2 = inlined_call_operand.vmem [shape: bf16[32,128], index: 2, kind: input, shape index: {}]
  %s3 = inlined_call_operand.vmem [shape: bf16[32,128], index: 3, kind: input, shape index: {}]
  %s4 = inlined_call_operand.vmem [shape: f32[1,128], index: 4, kind: input, shape index: {}]
  %s5 = inlined_call_operand.vmem [shape: f32[1,16,128], index: 5, kind: output, shape index: {}]
  %s6 = sld [smem:[#allocation0]]
  $region30: #{classifier_forward.5} parent=0
    _
  %s8 = ssub.s32 1, %s6
  %s9 = scalar_select 0, %s8, %s6
  // Predicated region
  $region2: #{classifier_forward.5} parent=0 // pred_check
    _
  $region3: #{classifier_forward.5} parent=0 // pred_check_branch
    %11 = sbr.rel (0) target = $region5
  $region4: #{classifier_forward.5} parent=0 // pred_region
    _
  $region5: #{classifier_forward.5} parent=0 // pred_fallthru
    _
  // Predicated region
  $region6: #{classifier_forward.5} parent=0 // pred_check
    _
  $region7: #{classifier_forward.5} parent=0 // pred_check_branch
    %13 = sbr.rel (0) target = $region9
  $region8: #{classifier_forward.5} parent=0 // pred_region
    _
  $region9: #{classifier_forward.5} parent=0 // pred_fallthru
    _
  // Predicated region
  $region10: #{classifier_forward.5} parent=0 // pred_check
    _
  $region11: #{classifier_forward.5} parent=0 // pred_check_branch
    %15 = sbr.rel (0) target = $region13
  $region12: #{classifier_forward.5} parent=0 // pred_region
    _
  $region13: #{classifier_forward.5} parent=0 // pred_fallthru
    _
  // Predicated region
  $region14: #{classifier_forward.5} parent=0 // pred_check
    _
  $region15: #{classifier_forward.5} parent=0 // pred_check_branch
    %17 = sbr.rel (0) target = $region17
  $region16: #{classifier_forward.5} parent=0 // pred_region
    _
  $region17: #{classifier_forward.5} parent=0 // pred_fallthru
    _
  // Predicated region
  $region18: #{classifier_forward.5} parent=0 // pred_check
    _
  $region19: #{classifier_forward.5} parent=0 // pred_check_branch
    %19 = sbr.rel (0) target = $region21
  $region20: #{classifier_forward.5} parent=0 // pred_region
    _
  $region21: #{classifier_forward.5} parent=0 // pred_fallthru
    _
  %v21 = vld [vmem:[%s0] sm:$0xf]
  %v22 = vld [vmem:[%s0 + $0x4] sm:$0xf]
  %v23 = vld [vmem:[%s2] sm:$0xf]
  %v24 = vld [vmem:[%s2 + $0x4] sm:$0xf]
  %v25 = vld [vmem:[%s2 + $0x8] sm:$0xf]
  %v26 = vld [vmem:[%s2 + $0xc] sm:$0xf]
  %v27 = vld [vmem:[%s1] sm:$0xf]
  %v28 = vld [vmem:[%s1 + $0x4] sm:$0xf]
  %v29 = vld [vmem:[%s3] sm:$0xf]
  %v30 = vld [vmem:[%s3 + $0x4] sm:$0xf]
  %v31 = vld [vmem:[%s3 + $0x8] sm:$0xf]
  %v32 = vld [vmem:[%s3 + $0xc] sm:$0xf]
  %v35 = vunpack.c.l.b16 %v27
  %v36 = vunpack.c.l.b16 %v28
  %v37 = vpack.c.b16 %v36, %v35
  %v42 = vunpack.c.l.b16 %v29
  %v43 = vunpack.c.l.b16 %v30
  %v44 = vunpack.c.l.b16 %v31
  %v45 = vunpack.c.l.b16 %v32
  %v46 = vpack.c.b16 %v43, %v42
  %v47 = vpack.c.b16 %v45, %v44
  %vm50 = vcmask 261120
  %v52 = vsel %vm50, %v37, 0
  %54 = vmatprep.subr.bf16.mxu0 0
  %55 = vmatpush1.bf16.msra.mxu0 0
  %56 = vmatprep.subr.bf16.mxu0 0
  %57 = vmatpush1.bf16.msra.mxu0 0
  %58 = vmatprep.subr.bf16.mxu0 0
  %59 = vmatpush1.bf16.msra.mxu0 0
  %60 = vmatprep.subr.bf16.mxu0 0
  %61 = vmatpush1.bf16.msra.mxu0 0
  %62 = vmatprep.subr.bf16.mxu0 0
  %63 = vmatpush1.bf16.msra.mxu0 0
  %64 = vmatprep.subr.bf16.mxu0 0
  %65 = vmatpush1.bf16.msra.mxu0 0
  %66 = vmatprep.subr.bf16.mxu0 0
  %67 = vmatpush1.bf16.msra.mxu0 %v47
  %68 = vmatprep.subr.bf16.mxu0 0
  %69 = vmatpush1.bf16.msra.mxu0 %v46
  %70 = vmatprep.subr.bf16.mxu0 0
  %71 = vmatpush2.bf16.msra.mxu0 0
  %72 = vmatprep.subr.bf16.mxu0 0
  %73 = vmatpush2.bf16.msra.mxu0 0
  %74 = vmatprep.subr.bf16.mxu0 0
  %75 = vmatpush2.bf16.msra.mxu0 0
  %76 = vmatprep.subr.bf16.mxu0 0
  %77 = vmatpush2.bf16.msra.mxu0 0
  %78 = vmatprep.subr.bf16.mxu0 0
  %79 = vmatpush2.bf16.msra.mxu0 0
  %80 = vmatprep.subr.bf16.mxu0 0
  %81 = vmatpush2.bf16.msra.mxu0 0
  %82 = vmatprep.subr.bf16.mxu0 0
  %83 = vmatpush2.bf16.msra.mxu0 0
  %84 = vmatprep.subr.bf16.mxu0 0
  %85 = vmatpush2.bf16.msra.mxu0 0
  %86 = vmatprep.mubr.bf16.mxu0 0
  %87 = vmatmul.mubr.bf16.gmra.mxu0 %v52
  %v88 = vpop.f32.mrf.mxu0
  %v89 = vadd.f32 0.0, %v88
  %v90 = vpop.f32.mrf.mxu0
  %v91 = vpop.f32.mrf.mxu0
  %v92 = vadd.f32 0.0, %v91
  %v93 = vpop.f32.mrf.mxu0
  %94 = vdwg.mxu0
  %v97 = vunpack.c.l.b16 %v21
  %v98 = vunpack.c.l.b16 %v22
  %v99 = vpack.c.b16 %v98, %v97
  %v104 = vunpack.c.l.b16 %v23
  %v105 = vunpack.c.l.b16 %v24
  %v106 = vunpack.c.l.b16 %v25
  %v107 = vunpack.c.l.b16 %v26
  %v108 = vpack.c.b16 %v105, %v104
  %v109 = vpack.c.b16 %v107, %v106
  %v113 = vsel %vm50, %v99, 0
  %115 = vmatprep.subr.bf16.mxu0 0
  %116 = vmatpush1.bf16.msra.mxu0 0
  %117 = vmatprep.subr.bf16.mxu0 0
  %118 = vmatpush1.bf16.msra.mxu0 0
  %119 = vmatprep.subr.bf16.mxu0 0
  %120 = vmatpush1.bf16.msra.mxu0 0
  %121 = vmatprep.subr.bf16.mxu0 0
  %122 = vmatpush1.bf16.msra.mxu0 0
  %123 = vmatprep.subr.bf16.mxu0 0
  %124 = vmatpush1.bf16.msra.mxu0 0
  %125 = vmatprep.subr.bf16.mxu0 0
  %126 = vmatpush1.bf16.msra.mxu0 0
  %127 = vmatprep.subr.bf16.mxu0 0
  %128 = vmatpush1.bf16.msra.mxu0 %v109
  %129 = vmatprep.subr.bf16.mxu0 0
  %130 = vmatpush1.bf16.msra.mxu0 %v108
  %131 = vmatprep.subr.bf16.mxu0 0
  %132 = vmatpush2.bf16.msra.mxu0 0
  %133 = vmatprep.subr.bf16.mxu0 0
  %134 = vmatpush2.bf16.msra.mxu0 0
  %135 = vmatprep.subr.bf16.mxu0 0
  %136 = vmatpush2.bf16.msra.mxu0 0
  %137 = vmatprep.subr.bf16.mxu0 0
  %138 = vmatpush2.bf16.msra.mxu0 0
  %139 = vmatprep.subr.bf16.mxu0 0
  %140 = vmatpush2.bf16.msra.mxu0 0
  %141 = vmatprep.subr.bf16.mxu0 0
  %142 = vmatpush2.bf16.msra.mxu0 0
  %143 = vmatprep.subr.bf16.mxu0 0
  %144 = vmatpush2.bf16.msra.mxu0 0
  %145 = vmatprep.subr.bf16.mxu0 0
  %146 = vmatpush2.bf16.msra.mxu0 0
  %147 = vmatprep.mubr.bf16.mxu0 0
  %148 = vmatmul.mubr.bf16.gmra.mxu0 %v113
  %v149 = vpop.f32.mrf.mxu0
  %v150 = vadd.f32 %v89, %v149
  %v151 = vpop.f32.mrf.mxu0
  %v152 = vpop.f32.mrf.mxu0
  %v153 = vadd.f32 %v92, %v152
  %v154 = vpop.f32.mrf.mxu0
  %155 = vdwg.mxu0
  %v156 = vld [vmem:[%s4] sm:$0x1]
  %v158 = vlaneseq
  %v159 = vshrl.u32 %v158, 7
  %v160 = vsub.s32 0, %v159
  %v161 = vrot.slane %v156, %v160
  %v163 = vadd.f32 %v150, %v161
  %v164 = vadd.f32 %v153, %v161
  %165 = vst [vmem:[%s5] sm:$0xff] %v163
  %166 = vst [vmem:[%s5 + $0x8] sm:$0xff] %v164
  // Predicated region
  $region22: #{classifier_forward.5} parent=0 // pred_check
    _
  $region23: #{classifier_forward.5} parent=0 // pred_check_branch
    %168 = sbr.rel (0) target = $region25
  $region24: #{classifier_forward.5} parent=0 // pred_region
    _
  $region25: #{classifier_forward.5} parent=0 // pred_fallthru
    _
  // Predicated region
  $region26: #{classifier_forward.5} parent=0 // pred_check
    _
  $region27: #{classifier_forward.5} parent=0 // pred_check_branch
    %170 = sbr.rel (0) target = $region29
  $region28: #{classifier_forward.5} parent=0 // pred_region
    _
  $region29: #{classifier_forward.5} parent=0 // pred_fallthru
    _

// kernel: classifier_forward.3
$region0: #{classifier_forward.3}
  #allocation0 [shape = 'u32[]', space=smem, size = 0x4, offset = 0x4, fixed_abs, tag = 'smem constant byte address 0x4 - core index']
  #allocation1 [shape = 'u32[144,128]{1,0:T(1,128)}', space=vmem, size = 0x12000, scoped, tag = 'internal scratch']
  #allocation2 [shape = 'f32[16,128]{1,0:T(8,128)}', space=vmem, size = 0x2000, scoped, tag = 'scratch operand']
  #allocation3 [shape = 'f32[16,128]{1,0:T(8,128)}', space=vmem, size = 0x2000, scoped, tag = 'scratch operand']
  #allocation4 [shape = 'f32[16,32]{1,0:T(8,128)}', space=vmem, size = 0x2000, scoped, tag = 'scratch operand']
  #allocation5 [shape = 'f32[16,32]{1,0:T(8,128)}', space=vmem, size = 0x2000, scoped, tag = 'scratch operand']
  #allocation6 [shape = 'f32[2,32]{1,0:T(2,128)}', space=vmem, size = 0x400, scoped, tag = 'scratch operand']
  #allocation7 [shape = 'f32[2,32]{1,0:T(2,128)}', space=vmem, size = 0x400, scoped, tag = 'scratch operand']
  #allocation8 [shape = 'f32[2,32]{1,0:T(2,128)}', space=vmem, size = 0x400, scoped, tag = 'scratch operand']
  #allocation9 [shape = 'f32[2,32]{1,0:T(2,128)}', space=vmem, size = 0x400, scoped, tag = 'scratch operand']
  %s0 = inlined_call_operand.vmem [shape: f32[1,16,16], index: 0, kind: input, shape index: {}, may-alias: {0,1}]
  %s1 = inlined_call_operand.vmem [shape: f32[1,16,16], index: 1, kind: input, shape index: {}, may-alias: {0,1}]
  %s2 = inlined_call_operand.hbm [shape: bf16[16,128], index: 2, kind: input, shape index: {}]
  %s3 = inlined_call_operand.hbm [shape: bf16[16,128], index: 3, kind: input, shape index: {}]
  %s4 = inlined_call_operand.vmem [shape: f32[1,128], index: 4, kind: input, shape index: {}]
  %s5 = inlined_call_operand.vmem [shape: f32[1,128], index: 5, kind: input, shape index: {}]
  %s6 = inlined_call_operand.vmem [shape: bf16[32,128], index: 6, kind: input, shape index: {}]
  %s7 = inlined_call_operand.vmem [shape: bf16[32,128], index: 7, kind: input, shape index: {}]
  %s8 = inlined_call_operand.vmem [shape: bf16[1,16,32], index: 8, kind: output, shape index: {0}]
  %s9 = inlined_call_operand.vmem [shape: bf16[1,16,32], index: 9, kind: output, shape index: {1}]
  %10 = xla_tuple %s8, %s9
  %s11 = sld [smem:[#allocation0]]
  $region62: #{classifier_forward.3} parent=0
    _
  %s13 = ssub.s32 1, %s11
  %s14 = scalar_select 0, %s13, %s11
  $region1: #{classifier_forward.3} parent=0
    #allocation10 [shape = 'u8[4096]{0}', space=vmem, size = 0x1000, scoped, tag = 'input window, operand 2, single buffered']
    #allocation11 [shape = 's32[1]{0}', space=sflag, size = 0x4, scoped, tag = 'scoped memory for classifier_forward.3']
    #allocation12 [shape = 'u8[4096]{0}', space=vmem, size = 0x1000, scoped, tag = 'input window, operand 3, single buffered']
    #allocation13 [shape = 's32[1]{0}', space=sflag, size = 0x4, scoped, tag = 'scoped memory for classifier_forward.3']
    %15 = vsyncpa [#allocation11], 0
    %16 = vsyncpa [#allocation13], 0
    // Predicated region
    $region2: #{classifier_forward.3} parent=1 // pred_check
      _
    $region3: #{classifier_forward.3} parent=1 // pred_check_branch
      %18 = sbr.rel (0) target = $region5
    $region4: #{classifier_forward.3} parent=1 // pred_region
      _
    $region5: #{classifier_forward.3} parent=1 // pred_fallthru
      _
    // Predicated region
    $region6: #{classifier_forward.3} parent=1 // pred_check
      _
    $region7: #{classifier_forward.3} parent=1 // pred_check_branch
      %20 = sbr.rel (0) target = $region9
    $region8: #{classifier_forward.3} parent=1 // pred_region
      %s21 = ssub.s32 0, 0
      %s22 = smul.u32 2, %s21
      %p23 = scmp.lt.s32.totalorder %s22, 1
      %s24 = scalar_select %p23, %s22, 1
      %s25 = smul.addr %s24, 8
      %s26 = scalar_lea.vmem %s1, %s25
      %s27 = ssub.s32 0, 0
      %s28 = smul.u32 2, %s27
    $region9: #{classifier_forward.3} parent=1 // pred_fallthru
      _
    // Predicated region
    $region10: #{classifier_forward.3} parent=1 // pred_check
      _
    $region11: #{classifier_forward.3} parent=1 // pred_check_branch
      %30 = sbr.rel (0) target = $region13
    $region12: #{classifier_forward.3} parent=1 // pred_region
      %s32 = ssub.s32 128, 128
      %33 = vsyncadd [#allocation11], %s32
      %s34 = sshll.u32 [#allocation10], 4
      %s35 = int_to_ptr.vmem [resolvable:$true] %s34
      %40 = dma.hbm_to_vmem [thread:$0]  %s2, 128, %s35, [#allocation11], 64, 64, 4
    $region13: #{classifier_forward.3} parent=1 // pred_fallthru
      _
    // Predicated region
    $region14: #{classifier_forward.3} parent=1 // pred_check
      _
    $region15: #{classifier_forward.3} parent=1 // pred_check_branch
      %42 = sbr.rel (0) target = $region17
    $region16: #{classifier_forward.3} parent=1 // pred_region
      %s44 = ssub.s32 128, 128
      %45 = vsyncadd [#allocation13], %s44
      %s46 = sshll.u32 [#allocation12], 4
      %s47 = int_to_ptr.vmem [resolvable:$true] %s46
      %52 = dma.hbm_to_vmem [thread:$0]  %s3, 128, %s47, [#allocation13], 64, 64, 4
    $region17: #{classifier_forward.3} parent=1 // pred_fallthru
      _
    // Predicated region
    $region18: #{classifier_forward.3} parent=1 // pred_check
      _
    $region19: #{classifier_forward.3} parent=1 // pred_check_branch
      %54 = sbr.rel (0) target = $region21
    $region20: #{classifier_forward.3} parent=1 // pred_region
      _
    $region21: #{classifier_forward.3} parent=1 // pred_fallthru
      _
    // Predicated region
    $region22: #{classifier_forward.3} parent=1 // pred_check
      _
    $region23: #{classifier_forward.3} parent=1 // pred_check_branch
      %56 = sbr.rel (0) target = $region25
    $region24: #{classifier_forward.3} parent=1 // pred_region
      _
    $region25: #{classifier_forward.3} parent=1 // pred_fallthru
      _
    // Predicated region
    $region26: #{classifier_forward.3} parent=1 // pred_check
      _
    $region27: #{classifier_forward.3} parent=1 // pred_check_branch
      %58 = sbr.rel (0) target = $region29
    $region28: #{classifier_forward.3} parent=1 // pred_region
      _
    $region29: #{classifier_forward.3} parent=1 // pred_fallthru
      _
    // Predicated region
    $region30: #{classifier_forward.3} parent=1 // pred_check
      _
    $region31: #{classifier_forward.3} parent=1 // pred_check_branch
      %60 = sbr.rel (0) target = $region33
    $region32: #{classifier_forward.3} parent=1 // pred_region
      _
    $region33: #{classifier_forward.3} parent=1 // pred_fallthru
      _
    // Predicated region
    $region34: #{classifier_forward.3} parent=1 // pred_check
      _
    $region35: #{classifier_forward.3} parent=1 // pred_check_branch
      %62 = sbr.rel (0) target = $region37
    $region36: #{classifier_forward.3} parent=1 // pred_region
      %63 = dma.done [#allocation11], 128
    $region37: #{classifier_forward.3} parent=1 // pred_fallthru
      _
    // Predicated region
    $region38: #{classifier_forward.3} parent=1 // pred_check
      _
    $region39: #{classifier_forward.3} parent=1 // pred_check_branch
      %65 = sbr.rel (0) target = $region41
    $region40: #{classifier_forward.3} parent=1 // pred_region
      %66 = dma.done [#allocation13], 128
    $region41: #{classifier_forward.3} parent=1 // pred_fallthru
      _
    %s67 = ssub.s32 0, 0
    %s68 = smul.u32 2, %s67
    %p69 = scmp.lt.s32.totalorder %s68, 1
    %s70 = scalar_select %p69, %s68, 1
    %s71 = smul.addr %s70, 8
    %s72 = scalar_lea.vmem %s1, %s71
    %s73 = ssub.s32 0, 0
    %s74 = smul.u32 2, %s73
    %p75 = scmp.lt.s32.totalorder %s74, 1
    %s76 = scalar_select %p75, %s74, 1
    %s77 = smul.addr %s76, 4
    %s78 = scalar_lea.vmem %s9, %s77
    %s79 = ssub.s32 0, 0
    %s80 = smul.u32 2, %s79
    %p81 = scmp.lt.s32.totalorder %s80, 1
    %s82 = scalar_select %p81, %s80, 1
    %s83 = smul.addr %s82, 8
    %s84 = scalar_lea.vmem %s1, %s83
    %s85 = ssub.s32 0, 0
    %s86 = smul.u32 2, %s85
    %s87 = ssub.s32 0, 0
    %s88 = smul.u32 2, %s87
    %p89 = scmp.lt.s32.totalorder %s88, 1
    %s90 = scalar_select %p89, %s88, 1
    %s91 = smul.addr %s90, 4
    %s92 = scalar_lea.vmem %s9, %s91
    %s93 = ssub.s32 0, 0
    %s94 = smul.u32 2, %s93
    %p96 = scmp.eq.s32.totalorder 0, 0
    // Predicated region
    $region42: #{classifier_forward.3} parent=1 // pred_check
      %p97 = pneg %p96
    $region43: #{classifier_forward.3} parent=1 // pred_check_branch
      %99 = sbr.rel (%p97) target = $region45
    $region44: #{classifier_forward.3} parent=1 // pred_region
      %vm100 = vcmask 254976
      %101 = vst.msk [vmem:[#allocation6] sm:$0x3] %vm100, 0.0
      %102 = vst.msk [vmem:[#allocation7] sm:$0x3] %vm100, 0.0
      %103 = vst.msk [vmem:[#allocation8] sm:$0x3] %vm100, 0.0
      %104 = vst.msk [vmem:[#allocation9] sm:$0x3] %vm100, 0.0
    $region45: #{classifier_forward.3} parent=1 // pred_fallthru
      _
    %v105 = vld [vmem:[%s4] sm:$0x1]
    %v106 = vld [vmem:[%s0] sm:$0xff]
    %v107 = vld [vmem:[%s0 + $0x8] sm:$0xff]
    %v108 = vpack.c.bf16 %v107, %v106
    %v109 = vld [vmem:[#allocation10] sm:$0xf]
    %v110 = vld [vmem:[#allocation10 + $0x4] sm:$0xf]
    %v113 = vunpack.c.l.b16 %v109
    %v114 = vunpack.c.l.b16 %v110
    %v115 = vpack.c.b16 %v114, %v113
    %vm117 = vcmask 130048
    %v119 = vsel %vm117, %v108, 0
    %121 = vmatprep.subr.bf16.mxu0 0
    %122 = vmatpush1.bf16.msra.mxu0 0
    %123 = vmatprep.subr.bf16.mxu0 0
    %124 = vmatpush1.bf16.msra.mxu0 0
    %125 = vmatprep.subr.bf16.mxu0 0
    %126 = vmatpush1.bf16.msra.mxu0 0
    %127 = vmatprep.subr.bf16.mxu0 0
    %128 = vmatpush1.bf16.msra.mxu0 0
    %129 = vmatprep.subr.bf16.mxu0 0
    %130 = vmatpush1.bf16.msra.mxu0 0
    %131 = vmatprep.subr.bf16.mxu0 0
    %132 = vmatpush1.bf16.msra.mxu0 0
    %133 = vmatprep.subr.bf16.mxu0 0
    %134 = vmatpush1.bf16.msra.mxu0 0
    %135 = vmatprep.subr.bf16.mxu0 0
    %136 = vmatpush1.bf16.msra.mxu0 %v115
    %137 = vmatprep.subr.bf16.mxu0 0
    %138 = vmatpush2.bf16.msra.mxu0 0
    %139 = vmatprep.subr.bf16.mxu0 0
    %140 = vmatpush2.bf16.msra.mxu0 0
    %141 = vmatprep.subr.bf16.mxu0 0
    %142 = vmatpush2.bf16.msra.mxu0 0
    %143 = vmatprep.subr.bf16.mxu0 0
    %144 = vmatpush2.bf16.msra.mxu0 0
    %145 = vmatprep.subr.bf16.mxu0 0
    %146 = vmatpush2.bf16.msra.mxu0 0
    %147 = vmatprep.subr.bf16.mxu0 0
    %148 = vmatpush2.bf16.msra.mxu0 0
    %149 = vmatprep.subr.bf16.mxu0 0
    %150 = vmatpush2.bf16.msra.mxu0 0
    %151 = vmatprep.subr.bf16.mxu0 0
    %152 = vmatpush2.bf16.msra.mxu0 0
    %153 = vmatprep.mubr.bf16.mxu0 0
    %154 = vmatmul.mubr.bf16.gmra.mxu0 %v119
    %v155 = vpop.f32.mrf.mxu0
    %v156 = vadd.f32 0.0, %v155
    %v157 = vpop.f32.mrf.mxu0
    %v158 = vpop.f32.mrf.mxu0
    %v159 = vadd.f32 0.0, %v158
    %v160 = vpop.f32.mrf.mxu0
    %161 = vdwg.mxu0
    %v163 = vlaneseq
    %v164 = vshrl.u32 %v163, 7
    %v165 = vsub.s32 0, %v164
    %v166 = vrot.slane %v105, %v165
    %v168 = vadd.f32 %v166, %v156
    %v169 = vadd.f32 %v166, %v159
    %170 = vst [vmem:[#allocation2] sm:$0xff] %v168
    %171 = vst [vmem:[#allocation2 + $0x8] sm:$0xff] %v169
    %v172 = vld [vmem:[%s5] sm:$0x1]
    %v173 = vld [vmem:[%s84] sm:$0xff]
    %v174 = vld [vmem:[%s84 + $0x8] sm:$0xff]
    %v175 = vpack.c.bf16 %v174, %v173
    %v176 = vld [vmem:[#allocation12] sm:$0xf]
    %v177 = vld [vmem:[#allocation12 + $0x4] sm:$0xf]
    %v180 = vunpack.c.l.b16 %v176
    %v181 = vunpack.c.l.b16 %v177
    %v182 = vpack.c.b16 %v181, %v180
    %v185 = vsel %vm117, %v175, 0
    %187 = vmatprep.subr.bf16.mxu0 0
    %188 = vmatpush1.bf16.msra.mxu0 0
    %189 = vmatprep.subr.bf16.mxu0 0
    %190 = vmatpush1.bf16.msra.mxu0 0
    %191 = vmatprep.subr.bf16.mxu0 0
    %192 = vmatpush1.bf16.msra.mxu0 0
    %193 = vmatprep.subr.bf16.mxu0 0
    %194 = vmatpush1.bf16.msra.mxu0 0
    %195 = vmatprep.subr.bf16.mxu0 0
    %196 = vmatpush1.bf16.msra.mxu0 0
    %197 = vmatprep.subr.bf16.mxu0 0
    %198 = vmatpush1.bf16.msra.mxu0 0
    %199 = vmatprep.subr.bf16.mxu0 0
    %200 = vmatpush1.bf16.msra.mxu0 0
    %201 = vmatprep.subr.bf16.mxu0 0
    %202 = vmatpush1.bf16.msra.mxu0 %v182
    %203 = vmatprep.subr.bf16.mxu0 0
    %204 = vmatpush2.bf16.msra.mxu0 0
    %205 = vmatprep.subr.bf16.mxu0 0
    %206 = vmatpush2.bf16.msra.mxu0 0
    %207 = vmatprep.subr.bf16.mxu0 0
    %208 = vmatpush2.bf16.msra.mxu0 0
    %209 = vmatprep.subr.bf16.mxu0 0
    %210 = vmatpush2.bf16.msra.mxu0 0
    %211 = vmatprep.subr.bf16.mxu0 0
    %212 = vmatpush2.bf16.msra.mxu0 0
    %213 = vmatprep.subr.bf16.mxu0 0
    %214 = vmatpush2.bf16.msra.mxu0 0
    %215 = vmatprep.subr.bf16.mxu0 0
    %216 = vmatpush2.bf16.msra.mxu0 0
    %217 = vmatprep.subr.bf16.mxu0 0
    %218 = vmatpush2.bf16.msra.mxu0 0
    %219 = vmatprep.mubr.bf16.mxu0 0
    %220 = vmatmul.mubr.bf16.gmra.mxu0 %v185
    %v221 = vpop.f32.mrf.mxu0
    %v222 = vadd.f32 0.0, %v221
    %v223 = vpop.f32.mrf.mxu0
    %v224 = vpop.f32.mrf.mxu0
    %v225 = vadd.f32 0.0, %v224
    %v226 = vpop.f32.mrf.mxu0
    %227 = vdwg.mxu0
    %v229 = vlaneseq
    %v230 = vshrl.u32 %v229, 7
    %v231 = vsub.s32 0, %v230
    %v232 = vrot.slane %v172, %v231
    %v234 = vadd.f32 %v232, %v222
    %v235 = vadd.f32 %v232, %v225
    %236 = vst [vmem:[#allocation3] sm:$0xff] %v234
    %237 = vst [vmem:[#allocation3 + $0x8] sm:$0xff] %v235
    %v238 = vld [vmem:[#allocation6] sm:$0x3]
    %v239 = vld [vmem:[#allocation7] sm:$0x3]
    %v240 = vld [vmem:[#allocation8] sm:$0x3]
    %v241 = vld [vmem:[#allocation9] sm:$0x3]
    %v242 = vld [vmem:[#allocation2] sm:$0x3]
    %v243 = vpack.c.bf16 %v238, %v238
    %v244 = vld [vmem:[%s6] sm:$0xf]
    %v245 = vld [vmem:[%s6 + $0x4] sm:$0xf]
    %v246 = vld [vmem:[%s6 + $0x8] sm:$0xf]
    %v247 = vld [vmem:[%s6 + $0xc] sm:$0xf]
    %v252 = vunpack.c.l.b16 %v244
    %v253 = vunpack.c.l.b16 %v245
    %v254 = vunpack.c.l.b16 %v246
    %v255 = vunpack.c.l.b16 %v247
    %v256 = vpack.c.b16 %v253, %v252
    %v257 = vpack.c.b16 %v255, %v254
    %vm260 = vcmask 261120
    %v262 = vsel %vm260, %v243, 0
    %264 = vmatprep.subr.bf16.mxu0 0
    %265 = vmatpush1.bf16.msra.mxu0 0
    %266 = vmatprep.subr.bf16.mxu0 0
    %267 = vmatpush1.bf16.msra.mxu0 0
    %268 = vmatprep.subr.bf16.mxu0 0
    %269 = vmatpush1.bf16.msra.mxu0 0
    %270 = vmatprep.subr.bf16.mxu0 0
    %271 = vmatpush1.bf16.msra.mxu0 0
    %272 = vmatprep.subr.bf16.mxu0 0
    %273 = vmatpush1.bf16.msra.mxu0 0
    %274 = vmatprep.subr.bf16.mxu0 0
    %275 = vmatpush1.bf16.msra.mxu0 0
    %276 = vmatprep.subr.bf16.mxu0 0
    %277 = vmatpush1.bf16.msra.mxu0 %v257
    %278 = vmatprep.subr.bf16.mxu0 0
    %279 = vmatpush1.bf16.msra.mxu0 %v256
    %280 = vmatprep.subr.bf16.mxu0 0
    %281 = vmatpush2.bf16.msra.mxu0 0
    %282 = vmatprep.subr.bf16.mxu0 0
    %283 = vmatpush2.bf16.msra.mxu0 0
    %284 = vmatprep.subr.bf16.mxu0 0
    %285 = vmatpush2.bf16.msra.mxu0 0
    %286 = vmatprep.subr.bf16.mxu0 0
    %287 = vmatpush2.bf16.msra.mxu0 0
    %288 = vmatprep.subr.bf16.mxu0 0
    %289 = vmatpush2.bf16.msra.mxu0 0
    %290 = vmatprep.subr.bf16.mxu0 0
    %291 = vmatpush2.bf16.msra.mxu0 0
    %292 = vmatprep.subr.bf16.mxu0 0
    %293 = vmatpush2.bf16.msra.mxu0 0
    %294 = vmatprep.subr.bf16.mxu0 0
    %295 = vmatpush2.bf16.msra.mxu0 0
    %296 = vmatprep.mubr.bf16.mxu0 0
    %297 = vmatmul.mubr.bf16.gmra.mxu0 %v262
    %v298 = vpop.f32.mrf.mxu0
    %v299 = vadd.f32 0.0, %v298
    %v300 = vpop.f32.mrf.mxu0
    %v301 = vpop.f32.mrf.mxu0
    %v302 = vpop.f32.mrf.mxu0
    %303 = vdwg.mxu0
    %v304 = vadd.f32 %v242, %v299
    %v305 = vmul.f32 %v304, 0.5
    %v306 = vtanh.pop %v305
    %v307 = vmul.f32 %v306, 0.5
    %v308 = vadd.f32 %v307, 0.5
    %v309 = vtanh.pop %v304
    %311 = vrot.lane.b32.xlu0 %v239, 32
    %v312 = vpop.permute.xlu0 %311
    %v314 = vmul.f32 %v308, %v312
    %316 = vrot.lane.b32.xlu0 %v309, 64
    %v317 = vpop.permute.xlu0 %316
    %v319 = vmul.f32 %v308, %v317
    %321 = vrot.lane.b32.xlu0 %v319, 32
    %v322 = vpop.permute.xlu0 %321
    %v324 = vadd.f32 %v314, %v322
    %v325 = vtanh.pop %v324
    %327 = vrot.lane.b32.xlu0 %v325, 64
    %v328 = vpop.permute.xlu0 %327
    %v330 = vmul.f32 %v308, %v328
    %332 = vrot.lane.b32.xlu0 %v330, 32
    %v333 = vpop.permute.xlu0 %332
    %vm335 = vcmask 254976
    %336 = vst.msk [vmem:[#allocation4] sm:$0x3] %vm335, %v333
    %s337 = scalar_lea.vmem [#allocation3], 14
    %v338 = vld [vmem:[%s337] sm:$0x3]
    %v339 = vpack.c.bf16 %v240, %v240
    %v340 = vld [vmem:[%s7] sm:$0xf]
    %v341 = vld [vmem:[%s7 + $0x4] sm:$0xf]
    %v342 = vld [vmem:[%s7 + $0x8] sm:$0xf]
    %v343 = vld [vmem:[%s7 + $0xc] sm:$0xf]
    %v348 = vunpack.c.l.b16 %v340
    %v349 = vunpack.c.l.b16 %v341
    %v350 = vunpack.c.l.b16 %v342
    %v351 = vunpack.c.l.b16 %v343
    %v352 = vpack.c.b16 %v349, %v348
    %v353 = vpack.c.b16 %v351, %v350
    %v357 = vsel %vm260, %v339, 0
    %359 = vmatprep.subr.bf16.mxu0 0
    %360 = vmatpush1.bf16.msra.mxu0 0
    %361 = vmatprep.subr.bf16.mxu0 0
    %362 = vmatpush1.bf16.msra.mxu0 0
    %363 = vmatprep.subr.bf16.mxu0 0
    %364 = vmatpush1.bf16.msra.mxu0 0
    %365 = vmatprep.subr.bf16.mxu0 0
    %366 = vmatpush1.bf16.msra.mxu0 0
    %367 = vmatprep.subr.bf16.mxu0 0
    %368 = vmatpush1.bf16.msra.mxu0 0
    %369 = vmatprep.subr.bf16.mxu0 0
    %370 = vmatpush1.bf16.msra.mxu0 0
    %371 = vmatprep.subr.bf16.mxu0 0
    %372 = vmatpush1.bf16.msra.mxu0 %v353
    %373 = vmatprep.subr.bf16.mxu0 0
    %374 = vmatpush1.bf16.msra.mxu0 %v352
    %375 = vmatprep.subr.bf16.mxu0 0
    %376 = vmatpush2.bf16.msra.mxu0 0
    %377 = vmatprep.subr.bf16.mxu0 0
    %378 = vmatpush2.bf16.msra.mxu0 0
    %379 = vmatprep.subr.bf16.mxu0 0
    %380 = vmatpush2.bf16.msra.mxu0 0
    %381 = vmatprep.subr.bf16.mxu0 0
    %382 = vmatpush2.bf16.msra.mxu0 0
    %383 = vmatprep.subr.bf16.mxu0 0
    %384 = vmatpush2.bf16.msra.mxu0 0
    %385 = vmatprep.subr.bf16.mxu0 0
    %386 = vmatpush2.bf16.msra.mxu0 0
    %387 = vmatprep.subr.bf16.mxu0 0
    %388 = vmatpush2.bf16.msra.mxu0 0
    %389 = vmatprep.subr.bf16.mxu0 0
    %390 = vmatpush2.bf16.msra.mxu0 0
    %391 = vmatprep.mubr.bf16.mxu0 0
    %392 = vmatmul.mubr.bf16.gmra.mxu0 %v357
    %v393 = vpop.f32.mrf.mxu0
    %v394 = vadd.f32 0.0, %v393
    %v395 = vpop.f32.mrf.mxu0
    %v396 = vpop.f32.mrf.mxu0
    %v397 = vpop.f32.mrf.mxu0
    %398 = vdwg.mxu0
    %v399 = vadd.f32 %v338, %v394
    %v400 = vmul.f32 %v399, 0.5
    %v401 = vtanh.pop %v400
    %v402 = vmul.f32 %v401, 0.5
    %v403 = vadd.f32 %v402, 0.5
    %v404 = vtanh.pop %v399
    %406 = vrot.lane.b32.xlu0 %v241, 32
    %v407 = vpop.permute.xlu0 %406
    %v409 = vmul.f32 %v403, %v407
    %411 = vrot.lane.b32.xlu0 %v404, 64
    %v412 = vpop.permute.xlu0 %411
    %v414 = vmul.f32 %v403, %v412
    %416 = vrot.lane.b32.xlu0 %v414, 32
    %v417 = vpop.permute.xlu0 %416
    %v419 = vadd.f32 %v409, %v417
    %v420 = vtanh.pop %v419
    %422 = vrot.lane.b32.xlu0 %v420, 64
    %v423 = vpop.permute.xlu0 %422
    %v425 = vmul.f32 %v403, %v423
    %427 = vrot.lane.b32.xlu0 %v425, 32
    %v428 = vpop.permute.xlu0 %427
    %s430 = scalar_lea.vmem [#allocation5], 14
    %431 = vst.msk [vmem:[%s430] sm:$0x3] %vm335, %v428
    %s432 = scalar_lea.vmem [#allocation2], 2
    %v433 = vld [vmem:[%s432] sm:$0x3]
    %v434 = vpack.c.bf16 %v330, %v330
    %v435 = vld [vmem:[%s6] sm:$0xf]
    %v436 = vld [vmem:[%s6 + $0x4] sm:$0xf]
    %v437 = vld [vmem:[%s6 + $0x8] sm:$0xf]
    %v438 = vld [vmem:[%s6 + $0xc] sm:$0xf]
    %440 = vrot.lane.b32.xlu0 %v434, 32
    %v441 = vpop.permute.xlu0 %440
    %v446 = vunpack.c.l.b16 %v435
    %v447 = vunpack.c.l.b16 %v436
    %v448 = vunpack.c.l.b16 %v437
    %v449 = vunpack.c.l.b16 %v438
    %v450 = vpack.c.b16 %v447, %v446
    %v451 = vpack.c.b16 %v449, %v448
    %v455 = vsel %vm260, %v441, 0
    %457 = vmatprep.subr.bf16.mxu0 0
    %458 = vmatpush1.bf16.msra.mxu0 0
    %459 = vmatprep.subr.bf16.mxu0 0
    %460 = vmatpush1.bf16.msra.mxu0 0
    %461 = vmatprep.subr.bf16.mxu0 0
    %462 = vmatpush1.bf16.msra.mxu0 0
    %463 = vmatprep.subr.bf16.mxu0 0
    %464 = vmatpush1.bf16.msra.mxu0 0
    %465 = vmatprep.subr.bf16.mxu0 0
    %466 = vmatpush1.bf16.msra.mxu0 0
    %467 = vmatprep.subr.bf16.mxu0 0
    %468 = vmatpush1.bf16.msra.mxu0 0
    %469 = vmatprep.subr.bf16.mxu0 0
    %470 = vmatpush1.bf16.msra.mxu0 %v451
    %471 = vmatprep.subr.bf16.mxu0 0
    %472 = vmatpush1.bf16.msra.mxu0 %v450
    %473 = vmatprep.subr.bf16.mxu0 0
    %474 = vmatpush2.bf16.msra.mxu0 0
    %475 = vmatprep.subr.bf16.mxu0 0
    %476 = vmatpush2.bf16.msra.mxu0 0
    %477 = vmatprep.subr.bf16.mxu0 0
    %478 = vmatpush2.bf16.msra.mxu0 0
    %479 = vmatprep.subr.bf16.mxu0 0
    %480 = vmatpush2.bf16.msra.mxu0 0
    %481 = vmatprep.subr.bf16.mxu0 0
    %482 = vmatpush2.bf16.msra.mxu0 0
    %483 = vmatprep.subr.bf16.mxu0 0
    %484 = vmatpush2.bf16.msra.mxu0 0
    %485 = vmatprep.subr.bf16.mxu0 0
    %486 = vmatpush2.bf16.msra.mxu0 0
    %487 = vmatprep.subr.bf16.mxu0 0
    %488 = vmatpush2.bf16.msra.mxu0 0
    %489 = vmatprep.mubr.bf16.mxu0 0
    %490 = vmatmul.mubr.bf16.gmra.mxu0 %v455
    %v491 = vpop.f32.mrf.mxu0
    %v492 = vadd.f32 0.0, %v491
    %v493 = vpop.f32.mrf.mxu0
    %v494 = vpop.f32.mrf.mxu0
    %v495 = vpop.f32.mrf.mxu0
    %496 = vdwg.mxu0
    %v497 = vadd.f32 %v433, %v492
    %v498 = vmul.f32 %v497, 0.5
    %v499 = vtanh.pop %v498
    %v500 = vmul.f32 %v499, 0.5
    %v501 = vadd.f32 %v500, 0.5
    %v502 = vtanh.pop %v497
    %v503 = vmul.f32 %v501, %v324
    %505 = vrot.lane.b32.xlu0 %v502, 64
    %v506 = vpop.permute.xlu0 %505
    %v508 = vmul.f32 %v501, %v506
    %510 = vrot.lane.b32.xlu0 %v508, 32
    %v511 = vpop.permute.xlu0 %510
    %v513 = vadd.f32 %v503, %v511
    %v514 = vtanh.pop %v513
    %516 = vrot.lane.b32.xlu0 %v514, 64
    %v517 = vpop.permute.xlu0 %516
    %v519 = vmul.f32 %v501, %v517
    %521 = vrot.lane.b32.xlu0 %v519, 32
    %v522 = vpop.permute.xlu0 %521
    %s524 = scalar_lea.vmem [#allocation4], 2
    %525 = vst.msk [vmem:[%s524] sm:$0x3] %vm335, %v522
    %s526 = scalar_lea.vmem [#allocation3], 12
    %v527 = vld [vmem:[%s526] sm:$0x3]
    %v528 = vpack.c.bf16 %v425, %v425
    %v529 = vld [vmem:[%s7] sm:$0xf]
    %v530 = vld [vmem:[%s7 + $0x4] sm:$0xf]
    %v531 = vld [vmem:[%s7 + $0x8] sm:$0xf]
    %v532 = vld [vmem:[%s7 + $0xc] sm:$0xf]
    %534 = vrot.lane.b32.xlu0 %v528, 32
    %v535 = vpop.permute.xlu0 %534
    %v540 = vunpack.c.l.b16 %v529
    %v541 = vunpack.c.l.b16 %v530
    %v542 = vunpack.c.l.b16 %v531
    %v543 = vunpack.c.l.b16 %v532
    %v544 = vpack.c.b16 %v541, %v540
    %v545 = vpack.c.b16 %v543, %v542
    %v549 = vsel %vm260, %v535, 0
    %551 = vmatprep.subr.bf16.mxu0 0
    %552 = vmatpush1.bf16.msra.mxu0 0
    %553 = vmatprep.subr.bf16.mxu0 0
    %554 = vmatpush1.bf16.msra.mxu0 0
    %555 = vmatprep.subr.bf16.mxu0 0
    %556 = vmatpush1.bf16.msra.mxu0 0
    %557 = vmatprep.subr.bf16.mxu0 0
    %558 = vmatpush1.bf16.msra.mxu0 0
    %559 = vmatprep.subr.bf16.mxu0 0
    %560 = vmatpush1.bf16.msra.mxu0 0
    %561 = vmatprep.subr.bf16.mxu0 0
    %562 = vmatpush1.bf16.msra.mxu0 0
    %563 = vmatprep.subr.bf16.mxu0 0
    %564 = vmatpush1.bf16.msra.mxu0 %v545
    %565 = vmatprep.subr.bf16.mxu0 0
    %566 = vmatpush1.bf16.msra.mxu0 %v544
    %567 = vmatprep.subr.bf16.mxu0 0
    %568 = vmatpush2.bf16.msra.mxu0 0
    %569 = vmatprep.subr.bf16.mxu0 0
    %570 = vmatpush2.bf16.msra.mxu0 0
    %571 = vmatprep.subr.bf16.mxu0 0
    %572 = vmatpush2.bf16.msra.mxu0 0
    %573 = vmatprep.subr.bf16.mxu0 0
    %574 = vmatpush2.bf16.msra.mxu0 0
    %575 = vmatprep.subr.bf16.mxu0 0
    %576 = vmatpush2.bf16.msra.mxu0 0
    %577 = vmatprep.subr.bf16.mxu0 0
    %578 = vmatpush2.bf16.msra.mxu0 0
    %579 = vmatprep.subr.bf16.mxu0 0
    %580 = vmatpush2.bf16.msra.mxu0 0
    %581 = vmatprep.subr.bf16.mxu0 0
    %582 = vmatpush2.bf16.msra.mxu0 0
    %583 = vmatprep.mubr.bf16.mxu0 0
    %584 = vmatmul.mubr.bf16.gmra.mxu0 %v549
    %v585 = vpop.f32.mrf.mxu0
    %v586 = vadd.f32 0.0, %v585
    %v587 = vpop.f32.mrf.mxu0
    %v588 = vpop.f32.mrf.mxu0
    %v589 = vpop.f32.mrf.mxu0
    %590 = vdwg.mxu0
    %v591 = vadd.f32 %v527, %v586
    %v592 = vmul.f32 %v591, 0.5
    %v593 = vtanh.pop %v592
    %v594 = vmul.f32 %v593, 0.5
    %v595 = vadd.f32 %v594, 0.5
    %v596 = vtanh.pop %v591
    %v597 = vmul.f32 %v595, %v419
    %599 = vrot.lane.b32.xlu0 %v596, 64
    %v600 = vpop.permute.xlu0 %599
    %v602 = vmul.f32 %v595, %v600
    %604 = vrot.lane.b32.xlu0 %v602, 32
    %v605 = vpop.permute.xlu0 %604
    %v607 = vadd.f32 %v597, %v605
    %v608 = vtanh.pop %v607
    %610 = vrot.lane.b32.xlu0 %v608, 64
    %v611 = vpop.permute.xlu0 %610
    %v613 = vmul.f32 %v595, %v611
    %615 = vrot.lane.b32.xlu0 %v613, 32
    %v616 = vpop.permute.xlu0 %615
    %s618 = scalar_lea.vmem [#allocation5], 12
    %619 = vst.msk [vmem:[%s618] sm:$0x3] %vm335, %v616
    %s620 = scalar_lea.vmem [#allocation2], 4
    %v621 = vld [vmem:[%s620] sm:$0x3]
    %v622 = vpack.c.bf16 %v519, %v519
    %v623 = vld [vmem:[%s6] sm:$0xf]
    %v624 = vld [vmem:[%s6 + $0x4] sm:$0xf]
    %v625 = vld [vmem:[%s6 + $0x8] sm:$0xf]
    %v626 = vld [vmem:[%s6 + $0xc] sm:$0xf]
    %628 = vrot.lane.b32.xlu0 %v622, 32
    %v629 = vpop.permute.xlu0 %628
    %v634 = vunpack.c.l.b16 %v623
    %v635 = vunpack.c.l.b16 %v624
    %v636 = vunpack.c.l.b16 %v625
    %v637 = vunpack.c.l.b16 %v626
    %v638 = vpack.c.b16 %v635, %v634
    %v639 = vpack.c.b16 %v637, %v636
    %v643 = vsel %vm260, %v629, 0
    %645 = vmatprep.subr.bf16.mxu0 0
    %646 = vmatpush1.bf16.msra.mxu0 0
    %647 = vmatprep.subr.bf16.mxu0 0
    %648 = vmatpush1.bf16.msra.mxu0 0
    %649 = vmatprep.subr.bf16.mxu0 0
    %650 = vmatpush1.bf16.msra.mxu0 0
    %651 = vmatprep.subr.bf16.mxu0 0
    %652 = vmatpush1.bf16.msra.mxu0 0
    %653 = vmatprep.subr.bf16.mxu0 0
    %654 = vmatpush1.bf16.msra.mxu0 0
    %655 = vmatprep.subr.bf16.mxu0 0
    %656 = vmatpush1.bf16.msra.mxu0 0
    %657 = vmatprep.subr.bf16.mxu0 0
    %658 = vmatpush1.bf16.msra.mxu0 %v639
    %659 = vmatprep.subr.bf16.mxu0 0
    %660 = vmatpush1.bf16.msra.mxu0 %v638
    %661 = vmatprep.subr.bf16.mxu0 0
    %662 = vmatpush2.bf16.msra.mxu0 0
    %663 = vmatprep.subr.bf16.mxu0 0
    %664 = vmatpush2.bf16.msra.mxu0 0
    %665 = vmatprep.subr.bf16.mxu0 0
    %666 = vmatpush2.bf16.msra.mxu0 0
    %667 = vmatprep.subr.bf16.mxu0 0
    %668 = vmatpush2.bf16.msra.mxu0 0
    %669 = vmatprep.subr.bf16.mxu0 0
    %670 = vmatpush2.bf16.msra.mxu0 0
    %671 = vmatprep.subr.bf16.mxu0 0
    %672 = vmatpush2.bf16.msra.mxu0 0
    %673 = vmatprep.subr.bf16.mxu0 0
    %674 = vmatpush2.bf16.msra.mxu0 0
    %675 = vmatprep.subr.bf16.mxu0 0
    %676 = vmatpush2.bf16.msra.mxu0 0
    %677 = vmatprep.mubr.bf16.mxu0 0
    %678 = vmatmul.mubr.bf16.gmra.mxu0 %v643
    %v679 = vpop.f32.mrf.mxu0
    %v680 = vadd.f32 0.0, %v679
    %v681 = vpop.f32.mrf.mxu0
    %v682 = vpop.f32.mrf.mxu0
    %v683 = vpop.f32.mrf.mxu0
    %684 = vdwg.mxu0
    %v685 = vadd.f32 %v621, %v680
    %v686 = vmul.f32 %v685, 0.5
    %v687 = vtanh.pop %v686
    %v688 = vmul.f32 %v687, 0.5
    %v689 = vadd.f32 %v688, 0.5
    %v690 = vtanh.pop %v685
    %v691 = vmul.f32 %v689, %v513
    %693 = vrot.lane.b32.xlu0 %v690, 64
    %v694 = vpop.permute.xlu0 %693
    %v696 = vmul.f32 %v689, %v694
    %698 = vrot.lane.b32.xlu0 %v696, 32
    %v699 = vpop.permute.xlu0 %698
    %v701 = vadd.f32 %v691, %v699
    %v702 = vtanh.pop %v701
    %704 = vrot.lane.b32.xlu0 %v702, 64
    %v705 = vpop.permute.xlu0 %704
    %v707 = vmul.f32 %v689, %v705
    %709 = vrot.lane.b32.xlu0 %v707, 32
    %v710 = vpop.permute.xlu0 %709
    %s712 = scalar_lea.vmem [#allocation4], 4
    %713 = vst.msk [vmem:[%s712] sm:$0x3] %vm335, %v710
    %s714 = scalar_lea.vmem [#allocation3], 10
    %v715 = vld [vmem:[%s714] sm:$0x3]
    %v716 = vpack.c.bf16 %v613, %v613
    %v717 = vld [vmem:[%s7] sm:$0xf]
    %v718 = vld [vmem:[%s7 + $0x4] sm:$0xf]
    %v719 = vld [vmem:[%s7 + $0x8] sm:$0xf]
    %v720 = vld [vmem:[%s7 + $0xc] sm:$0xf]
    %722 = vrot.lane.b32.xlu0 %v716, 32
    %v723 = vpop.permute.xlu0 %722
    %v728 = vunpack.c.l.b16 %v717
    %v729 = vunpack.c.l.b16 %v718
    %v730 = vunpack.c.l.b16 %v719
    %v731 = vunpack.c.l.b16 %v720
    %v732 = vpack.c.b16 %v729, %v728
    %v733 = vpack.c.b16 %v731, %v730
    %v737 = vsel %vm260, %v723, 0
    %739 = vmatprep.subr.bf16.mxu0 0
    %740 = vmatpush1.bf16.msra.mxu0 0
    %741 = vmatprep.subr.bf16.mxu0 0
    %742 = vmatpush1.bf16.msra.mxu0 0
    %743 = vmatprep.subr.bf16.mxu0 0
    %744 = vmatpush1.bf16.msra.mxu0 0
    %745 = vmatprep.subr.bf16.mxu0 0
    %746 = vmatpush1.bf16.msra.mxu0 0
    %747 = vmatprep.subr.bf16.mxu0 0
    %748 = vmatpush1.bf16.msra.mxu0 0
    %749 = vmatprep.subr.bf16.mxu0 0
    %750 = vmatpush1.bf16.msra.mxu0 0
    %751 = vmatprep.subr.bf16.mxu0 0
    %752 = vmatpush1.bf16.msra.mxu0 %v733
    %753 = vmatprep.subr.bf16.mxu0 0
    %754 = vmatpush1.bf16.msra.mxu0 %v732
    %755 = vmatprep.subr.bf16.mxu0 0
    %756 = vmatpush2.bf16.msra.mxu0 0
    %757 = vmatprep.subr.bf16.mxu0 0
    %758 = vmatpush2.bf16.msra.mxu0 0
    %759 = vmatprep.subr.bf16.mxu0 0
    %760 = vmatpush2.bf16.msra.mxu0 0
    %761 = vmatprep.subr.bf16.mxu0 0
    %762 = vmatpush2.bf16.msra.mxu0 0
    %763 = vmatprep.subr.bf16.mxu0 0
    %764 = vmatpush2.bf16.msra.mxu0 0
    %765 = vmatprep.subr.bf16.mxu0 0
    %766 = vmatpush2.bf16.msra.mxu0 0
    %767 = vmatprep.subr.bf16.mxu0 0
    %768 = vmatpush2.bf16.msra.mxu0 0
    %769 = vmatprep.subr.bf16.mxu0 0
    %770 = vmatpush2.bf16.msra.mxu0 0
    %771 = vmatprep.mubr.bf16.mxu0 0
    %772 = vmatmul.mubr.bf16.gmra.mxu0 %v737
    %v773 = vpop.f32.mrf.mxu0
    %v774 = vadd.f32 0.0, %v773
    %v775 = vpop.f32.mrf.mxu0
    %v776 = vpop.f32.mrf.mxu0
    %v777 = vpop.f32.mrf.mxu0
    %778 = vdwg.mxu0
    %v779 = vadd.f32 %v715, %v774
    %v780 = vmul.f32 %v779, 0.5
    %v781 = vtanh.pop %v780
    %v782 = vmul.f32 %v781, 0.5
    %v783 = vadd.f32 %v782, 0.5
    %v784 = vtanh.pop %v779
    %v785 = vmul.f32 %v783, %v607
    %787 = vrot.lane.b32.xlu0 %v784, 64
    %v788 = vpop.permute.xlu0 %787
    %v790 = vmul.f32 %v783, %v788
    %792 = vrot.lane.b32.xlu0 %v790, 32
    %v793 = vpop.permute.xlu0 %792
    %v795 = vadd.f32 %v785, %v793
    %v796 = vtanh.pop %v795
    %798 = vrot.lane.b32.xlu0 %v796, 64
    %v799 = vpop.permute.xlu0 %798
    %v801 = vmul.f32 %v783, %v799
    %803 = vrot.lane.b32.xlu0 %v801, 32
    %v804 = vpop.permute.xlu0 %803
    %s806 = scalar_lea.vmem [#allocation5], 10
    %807 = vst.msk [vmem:[%s806] sm:$0x3] %vm335, %v804
    %s808 = scalar_lea.vmem [#allocation2], 6
    %v809 = vld [vmem:[%s808] sm:$0x3]
    %v810 = vpack.c.bf16 %v707, %v707
    %v811 = vld [vmem:[%s6] sm:$0xf]
    %v812 = vld [vmem:[%s6 + $0x4] sm:$0xf]
    %v813 = vld [vmem:[%s6 + $0x8] sm:$0xf]
    %v814 = vld [vmem:[%s6 + $0xc] sm:$0xf]
    %816 = vrot.lane.b32.xlu0 %v810, 32
    %v817 = vpop.permute.xlu0 %816
    %v822 = vunpack.c.l.b16 %v811
    %v823 = vunpack.c.l.b16 %v812
    %v824 = vunpack.c.l.b16 %v813
    %v825 = vunpack.c.l.b16 %v814
    %v826 = vpack.c.b16 %v823, %v822
    %v827 = vpack.c.b16 %v825, %v824
    %v831 = vsel %vm260, %v817, 0
    %833 = vmatprep.subr.bf16.mxu0 0
    %834 = vmatpush1.bf16.msra.mxu0 0
    %835 = vmatprep.subr.bf16.mxu0 0
    %836 = vmatpush1.bf16.msra.mxu0 0
    %837 = vmatprep.subr.bf16.mxu0 0
    %838 = vmatpush1.bf16.msra.mxu0 0
    %839 = vmatprep.subr.bf16.mxu0 0
    %840 = vmatpush1.bf16.msra.mxu0 0
    %841 = vmatprep.subr.bf16.mxu0 0
    %842 = vmatpush1.bf16.msra.mxu0 0
    %843 = vmatprep.subr.bf16.mxu0 0
    %844 = vmatpush1.bf16.msra.mxu0 0
    %845 = vmatprep.subr.bf16.mxu0 0
    %846 = vmatpush1.bf16.msra.mxu0 %v827
    %847 = vmatprep.subr.bf16.mxu0 0
    %848 = vmatpush1.bf16.msra.mxu0 %v826
    %849 = vmatprep.subr.bf16.mxu0 0
    %850 = vmatpush2.bf16.msra.mxu0 0
    %851 = vmatprep.subr.bf16.mxu0 0
    %852 = vmatpush2.bf16.msra.mxu0 0
    %853 = vmatprep.subr.bf16.mxu0 0
    %854 = vmatpush2.bf16.msra.mxu0 0
    %855 = vmatprep.subr.bf16.mxu0 0
    %856 = vmatpush2.bf16.msra.mxu0 0
    %857 = vmatprep.subr.bf16.mxu0 0
    %858 = vmatpush2.bf16.msra.mxu0 0
    %859 = vmatprep.subr.bf16.mxu0 0
    %860 = vmatpush2.bf16.msra.mxu0 0
    %861 = vmatprep.subr.bf16.mxu0 0
    %862 = vmatpush2.bf16.msra.mxu0 0
    %863 = vmatprep.subr.bf16.mxu0 0
    %864 = vmatpush2.bf16.msra.mxu0 0
    %865 = vmatprep.mubr.bf16.mxu0 0
    %866 = vmatmul.mubr.bf16.gmra.mxu0 %v831
    %v867 = vpop.f32.mrf.mxu0
    %v868 = vadd.f32 0.0, %v867
    %v869 = vpop.f32.mrf.mxu0
    %v870 = vpop.f32.mrf.mxu0
    %v871 = vpop.f32.mrf.mxu0
    %872 = vdwg.mxu0
    %v873 = vadd.f32 %v809, %v868
    %v874 = vmul.f32 %v873, 0.5
    %v875 = vtanh.pop %v874
    %v876 = vmul.f32 %v875, 0.5
    %v877 = vadd.f32 %v876, 0.5
    %v878 = vtanh.pop %v873
    %v879 = vmul.f32 %v877, %v701
    %881 = vrot.lane.b32.xlu0 %v878, 64
    %v882 = vpop.permute.xlu0 %881
    %v884 = vmul.f32 %v877, %v882
    %886 = vrot.lane.b32.xlu0 %v884, 32
    %v887 = vpop.permute.xlu0 %886
    %v889 = vadd.f32 %v879, %v887
    %v890 = vtanh.pop %v889
    %892 = vrot.lane.b32.xlu0 %v890, 64
    %v893 = vpop.permute.xlu0 %892
    %v895 = vmul.f32 %v877, %v893
    %897 = vrot.lane.b32.xlu0 %v895, 32
    %v898 = vpop.permute.xlu0 %897
    %s900 = scalar_lea.vmem [#allocation4], 6
    %901 = vst.msk [vmem:[%s900] sm:$0x3] %vm335, %v898
    %s902 = scalar_lea.vmem [#allocation3], 8
    %v903 = vld [vmem:[%s902] sm:$0x3]
    %v904 = vpack.c.bf16 %v801, %v801
    %v905 = vld [vmem:[%s7] sm:$0xf]
    %v906 = vld [vmem:[%s7 + $0x4] sm:$0xf]
    %v907 = vld [vmem:[%s7 + $0x8] sm:$0xf]
    %v908 = vld [vmem:[%s7 + $0xc] sm:$0xf]
    %910 = vrot.lane.b32.xlu0 %v904, 32
    %v911 = vpop.permute.xlu0 %910
    %v916 = vunpack.c.l.b16 %v905
    %v917 = vunpack.c.l.b16 %v906
    %v918 = vunpack.c.l.b16 %v907
    %v919 = vunpack.c.l.b16 %v908
    %v920 = vpack.c.b16 %v917, %v916
    %v921 = vpack.c.b16 %v919, %v918
    %v925 = vsel %vm260, %v911, 0
    %927 = vmatprep.subr.bf16.mxu0 0
    %928 = vmatpush1.bf16.msra.mxu0 0
    %929 = vmatprep.subr.bf16.mxu0 0
    %930 = vmatpush1.bf16.msra.mxu0 0
    %931 = vmatprep.subr.bf16.mxu0 0
    %932 = vmatpush1.bf16.msra.mxu0 0
    %933 = vmatprep.subr.bf16.mxu0 0
    %934 = vmatpush1.bf16.msra.mxu0 0
    %935 = vmatprep.subr.bf16.mxu0 0
    %936 = vmatpush1.bf16.msra.mxu0 0
    %937 = vmatprep.subr.bf16.mxu0 0
    %938 = vmatpush1.bf16.msra.mxu0 0
    %939 = vmatprep.subr.bf16.mxu0 0
    %940 = vmatpush1.bf16.msra.mxu0 %v921
    %941 = vmatprep.subr.bf16.mxu0 0
    %942 = vmatpush1.bf16.msra.mxu0 %v920
    %943 = vmatprep.subr.bf16.mxu0 0
    %944 = vmatpush2.bf16.msra.mxu0 0
    %945 = vmatprep.subr.bf16.mxu0 0
    %946 = vmatpush2.bf16.msra.mxu0 0
    %947 = vmatprep.subr.bf16.mxu0 0
    %948 = vmatpush2.bf16.msra.mxu0 0
    %949 = vmatprep.subr.bf16.mxu0 0
    %950 = vmatpush2.bf16.msra.mxu0 0
    %951 = vmatprep.subr.bf16.mxu0 0
    %952 = vmatpush2.bf16.msra.mxu0 0
    %953 = vmatprep.subr.bf16.mxu0 0
    %954 = vmatpush2.bf16.msra.mxu0 0
    %955 = vmatprep.subr.bf16.mxu0 0
    %956 = vmatpush2.bf16.msra.mxu0 0
    %957 = vmatprep.subr.bf16.mxu0 0
    %958 = vmatpush2.bf16.msra.mxu0 0
    %959 = vmatprep.mubr.bf16.mxu0 0
    %960 = vmatmul.mubr.bf16.gmra.mxu0 %v925
    %v961 = vpop.f32.mrf.mxu0
    %v962 = vadd.f32 0.0, %v961
    %v963 = vpop.f32.mrf.mxu0
    %v964 = vpop.f32.mrf.mxu0
    %v965 = vpop.f32.mrf.mxu0
    %966 = vdwg.mxu0
    %v967 = vadd.f32 %v903, %v962
    %v968 = vmul.f32 %v967, 0.5
    %v969 = vtanh.pop %v968
    %v970 = vmul.f32 %v969, 0.5
    %v971 = vadd.f32 %v970, 0.5
    %v972 = vtanh.pop %v967
    %v973 = vmul.f32 %v971, %v795
    %975 = vrot.lane.b32.xlu0 %v972, 64
    %v976 = vpop.permute.xlu0 %975
    %v978 = vmul.f32 %v971, %v976
    %980 = vrot.lane.b32.xlu0 %v978, 32
    %v981 = vpop.permute.xlu0 %980
    %v983 = vadd.f32 %v973, %v981
    %v984 = vtanh.pop %v983
    %986 = vrot.lane.b32.xlu0 %v984, 64
    %v987 = vpop.permute.xlu0 %986
    %v989 = vmul.f32 %v971, %v987
    %991 = vrot.lane.b32.xlu0 %v989, 32
    %v992 = vpop.permute.xlu0 %991
    %s994 = scalar_lea.vmem [#allocation5], 8
    %995 = vst.msk [vmem:[%s994] sm:$0x3] %vm335, %v992
    %s996 = scalar_lea.vmem [#allocation2], 8
    %v997 = vld [vmem:[%s996] sm:$0x3]
    %v998 = vpack.c.bf16 %v895, %v895
    %v999 = vld [vmem:[%s6] sm:$0xf]
    %v1000 = vld [vmem:[%s6 + $0x4] sm:$0xf]
    %v1001 = vld [vmem:[%s6 + $0x8] sm:$0xf]
    %v1002 = vld [vmem:[%s6 + $0xc] sm:$0xf]
    %1004 = vrot.lane.b32.xlu0 %v998, 32
    %v1005 = vpop.permute.xlu0 %1004
    %v1010 = vunpack.c.l.b16 %v999
    %v1011 = vunpack.c.l.b16 %v1000
    %v1012 = vunpack.c.l.b16 %v1001
    %v1013 = vunpack.c.l.b16 %v1002
    %v1014 = vpack.c.b16 %v1011, %v1010
    %v1015 = vpack.c.b16 %v1013, %v1012
    %v1019 = vsel %vm260, %v1005, 0
    %1021 = vmatprep.subr.bf16.mxu0 0
    %1022 = vmatpush1.bf16.msra.mxu0 0
    %1023 = vmatprep.subr.bf16.mxu0 0
    %1024 = vmatpush1.bf16.msra.mxu0 0
    %1025 = vmatprep.subr.bf16.mxu0 0
    %1026 = vmatpush1.bf16.msra.mxu0 0
    %1027 = vmatprep.subr.bf16.mxu0 0
    %1028 = vmatpush1.bf16.msra.mxu0 0
    %1029 = vmatprep.subr.bf16.mxu0 0
    %1030 = vmatpush1.bf16.msra.mxu0 0
    %1031 = vmatprep.subr.bf16.mxu0 0
    %1032 = vmatpush1.bf16.msra.mxu0 0
    %1033 = vmatprep.subr.bf16.mxu0 0
    %1034 = vmatpush1.bf16.msra.mxu0 %v1015
    %1035 = vmatprep.subr.bf16.mxu0 0
    %1036 = vmatpush1.bf16.msra.mxu0 %v1014
    %1037 = vmatprep.subr.bf16.mxu0 0
    %1038 = vmatpush2.bf16.msra.mxu0 0
    %1039 = vmatprep.subr.bf16.mxu0 0
    %1040 = vmatpush2.bf16.msra.mxu0 0
    %1041 = vmatprep.subr.bf16.mxu0 0
    %1042 = vmatpush2.bf16.msra.mxu0 0
    %1043 = vmatprep.subr.bf16.mxu0 0
    %1044 = vmatpush2.bf16.msra.mxu0 0
    %1045 = vmatprep.subr.bf16.mxu0 0
    %1046 = vmatpush2.bf16.msra.mxu0 0
    %1047 = vmatprep.subr.bf16.mxu0 0
    %1048 = vmatpush2.bf16.msra.mxu0 0
    %1049 = vmatprep.subr.bf16.mxu0 0
    %1050 = vmatpush2.bf16.msra.mxu0 0
    %1051 = vmatprep.subr.bf16.mxu0 0
    %1052 = vmatpush2.bf16.msra.mxu0 0
    %1053 = vmatprep.mubr.bf16.mxu0 0
    %1054 = vmatmul.mubr.bf16.gmra.mxu0 %v1019
    %v1055 = vpop.f32.mrf.mxu0
    %v1056 = vadd.f32 0.0, %v1055
    %v1057 = vpop.f32.mrf.mxu0
    %v1058 = vpop.f32.mrf.mxu0
    %v1059 = vpop.f32.mrf.mxu0
    %1060 = vdwg.mxu0
    %v1061 = vadd.f32 %v997, %v1056
    %v1062 = vmul.f32 %v1061, 0.5
    %v1063 = vtanh.pop %v1062
    %v1064 = vmul.f32 %v1063, 0.5
    %v1065 = vadd.f32 %v1064, 0.5
    %v1066 = vtanh.pop %v1061
    %v1067 = vmul.f32 %v1065, %v889
    %1069 = vrot.lane.b32.xlu0 %v1066, 64
    %v1070 = vpop.permute.xlu0 %1069
    %v1072 = vmul.f32 %v1065, %v1070
    %1074 = vrot.lane.b32.xlu0 %v1072, 32
    %v1075 = vpop.permute.xlu0 %1074
    %v1077 = vadd.f32 %v1067, %v1075
    %v1078 = vtanh.pop %v1077
    %1080 = vrot.lane.b32.xlu0 %v1078, 64
    %v1081 = vpop.permute.xlu0 %1080
    %v1083 = vmul.f32 %v1065, %v1081
    %1085 = vrot.lane.b32.xlu0 %v1083, 32
    %v1086 = vpop.permute.xlu0 %1085
    %s1088 = scalar_lea.vmem [#allocation4], 8
    %1089 = vst.msk [vmem:[%s1088] sm:$0x3] %vm335, %v1086
    %s1090 = scalar_lea.vmem [#allocation3], 6
    %v1091 = vld [vmem:[%s1090] sm:$0x3]
    %v1092 = vpack.c.bf16 %v989, %v989
    %v1093 = vld [vmem:[%s7] sm:$0xf]
    %v1094 = vld [vmem:[%s7 + $0x4] sm:$0xf]
    %v1095 = vld [vmem:[%s7 + $0x8] sm:$0xf]
    %v1096 = vld [vmem:[%s7 + $0xc] sm:$0xf]
    %1098 = vrot.lane.b32.xlu0 %v1092, 32
    %v1099 = vpop.permute.xlu0 %1098
    %v1104 = vunpack.c.l.b16 %v1093
    %v1105 = vunpack.c.l.b16 %v1094
    %v1106 = vunpack.c.l.b16 %v1095
    %v1107 = vunpack.c.l.b16 %v1096
    %v1108 = vpack.c.b16 %v1105, %v1104
    %v1109 = vpack.c.b16 %v1107, %v1106
    %v1113 = vsel %vm260, %v1099, 0
    %1115 = vmatprep.subr.bf16.mxu0 0
    %1116 = vmatpush1.bf16.msra.mxu0 0
    %1117 = vmatprep.subr.bf16.mxu0 0
    %1118 = vmatpush1.bf16.msra.mxu0 0
    %1119 = vmatprep.subr.bf16.mxu0 0
    %1120 = vmatpush1.bf16.msra.mxu0 0
    %1121 = vmatprep.subr.bf16.mxu0 0
    %1122 = vmatpush1.bf16.msra.mxu0 0
    %1123 = vmatprep.subr.bf16.mxu0 0
    %1124 = vmatpush1.bf16.msra.mxu0 0
    %1125 = vmatprep.subr.bf16.mxu0 0
    %1126 = vmatpush1.bf16.msra.mxu0 0
    %1127 = vmatprep.subr.bf16.mxu0 0
    %1128 = vmatpush1.bf16.msra.mxu0 %v1109
    %1129 = vmatprep.subr.bf16.mxu0 0
    %1130 = vmatpush1.bf16.msra.mxu0 %v1108
    %1131 = vmatprep.subr.bf16.mxu0 0
    %1132 = vmatpush2.bf16.msra.mxu0 0
    %1133 = vmatprep.subr.bf16.mxu0 0
    %1134 = vmatpush2.bf16.msra.mxu0 0
    %1135 = vmatprep.subr.bf16.mxu0 0
    %1136 = vmatpush2.bf16.msra.mxu0 0
    %1137 = vmatprep.subr.bf16.mxu0 0
    %1138 = vmatpush2.bf16.msra.mxu0 0
    %1139 = vmatprep.subr.bf16.mxu0 0
    %1140 = vmatpush2.bf16.msra.mxu0 0
    %1141 = vmatprep.subr.bf16.mxu0 0
    %1142 = vmatpush2.bf16.msra.mxu0 0
    %1143 = vmatprep.subr.bf16.mxu0 0
    %1144 = vmatpush2.bf16.msra.mxu0 0
    %1145 = vmatprep.subr.bf16.mxu0 0
    %1146 = vmatpush2.bf16.msra.mxu0 0
    %1147 = vmatprep.mubr.bf16.mxu0 0
    %1148 = vmatmul.mubr.bf16.gmra.mxu0 %v1113
    %v1149 = vpop.f32.mrf.mxu0
    %v1150 = vadd.f32 0.0, %v1149
    %v1151 = vpop.f32.mrf.mxu0
    %v1152 = vpop.f32.mrf.mxu0
    %v1153 = vpop.f32.mrf.mxu0
    %1154 = vdwg.mxu0
    %v1155 = vadd.f32 %v1091, %v1150
    %v1156 = vmul.f32 %v1155, 0.5
    %v1157 = vtanh.pop %v1156
    %v1158 = vmul.f32 %v1157, 0.5
    %v1159 = vadd.f32 %v1158, 0.5
    %v1160 = vtanh.pop %v1155
    %v1161 = vmul.f32 %v1159, %v983
    %1163 = vrot.lane.b32.xlu0 %v1160, 64
    %v1164 = vpop.permute.xlu0 %1163
    %v1166 = vmul.f32 %v1159, %v1164
    %1168 = vrot.lane.b32.xlu0 %v1166, 32
    %v1169 = vpop.permute.xlu0 %1168
    %v1171 = vadd.f32 %v1161, %v1169
    %v1172 = vtanh.pop %v1171
    %1174 = vrot.lane.b32.xlu0 %v1172, 64
    %v1175 = vpop.permute.xlu0 %1174
    %v1177 = vmul.f32 %v1159, %v1175
    %1179 = vrot.lane.b32.xlu0 %v1177, 32
    %v1180 = vpop.permute.xlu0 %1179
    %s1182 = scalar_lea.vmem [#allocation5], 6
    %1183 = vst.msk [vmem:[%s1182] sm:$0x3] %vm335, %v1180
    %s1184 = scalar_lea.vmem [#allocation2], 10
    %v1185 = vld [vmem:[%s1184] sm:$0x3]
    %v1186 = vpack.c.bf16 %v1083, %v1083
    %v1187 = vld [vmem:[%s6] sm:$0xf]
    %v1188 = vld [vmem:[%s6 + $0x4] sm:$0xf]
    %v1189 = vld [vmem:[%s6 + $0x8] sm:$0xf]
    %v1190 = vld [vmem:[%s6 + $0xc] sm:$0xf]
    %1192 = vrot.lane.b32.xlu0 %v1186, 32
    %v1193 = vpop.permute.xlu0 %1192
    %v1198 = vunpack.c.l.b16 %v1187
    %v1199 = vunpack.c.l.b16 %v1188
    %v1200 = vunpack.c.l.b16 %v1189
    %v1201 = vunpack.c.l.b16 %v1190
    %v1202 = vpack.c.b16 %v1199, %v1198
    %v1203 = vpack.c.b16 %v1201, %v1200
    %v1207 = vsel %vm260, %v1193, 0
    %1209 = vmatprep.subr.bf16.mxu0 0
    %1210 = vmatpush1.bf16.msra.mxu0 0
    %1211 = vmatprep.subr.bf16.mxu0 0
    %1212 = vmatpush1.bf16.msra.mxu0 0
    %1213 = vmatprep.subr.bf16.mxu0 0
    %1214 = vmatpush1.bf16.msra.mxu0 0
    %1215 = vmatprep.subr.bf16.mxu0 0
    %1216 = vmatpush1.bf16.msra.mxu0 0
    %1217 = vmatprep.subr.bf16.mxu0 0
    %1218 = vmatpush1.bf16.msra.mxu0 0
    %1219 = vmatprep.subr.bf16.mxu0 0
    %1220 = vmatpush1.bf16.msra.mxu0 0
    %1221 = vmatprep.subr.bf16.mxu0 0
    %1222 = vmatpush1.bf16.msra.mxu0 %v1203
    %1223 = vmatprep.subr.bf16.mxu0 0
    %1224 = vmatpush1.bf16.msra.mxu0 %v1202
    %1225 = vmatprep.subr.bf16.mxu0 0
    %1226 = vmatpush2.bf16.msra.mxu0 0
    %1227 = vmatprep.subr.bf16.mxu0 0
    %1228 = vmatpush2.bf16.msra.mxu0 0
    %1229 = vmatprep.subr.bf16.mxu0 0
    %1230 = vmatpush2.bf16.msra.mxu0 0
    %1231 = vmatprep.subr.bf16.mxu0 0
    %1232 = vmatpush2.bf16.msra.mxu0 0
    %1233 = vmatprep.subr.bf16.mxu0 0
    %1234 = vmatpush2.bf16.msra.mxu0 0
    %1235 = vmatprep.subr.bf16.mxu0 0
    %1236 = vmatpush2.bf16.msra.mxu0 0
    %1237 = vmatprep.subr.bf16.mxu0 0
    %1238 = vmatpush2.bf16.msra.mxu0 0
    %1239 = vmatprep.subr.bf16.mxu0 0
    %1240 = vmatpush2.bf16.msra.mxu0 0
    %1241 = vmatprep.mubr.bf16.mxu0 0
    %1242 = vmatmul.mubr.bf16.gmra.mxu0 %v1207
    %v1243 = vpop.f32.mrf.mxu0
    %v1244 = vadd.f32 0.0, %v1243
    %v1245 = vpop.f32.mrf.mxu0
    %v1246 = vpop.f32.mrf.mxu0
    %v1247 = vpop.f32.mrf.mxu0
    %1248 = vdwg.mxu0
    %v1249 = vadd.f32 %v1185, %v1244
    %v1250 = vmul.f32 %v1249, 0.5
    %v1251 = vtanh.pop %v1250
    %v1252 = vmul.f32 %v1251, 0.5
    %v1253 = vadd.f32 %v1252, 0.5
    %v1254 = vtanh.pop %v1249
    %v1255 = vmul.f32 %v1253, %v1077
    %1257 = vrot.lane.b32.xlu0 %v1254, 64
    %v1258 = vpop.permute.xlu0 %1257
    %v1260 = vmul.f32 %v1253, %v1258
    %1262 = vrot.lane.b32.xlu0 %v1260, 32
    %v1263 = vpop.permute.xlu0 %1262
    %v1265 = vadd.f32 %v1255, %v1263
    %v1266 = vtanh.pop %v1265
    %1268 = vrot.lane.b32.xlu0 %v1266, 64
    %v1269 = vpop.permute.xlu0 %1268
    %v1271 = vmul.f32 %v1253, %v1269
    %1273 = vrot.lane.b32.xlu0 %v1271, 32
    %v1274 = vpop.permute.xlu0 %1273
    %s1276 = scalar_lea.vmem [#allocation4], 10
    %1277 = vst.msk [vmem:[%s1276] sm:$0x3] %vm335, %v1274
    %s1278 = scalar_lea.vmem [#allocation3], 4
    %v1279 = vld [vmem:[%s1278] sm:$0x3]
    %v1280 = vpack.c.bf16 %v1177, %v1177
    %v1281 = vld [vmem:[%s7] sm:$0xf]
    %v1282 = vld [vmem:[%s7 + $0x4] sm:$0xf]
    %v1283 = vld [vmem:[%s7 + $0x8] sm:$0xf]
    %v1284 = vld [vmem:[%s7 + $0xc] sm:$0xf]
    %1286 = vrot.lane.b32.xlu0 %v1280, 32
    %v1287 = vpop.permute.xlu0 %1286
    %v1292 = vunpack.c.l.b16 %v1281
    %v1293 = vunpack.c.l.b16 %v1282
    %v1294 = vunpack.c.l.b16 %v1283
    %v1295 = vunpack.c.l.b16 %v1284
    %v1296 = vpack.c.b16 %v1293, %v1292
    %v1297 = vpack.c.b16 %v1295, %v1294
    %v1301 = vsel %vm260, %v1287, 0
    %1303 = vmatprep.subr.bf16.mxu0 0
    %1304 = vmatpush1.bf16.msra.mxu0 0
    %1305 = vmatprep.subr.bf16.mxu0 0
    %1306 = vmatpush1.bf16.msra.mxu0 0
    %1307 = vmatprep.subr.bf16.mxu0 0
    %1308 = vmatpush1.bf16.msra.mxu0 0
    %1309 = vmatprep.subr.bf16.mxu0 0
    %1310 = vmatpush1.bf16.msra.mxu0 0
    %1311 = vmatprep.subr.bf16.mxu0 0
    %1312 = vmatpush1.bf16.msra.mxu0 0
    %1313 = vmatprep.subr.bf16.mxu0 0
    %1314 = vmatpush1.bf16.msra.mxu0 0
    %1315 = vmatprep.subr.bf16.mxu0 0
    %1316 = vmatpush1.bf16.msra.mxu0 %v1297
    %1317 = vmatprep.subr.bf16.mxu0 0
    %1318 = vmatpush1.bf16.msra.mxu0 %v1296
    %1319 = vmatprep.subr.bf16.mxu0 0
    %1320 = vmatpush2.bf16.msra.mxu0 0
    %1321 = vmatprep.subr.bf16.mxu0 0
    %1322 = vmatpush2.bf16.msra.mxu0 0
    %1323 = vmatprep.subr.bf16.mxu0 0
    %1324 = vmatpush2.bf16.msra.mxu0 0
    %1325 = vmatprep.subr.bf16.mxu0 0
    %1326 = vmatpush2.bf16.msra.mxu0 0
    %1327 = vmatprep.subr.bf16.mxu0 0
    %1328 = vmatpush2.bf16.msra.mxu0 0
    %1329 = vmatprep.subr.bf16.mxu0 0
    %1330 = vmatpush2.bf16.msra.mxu0 0
    %1331 = vmatprep.subr.bf16.mxu0 0
    %1332 = vmatpush2.bf16.msra.mxu0 0
    %1333 = vmatprep.subr.bf16.mxu0 0
    %1334 = vmatpush2.bf16.msra.mxu0 0
    %1335 = vmatprep.mubr.bf16.mxu0 0
    %1336 = vmatmul.mubr.bf16.gmra.mxu0 %v1301
    %v1337 = vpop.f32.mrf.mxu0
    %v1338 = vadd.f32 0.0, %v1337
    %v1339 = vpop.f32.mrf.mxu0
    %v1340 = vpop.f32.mrf.mxu0
    %v1341 = vpop.f32.mrf.mxu0
    %1342 = vdwg.mxu0
    %v1343 = vadd.f32 %v1279, %v1338
    %v1344 = vmul.f32 %v1343, 0.5
    %v1345 = vtanh.pop %v1344
    %v1346 = vmul.f32 %v1345, 0.5
    %v1347 = vadd.f32 %v1346, 0.5
    %v1348 = vtanh.pop %v1343
    %v1349 = vmul.f32 %v1347, %v1171
    %1351 = vrot.lane.b32.xlu0 %v1348, 64
    %v1352 = vpop.permute.xlu0 %1351
    %v1354 = vmul.f32 %v1347, %v1352
    %1356 = vrot.lane.b32.xlu0 %v1354, 32
    %v1357 = vpop.permute.xlu0 %1356
    %v1359 = vadd.f32 %v1349, %v1357
    %v1360 = vtanh.pop %v1359
    %1362 = vrot.lane.b32.xlu0 %v1360, 64
    %v1363 = vpop.permute.xlu0 %1362
    %v1365 = vmul.f32 %v1347, %v1363
    %1367 = vrot.lane.b32.xlu0 %v1365, 32
    %v1368 = vpop.permute.xlu0 %1367
    %s1370 = scalar_lea.vmem [#allocation5], 4
    %1371 = vst.msk [vmem:[%s1370] sm:$0x3] %vm335, %v1368
    %s1372 = scalar_lea.vmem [#allocation2], 12
    %v1373 = vld [vmem:[%s1372] sm:$0x3]
    %v1374 = vpack.c.bf16 %v1271, %v1271
    %v1375 = vld [vmem:[%s6] sm:$0xf]
    %v1376 = vld [vmem:[%s6 + $0x4] sm:$0xf]
    %v1377 = vld [vmem:[%s6 + $0x8] sm:$0xf]
    %v1378 = vld [vmem:[%s6 + $0xc] sm:$0xf]
    %1380 = vrot.lane.b32.xlu0 %v1374, 32
    %v1381 = vpop.permute.xlu0 %1380
    %v1386 = vunpack.c.l.b16 %v1375
    %v1387 = vunpack.c.l.b16 %v1376
    %v1388 = vunpack.c.l.b16 %v1377
    %v1389 = vunpack.c.l.b16 %v1378
    %v1390 = vpack.c.b16 %v1387, %v1386
    %v1391 = vpack.c.b16 %v1389, %v1388
    %v1395 = vsel %vm260, %v1381, 0
    %1397 = vmatprep.subr.bf16.mxu0 0
    %1398 = vmatpush1.bf16.msra.mxu0 0
    %1399 = vmatprep.subr.bf16.mxu0 0
    %1400 = vmatpush1.bf16.msra.mxu0 0
    %1401 = vmatprep.subr.bf16.mxu0 0
    %1402 = vmatpush1.bf16.msra.mxu0 0
    %1403 = vmatprep.subr.bf16.mxu0 0
    %1404 = vmatpush1.bf16.msra.mxu0 0
    %1405 = vmatprep.subr.bf16.mxu0 0
    %1406 = vmatpush1.bf16.msra.mxu0 0
    %1407 = vmatprep.subr.bf16.mxu0 0
    %1408 = vmatpush1.bf16.msra.mxu0 0
    %1409 = vmatprep.subr.bf16.mxu0 0
    %1410 = vmatpush1.bf16.msra.mxu0 %v1391
    %1411 = vmatprep.subr.bf16.mxu0 0
    %1412 = vmatpush1.bf16.msra.mxu0 %v1390
    %1413 = vmatprep.subr.bf16.mxu0 0
    %1414 = vmatpush2.bf16.msra.mxu0 0
    %1415 = vmatprep.subr.bf16.mxu0 0
    %1416 = vmatpush2.bf16.msra.mxu0 0
    %1417 = vmatprep.subr.bf16.mxu0 0
    %1418 = vmatpush2.bf16.msra.mxu0 0
    %1419 = vmatprep.subr.bf16.mxu0 0
    %1420 = vmatpush2.bf16.msra.mxu0 0
    %1421 = vmatprep.subr.bf16.mxu0 0
    %1422 = vmatpush2.bf16.msra.mxu0 0
    %1423 = vmatprep.subr.bf16.mxu0 0
    %1424 = vmatpush2.bf16.msra.mxu0 0
    %1425 = vmatprep.subr.bf16.mxu0 0
    %1426 = vmatpush2.bf16.msra.mxu0 0
    %1427 = vmatprep.subr.bf16.mxu0 0
    %1428 = vmatpush2.bf16.msra.mxu0 0
    %1429 = vmatprep.mubr.bf16.mxu0 0
    %1430 = vmatmul.mubr.bf16.gmra.mxu0 %v1395
    %v1431 = vpop.f32.mrf.mxu0
    %v1432 = vadd.f32 0.0, %v1431
    %v1433 = vpop.f32.mrf.mxu0
    %v1434 = vpop.f32.mrf.mxu0
    %v1435 = vpop.f32.mrf.mxu0
    %1436 = vdwg.mxu0
    %v1437 = vadd.f32 %v1373, %v1432
    %v1438 = vmul.f32 %v1437, 0.5
    %v1439 = vtanh.pop %v1438
    %v1440 = vmul.f32 %v1439, 0.5
    %v1441 = vadd.f32 %v1440, 0.5
    %v1442 = vtanh.pop %v1437
    %v1443 = vmul.f32 %v1441, %v1265
    %1445 = vrot.lane.b32.xlu0 %v1442, 64
    %v1446 = vpop.permute.xlu0 %1445
    %v1448 = vmul.f32 %v1441, %v1446
    %1450 = vrot.lane.b32.xlu0 %v1448, 32
    %v1451 = vpop.permute.xlu0 %1450
    %v1453 = vadd.f32 %v1443, %v1451
    %v1454 = vtanh.pop %v1453
    %1456 = vrot.lane.b32.xlu0 %v1454, 64
    %v1457 = vpop.permute.xlu0 %1456
    %v1459 = vmul.f32 %v1441, %v1457
    %1461 = vrot.lane.b32.xlu0 %v1459, 32
    %v1462 = vpop.permute.xlu0 %1461
    %s1464 = scalar_lea.vmem [#allocation4], 12
    %1465 = vst.msk [vmem:[%s1464] sm:$0x3] %vm335, %v1462
    %s1466 = scalar_lea.vmem [#allocation3], 2
    %v1467 = vld [vmem:[%s1466] sm:$0x3]
    %v1468 = vpack.c.bf16 %v1365, %v1365
    %v1469 = vld [vmem:[%s7] sm:$0xf]
    %v1470 = vld [vmem:[%s7 + $0x4] sm:$0xf]
    %v1471 = vld [vmem:[%s7 + $0x8] sm:$0xf]
    %v1472 = vld [vmem:[%s7 + $0xc] sm:$0xf]
    %1474 = vrot.lane.b32.xlu0 %v1468, 32
    %v1475 = vpop.permute.xlu0 %1474
    %v1480 = vunpack.c.l.b16 %v1469
    %v1481 = vunpack.c.l.b16 %v1470
    %v1482 = vunpack.c.l.b16 %v1471
    %v1483 = vunpack.c.l.b16 %v1472
    %v1484 = vpack.c.b16 %v1481, %v1480
    %v1485 = vpack.c.b16 %v1483, %v1482
    %v1489 = vsel %vm260, %v1475, 0
    %1491 = vmatprep.subr.bf16.mxu0 0
    %1492 = vmatpush1.bf16.msra.mxu0 0
    %1493 = vmatprep.subr.bf16.mxu0 0
    %1494 = vmatpush1.bf16.msra.mxu0 0
    %1495 = vmatprep.subr.bf16.mxu0 0
    %1496 = vmatpush1.bf16.msra.mxu0 0
    %1497 = vmatprep.subr.bf16.mxu0 0
    %1498 = vmatpush1.bf16.msra.mxu0 0
    %1499 = vmatprep.subr.bf16.mxu0 0
    %1500 = vmatpush1.bf16.msra.mxu0 0
    %1501 = vmatprep.subr.bf16.mxu0 0
    %1502 = vmatpush1.bf16.msra.mxu0 0
    %1503 = vmatprep.subr.bf16.mxu0 0
    %1504 = vmatpush1.bf16.msra.mxu0 %v1485
    %1505 = vmatprep.subr.bf16.mxu0 0
    %1506 = vmatpush1.bf16.msra.mxu0 %v1484
    %1507 = vmatprep.subr.bf16.mxu0 0
    %1508 = vmatpush2.bf16.msra.mxu0 0
    %1509 = vmatprep.subr.bf16.mxu0 0
    %1510 = vmatpush2.bf16.msra.mxu0 0
    %1511 = vmatprep.subr.bf16.mxu0 0
    %1512 = vmatpush2.bf16.msra.mxu0 0
    %1513 = vmatprep.subr.bf16.mxu0 0
    %1514 = vmatpush2.bf16.msra.mxu0 0
    %1515 = vmatprep.subr.bf16.mxu0 0
    %1516 = vmatpush2.bf16.msra.mxu0 0
    %1517 = vmatprep.subr.bf16.mxu0 0
    %1518 = vmatpush2.bf16.msra.mxu0 0
    %1519 = vmatprep.subr.bf16.mxu0 0
    %1520 = vmatpush2.bf16.msra.mxu0 0
    %1521 = vmatprep.subr.bf16.mxu0 0
    %1522 = vmatpush2.bf16.msra.mxu0 0
    %1523 = vmatprep.mubr.bf16.mxu0 0
    %1524 = vmatmul.mubr.bf16.gmra.mxu0 %v1489
    %v1525 = vpop.f32.mrf.mxu0
    %v1526 = vadd.f32 0.0, %v1525
    %v1527 = vpop.f32.mrf.mxu0
    %v1528 = vpop.f32.mrf.mxu0
    %v1529 = vpop.f32.mrf.mxu0
    %1530 = vdwg.mxu0
    %v1531 = vadd.f32 %v1467, %v1526
    %v1532 = vmul.f32 %v1531, 0.5
    %v1533 = vtanh.pop %v1532
    %v1534 = vmul.f32 %v1533, 0.5
    %v1535 = vadd.f32 %v1534, 0.5
    %v1536 = vtanh.pop %v1531
    %v1537 = vmul.f32 %v1535, %v1359
    %1539 = vrot.lane.b32.xlu0 %v1536, 64
    %v1540 = vpop.permute.xlu0 %1539
    %v1542 = vmul.f32 %v1535, %v1540
    %1544 = vrot.lane.b32.xlu0 %v1542, 32
    %v1545 = vpop.permute.xlu0 %1544
    %v1547 = vadd.f32 %v1537, %v1545
    %v1548 = vtanh.pop %v1547
    %1550 = vrot.lane.b32.xlu0 %v1548, 64
    %v1551 = vpop.permute.xlu0 %1550
    %v1553 = vmul.f32 %v1535, %v1551
    %1555 = vrot.lane.b32.xlu0 %v1553, 32
    %v1556 = vpop.permute.xlu0 %1555
    %s1558 = scalar_lea.vmem [#allocation5], 2
    %1559 = vst.msk [vmem:[%s1558] sm:$0x3] %vm335, %v1556
    %s1560 = scalar_lea.vmem [#allocation2], 14
    %v1561 = vld [vmem:[%s1560] sm:$0x3]
    %v1562 = vpack.c.bf16 %v1459, %v1459
    %v1563 = vld [vmem:[%s6] sm:$0xf]
    %v1564 = vld [vmem:[%s6 + $0x4] sm:$0xf]
    %v1565 = vld [vmem:[%s6 + $0x8] sm:$0xf]
    %v1566 = vld [vmem:[%s6 + $0xc] sm:$0xf]
    %1568 = vrot.lane.b32.xlu0 %v1562, 32
    %v1569 = vpop.permute.xlu0 %1568
    %v1574 = vunpack.c.l.b16 %v1563
    %v1575 = vunpack.c.l.b16 %v1564
    %v1576 = vunpack.c.l.b16 %v1565
    %v1577 = vunpack.c.l.b16 %v1566
    %v1578 = vpack.c.b16 %v1575, %v1574
    %v1579 = vpack.c.b16 %v1577, %v1576
    %v1583 = vsel %vm260, %v1569, 0
    %1585 = vmatprep.subr.bf16.mxu0 0
    %1586 = vmatpush1.bf16.msra.mxu0 0
    %1587 = vmatprep.subr.bf16.mxu0 0
    %1588 = vmatpush1.bf16.msra.mxu0 0
    %1589 = vmatprep.subr.bf16.mxu0 0
    %1590 = vmatpush1.bf16.msra.mxu0 0
    %1591 = vmatprep.subr.bf16.mxu0 0
    %1592 = vmatpush1.bf16.msra.mxu0 0
    %1593 = vmatprep.subr.bf16.mxu0 0
    %1594 = vmatpush1.bf16.msra.mxu0 0
    %1595 = vmatprep.subr.bf16.mxu0 0
    %1596 = vmatpush1.bf16.msra.mxu0 0
    %1597 = vmatprep.subr.bf16.mxu0 0
    %1598 = vmatpush1.bf16.msra.mxu0 %v1579
    %1599 = vmatprep.subr.bf16.mxu0 0
    %1600 = vmatpush1.bf16.msra.mxu0 %v1578
    %1601 = vmatprep.subr.bf16.mxu0 0
    %1602 = vmatpush2.bf16.msra.mxu0 0
    %1603 = vmatprep.subr.bf16.mxu0 0
    %1604 = vmatpush2.bf16.msra.mxu0 0
    %1605 = vmatprep.subr.bf16.mxu0 0
    %1606 = vmatpush2.bf16.msra.mxu0 0
    %1607 = vmatprep.subr.bf16.mxu0 0
    %1608 = vmatpush2.bf16.msra.mxu0 0
    %1609 = vmatprep.subr.bf16.mxu0 0
    %1610 = vmatpush2.bf16.msra.mxu0 0
    %1611 = vmatprep.subr.bf16.mxu0 0
    %1612 = vmatpush2.bf16.msra.mxu0 0
    %1613 = vmatprep.subr.bf16.mxu0 0
    %1614 = vmatpush2.bf16.msra.mxu0 0
    %1615 = vmatprep.subr.bf16.mxu0 0
    %1616 = vmatpush2.bf16.msra.mxu0 0
    %1617 = vmatprep.mubr.bf16.mxu0 0
    %1618 = vmatmul.mubr.bf16.gmra.mxu0 %v1583
    %v1619 = vpop.f32.mrf.mxu0
    %v1620 = vadd.f32 0.0, %v1619
    %v1621 = vpop.f32.mrf.mxu0
    %v1622 = vpop.f32.mrf.mxu0
    %v1623 = vpop.f32.mrf.mxu0
    %1624 = vdwg.mxu0
    %v1625 = vadd.f32 %v1561, %v1620
    %v1626 = vmul.f32 %v1625, 0.5
    %v1627 = vtanh.pop %v1626
    %v1628 = vmul.f32 %v1627, 0.5
    %v1629 = vadd.f32 %v1628, 0.5
    %v1630 = vtanh.pop %v1625
    %v1631 = vmul.f32 %v1629, %v1453
    %1633 = vrot.lane.b32.xlu0 %v1630, 64
    %v1634 = vpop.permute.xlu0 %1633
    %v1636 = vmul.f32 %v1629, %v1634
    %1638 = vrot.lane.b32.xlu0 %v1636, 32
    %v1639 = vpop.permute.xlu0 %1638
    %v1641 = vadd.f32 %v1631, %v1639
    %v1642 = vtanh.pop %v1641
    %1644 = vrot.lane.b32.xlu0 %v1642, 64
    %v1645 = vpop.permute.xlu0 %1644
    %v1647 = vmul.f32 %v1629, %v1645
    %1649 = vrot.lane.b32.xlu0 %v1647, 32
    %v1650 = vpop.permute.xlu0 %1649
    %s1652 = scalar_lea.vmem [#allocation4], 14
    %1653 = vst.msk [vmem:[%s1652] sm:$0x3] %vm335, %v1650
    %v1654 = vld [vmem:[#allocation3] sm:$0x3]
    %v1655 = vpack.c.bf16 %v1553, %v1553
    %v1656 = vld [vmem:[%s7] sm:$0xf]
    %v1657 = vld [vmem:[%s7 + $0x4] sm:$0xf]
    %v1658 = vld [vmem:[%s7 + $0x8] sm:$0xf]
    %v1659 = vld [vmem:[%s7 + $0xc] sm:$0xf]
    %1661 = vrot.lane.b32.xlu0 %v1655, 32
    %v1662 = vpop.permute.xlu0 %1661
    %v1667 = vunpack.c.l.b16 %v1656
    %v1668 = vunpack.c.l.b16 %v1657
    %v1669 = vunpack.c.l.b16 %v1658
    %v1670 = vunpack.c.l.b16 %v1659
    %v1671 = vpack.c.b16 %v1668, %v1667
    %v1672 = vpack.c.b16 %v1670, %v1669
    %v1676 = vsel %vm260, %v1662, 0
    %1678 = vmatprep.subr.bf16.mxu0 0
    %1679 = vmatpush1.bf16.msra.mxu0 0
    %1680 = vmatprep.subr.bf16.mxu0 0
    %1681 = vmatpush1.bf16.msra.mxu0 0
    %1682 = vmatprep.subr.bf16.mxu0 0
    %1683 = vmatpush1.bf16.msra.mxu0 0
    %1684 = vmatprep.subr.bf16.mxu0 0
    %1685 = vmatpush1.bf16.msra.mxu0 0
    %1686 = vmatprep.subr.bf16.mxu0 0
    %1687 = vmatpush1.bf16.msra.mxu0 0
    %1688 = vmatprep.subr.bf16.mxu0 0
    %1689 = vmatpush1.bf16.msra.mxu0 0
    %1690 = vmatprep.subr.bf16.mxu0 0
    %1691 = vmatpush1.bf16.msra.mxu0 %v1672
    %1692 = vmatprep.subr.bf16.mxu0 0
    %1693 = vmatpush1.bf16.msra.mxu0 %v1671
    %1694 = vmatprep.subr.bf16.mxu0 0
    %1695 = vmatpush2.bf16.msra.mxu0 0
    %1696 = vmatprep.subr.bf16.mxu0 0
    %1697 = vmatpush2.bf16.msra.mxu0 0
    %1698 = vmatprep.subr.bf16.mxu0 0
    %1699 = vmatpush2.bf16.msra.mxu0 0
    %1700 = vmatprep.subr.bf16.mxu0 0
    %1701 = vmatpush2.bf16.msra.mxu0 0
    %1702 = vmatprep.subr.bf16.mxu0 0
    %1703 = vmatpush2.bf16.msra.mxu0 0
    %1704 = vmatprep.subr.bf16.mxu0 0
    %1705 = vmatpush2.bf16.msra.mxu0 0
    %1706 = vmatprep.subr.bf16.mxu0 0
    %1707 = vmatpush2.bf16.msra.mxu0 0
    %1708 = vmatprep.subr.bf16.mxu0 0
    %1709 = vmatpush2.bf16.msra.mxu0 0
    %1710 = vmatprep.mubr.bf16.mxu0 0
    %1711 = vmatmul.mubr.bf16.gmra.mxu0 %v1676
    %v1712 = vpop.f32.mrf.mxu0
    %v1713 = vadd.f32 0.0, %v1712
    %v1714 = vpop.f32.mrf.mxu0
    %v1715 = vpop.f32.mrf.mxu0
    %v1716 = vpop.f32.mrf.mxu0
    %1717 = vdwg.mxu0
    %v1718 = vadd.f32 %v1654, %v1713
    %v1719 = vmul.f32 %v1718, 0.5
    %v1720 = vtanh.pop %v1719
    %v1721 = vmul.f32 %v1720, 0.5
    %v1722 = vadd.f32 %v1721, 0.5
    %v1723 = vtanh.pop %v1718
    %v1724 = vmul.f32 %v1722, %v1547
    %1726 = vrot.lane.b32.xlu0 %v1723, 64
    %v1727 = vpop.permute.xlu0 %1726
    %v1729 = vmul.f32 %v1722, %v1727
    %1731 = vrot.lane.b32.xlu0 %v1729, 32
    %v1732 = vpop.permute.xlu0 %1731
    %v1734 = vadd.f32 %v1724, %v1732
    %v1735 = vtanh.pop %v1734
    %1737 = vrot.lane.b32.xlu0 %v1735, 64
    %v1738 = vpop.permute.xlu0 %1737
    %v1740 = vmul.f32 %v1722, %v1738
    %1742 = vrot.lane.b32.xlu0 %v1740, 32
    %v1743 = vpop.permute.xlu0 %1742
    %1745 = vst.msk [vmem:[#allocation5] sm:$0x3] %vm335, %v1743
    %1746 = vst.msk [vmem:[#allocation6] sm:$0x3] %vm335, %v1650
    %1748 = vrot.lane.b32.xlu0 %v1641, 96
    %v1749 = vpop.permute.xlu0 %1748
    %1751 = vst.msk [vmem:[#allocation7] sm:$0x3] %vm335, %v1749
    %1752 = vst.msk [vmem:[#allocation8] sm:$0x3] %vm335, %v1743
    %1754 = vrot.lane.b32.xlu0 %v1734, 96
    %v1755 = vpop.permute.xlu0 %1754
    %1757 = vst.msk [vmem:[#allocation9] sm:$0x3] %vm335, %v1755
    %v1758 = vld [vmem:[#allocation4] sm:$0xff]
    %v1759 = vld [vmem:[#allocation4 + $0x8] sm:$0xff]
    %v1760 = vpack.c.bf16 %v1759, %v1758
    %v1762 = vunpack.c.l.b16 %v1760
    %v1763 = vunpack.c.h.b16 %v1760
    %v1764 = vpack.c.b16 %v1762, %v1762
    %v1765 = vpack.c.b16 %v1763, %v1763
    %vm1768 = vcmask 257024
    %1769 = vst.msk [vmem:[%s8] sm:$0xf] %vm1768, %v1764
    %1770 = vst.msk [vmem:[%s8 + $0x4] sm:$0xf] %vm1768, %v1765
    %v1771 = vld [vmem:[#allocation5] sm:$0xff]
    %v1772 = vld [vmem:[#allocation5 + $0x8] sm:$0xff]
    %v1773 = vpack.c.bf16 %v1772, %v1771
    %v1775 = vunpack.c.l.b16 %v1773
    %v1776 = vunpack.c.h.b16 %v1773
    %v1777 = vpack.c.b16 %v1775, %v1775
    %v1778 = vpack.c.b16 %v1776, %v1776
    %1781 = vst.msk [vmem:[%s92] sm:$0xf] %vm1768, %v1777
    %1782 = vst.msk [vmem:[%s92 + $0x4] sm:$0xf] %vm1768, %v1778
    %s1783 = ssub.s32 0, 0
    %s1784 = smul.u32 2, %s1783
    %p1785 = scmp.lt.s32.totalorder %s1784, 1
    %s1786 = scalar_select %p1785, %s1784, 1
    %s1787 = smul.addr %s1786, 4
    %s1788 = scalar_lea.vmem %s9, %s1787
    // Predicated region
    $region46: #{classifier_forward.3} parent=1 // pred_check
      _
    $region47: #{classifier_forward.3} parent=1 // pred_check_branch
      %1790 = sbr.rel (0) target = $region49
    $region48: #{classifier_forward.3} parent=1 // pred_region
      _
    $region49: #{classifier_forward.3} parent=1 // pred_fallthru
      _
    // Predicated region
    $region50: #{classifier_forward.3} parent=1 // pred_check
      _
    $region51: #{classifier_forward.3} parent=1 // pred_check_branch
      %1792 = sbr.rel (0) target = $region53
    $region52: #{classifier_forward.3} parent=1 // pred_region
      %s1793 = ssub.s32 0, 0
      %s1794 = smul.u32 2, %s1793
    $region53: #{classifier_forward.3} parent=1 // pred_fallthru
      _
    // Predicated region
    $region54: #{classifier_forward.3} parent=1 // pred_check
      _
    $region55: #{classifier_forward.3} parent=1 // pred_check_branch
      %1796 = sbr.rel (0) target = $region57
    $region56: #{classifier_forward.3} parent=1 // pred_region
      _
    $region57: #{classifier_forward.3} parent=1 // pred_fallthru
      _
    // Predicated region
    $region58: #{classifier_forward.3} parent=1 // pred_check
      _
    $region59: #{classifier_forward.3} parent=1 // pred_check_branch
      %1798 = sbr.rel (0) target = $region61
    $region60: #{classifier_forward.3} parent=1 // pred_region
      %s1799 = ssub.s32 0, 0
      %s1800 = smul.u32 2, %s1799
      %p1801 = scmp.lt.s32.totalorder %s1800, 1
      %s1802 = scalar_select %p1801, %s1800, 1
      %s1803 = smul.addr %s1802, 4
      %s1804 = scalar_lea.vmem %s9, %s1803
    $region61: #{classifier_forward.3} parent=1 // pred_fallthru
      _
    %1805 = vsyncpa [#allocation11], 1
    %1806 = vsyncpa [#allocation13], 1

// kernel: classifier_forward.4
$region0: #{classifier_forward.4}
  #allocation0 [shape = 'u32[]', space=smem, size = 0x4, offset = 0x4, fixed_abs, tag = 'smem constant byte address 0x4 - core index']
  #allocation1 [shape = 'u32[144,128]{1,0:T(1,128)}', space=vmem, size = 0x12000, scoped, tag = 'internal scratch']
  #allocation2 [shape = 'f32[16,128]{1,0:T(8,128)}', space=vmem, size = 0x2000, scoped, tag = 'scratch operand']
  #allocation3 [shape = 'f32[16,128]{1,0:T(8,128)}', space=vmem, size = 0x2000, scoped, tag = 'scratch operand']
  #allocation4 [shape = 'f32[16,32]{1,0:T(8,128)}', space=vmem, size = 0x2000, scoped, tag = 'scratch operand']
  #allocation5 [shape = 'f32[16,32]{1,0:T(8,128)}', space=vmem, size = 0x2000, scoped, tag = 'scratch operand']
  #allocation6 [shape = 'f32[2,32]{1,0:T(2,128)}', space=vmem, size = 0x400, scoped, tag = 'scratch operand']
  #allocation7 [shape = 'f32[2,32]{1,0:T(2,128)}', space=vmem, size = 0x400, scoped, tag = 'scratch operand']
  #allocation8 [shape = 'f32[2,32]{1,0:T(2,128)}', space=vmem, size = 0x400, scoped, tag = 'scratch operand']
  #allocation9 [shape = 'f32[2,32]{1,0:T(2,128)}', space=vmem, size = 0x400, scoped, tag = 'scratch operand']
  %s0 = inlined_call_operand.vmem [shape: bf16[1,16,32], index: 0, kind: input, shape index: {}, may-alias: {0,2}]
  %s1 = inlined_call_operand.vmem [shape: bf16[1,16,32], index: 1, kind: input, shape index: {}, may-alias: {1,3}]
  %s2 = inlined_call_operand.vmem [shape: bf16[1,16,32], index: 2, kind: input, shape index: {}, may-alias: {0,2}]
  %s3 = inlined_call_operand.vmem [shape: bf16[1,16,32], index: 3, kind: input, shape index: {}, may-alias: {1,3}]
  %s4 = inlined_call_operand.vmem [shape: bf16[32,128], index: 4, kind: input, shape index: {}]
  %s5 = inlined_call_operand.vmem [shape: bf16[32,128], index: 5, kind: input, shape index: {}]
  %s6 = inlined_call_operand.vmem [shape: bf16[32,128], index: 6, kind: input, shape index: {}]
  %s7 = inlined_call_operand.vmem [shape: bf16[32,128], index: 7, kind: input, shape index: {}]
  %s8 = inlined_call_operand.vmem [shape: f32[1,128], index: 8, kind: input, shape index: {}]
  %s9 = inlined_call_operand.vmem [shape: f32[1,128], index: 9, kind: input, shape index: {}]
  %s10 = inlined_call_operand.vmem [shape: bf16[32,128], index: 10, kind: input, shape index: {}]
  %s11 = inlined_call_operand.vmem [shape: bf16[32,128], index: 11, kind: input, shape index: {}]
  %s12 = inlined_call_operand.vmem [shape: bf16[1,16,32], index: 12, kind: output, shape index: {0}]
  %s13 = inlined_call_operand.vmem [shape: bf16[1,16,32], index: 13, kind: output, shape index: {1}]
  %14 = xla_tuple %s12, %s13
  %s15 = sld [smem:[#allocation0]]
  $region70: #{classifier_forward.4} parent=0
    _
  %s17 = ssub.s32 1, %s15
  %s18 = scalar_select 0, %s17, %s15
  // Predicated region
  $region2: #{classifier_forward.4} parent=0 // pred_check
    _
  $region3: #{classifier_forward.4} parent=0 // pred_check_branch
    %20 = sbr.rel (0) target = $region5
  $region4: #{classifier_forward.4} parent=0 // pred_region
    _
  $region5: #{classifier_forward.4} parent=0 // pred_fallthru
    _
  // Predicated region
  $region6: #{classifier_forward.4} parent=0 // pred_check
    _
  $region7: #{classifier_forward.4} parent=0 // pred_check_branch
    %22 = sbr.rel (0) target = $region9
  $region8: #{classifier_forward.4} parent=0 // pred_region
    _
  $region9: #{classifier_forward.4} parent=0 // pred_fallthru
    _
  // Predicated region
  $region10: #{classifier_forward.4} parent=0 // pred_check
    _
  $region11: #{classifier_forward.4} parent=0 // pred_check_branch
    %24 = sbr.rel (0) target = $region13
  $region12: #{classifier_forward.4} parent=0 // pred_region
    %s25 = ssub.s32 0, 0
    %s26 = smul.u32 2, %s25
    %p27 = scmp.lt.s32.totalorder %s26, 1
    %s28 = scalar_select %p27, %s26, 1
    %s29 = smul.addr %s28, 4
    %s30 = scalar_lea.vmem %s2, %s29
    %s31 = ssub.s32 0, 0
    %s32 = smul.u32 2, %s31
  $region13: #{classifier_forward.4} parent=0 // pred_fallthru
    _
  // Predicated region
  $region14: #{classifier_forward.4} parent=0 // pred_check
    _
  $region15: #{classifier_forward.4} parent=0 // pred_check_branch
    %34 = sbr.rel (0) target = $region17
  $region16: #{classifier_forward.4} parent=0 // pred_region
    %s35 = ssub.s32 0, 0
    %s36 = smul.u32 2, %s35
    %p37 = scmp.lt.s32.totalorder %s36, 1
    %s38 = scalar_select %p37, %s36, 1
    %s39 = smul.addr %s38, 4
    %s40 = scalar_lea.vmem %s3, %s39
    %s41 = ssub.s32 0, 0
    %s42 = smul.u32 2, %s41
  $region17: #{classifier_forward.4} parent=0 // pred_fallthru
    _
  // Predicated region
  $region18: #{classifier_forward.4} parent=0 // pred_check
    _
  $region19: #{classifier_forward.4} parent=0 // pred_check_branch
    %44 = sbr.rel (0) target = $region21
  $region20: #{classifier_forward.4} parent=0 // pred_region
    _
  $region21: #{classifier_forward.4} parent=0 // pred_fallthru
    _
  // Predicated region
  $region22: #{classifier_forward.4} parent=0 // pred_check
    _
  $region23: #{classifier_forward.4} parent=0 // pred_check_branch
    %46 = sbr.rel (0) target = $region25
  $region24: #{classifier_forward.4} parent=0 // pred_region
    _
  $region25: #{classifier_forward.4} parent=0 // pred_fallthru
    _
  // Predicated region
  $region26: #{classifier_forward.4} parent=0 // pred_check
    _
  $region27: #{classifier_forward.4} parent=0 // pred_check_branch
    %48 = sbr.rel (0) target = $region29
  $region28: #{classifier_forward.4} parent=0 // pred_region
    _
  $region29: #{classifier_forward.4} parent=0 // pred_fallthru
    _
  // Predicated region
  $region30: #{classifier_forward.4} parent=0 // pred_check
    _
  $region31: #{classifier_forward.4} parent=0 // pred_check_branch
    %50 = sbr.rel (0) target = $region33
  $region32: #{classifier_forward.4} parent=0 // pred_region
    _
  $region33: #{classifier_forward.4} parent=0 // pred_fallthru
    _
  // Predicated region
  $region34: #{classifier_forward.4} parent=0 // pred_check
    _
  $region35: #{classifier_forward.4} parent=0 // pred_check_branch
    %52 = sbr.rel (0) target = $region37
  $region36: #{classifier_forward.4} parent=0 // pred_region
    _
  $region37: #{classifier_forward.4} parent=0 // pred_fallthru
    _
  // Predicated region
  $region38: #{classifier_forward.4} parent=0 // pred_check
    _
  $region39: #{classifier_forward.4} parent=0 // pred_check_branch
    %54 = sbr.rel (0) target = $region41
  $region40: #{classifier_forward.4} parent=0 // pred_region
    _
  $region41: #{classifier_forward.4} parent=0 // pred_fallthru
    _
  // Predicated region
  $region42: #{classifier_forward.4} parent=0 // pred_check
    _
  $region43: #{classifier_forward.4} parent=0 // pred_check_branch
    %56 = sbr.rel (0) target = $region45
  $region44: #{classifier_forward.4} parent=0 // pred_region
    _
  $region45: #{classifier_forward.4} parent=0 // pred_fallthru
    _
  // Predicated region
  $region46: #{classifier_forward.4} parent=0 // pred_check
    _
  $region47: #{classifier_forward.4} parent=0 // pred_check_branch
    %58 = sbr.rel (0) target = $region49
  $region48: #{classifier_forward.4} parent=0 // pred_region
    _
  $region49: #{classifier_forward.4} parent=0 // pred_fallthru
    _
  %s59 = ssub.s32 0, 0
  %s60 = smul.u32 2, %s59
  %p61 = scmp.lt.s32.totalorder %s60, 1
  %s62 = scalar_select %p61, %s60, 1
  %s63 = smul.addr %s62, 4
  %s64 = scalar_lea.vmem %s2, %s63
  %s65 = ssub.s32 0, 0
  %s66 = smul.u32 2, %s65
  %p67 = scmp.lt.s32.totalorder %s66, 1
  %s68 = scalar_select %p67, %s66, 1
  %s69 = smul.addr %s68, 4
  %s70 = scalar_lea.vmem %s3, %s69
  %s71 = ssub.s32 0, 0
  %s72 = smul.u32 2, %s71
  %p73 = scmp.lt.s32.totalorder %s72, 1
  %s74 = scalar_select %p73, %s72, 1
  %s75 = smul.addr %s74, 4
  %s76 = scalar_lea.vmem %s13, %s75
  %s77 = ssub.s32 0, 0
  %s78 = smul.u32 2, %s77
  %p79 = scmp.lt.s32.totalorder %s78, 1
  %s80 = scalar_select %p79, %s78, 1
  %s81 = smul.addr %s80, 4
  %s82 = scalar_lea.vmem %s2, %s81
  %s83 = ssub.s32 0, 0
  %s84 = smul.u32 2, %s83
  %s85 = ssub.s32 0, 0
  %s86 = smul.u32 2, %s85
  %p87 = scmp.lt.s32.totalorder %s86, 1
  %s88 = scalar_select %p87, %s86, 1
  %s89 = smul.addr %s88, 4
  %s90 = scalar_lea.vmem %s3, %s89
  %s91 = ssub.s32 0, 0
  %s92 = smul.u32 2, %s91
  %s93 = ssub.s32 0, 0
  %s94 = smul.u32 2, %s93
  %p95 = scmp.lt.s32.totalorder %s94, 1
  %s96 = scalar_select %p95, %s94, 1
  %s97 = smul.addr %s96, 4
  %s98 = scalar_lea.vmem %s13, %s97
  %s99 = ssub.s32 0, 0
  %s100 = smul.u32 2, %s99
  %p102 = scmp.eq.s32.totalorder 0, 0
  // Predicated region
  $region50: #{classifier_forward.4} parent=0 // pred_check
    %p103 = pneg %p102
  $region51: #{classifier_forward.4} parent=0 // pred_check_branch
    %105 = sbr.rel (%p103) target = $region53
  $region52: #{classifier_forward.4} parent=0 // pred_region
    %vm106 = vcmask 254976
    %107 = vst.msk [vmem:[#allocation6] sm:$0x3] %vm106, 0.0
    %108 = vst.msk [vmem:[#allocation7] sm:$0x3] %vm106, 0.0
    %109 = vst.msk [vmem:[#allocation8] sm:$0x3] %vm106, 0.0
    %110 = vst.msk [vmem:[#allocation9] sm:$0x3] %vm106, 0.0
  $region53: #{classifier_forward.4} parent=0 // pred_fallthru
    _
  %v111 = vld [vmem:[%s8] sm:$0x1]
  %v112 = vld [vmem:[%s0] sm:$0xf]
  %v113 = vld [vmem:[%s0 + $0x4] sm:$0xf]
  %v114 = vld [vmem:[%s4] sm:$0xf]
  %v115 = vld [vmem:[%s4 + $0x4] sm:$0xf]
  %v116 = vld [vmem:[%s4 + $0x8] sm:$0xf]
  %v117 = vld [vmem:[%s4 + $0xc] sm:$0xf]
  %v120 = vunpack.c.l.b16 %v112
  %v121 = vunpack.c.l.b16 %v113
  %v122 = vpack.c.b16 %v121, %v120
  %v127 = vunpack.c.l.b16 %v114
  %v128 = vunpack.c.l.b16 %v115
  %v129 = vunpack.c.l.b16 %v116
  %v130 = vunpack.c.l.b16 %v117
  %v131 = vpack.c.b16 %v128, %v127
  %v132 = vpack.c.b16 %v130, %v129
  %vm135 = vcmask 261120
  %v137 = vsel %vm135, %v122, 0
  %139 = vmatprep.subr.bf16.mxu0 0
  %140 = vmatpush1.bf16.msra.mxu0 0
  %141 = vmatprep.subr.bf16.mxu0 0
  %142 = vmatpush1.bf16.msra.mxu0 0
  %143 = vmatprep.subr.bf16.mxu0 0
  %144 = vmatpush1.bf16.msra.mxu0 0
  %145 = vmatprep.subr.bf16.mxu0 0
  %146 = vmatpush1.bf16.msra.mxu0 0
  %147 = vmatprep.subr.bf16.mxu0 0
  %148 = vmatpush1.bf16.msra.mxu0 0
  %149 = vmatprep.subr.bf16.mxu0 0
  %150 = vmatpush1.bf16.msra.mxu0 0
  %151 = vmatprep.subr.bf16.mxu0 0
  %152 = vmatpush1.bf16.msra.mxu0 %v132
  %153 = vmatprep.subr.bf16.mxu0 0
  %154 = vmatpush1.bf16.msra.mxu0 %v131
  %155 = vmatprep.subr.bf16.mxu0 0
  %156 = vmatpush2.bf16.msra.mxu0 0
  %157 = vmatprep.subr.bf16.mxu0 0
  %158 = vmatpush2.bf16.msra.mxu0 0
  %159 = vmatprep.subr.bf16.mxu0 0
  %160 = vmatpush2.bf16.msra.mxu0 0
  %161 = vmatprep.subr.bf16.mxu0 0
  %162 = vmatpush2.bf16.msra.mxu0 0
  %163 = vmatprep.subr.bf16.mxu0 0
  %164 = vmatpush2.bf16.msra.mxu0 0
  %165 = vmatprep.subr.bf16.mxu0 0
  %166 = vmatpush2.bf16.msra.mxu0 0
  %167 = vmatprep.subr.bf16.mxu0 0
  %168 = vmatpush2.bf16.msra.mxu0 0
  %169 = vmatprep.subr.bf16.mxu0 0
  %170 = vmatpush2.bf16.msra.mxu0 0
  %171 = vmatprep.mubr.bf16.mxu0 0
  %172 = vmatmul.mubr.bf16.gmra.mxu0 %v137
  %v173 = vpop.f32.mrf.mxu0
  %v174 = vadd.f32 0.0, %v173
  %v175 = vpop.f32.mrf.mxu0
  %v176 = vpop.f32.mrf.mxu0
  %v177 = vadd.f32 0.0, %v176
  %v178 = vpop.f32.mrf.mxu0
  %179 = vdwg.mxu0
  %v181 = vlaneseq
  %v182 = vshrl.u32 %v181, 7
  %v183 = vsub.s32 0, %v182
  %v184 = vrot.slane %v111, %v183
  %v186 = vadd.f32 %v184, %v174
  %v187 = vadd.f32 %v184, %v177
  %v188 = vld [vmem:[%s1] sm:$0xf]
  %v189 = vld [vmem:[%s1 + $0x4] sm:$0xf]
  %v190 = vld [vmem:[%s5] sm:$0xf]
  %v191 = vld [vmem:[%s5 + $0x4] sm:$0xf]
  %v192 = vld [vmem:[%s5 + $0x8] sm:$0xf]
  %v193 = vld [vmem:[%s5 + $0xc] sm:$0xf]
  %v196 = vunpack.c.l.b16 %v188
  %v197 = vunpack.c.l.b16 %v189
  %v198 = vpack.c.b16 %v197, %v196
  %v203 = vunpack.c.l.b16 %v190
  %v204 = vunpack.c.l.b16 %v191
  %v205 = vunpack.c.l.b16 %v192
  %v206 = vunpack.c.l.b16 %v193
  %v207 = vpack.c.b16 %v204, %v203
  %v208 = vpack.c.b16 %v206, %v205
  %v212 = vsel %vm135, %v198, 0
  %214 = vmatprep.subr.bf16.mxu0 0
  %215 = vmatpush1.bf16.msra.mxu0 0
  %216 = vmatprep.subr.bf16.mxu0 0
  %217 = vmatpush1.bf16.msra.mxu0 0
  %218 = vmatprep.subr.bf16.mxu0 0
  %219 = vmatpush1.bf16.msra.mxu0 0
  %220 = vmatprep.subr.bf16.mxu0 0
  %221 = vmatpush1.bf16.msra.mxu0 0
  %222 = vmatprep.subr.bf16.mxu0 0
  %223 = vmatpush1.bf16.msra.mxu0 0
  %224 = vmatprep.subr.bf16.mxu0 0
  %225 = vmatpush1.bf16.msra.mxu0 0
  %226 = vmatprep.subr.bf16.mxu0 0
  %227 = vmatpush1.bf16.msra.mxu0 %v208
  %228 = vmatprep.subr.bf16.mxu0 0
  %229 = vmatpush1.bf16.msra.mxu0 %v207
  %230 = vmatprep.subr.bf16.mxu0 0
  %231 = vmatpush2.bf16.msra.mxu0 0
  %232 = vmatprep.subr.bf16.mxu0 0
  %233 = vmatpush2.bf16.msra.mxu0 0
  %234 = vmatprep.subr.bf16.mxu0 0
  %235 = vmatpush2.bf16.msra.mxu0 0
  %236 = vmatprep.subr.bf16.mxu0 0
  %237 = vmatpush2.bf16.msra.mxu0 0
  %238 = vmatprep.subr.bf16.mxu0 0
  %239 = vmatpush2.bf16.msra.mxu0 0
  %240 = vmatprep.subr.bf16.mxu0 0
  %241 = vmatpush2.bf16.msra.mxu0 0
  %242 = vmatprep.subr.bf16.mxu0 0
  %243 = vmatpush2.bf16.msra.mxu0 0
  %244 = vmatprep.subr.bf16.mxu0 0
  %245 = vmatpush2.bf16.msra.mxu0 0
  %246 = vmatprep.mubr.bf16.mxu0 0
  %247 = vmatmul.mubr.bf16.gmra.mxu0 %v212
  %v248 = vpop.f32.mrf.mxu0
  %v249 = vadd.f32 0.0, %v248
  %v250 = vpop.f32.mrf.mxu0
  %v251 = vpop.f32.mrf.mxu0
  %v252 = vadd.f32 0.0, %v251
  %v253 = vpop.f32.mrf.mxu0
  %254 = vdwg.mxu0
  %v255 = vadd.f32 %v186, %v249
  %v256 = vadd.f32 %v187, %v252
  %257 = vst [vmem:[#allocation2] sm:$0xff] %v255
  %258 = vst [vmem:[#allocation2 + $0x8] sm:$0xff] %v256
  %v259 = vld [vmem:[%s9] sm:$0x1]
  %v260 = vld [vmem:[%s82] sm:$0xf]
  %v261 = vld [vmem:[%s82 + $0x4] sm:$0xf]
  %v262 = vld [vmem:[%s6] sm:$0xf]
  %v263 = vld [vmem:[%s6 + $0x4] sm:$0xf]
  %v264 = vld [vmem:[%s6 + $0x8] sm:$0xf]
  %v265 = vld [vmem:[%s6 + $0xc] sm:$0xf]
  %v268 = vunpack.c.l.b16 %v260
  %v269 = vunpack.c.l.b16 %v261
  %v270 = vpack.c.b16 %v269, %v268
  %v275 = vunpack.c.l.b16 %v262
  %v276 = vunpack.c.l.b16 %v263
  %v277 = vunpack.c.l.b16 %v264
  %v278 = vunpack.c.l.b16 %v265
  %v279 = vpack.c.b16 %v276, %v275
  %v280 = vpack.c.b16 %v278, %v277
  %v284 = vsel %vm135, %v270, 0
  %286 = vmatprep.subr.bf16.mxu0 0
  %287 = vmatpush1.bf16.msra.mxu0 0
  %288 = vmatprep.subr.bf16.mxu0 0
  %289 = vmatpush1.bf16.msra.mxu0 0
  %290 = vmatprep.subr.bf16.mxu0 0
  %291 = vmatpush1.bf16.msra.mxu0 0
  %292 = vmatprep.subr.bf16.mxu0 0
  %293 = vmatpush1.bf16.msra.mxu0 0
  %294 = vmatprep.subr.bf16.mxu0 0
  %295 = vmatpush1.bf16.msra.mxu0 0
  %296 = vmatprep.subr.bf16.mxu0 0
  %297 = vmatpush1.bf16.msra.mxu0 0
  %298 = vmatprep.subr.bf16.mxu0 0
  %299 = vmatpush1.bf16.msra.mxu0 %v280
  %300 = vmatprep.subr.bf16.mxu0 0
  %301 = vmatpush1.bf16.msra.mxu0 %v279
  %302 = vmatprep.subr.bf16.mxu0 0
  %303 = vmatpush2.bf16.msra.mxu0 0
  %304 = vmatprep.subr.bf16.mxu0 0
  %305 = vmatpush2.bf16.msra.mxu0 0
  %306 = vmatprep.subr.bf16.mxu0 0
  %307 = vmatpush2.bf16.msra.mxu0 0
  %308 = vmatprep.subr.bf16.mxu0 0
  %309 = vmatpush2.bf16.msra.mxu0 0
  %310 = vmatprep.subr.bf16.mxu0 0
  %311 = vmatpush2.bf16.msra.mxu0 0
  %312 = vmatprep.subr.bf16.mxu0 0
  %313 = vmatpush2.bf16.msra.mxu0 0
  %314 = vmatprep.subr.bf16.mxu0 0
  %315 = vmatpush2.bf16.msra.mxu0 0
  %316 = vmatprep.subr.bf16.mxu0 0
  %317 = vmatpush2.bf16.msra.mxu0 0
  %318 = vmatprep.mubr.bf16.mxu0 0
  %319 = vmatmul.mubr.bf16.gmra.mxu0 %v284
  %v320 = vpop.f32.mrf.mxu0
  %v321 = vadd.f32 0.0, %v320
  %v322 = vpop.f32.mrf.mxu0
  %v323 = vpop.f32.mrf.mxu0
  %v324 = vadd.f32 0.0, %v323
  %v325 = vpop.f32.mrf.mxu0
  %326 = vdwg.mxu0
  %v328 = vlaneseq
  %v329 = vshrl.u32 %v328, 7
  %v330 = vsub.s32 0, %v329
  %v331 = vrot.slane %v259, %v330
  %v333 = vadd.f32 %v331, %v321
  %v334 = vadd.f32 %v331, %v324
  %v335 = vld [vmem:[%s90] sm:$0xf]
  %v336 = vld [vmem:[%s90 + $0x4] sm:$0xf]
  %v337 = vld [vmem:[%s7] sm:$0xf]
  %v338 = vld [vmem:[%s7 + $0x4] sm:$0xf]
  %v339 = vld [vmem:[%s7 + $0x8] sm:$0xf]
  %v340 = vld [vmem:[%s7 + $0xc] sm:$0xf]
  %v343 = vunpack.c.l.b16 %v335
  %v344 = vunpack.c.l.b16 %v336
  %v345 = vpack.c.b16 %v344, %v343
  %v350 = vunpack.c.l.b16 %v337
  %v351 = vunpack.c.l.b16 %v338
  %v352 = vunpack.c.l.b16 %v339
  %v353 = vunpack.c.l.b16 %v340
  %v354 = vpack.c.b16 %v351, %v350
  %v355 = vpack.c.b16 %v353, %v352
  %v359 = vsel %vm135, %v345, 0
  %361 = vmatprep.subr.bf16.mxu0 0
  %362 = vmatpush1.bf16.msra.mxu0 0
  %363 = vmatprep.subr.bf16.mxu0 0
  %364 = vmatpush1.bf16.msra.mxu0 0
  %365 = vmatprep.subr.bf16.mxu0 0
  %366 = vmatpush1.bf16.msra.mxu0 0
  %367 = vmatprep.subr.bf16.mxu0 0
  %368 = vmatpush1.bf16.msra.mxu0 0
  %369 = vmatprep.subr.bf16.mxu0 0
  %370 = vmatpush1.bf16.msra.mxu0 0
  %371 = vmatprep.subr.bf16.mxu0 0
  %372 = vmatpush1.bf16.msra.mxu0 0
  %373 = vmatprep.subr.bf16.mxu0 0
  %374 = vmatpush1.bf16.msra.mxu0 %v355
  %375 = vmatprep.subr.bf16.mxu0 0
  %376 = vmatpush1.bf16.msra.mxu0 %v354
  %377 = vmatprep.subr.bf16.mxu0 0
  %378 = vmatpush2.bf16.msra.mxu0 0
  %379 = vmatprep.subr.bf16.mxu0 0
  %380 = vmatpush2.bf16.msra.mxu0 0
  %381 = vmatprep.subr.bf16.mxu0 0
  %382 = vmatpush2.bf16.msra.mxu0 0
  %383 = vmatprep.subr.bf16.mxu0 0
  %384 = vmatpush2.bf16.msra.mxu0 0
  %385 = vmatprep.subr.bf16.mxu0 0
  %386 = vmatpush2.bf16.msra.mxu0 0
  %387 = vmatprep.subr.bf16.mxu0 0
  %388 = vmatpush2.bf16.msra.mxu0 0
  %389 = vmatprep.subr.bf16.mxu0 0
  %390 = vmatpush2.bf16.msra.mxu0 0
  %391 = vmatprep.subr.bf16.mxu0 0
  %392 = vmatpush2.bf16.msra.mxu0 0
  %393 = vmatprep.mubr.bf16.mxu0 0
  %394 = vmatmul.mubr.bf16.gmra.mxu0 %v359
  %v395 = vpop.f32.mrf.mxu0
  %v396 = vadd.f32 0.0, %v395
  %v397 = vpop.f32.mrf.mxu0
  %v398 = vpop.f32.mrf.mxu0
  %v399 = vadd.f32 0.0, %v398
  %v400 = vpop.f32.mrf.mxu0
  %401 = vdwg.mxu0
  %v402 = vadd.f32 %v333, %v396
  %v403 = vadd.f32 %v334, %v399
  %404 = vst [vmem:[#allocation3] sm:$0xff] %v402
  %405 = vst [vmem:[#allocation3 + $0x8] sm:$0xff] %v403
  %v406 = vld [vmem:[#allocation6] sm:$0x3]
  %v407 = vld [vmem:[#allocation7] sm:$0x3]
  %v408 = vld [vmem:[#allocation8] sm:$0x3]
  %v409 = vld [vmem:[#allocation9] sm:$0x3]
  %v410 = vld [vmem:[#allocation2] sm:$0x3]
  %v411 = vpack.c.bf16 %v406, %v406
  %v412 = vld [vmem:[%s10] sm:$0xf]
  %v413 = vld [vmem:[%s10 + $0x4] sm:$0xf]
  %v414 = vld [vmem:[%s10 + $0x8] sm:$0xf]
  %v415 = vld [vmem:[%s10 + $0xc] sm:$0xf]
  %v420 = vunpack.c.l.b16 %v412
  %v421 = vunpack.c.l.b16 %v413
  %v422 = vunpack.c.l.b16 %v414
  %v423 = vunpack.c.l.b16 %v415
  %v424 = vpack.c.b16 %v421, %v420
  %v425 = vpack.c.b16 %v423, %v422
  %v429 = vsel %vm135, %v411, 0
  %431 = vmatprep.subr.bf16.mxu0 0
  %432 = vmatpush1.bf16.msra.mxu0 0
  %433 = vmatprep.subr.bf16.mxu0 0
  %434 = vmatpush1.bf16.msra.mxu0 0
  %435 = vmatprep.subr.bf16.mxu0 0
  %436 = vmatpush1.bf16.msra.mxu0 0
  %437 = vmatprep.subr.bf16.mxu0 0
  %438 = vmatpush1.bf16.msra.mxu0 0
  %439 = vmatprep.subr.bf16.mxu0 0
  %440 = vmatpush1.bf16.msra.mxu0 0
  %441 = vmatprep.subr.bf16.mxu0 0
  %442 = vmatpush1.bf16.msra.mxu0 0
  %443 = vmatprep.subr.bf16.mxu0 0
  %444 = vmatpush1.bf16.msra.mxu0 %v425
  %445 = vmatprep.subr.bf16.mxu0 0
  %446 = vmatpush1.bf16.msra.mxu0 %v424
  %447 = vmatprep.subr.bf16.mxu0 0
  %448 = vmatpush2.bf16.msra.mxu0 0
  %449 = vmatprep.subr.bf16.mxu0 0
  %450 = vmatpush2.bf16.msra.mxu0 0
  %451 = vmatprep.subr.bf16.mxu0 0
  %452 = vmatpush2.bf16.msra.mxu0 0
  %453 = vmatprep.subr.bf16.mxu0 0
  %454 = vmatpush2.bf16.msra.mxu0 0
  %455 = vmatprep.subr.bf16.mxu0 0
  %456 = vmatpush2.bf16.msra.mxu0 0
  %457 = vmatprep.subr.bf16.mxu0 0
  %458 = vmatpush2.bf16.msra.mxu0 0
  %459 = vmatprep.subr.bf16.mxu0 0
  %460 = vmatpush2.bf16.msra.mxu0 0
  %461 = vmatprep.subr.bf16.mxu0 0
  %462 = vmatpush2.bf16.msra.mxu0 0
  %463 = vmatprep.mubr.bf16.mxu0 0
  %464 = vmatmul.mubr.bf16.gmra.mxu0 %v429
  %v465 = vpop.f32.mrf.mxu0
  %v466 = vadd.f32 0.0, %v465
  %v467 = vpop.f32.mrf.mxu0
  %v468 = vpop.f32.mrf.mxu0
  %v469 = vpop.f32.mrf.mxu0
  %470 = vdwg.mxu0
  %v471 = vadd.f32 %v410, %v466
  %v472 = vmul.f32 %v471, 0.5
  %v473 = vtanh.pop %v472
  %v474 = vmul.f32 %v473, 0.5
  %v475 = vadd.f32 %v474, 0.5
  %v476 = vtanh.pop %v471
  %478 = vrot.lane.b32.xlu0 %v407, 32
  %v479 = vpop.permute.xlu0 %478
  %v481 = vmul.f32 %v475, %v479
  %483 = vrot.lane.b32.xlu0 %v476, 64
  %v484 = vpop.permute.xlu0 %483
  %v486 = vmul.f32 %v475, %v484
  %488 = vrot.lane.b32.xlu0 %v486, 32
  %v489 = vpop.permute.xlu0 %488
  %v491 = vadd.f32 %v481, %v489
  %v492 = vtanh.pop %v491
  %494 = vrot.lane.b32.xlu0 %v492, 64
  %v495 = vpop.permute.xlu0 %494
  %v497 = vmul.f32 %v475, %v495
  %499 = vrot.lane.b32.xlu0 %v497, 32
  %v500 = vpop.permute.xlu0 %499
  %vm502 = vcmask 254976
  %503 = vst.msk [vmem:[#allocation4] sm:$0x3] %vm502, %v500
  %s504 = scalar_lea.vmem [#allocation3], 14
  %v505 = vld [vmem:[%s504] sm:$0x3]
  %v506 = vpack.c.bf16 %v408, %v408
  %v507 = vld [vmem:[%s11] sm:$0xf]
  %v508 = vld [vmem:[%s11 + $0x4] sm:$0xf]
  %v509 = vld [vmem:[%s11 + $0x8] sm:$0xf]
  %v510 = vld [vmem:[%s11 + $0xc] sm:$0xf]
  %v515 = vunpack.c.l.b16 %v507
  %v516 = vunpack.c.l.b16 %v508
  %v517 = vunpack.c.l.b16 %v509
  %v518 = vunpack.c.l.b16 %v510
  %v519 = vpack.c.b16 %v516, %v515
  %v520 = vpack.c.b16 %v518, %v517
  %v524 = vsel %vm135, %v506, 0
  %526 = vmatprep.subr.bf16.mxu0 0
  %527 = vmatpush1.bf16.msra.mxu0 0
  %528 = vmatprep.subr.bf16.mxu0 0
  %529 = vmatpush1.bf16.msra.mxu0 0
  %530 = vmatprep.subr.bf16.mxu0 0
  %531 = vmatpush1.bf16.msra.mxu0 0
  %532 = vmatprep.subr.bf16.mxu0 0
  %533 = vmatpush1.bf16.msra.mxu0 0
  %534 = vmatprep.subr.bf16.mxu0 0
  %535 = vmatpush1.bf16.msra.mxu0 0
  %536 = vmatprep.subr.bf16.mxu0 0
  %537 = vmatpush1.bf16.msra.mxu0 0
  %538 = vmatprep.subr.bf16.mxu0 0
  %539 = vmatpush1.bf16.msra.mxu0 %v520
  %540 = vmatprep.subr.bf16.mxu0 0
  %541 = vmatpush1.bf16.msra.mxu0 %v519
  %542 = vmatprep.subr.bf16.mxu0 0
  %543 = vmatpush2.bf16.msra.mxu0 0
  %544 = vmatprep.subr.bf16.mxu0 0
  %545 = vmatpush2.bf16.msra.mxu0 0
  %546 = vmatprep.subr.bf16.mxu0 0
  %547 = vmatpush2.bf16.msra.mxu0 0
  %548 = vmatprep.subr.bf16.mxu0 0
  %549 = vmatpush2.bf16.msra.mxu0 0
  %550 = vmatprep.subr.bf16.mxu0 0
  %551 = vmatpush2.bf16.msra.mxu0 0
  %552 = vmatprep.subr.bf16.mxu0 0
  %553 = vmatpush2.bf16.msra.mxu0 0
  %554 = vmatprep.subr.bf16.mxu0 0
  %555 = vmatpush2.bf16.msra.mxu0 0
  %556 = vmatprep.subr.bf16.mxu0 0
  %557 = vmatpush2.bf16.msra.mxu0 0
  %558 = vmatprep.mubr.bf16.mxu0 0
  %559 = vmatmul.mubr.bf16.gmra.mxu0 %v524
  %v560 = vpop.f32.mrf.mxu0
  %v561 = vadd.f32 0.0, %v560
  %v562 = vpop.f32.mrf.mxu0
  %v563 = vpop.f32.mrf.mxu0
  %v564 = vpop.f32.mrf.mxu0
  %565 = vdwg.mxu0
  %v566 = vadd.f32 %v505, %v561
  %v567 = vmul.f32 %v566, 0.5
  %v568 = vtanh.pop %v567
  %v569 = vmul.f32 %v568, 0.5
  %v570 = vadd.f32 %v569, 0.5
  %v571 = vtanh.pop %v566
  %573 = vrot.lane.b32.xlu0 %v409, 32
  %v574 = vpop.permute.xlu0 %573
  %v576 = vmul.f32 %v570, %v574
  %578 = vrot.lane.b32.xlu0 %v571, 64
  %v579 = vpop.permute.xlu0 %578
  %v581 = vmul.f32 %v570, %v579
  %583 = vrot.lane.b32.xlu0 %v581, 32
  %v584 = vpop.permute.xlu0 %583
  %v586 = vadd.f32 %v576, %v584
  %v587 = vtanh.pop %v586
  %589 = vrot.lane.b32.xlu0 %v587, 64
  %v590 = vpop.permute.xlu0 %589
  %v592 = vmul.f32 %v570, %v590
  %594 = vrot.lane.b32.xlu0 %v592, 32
  %v595 = vpop.permute.xlu0 %594
  %s597 = scalar_lea.vmem [#allocation5], 14
  %598 = vst.msk [vmem:[%s597] sm:$0x3] %vm502, %v595
  %s599 = scalar_lea.vmem [#allocation2], 2
  %v600 = vld [vmem:[%s599] sm:$0x3]
  %v601 = vpack.c.bf16 %v497, %v497
  %v602 = vld [vmem:[%s10] sm:$0xf]
  %v603 = vld [vmem:[%s10 + $0x4] sm:$0xf]
  %v604 = vld [vmem:[%s10 + $0x8] sm:$0xf]
  %v605 = vld [vmem:[%s10 + $0xc] sm:$0xf]
  %607 = vrot.lane.b32.xlu0 %v601, 32
  %v608 = vpop.permute.xlu0 %607
  %v613 = vunpack.c.l.b16 %v602
  %v614 = vunpack.c.l.b16 %v603
  %v615 = vunpack.c.l.b16 %v604
  %v616 = vunpack.c.l.b16 %v605
  %v617 = vpack.c.b16 %v614, %v613
  %v618 = vpack.c.b16 %v616, %v615
  %v622 = vsel %vm135, %v608, 0
  %624 = vmatprep.subr.bf16.mxu0 0
  %625 = vmatpush1.bf16.msra.mxu0 0
  %626 = vmatprep.subr.bf16.mxu0 0
  %627 = vmatpush1.bf16.msra.mxu0 0
  %628 = vmatprep.subr.bf16.mxu0 0
  %629 = vmatpush1.bf16.msra.mxu0 0
  %630 = vmatprep.subr.bf16.mxu0 0
  %631 = vmatpush1.bf16.msra.mxu0 0
  %632 = vmatprep.subr.bf16.mxu0 0
  %633 = vmatpush1.bf16.msra.mxu0 0
  %634 = vmatprep.subr.bf16.mxu0 0
  %635 = vmatpush1.bf16.msra.mxu0 0
  %636 = vmatprep.subr.bf16.mxu0 0
  %637 = vmatpush1.bf16.msra.mxu0 %v618
  %638 = vmatprep.subr.bf16.mxu0 0
  %639 = vmatpush1.bf16.msra.mxu0 %v617
  %640 = vmatprep.subr.bf16.mxu0 0
  %641 = vmatpush2.bf16.msra.mxu0 0
  %642 = vmatprep.subr.bf16.mxu0 0
  %643 = vmatpush2.bf16.msra.mxu0 0
  %644 = vmatprep.subr.bf16.mxu0 0
  %645 = vmatpush2.bf16.msra.mxu0 0
  %646 = vmatprep.subr.bf16.mxu0 0
  %647 = vmatpush2.bf16.msra.mxu0 0
  %648 = vmatprep.subr.bf16.mxu0 0
  %649 = vmatpush2.bf16.msra.mxu0 0
  %650 = vmatprep.subr.bf16.mxu0 0
  %651 = vmatpush2.bf16.msra.mxu0 0
  %652 = vmatprep.subr.bf16.mxu0 0
  %653 = vmatpush2.bf16.msra.mxu0 0
  %654 = vmatprep.subr.bf16.mxu0 0
  %655 = vmatpush2.bf16.msra.mxu0 0
  %656 = vmatprep.mubr.bf16.mxu0 0
  %657 = vmatmul.mubr.bf16.gmra.mxu0 %v622
  %v658 = vpop.f32.mrf.mxu0
  %v659 = vadd.f32 0.0, %v658
  %v660 = vpop.f32.mrf.mxu0
  %v661 = vpop.f32.mrf.mxu0
  %v662 = vpop.f32.mrf.mxu0
  %663 = vdwg.mxu0
  %v664 = vadd.f32 %v600, %v659
  %v665 = vmul.f32 %v664, 0.5
  %v666 = vtanh.pop %v665
  %v667 = vmul.f32 %v666, 0.5
  %v668 = vadd.f32 %v667, 0.5
  %v669 = vtanh.pop %v664
  %v670 = vmul.f32 %v668, %v491
  %672 = vrot.lane.b32.xlu0 %v669, 64
  %v673 = vpop.permute.xlu0 %672
  %v675 = vmul.f32 %v668, %v673
  %677 = vrot.lane.b32.xlu0 %v675, 32
  %v678 = vpop.permute.xlu0 %677
  %v680 = vadd.f32 %v670, %v678
  %v681 = vtanh.pop %v680
  %683 = vrot.lane.b32.xlu0 %v681, 64
  %v684 = vpop.permute.xlu0 %683
  %v686 = vmul.f32 %v668, %v684
  %688 = vrot.lane.b32.xlu0 %v686, 32
  %v689 = vpop.permute.xlu0 %688
  %s691 = scalar_lea.vmem [#allocation4], 2
  %692 = vst.msk [vmem:[%s691] sm:$0x3] %vm502, %v689
  %s693 = scalar_lea.vmem [#allocation3], 12
  %v694 = vld [vmem:[%s693] sm:$0x3]
  %v695 = vpack.c.bf16 %v592, %v592
  %v696 = vld [vmem:[%s11] sm:$0xf]
  %v697 = vld [vmem:[%s11 + $0x4] sm:$0xf]
  %v698 = vld [vmem:[%s11 + $0x8] sm:$0xf]
  %v699 = vld [vmem:[%s11 + $0xc] sm:$0xf]
  %701 = vrot.lane.b32.xlu0 %v695, 32
  %v702 = vpop.permute.xlu0 %701
  %v707 = vunpack.c.l.b16 %v696
  %v708 = vunpack.c.l.b16 %v697
  %v709 = vunpack.c.l.b16 %v698
  %v710 = vunpack.c.l.b16 %v699
  %v711 = vpack.c.b16 %v708, %v707
  %v712 = vpack.c.b16 %v710, %v709
  %v716 = vsel %vm135, %v702, 0
  %718 = vmatprep.subr.bf16.mxu0 0
  %719 = vmatpush1.bf16.msra.mxu0 0
  %720 = vmatprep.subr.bf16.mxu0 0
  %721 = vmatpush1.bf16.msra.mxu0 0
  %722 = vmatprep.subr.bf16.mxu0 0
  %723 = vmatpush1.bf16.msra.mxu0 0
  %724 = vmatprep.subr.bf16.mxu0 0
  %725 = vmatpush1.bf16.msra.mxu0 0
  %726 = vmatprep.subr.bf16.mxu0 0
  %727 = vmatpush1.bf16.msra.mxu0 0
  %728 = vmatprep.subr.bf16.mxu0 0
  %729 = vmatpush1.bf16.msra.mxu0 0
  %730 = vmatprep.subr.bf16.mxu0 0
  %731 = vmatpush1.bf16.msra.mxu0 %v712
  %732 = vmatprep.subr.bf16.mxu0 0
  %733 = vmatpush1.bf16.msra.mxu0 %v711
  %734 = vmatprep.subr.bf16.mxu0 0
  %735 = vmatpush2.bf16.msra.mxu0 0
  %736 = vmatprep.subr.bf16.mxu0 0
  %737 = vmatpush2.bf16.msra.mxu0 0
  %738 = vmatprep.subr.bf16.mxu0 0
  %739 = vmatpush2.bf16.msra.mxu0 0
  %740 = vmatprep.subr.bf16.mxu0 0
  %741 = vmatpush2.bf16.msra.mxu0 0
  %742 = vmatprep.subr.bf16.mxu0 0
  %743 = vmatpush2.bf16.msra.mxu0 0
  %744 = vmatprep.subr.bf16.mxu0 0
  %745 = vmatpush2.bf16.msra.mxu0 0
  %746 = vmatprep.subr.bf16.mxu0 0
  %747 = vmatpush2.bf16.msra.mxu0 0
  %748 = vmatprep.subr.bf16.mxu0 0
  %749 = vmatpush2.bf16.msra.mxu0 0
  %750 = vmatprep.mubr.bf16.mxu0 0
  %751 = vmatmul.mubr.bf16.gmra.mxu0 %v716
  %v752 = vpop.f32.mrf.mxu0
  %v753 = vadd.f32 0.0, %v752
  %v754 = vpop.f32.mrf.mxu0
  %v755 = vpop.f32.mrf.mxu0
  %v756 = vpop.f32.mrf.mxu0
  %757 = vdwg.mxu0
  %v758 = vadd.f32 %v694, %v753
  %v759 = vmul.f32 %v758, 0.5
  %v760 = vtanh.pop %v759
  %v761 = vmul.f32 %v760, 0.5
  %v762 = vadd.f32 %v761, 0.5
  %v763 = vtanh.pop %v758
  %v764 = vmul.f32 %v762, %v586
  %766 = vrot.lane.b32.xlu0 %v763, 64
  %v767 = vpop.permute.xlu0 %766
  %v769 = vmul.f32 %v762, %v767
  %771 = vrot.lane.b32.xlu0 %v769, 32
  %v772 = vpop.permute.xlu0 %771
  %v774 = vadd.f32 %v764, %v772
  %v775 = vtanh.pop %v774
  %777 = vrot.lane.b32.xlu0 %v775, 64
  %v778 = vpop.permute.xlu0 %777
  %v780 = vmul.f32 %v762, %v778
  %782 = vrot.lane.b32.xlu0 %v780, 32
  %v783 = vpop.permute.xlu0 %782
  %s785 = scalar_lea.vmem [#allocation5], 12
  %786 = vst.msk [vmem:[%s785] sm:$0x3] %vm502, %v783
  %s787 = scalar_lea.vmem [#allocation2], 4
  %v788 = vld [vmem:[%s787] sm:$0x3]
  %v789 = vpack.c.bf16 %v686, %v686
  %v790 = vld [vmem:[%s10] sm:$0xf]
  %v791 = vld [vmem:[%s10 + $0x4] sm:$0xf]
  %v792 = vld [vmem:[%s10 + $0x8] sm:$0xf]
  %v793 = vld [vmem:[%s10 + $0xc] sm:$0xf]
  %795 = vrot.lane.b32.xlu0 %v789, 32
  %v796 = vpop.permute.xlu0 %795
  %v801 = vunpack.c.l.b16 %v790
  %v802 = vunpack.c.l.b16 %v791
  %v803 = vunpack.c.l.b16 %v792
  %v804 = vunpack.c.l.b16 %v793
  %v805 = vpack.c.b16 %v802, %v801
  %v806 = vpack.c.b16 %v804, %v803
  %v810 = vsel %vm135, %v796, 0
  %812 = vmatprep.subr.bf16.mxu0 0
  %813 = vmatpush1.bf16.msra.mxu0 0
  %814 = vmatprep.subr.bf16.mxu0 0
  %815 = vmatpush1.bf16.msra.mxu0 0
  %816 = vmatprep.subr.bf16.mxu0 0
  %817 = vmatpush1.bf16.msra.mxu0 0
  %818 = vmatprep.subr.bf16.mxu0 0
  %819 = vmatpush1.bf16.msra.mxu0 0
  %820 = vmatprep.subr.bf16.mxu0 0
  %821 = vmatpush1.bf16.msra.mxu0 0
  %822 = vmatprep.subr.bf16.mxu0 0
  %823 = vmatpush1.bf16.msra.mxu0 0
  %824 = vmatprep.subr.bf16.mxu0 0
  %825 = vmatpush1.bf16.msra.mxu0 %v806
  %826 = vmatprep.subr.bf16.mxu0 0
  %827 = vmatpush1.bf16.msra.mxu0 %v805
  %828 = vmatprep.subr.bf16.mxu0 0
  %829 = vmatpush2.bf16.msra.mxu0 0
  %830 = vmatprep.subr.bf16.mxu0 0
  %831 = vmatpush2.bf16.msra.mxu0 0
  %832 = vmatprep.subr.bf16.mxu0 0
  %833 = vmatpush2.bf16.msra.mxu0 0
  %834 = vmatprep.subr.bf16.mxu0 0
  %835 = vmatpush2.bf16.msra.mxu0 0
  %836 = vmatprep.subr.bf16.mxu0 0
  %837 = vmatpush2.bf16.msra.mxu0 0
  %838 = vmatprep.subr.bf16.mxu0 0
  %839 = vmatpush2.bf16.msra.mxu0 0
  %840 = vmatprep.subr.bf16.mxu0 0
  %841 = vmatpush2.bf16.msra.mxu0 0
  %842 = vmatprep.subr.bf16.mxu0 0
  %843 = vmatpush2.bf16.msra.mxu0 0
  %844 = vmatprep.mubr.bf16.mxu0 0
  %845 = vmatmul.mubr.bf16.gmra.mxu0 %v810
  %v846 = vpop.f32.mrf.mxu0
  %v847 = vadd.f32 0.0, %v846
  %v848 = vpop.f32.mrf.mxu0
  %v849 = vpop.f32.mrf.mxu0
  %v850 = vpop.f32.mrf.mxu0
  %851 = vdwg.mxu0
  %v852 = vadd.f32 %v788, %v847
  %v853 = vmul.f32 %v852, 0.5
  %v854 = vtanh.pop %v853
  %v855 = vmul.f32 %v854, 0.5
  %v856 = vadd.f32 %v855, 0.5
  %v857 = vtanh.pop %v852
  %v858 = vmul.f32 %v856, %v680
  %860 = vrot.lane.b32.xlu0 %v857, 64
  %v861 = vpop.permute.xlu0 %860
  %v863 = vmul.f32 %v856, %v861
  %865 = vrot.lane.b32.xlu0 %v863, 32
  %v866 = vpop.permute.xlu0 %865
  %v868 = vadd.f32 %v858, %v866
  %v869 = vtanh.pop %v868
  %871 = vrot.lane.b32.xlu0 %v869, 64
  %v872 = vpop.permute.xlu0 %871
  %v874 = vmul.f32 %v856, %v872
  %876 = vrot.lane.b32.xlu0 %v874, 32
  %v877 = vpop.permute.xlu0 %876
  %s879 = scalar_lea.vmem [#allocation4], 4
  %880 = vst.msk [vmem:[%s879] sm:$0x3] %vm502, %v877
  %s881 = scalar_lea.vmem [#allocation3], 10
  %v882 = vld [vmem:[%s881] sm:$0x3]
  %v883 = vpack.c.bf16 %v780, %v780
  %v884 = vld [vmem:[%s11] sm:$0xf]
  %v885 = vld [vmem:[%s11 + $0x4] sm:$0xf]
  %v886 = vld [vmem:[%s11 + $0x8] sm:$0xf]
  %v887 = vld [vmem:[%s11 + $0xc] sm:$0xf]
  %889 = vrot.lane.b32.xlu0 %v883, 32
  %v890 = vpop.permute.xlu0 %889
  %v895 = vunpack.c.l.b16 %v884
  %v896 = vunpack.c.l.b16 %v885
  %v897 = vunpack.c.l.b16 %v886
  %v898 = vunpack.c.l.b16 %v887
  %v899 = vpack.c.b16 %v896, %v895
  %v900 = vpack.c.b16 %v898, %v897
  %v904 = vsel %vm135, %v890, 0
  %906 = vmatprep.subr.bf16.mxu0 0
  %907 = vmatpush1.bf16.msra.mxu0 0
  %908 = vmatprep.subr.bf16.mxu0 0
  %909 = vmatpush1.bf16.msra.mxu0 0
  %910 = vmatprep.subr.bf16.mxu0 0
  %911 = vmatpush1.bf16.msra.mxu0 0
  %912 = vmatprep.subr.bf16.mxu0 0
  %913 = vmatpush1.bf16.msra.mxu0 0
  %914 = vmatprep.subr.bf16.mxu0 0
  %915 = vmatpush1.bf16.msra.mxu0 0
  %916 = vmatprep.subr.bf16.mxu0 0
  %917 = vmatpush1.bf16.msra.mxu0 0
  %918 = vmatprep.subr.bf16.mxu0 0
  %919 = vmatpush1.bf16.msra.mxu0 %v900
  %920 = vmatprep.subr.bf16.mxu0 0
  %921 = vmatpush1.bf16.msra.mxu0 %v899
  %922 = vmatprep.subr.bf16.mxu0 0
  %923 = vmatpush2.bf16.msra.mxu0 0
  %924 = vmatprep.subr.bf16.mxu0 0
  %925 = vmatpush2.bf16.msra.mxu0 0
  %926 = vmatprep.subr.bf16.mxu0 0
  %927 = vmatpush2.bf16.msra.mxu0 0
  %928 = vmatprep.subr.bf16.mxu0 0
  %929 = vmatpush2.bf16.msra.mxu0 0
  %930 = vmatprep.subr.bf16.mxu0 0
  %931 = vmatpush2.bf16.msra.mxu0 0
  %932 = vmatprep.subr.bf16.mxu0 0
  %933 = vmatpush2.bf16.msra.mxu0 0
  %934 = vmatprep.subr.bf16.mxu0 0
  %935 = vmatpush2.bf16.msra.mxu0 0
  %936 = vmatprep.subr.bf16.mxu0 0
  %937 = vmatpush2.bf16.msra.mxu0 0
  %938 = vmatprep.mubr.bf16.mxu0 0
  %939 = vmatmul.mubr.bf16.gmra.mxu0 %v904
  %v940 = vpop.f32.mrf.mxu0
  %v941 = vadd.f32 0.0, %v940
  %v942 = vpop.f32.mrf.mxu0
  %v943 = vpop.f32.mrf.mxu0
  %v944 = vpop.f32.mrf.mxu0
  %945 = vdwg.mxu0
  %v946 = vadd.f32 %v882, %v941
  %v947 = vmul.f32 %v946, 0.5
  %v948 = vtanh.pop %v947
  %v949 = vmul.f32 %v948, 0.5
  %v950 = vadd.f32 %v949, 0.5
  %v951 = vtanh.pop %v946
  %v952 = vmul.f32 %v950, %v774
  %954 = vrot.lane.b32.xlu0 %v951, 64
  %v955 = vpop.permute.xlu0 %954
  %v957 = vmul.f32 %v950, %v955
  %959 = vrot.lane.b32.xlu0 %v957, 32
  %v960 = vpop.permute.xlu0 %959
  %v962 = vadd.f32 %v952, %v960
  %v963 = vtanh.pop %v962
  %965 = vrot.lane.b32.xlu0 %v963, 64
  %v966 = vpop.permute.xlu0 %965
  %v968 = vmul.f32 %v950, %v966
  %970 = vrot.lane.b32.xlu0 %v968, 32
  %v971 = vpop.permute.xlu0 %970
  %s973 = scalar_lea.vmem [#allocation5], 10
  %974 = vst.msk [vmem:[%s973] sm:$0x3] %vm502, %v971
  %s975 = scalar_lea.vmem [#allocation2], 6
  %v976 = vld [vmem:[%s975] sm:$0x3]
  %v977 = vpack.c.bf16 %v874, %v874
  %v978 = vld [vmem:[%s10] sm:$0xf]
  %v979 = vld [vmem:[%s10 + $0x4] sm:$0xf]
  %v980 = vld [vmem:[%s10 + $0x8] sm:$0xf]
  %v981 = vld [vmem:[%s10 + $0xc] sm:$0xf]
  %983 = vrot.lane.b32.xlu0 %v977, 32
  %v984 = vpop.permute.xlu0 %983
  %v989 = vunpack.c.l.b16 %v978
  %v990 = vunpack.c.l.b16 %v979
  %v991 = vunpack.c.l.b16 %v980
  %v992 = vunpack.c.l.b16 %v981
  %v993 = vpack.c.b16 %v990, %v989
  %v994 = vpack.c.b16 %v992, %v991
  %v998 = vsel %vm135, %v984, 0
  %1000 = vmatprep.subr.bf16.mxu0 0
  %1001 = vmatpush1.bf16.msra.mxu0 0
  %1002 = vmatprep.subr.bf16.mxu0 0
  %1003 = vmatpush1.bf16.msra.mxu0 0
  %1004 = vmatprep.subr.bf16.mxu0 0
  %1005 = vmatpush1.bf16.msra.mxu0 0
  %1006 = vmatprep.subr.bf16.mxu0 0
  %1007 = vmatpush1.bf16.msra.mxu0 0
  %1008 = vmatprep.subr.bf16.mxu0 0
  %1009 = vmatpush1.bf16.msra.mxu0 0
  %1010 = vmatprep.subr.bf16.mxu0 0
  %1011 = vmatpush1.bf16.msra.mxu0 0
  %1012 = vmatprep.subr.bf16.mxu0 0
  %1013 = vmatpush1.bf16.msra.mxu0 %v994
  %1014 = vmatprep.subr.bf16.mxu0 0
  %1015 = vmatpush1.bf16.msra.mxu0 %v993
  %1016 = vmatprep.subr.bf16.mxu0 0
  %1017 = vmatpush2.bf16.msra.mxu0 0
  %1018 = vmatprep.subr.bf16.mxu0 0
  %1019 = vmatpush2.bf16.msra.mxu0 0
  %1020 = vmatprep.subr.bf16.mxu0 0
  %1021 = vmatpush2.bf16.msra.mxu0 0
  %1022 = vmatprep.subr.bf16.mxu0 0
  %1023 = vmatpush2.bf16.msra.mxu0 0
  %1024 = vmatprep.subr.bf16.mxu0 0
  %1025 = vmatpush2.bf16.msra.mxu0 0
  %1026 = vmatprep.subr.bf16.mxu0 0
  %1027 = vmatpush2.bf16.msra.mxu0 0
  %1028 = vmatprep.subr.bf16.mxu0 0
  %1029 = vmatpush2.bf16.msra.mxu0 0
  %1030 = vmatprep.subr.bf16.mxu0 0
  %1031 = vmatpush2.bf16.msra.mxu0 0
  %1032 = vmatprep.mubr.bf16.mxu0 0
  %1033 = vmatmul.mubr.bf16.gmra.mxu0 %v998
  %v1034 = vpop.f32.mrf.mxu0
  %v1035 = vadd.f32 0.0, %v1034
  %v1036 = vpop.f32.mrf.mxu0
  %v1037 = vpop.f32.mrf.mxu0
  %v1038 = vpop.f32.mrf.mxu0
  %1039 = vdwg.mxu0
  %v1040 = vadd.f32 %v976, %v1035
  %v1041 = vmul.f32 %v1040, 0.5
  %v1042 = vtanh.pop %v1041
  %v1043 = vmul.f32 %v1042, 0.5
  %v1044 = vadd.f32 %v1043, 0.5
  %v1045 = vtanh.pop %v1040
  %v1046 = vmul.f32 %v1044, %v868
  %1048 = vrot.lane.b32.xlu0 %v1045, 64
  %v1049 = vpop.permute.xlu0 %1048
  %v1051 = vmul.f32 %v1044, %v1049
  %1053 = vrot.lane.b32.xlu0 %v1051, 32
  %v1054 = vpop.permute.xlu0 %1053
  %v1056 = vadd.f32 %v1046, %v1054
  %v1057 = vtanh.pop %v1056
  %1059 = vrot.lane.b32.xlu0 %v1057, 64
  %v1060 = vpop.permute.xlu0 %1059
  %v1062 = vmul.f32 %v1044, %v1060
  %1064 = vrot.lane.b32.xlu0 %v1062, 32
  %v1065 = vpop.permute.xlu0 %1064
  %s1067 = scalar_lea.vmem [#allocation4], 6
  %1068 = vst.msk [vmem:[%s1067] sm:$0x3] %vm502, %v1065
  %s1069 = scalar_lea.vmem [#allocation3], 8
  %v1070 = vld [vmem:[%s1069] sm:$0x3]
  %v1071 = vpack.c.bf16 %v968, %v968
  %v1072 = vld [vmem:[%s11] sm:$0xf]
  %v1073 = vld [vmem:[%s11 + $0x4] sm:$0xf]
  %v1074 = vld [vmem:[%s11 + $0x8] sm:$0xf]
  %v1075 = vld [vmem:[%s11 + $0xc] sm:$0xf]
  %1077 = vrot.lane.b32.xlu0 %v1071, 32
  %v1078 = vpop.permute.xlu0 %1077
  %v1083 = vunpack.c.l.b16 %v1072
  %v1084 = vunpack.c.l.b16 %v1073
  %v1085 = vunpack.c.l.b16 %v1074
  %v1086 = vunpack.c.l.b16 %v1075
  %v1087 = vpack.c.b16 %v1084, %v1083
  %v1088 = vpack.c.b16 %v1086, %v1085
  %v1092 = vsel %vm135, %v1078, 0
  %1094 = vmatprep.subr.bf16.mxu0 0
  %1095 = vmatpush1.bf16.msra.mxu0 0
  %1096 = vmatprep.subr.bf16.mxu0 0
  %1097 = vmatpush1.bf16.msra.mxu0 0
  %1098 = vmatprep.subr.bf16.mxu0 0
  %1099 = vmatpush1.bf16.msra.mxu0 0
  %1100 = vmatprep.subr.bf16.mxu0 0
  %1101 = vmatpush1.bf16.msra.mxu0 0
  %1102 = vmatprep.subr.bf16.mxu0 0
  %1103 = vmatpush1.bf16.msra.mxu0 0
  %1104 = vmatprep.subr.bf16.mxu0 0
  %1105 = vmatpush1.bf16.msra.mxu0 0
  %1106 = vmatprep.subr.bf16.mxu0 0
  %1107 = vmatpush1.bf16.msra.mxu0 %v1088
  %1108 = vmatprep.subr.bf16.mxu0 0
  %1109 = vmatpush1.bf16.msra.mxu0 %v1087
  %1110 = vmatprep.subr.bf16.mxu0 0
  %1111 = vmatpush2.bf16.msra.mxu0 0
  %1112 = vmatprep.subr.bf16.mxu0 0
  %1113 = vmatpush2.bf16.msra.mxu0 0
  %1114 = vmatprep.subr.bf16.mxu0 0
  %1115 = vmatpush2.bf16.msra.mxu0 0
  %1116 = vmatprep.subr.bf16.mxu0 0
  %1117 = vmatpush2.bf16.msra.mxu0 0
  %1118 = vmatprep.subr.bf16.mxu0 0
  %1119 = vmatpush2.bf16.msra.mxu0 0
  %1120 = vmatprep.subr.bf16.mxu0 0
  %1121 = vmatpush2.bf16.msra.mxu0 0
  %1122 = vmatprep.subr.bf16.mxu0 0
  %1123 = vmatpush2.bf16.msra.mxu0 0
  %1124 = vmatprep.subr.bf16.mxu0 0
  %1125 = vmatpush2.bf16.msra.mxu0 0
  %1126 = vmatprep.mubr.bf16.mxu0 0
  %1127 = vmatmul.mubr.bf16.gmra.mxu0 %v1092
  %v1128 = vpop.f32.mrf.mxu0
  %v1129 = vadd.f32 0.0, %v1128
  %v1130 = vpop.f32.mrf.mxu0
  %v1131 = vpop.f32.mrf.mxu0
  %v1132 = vpop.f32.mrf.mxu0
  %1133 = vdwg.mxu0
  %v1134 = vadd.f32 %v1070, %v1129
  %v1135 = vmul.f32 %v1134, 0.5
  %v1136 = vtanh.pop %v1135
  %v1137 = vmul.f32 %v1136, 0.5
  %v1138 = vadd.f32 %v1137, 0.5
  %v1139 = vtanh.pop %v1134
  %v1140 = vmul.f32 %v1138, %v962
  %1142 = vrot.lane.b32.xlu0 %v1139, 64
  %v1143 = vpop.permute.xlu0 %1142
  %v1145 = vmul.f32 %v1138, %v1143
  %1147 = vrot.lane.b32.xlu0 %v1145, 32
  %v1148 = vpop.permute.xlu0 %1147
  %v1150 = vadd.f32 %v1140, %v1148
  %v1151 = vtanh.pop %v1150
  %1153 = vrot.lane.b32.xlu0 %v1151, 64
  %v1154 = vpop.permute.xlu0 %1153
  %v1156 = vmul.f32 %v1138, %v1154
  %1158 = vrot.lane.b32.xlu0 %v1156, 32
  %v1159 = vpop.permute.xlu0 %1158
  %s1161 = scalar_lea.vmem [#allocation5], 8
  %1162 = vst.msk [vmem:[%s1161] sm:$0x3] %vm502, %v1159
  %s1163 = scalar_lea.vmem [#allocation2], 8
  %v1164 = vld [vmem:[%s1163] sm:$0x3]
  %v1165 = vpack.c.bf16 %v1062, %v1062
  %v1166 = vld [vmem:[%s10] sm:$0xf]
  %v1167 = vld [vmem:[%s10 + $0x4] sm:$0xf]
  %v1168 = vld [vmem:[%s10 + $0x8] sm:$0xf]
  %v1169 = vld [vmem:[%s10 + $0xc] sm:$0xf]
  %1171 = vrot.lane.b32.xlu0 %v1165, 32
  %v1172 = vpop.permute.xlu0 %1171
  %v1177 = vunpack.c.l.b16 %v1166
  %v1178 = vunpack.c.l.b16 %v1167
  %v1179 = vunpack.c.l.b16 %v1168
  %v1180 = vunpack.c.l.b16 %v1169
  %v1181 = vpack.c.b16 %v1178, %v1177
  %v1182 = vpack.c.b16 %v1180, %v1179
  %v1186 = vsel %vm135, %v1172, 0
  %1188 = vmatprep.subr.bf16.mxu0 0
  %1189 = vmatpush1.bf16.msra.mxu0 0
  %1190 = vmatprep.subr.bf16.mxu0 0
  %1191 = vmatpush1.bf16.msra.mxu0 0
  %1192 = vmatprep.subr.bf16.mxu0 0
  %1193 = vmatpush1.bf16.msra.mxu0 0
  %1194 = vmatprep.subr.bf16.mxu0 0
  %1195 = vmatpush1.bf16.msra.mxu0 0
  %1196 = vmatprep.subr.bf16.mxu0 0
  %1197 = vmatpush1.bf16.msra.mxu0 0
  %1198 = vmatprep.subr.bf16.mxu0 0
  %1199 = vmatpush1.bf16.msra.mxu0 0
  %1200 = vmatprep.subr.bf16.mxu0 0
  %1201 = vmatpush1.bf16.msra.mxu0 %v1182
  %1202 = vmatprep.subr.bf16.mxu0 0
  %1203 = vmatpush1.bf16.msra.mxu0 %v1181
  %1204 = vmatprep.subr.bf16.mxu0 0
  %1205 = vmatpush2.bf16.msra.mxu0 0
  %1206 = vmatprep.subr.bf16.mxu0 0
  %1207 = vmatpush2.bf16.msra.mxu0 0
  %1208 = vmatprep.subr.bf16.mxu0 0
  %1209 = vmatpush2.bf16.msra.mxu0 0
  %1210 = vmatprep.subr.bf16.mxu0 0
  %1211 = vmatpush2.bf16.msra.mxu0 0
  %1212 = vmatprep.subr.bf16.mxu0 0
  %1213 = vmatpush2.bf16.msra.mxu0 0
  %1214 = vmatprep.subr.bf16.mxu0 0
  %1215 = vmatpush2.bf16.msra.mxu0 0
  %1216 = vmatprep.subr.bf16.mxu0 0
  %1217 = vmatpush2.bf16.msra.mxu0 0
  %1218 = vmatprep.subr.bf16.mxu0 0
  %1219 = vmatpush2.bf16.msra.mxu0 0
  %1220 = vmatprep.mubr.bf16.mxu0 0
  %1221 = vmatmul.mubr.bf16.gmra.mxu0 %v1186
  %v1222 = vpop.f32.mrf.mxu0
  %v1223 = vadd.f32 0.0, %v1222
  %v1224 = vpop.f32.mrf.mxu0
  %v1225 = vpop.f32.mrf.mxu0
  %v1226 = vpop.f32.mrf.mxu0
  %1227 = vdwg.mxu0
  %v1228 = vadd.f32 %v1164, %v1223
  %v1229 = vmul.f32 %v1228, 0.5
  %v1230 = vtanh.pop %v1229
  %v1231 = vmul.f32 %v1230, 0.5
  %v1232 = vadd.f32 %v1231, 0.5
  %v1233 = vtanh.pop %v1228
  %v1234 = vmul.f32 %v1232, %v1056
  %1236 = vrot.lane.b32.xlu0 %v1233, 64
  %v1237 = vpop.permute.xlu0 %1236
  %v1239 = vmul.f32 %v1232, %v1237
  %1241 = vrot.lane.b32.xlu0 %v1239, 32
  %v1242 = vpop.permute.xlu0 %1241
  %v1244 = vadd.f32 %v1234, %v1242
  %v1245 = vtanh.pop %v1244
  %1247 = vrot.lane.b32.xlu0 %v1245, 64
  %v1248 = vpop.permute.xlu0 %1247
  %v1250 = vmul.f32 %v1232, %v1248
  %1252 = vrot.lane.b32.xlu0 %v1250, 32
  %v1253 = vpop.permute.xlu0 %1252
  %s1255 = scalar_lea.vmem [#allocation4], 8
  %1256 = vst.msk [vmem:[%s1255] sm:$0x3] %vm502, %v1253
  %s1257 = scalar_lea.vmem [#allocation3], 6
  %v1258 = vld [vmem:[%s1257] sm:$0x3]
  %v1259 = vpack.c.bf16 %v1156, %v1156
  %v1260 = vld [vmem:[%s11] sm:$0xf]
  %v1261 = vld [vmem:[%s11 + $0x4] sm:$0xf]
  %v1262 = vld [vmem:[%s11 + $0x8] sm:$0xf]
  %v1263 = vld [vmem:[%s11 + $0xc] sm:$0xf]
  %1265 = vrot.lane.b32.xlu0 %v1259, 32
  %v1266 = vpop.permute.xlu0 %1265
  %v1271 = vunpack.c.l.b16 %v1260
  %v1272 = vunpack.c.l.b16 %v1261
  %v1273 = vunpack.c.l.b16 %v1262
  %v1274 = vunpack.c.l.b16 %v1263
  %v1275 = vpack.c.b16 %v1272, %v1271
  %v1276 = vpack.c.b16 %v1274, %v1273
  %v1280 = vsel %vm135, %v1266, 0
  %1282 = vmatprep.subr.bf16.mxu0 0
  %1283 = vmatpush1.bf16.msra.mxu0 0
  %1284 = vmatprep.subr.bf16.mxu0 0
  %1285 = vmatpush1.bf16.msra.mxu0 0
  %1286 = vmatprep.subr.bf16.mxu0 0
  %1287 = vmatpush1.bf16.msra.mxu0 0
  %1288 = vmatprep.subr.bf16.mxu0 0
  %1289 = vmatpush1.bf16.msra.mxu0 0
  %1290 = vmatprep.subr.bf16.mxu0 0
  %1291 = vmatpush1.bf16.msra.mxu0 0
  %1292 = vmatprep.subr.bf16.mxu0 0
  %1293 = vmatpush1.bf16.msra.mxu0 0
  %1294 = vmatprep.subr.bf16.mxu0 0
  %1295 = vmatpush1.bf16.msra.mxu0 %v1276
  %1296 = vmatprep.subr.bf16.mxu0 0
  %1297 = vmatpush1.bf16.msra.mxu0 %v1275
  %1298 = vmatprep.subr.bf16.mxu0 0
  %1299 = vmatpush2.bf16.msra.mxu0 0
  %1300 = vmatprep.subr.bf16.mxu0 0
  %1301 = vmatpush2.bf16.msra.mxu0 0
  %1302 = vmatprep.subr.bf16.mxu0 0
  %1303 = vmatpush2.bf16.msra.mxu0 0
  %1304 = vmatprep.subr.bf16.mxu0 0
  %1305 = vmatpush2.bf16.msra.mxu0 0
  %1306 = vmatprep.subr.bf16.mxu0 0
  %1307 = vmatpush2.bf16.msra.mxu0 0
  %1308 = vmatprep.subr.bf16.mxu0 0
  %1309 = vmatpush2.bf16.msra.mxu0 0
  %1310 = vmatprep.subr.bf16.mxu0 0
  %1311 = vmatpush2.bf16.msra.mxu0 0
  %1312 = vmatprep.subr.bf16.mxu0 0
  %1313 = vmatpush2.bf16.msra.mxu0 0
  %1314 = vmatprep.mubr.bf16.mxu0 0
  %1315 = vmatmul.mubr.bf16.gmra.mxu0 %v1280
  %v1316 = vpop.f32.mrf.mxu0
  %v1317 = vadd.f32 0.0, %v1316
  %v1318 = vpop.f32.mrf.mxu0
  %v1319 = vpop.f32.mrf.mxu0
  %v1320 = vpop.f32.mrf.mxu0
  %1321 = vdwg.mxu0
  %v1322 = vadd.f32 %v1258, %v1317
  %v1323 = vmul.f32 %v1322, 0.5
  %v1324 = vtanh.pop %v1323
  %v1325 = vmul.f32 %v1324, 0.5
  %v1326 = vadd.f32 %v1325, 0.5
  %v1327 = vtanh.pop %v1322
  %v1328 = vmul.f32 %v1326, %v1150
  %1330 = vrot.lane.b32.xlu0 %v1327, 64
  %v1331 = vpop.permute.xlu0 %1330
  %v1333 = vmul.f32 %v1326, %v1331
  %1335 = vrot.lane.b32.xlu0 %v1333, 32
  %v1336 = vpop.permute.xlu0 %1335
  %v1338 = vadd.f32 %v1328, %v1336
  %v1339 = vtanh.pop %v1338
  %1341 = vrot.lane.b32.xlu0 %v1339, 64
  %v1342 = vpop.permute.xlu0 %1341
  %v1344 = vmul.f32 %v1326, %v1342
  %1346 = vrot.lane.b32.xlu0 %v1344, 32
  %v1347 = vpop.permute.xlu0 %1346
  %s1349 = scalar_lea.vmem [#allocation5], 6
  %1350 = vst.msk [vmem:[%s1349] sm:$0x3] %vm502, %v1347
  %s1351 = scalar_lea.vmem [#allocation2], 10
  %v1352 = vld [vmem:[%s1351] sm:$0x3]
  %v1353 = vpack.c.bf16 %v1250, %v1250
  %v1354 = vld [vmem:[%s10] sm:$0xf]
  %v1355 = vld [vmem:[%s10 + $0x4] sm:$0xf]
  %v1356 = vld [vmem:[%s10 + $0x8] sm:$0xf]
  %v1357 = vld [vmem:[%s10 + $0xc] sm:$0xf]
  %1359 = vrot.lane.b32.xlu0 %v1353, 32
  %v1360 = vpop.permute.xlu0 %1359
  %v1365 = vunpack.c.l.b16 %v1354
  %v1366 = vunpack.c.l.b16 %v1355
  %v1367 = vunpack.c.l.b16 %v1356
  %v1368 = vunpack.c.l.b16 %v1357
  %v1369 = vpack.c.b16 %v1366, %v1365
  %v1370 = vpack.c.b16 %v1368, %v1367
  %v1374 = vsel %vm135, %v1360, 0
  %1376 = vmatprep.subr.bf16.mxu0 0
  %1377 = vmatpush1.bf16.msra.mxu0 0
  %1378 = vmatprep.subr.bf16.mxu0 0
  %1379 = vmatpush1.bf16.msra.mxu0 0
  %1380 = vmatprep.subr.bf16.mxu0 0
  %1381 = vmatpush1.bf16.msra.mxu0 0
  %1382 = vmatprep.subr.bf16.mxu0 0
  %1383 = vmatpush1.bf16.msra.mxu0 0
  %1384 = vmatprep.subr.bf16.mxu0 0
  %1385 = vmatpush1.bf16.msra.mxu0 0
  %1386 = vmatprep.subr.bf16.mxu0 0
  %1387 = vmatpush1.bf16.msra.mxu0 0
  %1388 = vmatprep.subr.bf16.mxu0 0
  %1389 = vmatpush1.bf16.msra.mxu0 %v1370
  %1390 = vmatprep.subr.bf16.mxu0 0
  %1391 = vmatpush1.bf16.msra.mxu0 %v1369
  %1392 = vmatprep.subr.bf16.mxu0 0
  %1393 = vmatpush2.bf16.msra.mxu0 0
  %1394 = vmatprep.subr.bf16.mxu0 0
  %1395 = vmatpush2.bf16.msra.mxu0 0
  %1396 = vmatprep.subr.bf16.mxu0 0
  %1397 = vmatpush2.bf16.msra.mxu0 0
  %1398 = vmatprep.subr.bf16.mxu0 0
  %1399 = vmatpush2.bf16.msra.mxu0 0
  %1400 = vmatprep.subr.bf16.mxu0 0
  %1401 = vmatpush2.bf16.msra.mxu0 0
  %1402 = vmatprep.subr.bf16.mxu0 0
  %1403 = vmatpush2.bf16.msra.mxu0 0
  %1404 = vmatprep.subr.bf16.mxu0 0
  %1405 = vmatpush2.bf16.msra.mxu0 0
  %1406 = vmatprep.subr.bf16.mxu0 0
  %1407 = vmatpush2.bf16.msra.mxu0 0
  %1408 = vmatprep.mubr.bf16.mxu0 0
  %1409 = vmatmul.mubr.bf16.gmra.mxu0 %v1374
  %v1410 = vpop.f32.mrf.mxu0
  %v1411 = vadd.f32 0.0, %v1410
  %v1412 = vpop.f32.mrf.mxu0
  %v1413 = vpop.f32.mrf.mxu0
  %v1414 = vpop.f32.mrf.mxu0
  %1415 = vdwg.mxu0
  %v1416 = vadd.f32 %v1352, %v1411
  %v1417 = vmul.f32 %v1416, 0.5
  %v1418 = vtanh.pop %v1417
  %v1419 = vmul.f32 %v1418, 0.5
  %v1420 = vadd.f32 %v1419, 0.5
  %v1421 = vtanh.pop %v1416
  %v1422 = vmul.f32 %v1420, %v1244
  %1424 = vrot.lane.b32.xlu0 %v1421, 64
  %v1425 = vpop.permute.xlu0 %1424
  %v1427 = vmul.f32 %v1420, %v1425
  %1429 = vrot.lane.b32.xlu0 %v1427, 32
  %v1430 = vpop.permute.xlu0 %1429
  %v1432 = vadd.f32 %v1422, %v1430
  %v1433 = vtanh.pop %v1432
  %1435 = vrot.lane.b32.xlu0 %v1433, 64
  %v1436 = vpop.permute.xlu0 %1435
  %v1438 = vmul.f32 %v1420, %v1436
  %1440 = vrot.lane.b32.xlu0 %v1438, 32
  %v1441 = vpop.permute.xlu0 %1440
  %s1443 = scalar_lea.vmem [#allocation4], 10
  %1444 = vst.msk [vmem:[%s1443] sm:$0x3] %vm502, %v1441
  %s1445 = scalar_lea.vmem [#allocation3], 4
  %v1446 = vld [vmem:[%s1445] sm:$0x3]
  %v1447 = vpack.c.bf16 %v1344, %v1344
  %v1448 = vld [vmem:[%s11] sm:$0xf]
  %v1449 = vld [vmem:[%s11 + $0x4] sm:$0xf]
  %v1450 = vld [vmem:[%s11 + $0x8] sm:$0xf]
  %v1451 = vld [vmem:[%s11 + $0xc] sm:$0xf]
  %1453 = vrot.lane.b32.xlu0 %v1447, 32
  %v1454 = vpop.permute.xlu0 %1453
  %v1459 = vunpack.c.l.b16 %v1448
  %v1460 = vunpack.c.l.b16 %v1449
  %v1461 = vunpack.c.l.b16 %v1450
  %v1462 = vunpack.c.l.b16 %v1451
  %v1463 = vpack.c.b16 %v1460, %v1459
  %v1464 = vpack.c.b16 %v1462, %v1461
  %v1468 = vsel %vm135, %v1454, 0
  %1470 = vmatprep.subr.bf16.mxu0 0
  %1471 = vmatpush1.bf16.msra.mxu0 0
  %1472 = vmatprep.subr.bf16.mxu0 0
  %1473 = vmatpush1.bf16.msra.mxu0 0
  %1474 = vmatprep.subr.bf16.mxu0 0
  %1475 = vmatpush1.bf16.msra.mxu0 0
  %1476 = vmatprep.subr.bf16.mxu0 0
  %1477 = vmatpush1.bf16.msra.mxu0 0
  %1478 = vmatprep.subr.bf16.mxu0 0
  %1479 = vmatpush1.bf16.msra.mxu0 0
  %1480 = vmatprep.subr.bf16.mxu0 0
  %1481 = vmatpush1.bf16.msra.mxu0 0
  %1482 = vmatprep.subr.bf16.mxu0 0
  %1483 = vmatpush1.bf16.msra.mxu0 %v1464
  %1484 = vmatprep.subr.bf16.mxu0 0
  %1485 = vmatpush1.bf16.msra.mxu0 %v1463
  %1486 = vmatprep.subr.bf16.mxu0 0
  %1487 = vmatpush2.bf16.msra.mxu0 0
  %1488 = vmatprep.subr.bf16.mxu0 0
  %1489 = vmatpush2.bf16.msra.mxu0 0
  %1490 = vmatprep.subr.bf16.mxu0 0
  %1491 = vmatpush2.bf16.msra.mxu0 0
  %1492 = vmatprep.subr.bf16.mxu0 0
  %1493 = vmatpush2.bf16.msra.mxu0 0
  %1494 = vmatprep.subr.bf16.mxu0 0
  %1495 = vmatpush2.bf16.msra.mxu0 0
  %1496 = vmatprep.subr.bf16.mxu0 0
  %1497 = vmatpush2.bf16.msra.mxu0 0
  %1498 = vmatprep.subr.bf16.mxu0 0
  %1499 = vmatpush2.bf16.msra.mxu0 0
  %1500 = vmatprep.subr.bf16.mxu0 0
  %1501 = vmatpush2.bf16.msra.mxu0 0
  %1502 = vmatprep.mubr.bf16.mxu0 0
  %1503 = vmatmul.mubr.bf16.gmra.mxu0 %v1468
  %v1504 = vpop.f32.mrf.mxu0
  %v1505 = vadd.f32 0.0, %v1504
  %v1506 = vpop.f32.mrf.mxu0
  %v1507 = vpop.f32.mrf.mxu0
  %v1508 = vpop.f32.mrf.mxu0
  %1509 = vdwg.mxu0
  %v1510 = vadd.f32 %v1446, %v1505
  %v1511 = vmul.f32 %v1510, 0.5
  %v1512 = vtanh.pop %v1511
  %v1513 = vmul.f32 %v1512, 0.5
  %v1514 = vadd.f32 %v1513, 0.5
  %v1515 = vtanh.pop %v1510
  %v1516 = vmul.f32 %v1514, %v1338
  %1518 = vrot.lane.b32.xlu0 %v1515, 64
  %v1519 = vpop.permute.xlu0 %1518
  %v1521 = vmul.f32 %v1514, %v1519
  %1523 = vrot.lane.b32.xlu0 %v1521, 32
  %v1524 = vpop.permute.xlu0 %1523
  %v1526 = vadd.f32 %v1516, %v1524
  %v1527 = vtanh.pop %v1526
  %1529 = vrot.lane.b32.xlu0 %v1527, 64
  %v1530 = vpop.permute.xlu0 %1529
  %v1532 = vmul.f32 %v1514, %v1530
  %1534 = vrot.lane.b32.xlu0 %v1532, 32
  %v1535 = vpop.permute.xlu0 %1534
  %s1537 = scalar_lea.vmem [#allocation5], 4
  %1538 = vst.msk [vmem:[%s1537] sm:$0x3] %vm502, %v1535
  %s1539 = scalar_lea.vmem [#allocation2], 12
  %v1540 = vld [vmem:[%s1539] sm:$0x3]
  %v1541 = vpack.c.bf16 %v1438, %v1438
  %v1542 = vld [vmem:[%s10] sm:$0xf]
  %v1543 = vld [vmem:[%s10 + $0x4] sm:$0xf]
  %v1544 = vld [vmem:[%s10 + $0x8] sm:$0xf]
  %v1545 = vld [vmem:[%s10 + $0xc] sm:$0xf]
  %1547 = vrot.lane.b32.xlu0 %v1541, 32
  %v1548 = vpop.permute.xlu0 %1547
  %v1553 = vunpack.c.l.b16 %v1542
  %v1554 = vunpack.c.l.b16 %v1543
  %v1555 = vunpack.c.l.b16 %v1544
  %v1556 = vunpack.c.l.b16 %v1545
  %v1557 = vpack.c.b16 %v1554, %v1553
  %v1558 = vpack.c.b16 %v1556, %v1555
  %v1562 = vsel %vm135, %v1548, 0
  %1564 = vmatprep.subr.bf16.mxu0 0
  %1565 = vmatpush1.bf16.msra.mxu0 0
  %1566 = vmatprep.subr.bf16.mxu0 0
  %1567 = vmatpush1.bf16.msra.mxu0 0
  %1568 = vmatprep.subr.bf16.mxu0 0
  %1569 = vmatpush1.bf16.msra.mxu0 0
  %1570 = vmatprep.subr.bf16.mxu0 0
  %1571 = vmatpush1.bf16.msra.mxu0 0
  %1572 = vmatprep.subr.bf16.mxu0 0
  %1573 = vmatpush1.bf16.msra.mxu0 0
  %1574 = vmatprep.subr.bf16.mxu0 0
  %1575 = vmatpush1.bf16.msra.mxu0 0
  %1576 = vmatprep.subr.bf16.mxu0 0
  %1577 = vmatpush1.bf16.msra.mxu0 %v1558
  %1578 = vmatprep.subr.bf16.mxu0 0
  %1579 = vmatpush1.bf16.msra.mxu0 %v1557
  %1580 = vmatprep.subr.bf16.mxu0 0
  %1581 = vmatpush2.bf16.msra.mxu0 0
  %1582 = vmatprep.subr.bf16.mxu0 0
  %1583 = vmatpush2.bf16.msra.mxu0 0
  %1584 = vmatprep.subr.bf16.mxu0 0
  %1585 = vmatpush2.bf16.msra.mxu0 0
  %1586 = vmatprep.subr.bf16.mxu0 0
  %1587 = vmatpush2.bf16.msra.mxu0 0
  %1588 = vmatprep.subr.bf16.mxu0 0
  %1589 = vmatpush2.bf16.msra.mxu0 0
  %1590 = vmatprep.subr.bf16.mxu0 0
  %1591 = vmatpush2.bf16.msra.mxu0 0
  %1592 = vmatprep.subr.bf16.mxu0 0
  %1593 = vmatpush2.bf16.msra.mxu0 0
  %1594 = vmatprep.subr.bf16.mxu0 0
  %1595 = vmatpush2.bf16.msra.mxu0 0
  %1596 = vmatprep.mubr.bf16.mxu0 0
  %1597 = vmatmul.mubr.bf16.gmra.mxu0 %v1562
  %v1598 = vpop.f32.mrf.mxu0
  %v1599 = vadd.f32 0.0, %v1598
  %v1600 = vpop.f32.mrf.mxu0
  %v1601 = vpop.f32.mrf.mxu0
  %v1602 = vpop.f32.mrf.mxu0
  %1603 = vdwg.mxu0
  %v1604 = vadd.f32 %v1540, %v1599
  %v1605 = vmul.f32 %v1604, 0.5
  %v1606 = vtanh.pop %v1605
  %v1607 = vmul.f32 %v1606, 0.5
  %v1608 = vadd.f32 %v1607, 0.5
  %v1609 = vtanh.pop %v1604
  %v1610 = vmul.f32 %v1608, %v1432
  %1612 = vrot.lane.b32.xlu0 %v1609, 64
  %v1613 = vpop.permute.xlu0 %1612
  %v1615 = vmul.f32 %v1608, %v1613
  %1617 = vrot.lane.b32.xlu0 %v1615, 32
  %v1618 = vpop.permute.xlu0 %1617
  %v1620 = vadd.f32 %v1610, %v1618
  %v1621 = vtanh.pop %v1620
  %1623 = vrot.lane.b32.xlu0 %v1621, 64
  %v1624 = vpop.permute.xlu0 %1623
  %v1626 = vmul.f32 %v1608, %v1624
  %1628 = vrot.lane.b32.xlu0 %v1626, 32
  %v1629 = vpop.permute.xlu0 %1628
  %s1631 = scalar_lea.vmem [#allocation4], 12
  %1632 = vst.msk [vmem:[%s1631] sm:$0x3] %vm502, %v1629
  %s1633 = scalar_lea.vmem [#allocation3], 2
  %v1634 = vld [vmem:[%s1633] sm:$0x3]
  %v1635 = vpack.c.bf16 %v1532, %v1532
  %v1636 = vld [vmem:[%s11] sm:$0xf]
  %v1637 = vld [vmem:[%s11 + $0x4] sm:$0xf]
  %v1638 = vld [vmem:[%s11 + $0x8] sm:$0xf]
  %v1639 = vld [vmem:[%s11 + $0xc] sm:$0xf]
  %1641 = vrot.lane.b32.xlu0 %v1635, 32
  %v1642 = vpop.permute.xlu0 %1641
  %v1647 = vunpack.c.l.b16 %v1636
  %v1648 = vunpack.c.l.b16 %v1637
  %v1649 = vunpack.c.l.b16 %v1638
  %v1650 = vunpack.c.l.b16 %v1639
  %v1651 = vpack.c.b16 %v1648, %v1647
  %v1652 = vpack.c.b16 %v1650, %v1649
  %v1656 = vsel %vm135, %v1642, 0
  %1658 = vmatprep.subr.bf16.mxu0 0
  %1659 = vmatpush1.bf16.msra.mxu0 0
  %1660 = vmatprep.subr.bf16.mxu0 0
  %1661 = vmatpush1.bf16.msra.mxu0 0
  %1662 = vmatprep.subr.bf16.mxu0 0
  %1663 = vmatpush1.bf16.msra.mxu0 0
  %1664 = vmatprep.subr.bf16.mxu0 0
  %1665 = vmatpush1.bf16.msra.mxu0 0
  %1666 = vmatprep.subr.bf16.mxu0 0
  %1667 = vmatpush1.bf16.msra.mxu0 0
  %1668 = vmatprep.subr.bf16.mxu0 0
  %1669 = vmatpush1.bf16.msra.mxu0 0
  %1670 = vmatprep.subr.bf16.mxu0 0
  %1671 = vmatpush1.bf16.msra.mxu0 %v1652
  %1672 = vmatprep.subr.bf16.mxu0 0
  %1673 = vmatpush1.bf16.msra.mxu0 %v1651
  %1674 = vmatprep.subr.bf16.mxu0 0
  %1675 = vmatpush2.bf16.msra.mxu0 0
  %1676 = vmatprep.subr.bf16.mxu0 0
  %1677 = vmatpush2.bf16.msra.mxu0 0
  %1678 = vmatprep.subr.bf16.mxu0 0
  %1679 = vmatpush2.bf16.msra.mxu0 0
  %1680 = vmatprep.subr.bf16.mxu0 0
  %1681 = vmatpush2.bf16.msra.mxu0 0
  %1682 = vmatprep.subr.bf16.mxu0 0
  %1683 = vmatpush2.bf16.msra.mxu0 0
  %1684 = vmatprep.subr.bf16.mxu0 0
  %1685 = vmatpush2.bf16.msra.mxu0 0
  %1686 = vmatprep.subr.bf16.mxu0 0
  %1687 = vmatpush2.bf16.msra.mxu0 0
  %1688 = vmatprep.subr.bf16.mxu0 0
  %1689 = vmatpush2.bf16.msra.mxu0 0
  %1690 = vmatprep.mubr.bf16.mxu0 0
  %1691 = vmatmul.mubr.bf16.gmra.mxu0 %v1656
  %v1692 = vpop.f32.mrf.mxu0
  %v1693 = vadd.f32 0.0, %v1692
  %v1694 = vpop.f32.mrf.mxu0
  %v1695 = vpop.f32.mrf.mxu0
  %v1696 = vpop.f32.mrf.mxu0
  %1697 = vdwg.mxu0
  %v1698 = vadd.f32 %v1634, %v1693
  %v1699 = vmul.f32 %v1698, 0.5
  %v1700 = vtanh.pop %v1699
  %v1701 = vmul.f32 %v1700, 0.5
  %v1702 = vadd.f32 %v1701, 0.5
  %v1703 = vtanh.pop %v1698
  %v1704 = vmul.f32 %v1702, %v1526
  %1706 = vrot.lane.b32.xlu0 %v1703, 64
  %v1707 = vpop.permute.xlu0 %1706
  %v1709 = vmul.f32 %v1702, %v1707
  %1711 = vrot.lane.b32.xlu0 %v1709, 32
  %v1712 = vpop.permute.xlu0 %1711
  %v1714 = vadd.f32 %v1704, %v1712
  %v1715 = vtanh.pop %v1714
  %1717 = vrot.lane.b32.xlu0 %v1715, 64
  %v1718 = vpop.permute.xlu0 %1717
  %v1720 = vmul.f32 %v1702, %v1718
  %1722 = vrot.lane.b32.xlu0 %v1720, 32
  %v1723 = vpop.permute.xlu0 %1722
  %s1725 = scalar_lea.vmem [#allocation5], 2
  %1726 = vst.msk [vmem:[%s1725] sm:$0x3] %vm502, %v1723
  %s1727 = scalar_lea.vmem [#allocation2], 14
  %v1728 = vld [vmem:[%s1727] sm:$0x3]
  %v1729 = vpack.c.bf16 %v1626, %v1626
  %v1730 = vld [vmem:[%s10] sm:$0xf]
  %v1731 = vld [vmem:[%s10 + $0x4] sm:$0xf]
  %v1732 = vld [vmem:[%s10 + $0x8] sm:$0xf]
  %v1733 = vld [vmem:[%s10 + $0xc] sm:$0xf]
  %1735 = vrot.lane.b32.xlu0 %v1729, 32
  %v1736 = vpop.permute.xlu0 %1735
  %v1741 = vunpack.c.l.b16 %v1730
  %v1742 = vunpack.c.l.b16 %v1731
  %v1743 = vunpack.c.l.b16 %v1732
  %v1744 = vunpack.c.l.b16 %v1733
  %v1745 = vpack.c.b16 %v1742, %v1741
  %v1746 = vpack.c.b16 %v1744, %v1743
  %v1750 = vsel %vm135, %v1736, 0
  %1752 = vmatprep.subr.bf16.mxu0 0
  %1753 = vmatpush1.bf16.msra.mxu0 0
  %1754 = vmatprep.subr.bf16.mxu0 0
  %1755 = vmatpush1.bf16.msra.mxu0 0
  %1756 = vmatprep.subr.bf16.mxu0 0
  %1757 = vmatpush1.bf16.msra.mxu0 0
  %1758 = vmatprep.subr.bf16.mxu0 0
  %1759 = vmatpush1.bf16.msra.mxu0 0
  %1760 = vmatprep.subr.bf16.mxu0 0
  %1761 = vmatpush1.bf16.msra.mxu0 0
  %1762 = vmatprep.subr.bf16.mxu0 0
  %1763 = vmatpush1.bf16.msra.mxu0 0
  %1764 = vmatprep.subr.bf16.mxu0 0
  %1765 = vmatpush1.bf16.msra.mxu0 %v1746
  %1766 = vmatprep.subr.bf16.mxu0 0
  %1767 = vmatpush1.bf16.msra.mxu0 %v1745
  %1768 = vmatprep.subr.bf16.mxu0 0
  %1769 = vmatpush2.bf16.msra.mxu0 0
  %1770 = vmatprep.subr.bf16.mxu0 0
  %1771 = vmatpush2.bf16.msra.mxu0 0
  %1772 = vmatprep.subr.bf16.mxu0 0
  %1773 = vmatpush2.bf16.msra.mxu0 0
  %1774 = vmatprep.subr.bf16.mxu0 0
  %1775 = vmatpush2.bf16.msra.mxu0 0
  %1776 = vmatprep.subr.bf16.mxu0 0
  %1777 = vmatpush2.bf16.msra.mxu0 0
  %1778 = vmatprep.subr.bf16.mxu0 0
  %1779 = vmatpush2.bf16.msra.mxu0 0
  %1780 = vmatprep.subr.bf16.mxu0 0
  %1781 = vmatpush2.bf16.msra.mxu0 0
  %1782 = vmatprep.subr.bf16.mxu0 0
  %1783 = vmatpush2.bf16.msra.mxu0 0
  %1784 = vmatprep.mubr.bf16.mxu0 0
  %1785 = vmatmul.mubr.bf16.gmra.mxu0 %v1750
  %v1786 = vpop.f32.mrf.mxu0
  %v1787 = vadd.f32 0.0, %v1786
  %v1788 = vpop.f32.mrf.mxu0
  %v1789 = vpop.f32.mrf.mxu0
  %v1790 = vpop.f32.mrf.mxu0
  %1791 = vdwg.mxu0
  %v1792 = vadd.f32 %v1728, %v1787
  %v1793 = vmul.f32 %v1792, 0.5
  %v1794 = vtanh.pop %v1793
  %v1795 = vmul.f32 %v1794, 0.5
  %v1796 = vadd.f32 %v1795, 0.5
  %v1797 = vtanh.pop %v1792
  %v1798 = vmul.f32 %v1796, %v1620
  %1800 = vrot.lane.b32.xlu0 %v1797, 64
  %v1801 = vpop.permute.xlu0 %1800
  %v1803 = vmul.f32 %v1796, %v1801
  %1805 = vrot.lane.b32.xlu0 %v1803, 32
  %v1806 = vpop.permute.xlu0 %1805
  %v1808 = vadd.f32 %v1798, %v1806
  %v1809 = vtanh.pop %v1808
  %1811 = vrot.lane.b32.xlu0 %v1809, 64
  %v1812 = vpop.permute.xlu0 %1811
  %v1814 = vmul.f32 %v1796, %v1812
  %1816 = vrot.lane.b32.xlu0 %v1814, 32
  %v1817 = vpop.permute.xlu0 %1816
  %s1819 = scalar_lea.vmem [#allocation4], 14
  %1820 = vst.msk [vmem:[%s1819] sm:$0x3] %vm502, %v1817
  %v1821 = vld [vmem:[#allocation3] sm:$0x3]
  %v1822 = vpack.c.bf16 %v1720, %v1720
  %v1823 = vld [vmem:[%s11] sm:$0xf]
  %v1824 = vld [vmem:[%s11 + $0x4] sm:$0xf]
  %v1825 = vld [vmem:[%s11 + $0x8] sm:$0xf]
  %v1826 = vld [vmem:[%s11 + $0xc] sm:$0xf]
  %1828 = vrot.lane.b32.xlu0 %v1822, 32
  %v1829 = vpop.permute.xlu0 %1828
  %v1834 = vunpack.c.l.b16 %v1823
  %v1835 = vunpack.c.l.b16 %v1824
  %v1836 = vunpack.c.l.b16 %v1825
  %v1837 = vunpack.c.l.b16 %v1826
  %v1838 = vpack.c.b16 %v1835, %v1834
  %v1839 = vpack.c.b16 %v1837, %v1836
  %v1843 = vsel %vm135, %v1829, 0
  %1845 = vmatprep.subr.bf16.mxu0 0
  %1846 = vmatpush1.bf16.msra.mxu0 0
  %1847 = vmatprep.subr.bf16.mxu0 0
  %1848 = vmatpush1.bf16.msra.mxu0 0
  %1849 = vmatprep.subr.bf16.mxu0 0
  %1850 = vmatpush1.bf16.msra.mxu0 0
  %1851 = vmatprep.subr.bf16.mxu0 0
  %1852 = vmatpush1.bf16.msra.mxu0 0
  %1853 = vmatprep.subr.bf16.mxu0 0
  %1854 = vmatpush1.bf16.msra.mxu0 0
  %1855 = vmatprep.subr.bf16.mxu0 0
  %1856 = vmatpush1.bf16.msra.mxu0 0
  %1857 = vmatprep.subr.bf16.mxu0 0
  %1858 = vmatpush1.bf16.msra.mxu0 %v1839
  %1859 = vmatprep.subr.bf16.mxu0 0
  %1860 = vmatpush1.bf16.msra.mxu0 %v1838
  %1861 = vmatprep.subr.bf16.mxu0 0
  %1862 = vmatpush2.bf16.msra.mxu0 0
  %1863 = vmatprep.subr.bf16.mxu0 0
  %1864 = vmatpush2.bf16.msra.mxu0 0
  %1865 = vmatprep.subr.bf16.mxu0 0
  %1866 = vmatpush2.bf16.msra.mxu0 0
  %1867 = vmatprep.subr.bf16.mxu0 0
  %1868 = vmatpush2.bf16.msra.mxu0 0
  %1869 = vmatprep.subr.bf16.mxu0 0
  %1870 = vmatpush2.bf16.msra.mxu0 0
  %1871 = vmatprep.subr.bf16.mxu0 0
  %1872 = vmatpush2.bf16.msra.mxu0 0
  %1873 = vmatprep.subr.bf16.mxu0 0
  %1874 = vmatpush2.bf16.msra.mxu0 0
  %1875 = vmatprep.subr.bf16.mxu0 0
  %1876 = vmatpush2.bf16.msra.mxu0 0
  %1877 = vmatprep.mubr.bf16.mxu0 0
  %1878 = vmatmul.mubr.bf16.gmra.mxu0 %v1843
  %v1879 = vpop.f32.mrf.mxu0
  %v1880 = vadd.f32 0.0, %v1879
  %v1881 = vpop.f32.mrf.mxu0
  %v1882 = vpop.f32.mrf.mxu0
  %v1883 = vpop.f32.mrf.mxu0
  %1884 = vdwg.mxu0
  %v1885 = vadd.f32 %v1821, %v1880
  %v1886 = vmul.f32 %v1885, 0.5
  %v1887 = vtanh.pop %v1886
  %v1888 = vmul.f32 %v1887, 0.5
  %v1889 = vadd.f32 %v1888, 0.5
  %v1890 = vtanh.pop %v1885
  %v1891 = vmul.f32 %v1889, %v1714
  %1893 = vrot.lane.b32.xlu0 %v1890, 64
  %v1894 = vpop.permute.xlu0 %1893
  %v1896 = vmul.f32 %v1889, %v1894
  %1898 = vrot.lane.b32.xlu0 %v1896, 32
  %v1899 = vpop.permute.xlu0 %1898
  %v1901 = vadd.f32 %v1891, %v1899
  %v1902 = vtanh.pop %v1901
  %1904 = vrot.lane.b32.xlu0 %v1902, 64
  %v1905 = vpop.permute.xlu0 %1904
  %v1907 = vmul.f32 %v1889, %v1905
  %1909 = vrot.lane.b32.xlu0 %v1907, 32
  %v1910 = vpop.permute.xlu0 %1909
  %1912 = vst.msk [vmem:[#allocation5] sm:$0x3] %vm502, %v1910
  %1913 = vst.msk [vmem:[#allocation6] sm:$0x3] %vm502, %v1817
  %1915 = vrot.lane.b32.xlu0 %v1808, 96
  %v1916 = vpop.permute.xlu0 %1915
  %1918 = vst.msk [vmem:[#allocation7] sm:$0x3] %vm502, %v1916
  %1919 = vst.msk [vmem:[#allocation8] sm:$0x3] %vm502, %v1910
  %1921 = vrot.lane.b32.xlu0 %v1901, 96
  %v1922 = vpop.permute.xlu0 %1921
  %1924 = vst.msk [vmem:[#allocation9] sm:$0x3] %vm502, %v1922
  %v1925 = vld [vmem:[#allocation4] sm:$0xff]
  %v1926 = vld [vmem:[#allocation4 + $0x8] sm:$0xff]
  %v1927 = vpack.c.bf16 %v1926, %v1925
  %v1929 = vunpack.c.l.b16 %v1927
  %v1930 = vunpack.c.h.b16 %v1927
  %v1931 = vpack.c.b16 %v1929, %v1929
  %v1932 = vpack.c.b16 %v1930, %v1930
  %vm1935 = vcmask 257024
  %1936 = vst.msk [vmem:[%s12] sm:$0xf] %vm1935, %v1931
  %1937 = vst.msk [vmem:[%s12 + $0x4] sm:$0xf] %vm1935, %v1932
  %v1938 = vld [vmem:[#allocation5] sm:$0xff]
  %v1939 = vld [vmem:[#allocation5 + $0x8] sm:$0xff]
  %v1940 = vpack.c.bf16 %v1939, %v1938
  %v1942 = vunpack.c.l.b16 %v1940
  %v1943 = vunpack.c.h.b16 %v1940
  %v1944 = vpack.c.b16 %v1942, %v1942
  %v1945 = vpack.c.b16 %v1943, %v1943
  %1948 = vst.msk [vmem:[%s98] sm:$0xf] %vm1935, %v1944
  %1949 = vst.msk [vmem:[%s98 + $0x4] sm:$0xf] %vm1935, %v1945
  %s1950 = ssub.s32 0, 0
  %s1951 = smul.u32 2, %s1950
  %p1952 = scmp.lt.s32.totalorder %s1951, 1
  %s1953 = scalar_select %p1952, %s1951, 1
  %s1954 = smul.addr %s1953, 4
  %s1955 = scalar_lea.vmem %s13, %s1954
  // Predicated region
  $region54: #{classifier_forward.4} parent=0 // pred_check
    _
  $region55: #{classifier_forward.4} parent=0 // pred_check_branch
    %1957 = sbr.rel (0) target = $region57
  $region56: #{classifier_forward.4} parent=0 // pred_region
    _
  $region57: #{classifier_forward.4} parent=0 // pred_fallthru
    _
  // Predicated region
  $region58: #{classifier_forward.4} parent=0 // pred_check
    _
  $region59: #{classifier_forward.4} parent=0 // pred_check_branch
    %1959 = sbr.rel (0) target = $region61
  $region60: #{classifier_forward.4} parent=0 // pred_region
    %s1960 = ssub.s32 0, 0
    %s1961 = smul.u32 2, %s1960
  $region61: #{classifier_forward.4} parent=0 // pred_fallthru
    _
  // Predicated region
  $region62: #{classifier_forward.4} parent=0 // pred_check
    _
  $region63: #{classifier_forward.4} parent=0 // pred_check_branch
    %1963 = sbr.rel (0) target = $region65
  $region64: #{classifier_forward.4} parent=0 // pred_region
    _
  $region65: #{classifier_forward.4} parent=0 // pred_fallthru
    _
  // Predicated region
  $region66: #{classifier_forward.4} parent=0 // pred_check
    _
  $region67: #{classifier_forward.4} parent=0 // pred_check_branch
    %1965 = sbr.rel (0) target = $region69
  $region68: #{classifier_forward.4} parent=0 // pred_region
    %s1966 = ssub.s32 0, 0
    %s1967 = smul.u32 2, %s1966
    %p1968 = scmp.lt.s32.totalorder %s1967, 1
    %s1969 = scalar_select %p1968, %s1967, 1
    %s1970 = smul.addr %s1969, 4
    %s1971 = scalar_lea.vmem %s13, %s1970
  $region69: #{classifier_forward.4} parent=0 // pred_fallthru
    _

</llo_original>
